<compile_context>
chip_gen: v7x
topology: tpu7x:2x2x1
jax: 0.10.0
libtpu: 0.0.40
codegen_flags: <defaults>
</compile_context>

<pallas_src>
import functools

import jax
import jax.numpy as jnp
from jax import lax
from jax.experimental import pallas as pl
from jax.experimental.pallas import tpu as pltpu


def _residual_block_kernel(x_ref, wa_ref, ba_ref, wb_ref, bb_ref, o_ref,
                           pad_ref, acc_ref):
    """One batch element per grid step.

    x_ref  : (1, H, W, C)    input block (conv-a input AND residual shortcut)
    wa_ref : (9, C, C)       conv-a weights (BN scale pre-folded), tap-major
    ba_ref : (1, C)          folded BN bias, branch a
    wb_ref : (9, C, C)       conv-b weights (BN scale pre-folded)
    bb_ref : (1, C)          folded BN bias, branch b
    o_ref  : (1, H, W, C)    output
    pad_ref: (H+2, W+2, C)   VMEM scratch: zero-padded conv input (reused for
                             both convs; only the border is (re)zeroed)
    acc_ref: (H*W, C)        VMEM scratch: f32 conv accumulator
    """
    _, H, W, C = o_ref.shape
    HW = H * W

    # ---- zero only the 1-pixel border (O(perimeter), not O(area)). ---------
    # The interior is fully rewritten below, so the scratch carries no state
    # across grid steps and the grid axis may be sharded ("parallel").
    zrow = jnp.zeros((1, W + 2, C), jnp.float32)
    zcol = jnp.zeros((H + 2, 1, C), jnp.float32)
    pad_ref[0:1, :, :] = zrow
    pad_ref[H + 1:H + 2, :, :] = zrow
    pad_ref[:, 0:1, :] = zcol
    pad_ref[:, W + 1:W + 2, :] = zcol

    # fill interior with x (f32) for conv a
    pad_ref[1:1 + H, 1:1 + W, :] = x_ref[0].astype(jnp.float32)

    def conv3x3(w_ref):
        # NOTE: for realistic channel counts (C >= 128) the 9 taps should be
        # fused into a single K=9*C im2col matmul (and operands cast to bf16 on
        # v6e/v7x) to fill the MXU contraction depth; at the lane-sparse C=4
        # test shape the 9-tap form is the portable/safe choice.
        acc_ref[...] = jnp.zeros_like(acc_ref)
        for kh in range(3):
            for kw in range(3):
                patch = pad_ref[kh:kh + H, kw:kw + W, :].reshape(HW, C)
                acc_ref[...] += jnp.dot(patch, w_ref[kh * 3 + kw],
                                        preferred_element_type=jnp.float32)
        return acc_ref[...]

    # ---- branch a: conv (BN scale folded in) + bias + ReLU ------------------
    ya = jnp.maximum(conv3x3(wa_ref) + ba_ref[...], 0.0)          # (HW, C)

    # re-pad the intermediate in place (border is already zero)
    pad_ref[1:1 + H, 1:1 + W, :] = ya.reshape(H, W, C)

    # ---- branch b: conv + bias (activation_none), then residual add --------
    yb = conv3x3(wb_ref) + bb_ref[...]                             # (HW, C)
    out = x_ref[0].astype(jnp.float32) + yb.reshape(H, W, C)
    o_ref[0] = out.astype(o_ref.dtype)


@jax.jit
def residual_block_nhwc(x, wa_hwio, sa, ba, wb_hwio, sb, bb):
    """x: (N, H, W, C) float32, weights HWIO (3,3,C,C).  Returns (N, H, W, C)."""
    N, H, W, C = x.shape

    # fold BN scale into the conv output channels (rides the MXU for free)
    wa = (wa_hwio * sa[None, None, None, :]).astype(jnp.float32).reshape(9, C, C)
    wb = (wb_hwio * sb[None, None, None, :]).astype(jnp.float32).reshape(9, C, C)
    ba2 = ba.reshape(1, C).astype(jnp.float32)
    bb2 = bb.reshape(1, C).astype(jnp.float32)

    return pl.pallas_call(
        _residual_block_kernel,
        out_shape=jax.ShapeDtypeStruct((N, H, W, C), x.dtype),
        grid_spec=pltpu.PrefetchScalarGridSpec(
            num_scalar_prefetch=0,
            grid=(N,),
            in_specs=[
                pl.BlockSpec((1, H, W, C), lambda n: (n, 0, 0, 0)),
                pl.BlockSpec((9, C, C), lambda n: (0, 0, 0)),
                pl.BlockSpec((1, C), lambda n: (0, 0)),
                pl.BlockSpec((9, C, C), lambda n: (0, 0, 0)),
                pl.BlockSpec((1, C), lambda n: (0, 0)),
            ],
            out_specs=pl.BlockSpec((1, H, W, C), lambda n: (n, 0, 0, 0)),
            scratch_shapes=[
                pltpu.VMEM((H + 2, W + 2, C), jnp.float32),   # padded conv input
                pltpu.VMEM((H * W, C), jnp.float32),          # conv accumulator
            ],
        ),
        compiler_params=pltpu.CompilerParams(
            dimension_semantics=("parallel",),     # batch is independent (v7x megacore)
            vmem_limit_bytes=64 * 1024 * 1024,
        ),
    )(x, wa, ba2, wb, bb2)


def residual_block_nchw(x_nchw, wa_hwio, sa, ba, wb_hwio, sb, bb):
    """PyTorch-convention NCHW wrapper.  (Callers that can produce/consume
    NHWC should use residual_block_nhwc directly and skip the transposes.)"""
    x = jnp.transpose(x_nchw, (0, 2, 3, 1))            # -> NHWC
    out = residual_block_nhwc(x, wa_hwio, sa, ba, wb_hwio, sb, bb)
    return jnp.transpose(out, (0, 3, 1, 2))            # -> NCHW


def _fold_bn(gamma, beta, running_mean, running_var, eps=1e-5):
    scale = gamma / jnp.sqrt(running_var + eps)
    bias = beta - running_mean * scale
    return scale, bias


def _reference_nchw(x_nchw, wa_hwio, sa, ba, wb_hwio, sb, bb):
    """Pure-JAX reference of the PyTorch ResidualBlock forward (eval-mode BN)."""
    x = jnp.transpose(x_nchw, (0, 2, 3, 1))
    dn = ('NHWC', 'HWIO', 'NHWC')
    ya = lax.conv_general_dilated(x, wa_hwio, (1, 1), ((1, 1), (1, 1)),
                                  dimension_numbers=dn)
    ya = jnp.maximum(ya * sa + ba, 0.0)                # BN + ReLU
    yb = lax.conv_general_dilated(ya, wb_hwio, (1, 1), ((1, 1), (1, 1)),
                                  dimension_numbers=dn)
    yb = yb * sb + bb                                  # BN + Identity
    return jnp.transpose(x + yb, (0, 3, 1, 2))


if __name__ == "__main__":
    N, C, H, W = 2, 4, 16, 16
    key = jax.random.PRNGKey(0)
    keys = jax.random.split(key, 12)

    x = jax.random.normal(keys[0], (N, C, H, W), jnp.float32)

    # Conv weights in HWIO (3, 3, Cin, Cout); Conv2d has bias=False (has_bn=True).
    wa_hwio = jax.random.normal(keys[1], (3, 3, C, C), jnp.float32) * 0.2
    wb_hwio = jax.random.normal(keys[2], (3, 3, C, C), jnp.float32) * 0.2

    # BatchNorm2d params / running stats (eval mode), folded to scale & bias.
    gamma_a = 1.0 + 0.1 * jax.random.normal(keys[3], (C,), jnp.float32)
    beta_a = 0.1 * jax.random.normal(keys[4], (C,), jnp.float32)
    mean_a = 0.1 * jax.random.normal(keys[5], (C,), jnp.float32)
    var_a = jnp.abs(jax.random.normal(keys[6], (C,), jnp.float32)) + 0.5

    gamma_b = 1.0 + 0.1 * jax.random.normal(keys[7], (C,), jnp.float32)
    beta_b = 0.1 * jax.random.normal(keys[8], (C,), jnp.float32)
    mean_b = 0.1 * jax.random.normal(keys[9], (C,), jnp.float32)
    var_b = jnp.abs(jax.random.normal(keys[10], (C,), jnp.float32)) + 0.5

    sa, ba = _fold_bn(gamma_a, beta_a, mean_a, var_a)
    sb, bb = _fold_bn(gamma_b, beta_b, mean_b, var_b)

    out = residual_block_nchw(x, wa_hwio, sa, ba, wb_hwio, sb, bb)
    out = jax.block_until_ready(out)

    ref = jax.block_until_ready(
        _reference_nchw(x, wa_hwio, sa, ba, wb_hwio, sb, bb))

    assert out.shape == (N, C, H, W)
    assert jnp.allclose(out, ref, atol=1e-3, rtol=1e-3), (
        float(jnp.max(jnp.abs(out - ref))))

    print("KERNEL_OK")
</pallas_src>

<mosaic_0001>
module attributes {stable_mosaic.version = 11 : i64} {
  func.func @_residual_block_kernel(%arg0: i32, %arg1: memref<1x16x16x4xf32, #tpu.memory_space<vmem>>, %arg2: memref<9x4x4xf32, #tpu.memory_space<vmem>>, %arg3: memref<1x4xf32, #tpu.memory_space<vmem>>, %arg4: memref<9x4x4xf32, #tpu.memory_space<vmem>>, %arg5: memref<1x4xf32, #tpu.memory_space<vmem>>, %arg6: memref<1x16x16x4xf32, #tpu.memory_space<vmem>>, %arg7: memref<18x18x4xf32, #tpu.memory_space<vmem>>, %arg8: memref<256x4xf32, #tpu.memory_space<vmem>>) attributes {dimension_semantics = [#tpu.dimension_semantics<parallel>], iteration_bounds = array<i64: 2>, scalar_prefetch = 0 : i64, scratch_operands = 2 : i64, tpu.core_type = #tpu.core_type<tc>, window_params = [{transform_indices = @transform_0, window_bounds = array<i64: 1, 16, 16, 4>}, {pipeline_mode = #tpu.pipeline_mode<synchronous>, transform_indices = @transform_1, window_bounds = array<i64: 9, 4, 4>}, {pipeline_mode = #tpu.pipeline_mode<synchronous>, transform_indices = @transform_2, window_bounds = array<i64: 1, 4>}, {pipeline_mode = #tpu.pipeline_mode<synchronous>, transform_indices = @transform_3, window_bounds = array<i64: 9, 4, 4>}, {pipeline_mode = #tpu.pipeline_mode<synchronous>, transform_indices = @transform_4, window_bounds = array<i64: 1, 4>}, {transform_indices = @transform_5, window_bounds = array<i64: 1, 16, 16, 4>}]} {
    %cst = arith.constant 0.000000e+00 : f32
    %0 = vector.broadcast %cst : f32 to vector<1x18x4xf32>
    %cst_0 = arith.constant 0.000000e+00 : f32
    %1 = vector.broadcast %cst_0 : f32 to vector<18x1x4xf32>
    %c0 = arith.constant 0 : index
    %c0_1 = arith.constant 0 : index
    %c0_2 = arith.constant 0 : index
    %2 = vector.load %arg7[%c0, %c0_1, %c0_2] : memref<18x18x4xf32, #tpu.memory_space<vmem>>, vector<1x18x4xf32>
    tpu.vector_store %arg7[%c0, %c0_1, %c0_2], %0 {strides = array<i32>} : memref<18x18x4xf32, #tpu.memory_space<vmem>>, vector<1x18x4xf32>,
    %c17 = arith.constant 17 : index
    %c0_3 = arith.constant 0 : index
    %c0_4 = arith.constant 0 : index
    %3 = vector.load %arg7[%c17, %c0_3, %c0_4] : memref<18x18x4xf32, #tpu.memory_space<vmem>>, vector<1x18x4xf32>
    tpu.vector_store %arg7[%c17, %c0_3, %c0_4], %0 {strides = array<i32>} : memref<18x18x4xf32, #tpu.memory_space<vmem>>, vector<1x18x4xf32>,
    %c0_5 = arith.constant 0 : index
    %c0_6 = arith.constant 0 : index
    %c0_7 = arith.constant 0 : index
    %4 = vector.load %arg7[%c0_5, %c0_6, %c0_7] : memref<18x18x4xf32, #tpu.memory_space<vmem>>, vector<18x1x4xf32>
    tpu.vector_store %arg7[%c0_5, %c0_6, %c0_7], %1 {strides = array<i32>} : memref<18x18x4xf32, #tpu.memory_space<vmem>>, vector<18x1x4xf32>,
    %c0_8 = arith.constant 0 : index
    %c17_9 = arith.constant 17 : index
    %c0_10 = arith.constant 0 : index
    %5 = vector.load %arg7[%c0_8, %c17_9, %c0_10] : memref<18x18x4xf32, #tpu.memory_space<vmem>>, vector<18x1x4xf32>
    tpu.vector_store %arg7[%c0_8, %c17_9, %c0_10], %1 {strides = array<i32>} : memref<18x18x4xf32, #tpu.memory_space<vmem>>, vector<18x1x4xf32>,
    %c0_11 = arith.constant 0 : index
    %c0_12 = arith.constant 0 : index
    %c0_13 = arith.constant 0 : index
    %c0_14 = arith.constant 0 : index
    %6 = vector.load %arg1[%c0_11, %c0_12, %c0_13, %c0_14] : memref<1x16x16x4xf32, #tpu.memory_space<vmem>>, vector<1x16x16x4xf32>
    %7 = vector.shape_cast %6 : vector<1x16x16x4xf32> to vector<16x16x4xf32>
    %c1 = arith.constant 1 : index
    %c1_15 = arith.constant 1 : index
    %c0_16 = arith.constant 0 : index
    %8 = vector.load %arg7[%c1, %c1_15, %c0_16] : memref<18x18x4xf32, #tpu.memory_space<vmem>>, vector<16x16x4xf32>
    tpu.vector_store %arg7[%c1, %c1_15, %c0_16], %7 {strides = array<i32>} : memref<18x18x4xf32, #tpu.memory_space<vmem>>, vector<16x16x4xf32>,
    %cst_17 = arith.constant 0.000000e+00 : f32
    %9 = vector.broadcast %cst_17 : f32 to vector<256x4xf32>
    %c0_18 = arith.constant 0 : index
    %c0_19 = arith.constant 0 : index
    %10 = vector.load %arg8[%c0_18, %c0_19] : memref<256x4xf32, #tpu.memory_space<vmem>>, vector<256x4xf32>
    tpu.vector_store %arg8[%c0_18, %c0_19], %9 {strides = array<i32>} : memref<256x4xf32, #tpu.memory_space<vmem>>, vector<256x4xf32>,
    %c0_20 = arith.constant 0 : index
    %c0_21 = arith.constant 0 : index
    %c0_22 = arith.constant 0 : index
    %11 = vector.load %arg7[%c0_20, %c0_21, %c0_22] : memref<18x18x4xf32, #tpu.memory_space<vmem>>, vector<16x16x4xf32>
    %12 = vector.shape_cast %11 : vector<16x16x4xf32> to vector<256x4xf32>
    %c0_23 = arith.constant 0 : index
    %c0_24 = arith.constant 0 : index
    %13 = vector.load %arg8[%c0_23, %c0_24] : memref<256x4xf32, #tpu.memory_space<vmem>>, vector<256x4xf32>
    %c0_25 = arith.constant 0 : index
    %c0_26 = arith.constant 0 : index
    %c0_27 = arith.constant 0 : index
    %14 = vector.load %arg2[%c0_25, %c0_26, %c0_27] : memref<9x4x4xf32, #tpu.memory_space<vmem>>, vector<1x4x4xf32>
    %15 = vector.shape_cast %14 : vector<1x4x4xf32> to vector<4x4xf32>
    %cst_28 = arith.constant dense<0.000000e+00> : vector<256x4xf32>
    %16 = tpu.matmul %12, %15, %cst_28 {dimension_numbers = #tpu.dot_dimension_numbers<[1], [0], [0], [1], [0, 0, 1, 1], [], []>} : vector<256x4xf32>, vector<4x4xf32>, vector<256x4xf32> -> vector<256x4xf32>
    %17 = arith.addf %13, %16 : vector<256x4xf32>
    %c0_29 = arith.constant 0 : index
    %c0_30 = arith.constant 0 : index
    %18 = vector.load %arg8[%c0_29, %c0_30] : memref<256x4xf32, #tpu.memory_space<vmem>>, vector<256x4xf32>
    tpu.vector_store %arg8[%c0_29, %c0_30], %17 {strides = array<i32>} : memref<256x4xf32, #tpu.memory_space<vmem>>, vector<256x4xf32>,
    %c0_31 = arith.constant 0 : index
    %c1_32 = arith.constant 1 : index
    %c0_33 = arith.constant 0 : index
    %19 = vector.load %arg7[%c0_31, %c1_32, %c0_33] : memref<18x18x4xf32, #tpu.memory_space<vmem>>, vector<16x16x4xf32>
    %20 = vector.shape_cast %19 : vector<16x16x4xf32> to vector<256x4xf32>
    %c0_34 = arith.constant 0 : index
    %c0_35 = arith.constant 0 : index
    %21 = vector.load %arg8[%c0_34, %c0_35] : memref<256x4xf32, #tpu.memory_space<vmem>>, vector<256x4xf32>
    %c1_36 = arith.constant 1 : index
    %c0_37 = arith.constant 0 : index
    %c0_38 = arith.constant 0 : index
    %22 = vector.load %arg2[%c1_36, %c0_37, %c0_38] : memref<9x4x4xf32, #tpu.memory_space<vmem>>, vector<1x4x4xf32>
    %23 = vector.shape_cast %22 : vector<1x4x4xf32> to vector<4x4xf32>
    %cst_39 = arith.constant dense<0.000000e+00> : vector<256x4xf32>
    %24 = tpu.matmul %20, %23, %cst_39 {dimension_numbers = #tpu.dot_dimension_numbers<[1], [0], [0], [1], [0, 0, 1, 1], [], []>} : vector<256x4xf32>, vector<4x4xf32>, vector<256x4xf32> -> vector<256x4xf32>
    %25 = arith.addf %21, %24 : vector<256x4xf32>
    %c0_40 = arith.constant 0 : index
    %c0_41 = arith.constant 0 : index
    %26 = vector.load %arg8[%c0_40, %c0_41] : memref<256x4xf32, #tpu.memory_space<vmem>>, vector<256x4xf32>
    tpu.vector_store %arg8[%c0_40, %c0_41], %25 {strides = array<i32>} : memref<256x4xf32, #tpu.memory_space<vmem>>, vector<256x4xf32>,
    %c0_42 = arith.constant 0 : index
    %c2 = arith.constant 2 : index
    %c0_43 = arith.constant 0 : index
    %27 = vector.load %arg7[%c0_42, %c2, %c0_43] : memref<18x18x4xf32, #tpu.memory_space<vmem>>, vector<16x16x4xf32>
    %28 = vector.shape_cast %27 : vector<16x16x4xf32> to vector<256x4xf32>
    %c0_44 = arith.constant 0 : index
    %c0_45 = arith.constant 0 : index
    %29 = vector.load %arg8[%c0_44, %c0_45] : memref<256x4xf32, #tpu.memory_space<vmem>>, vector<256x4xf32>
    %c2_46 = arith.constant 2 : index
    %c0_47 = arith.constant 0 : index
    %c0_48 = arith.constant 0 : index
    %30 = vector.load %arg2[%c2_46, %c0_47, %c0_48] : memref<9x4x4xf32, #tpu.memory_space<vmem>>, vector<1x4x4xf32>
    %31 = vector.shape_cast %30 : vector<1x4x4xf32> to vector<4x4xf32>
    %cst_49 = arith.constant dense<0.000000e+00> : vector<256x4xf32>
    %32 = tpu.matmul %28, %31, %cst_49 {dimension_numbers = #tpu.dot_dimension_numbers<[1], [0], [0], [1], [0, 0, 1, 1], [], []>} : vector<256x4xf32>, vector<4x4xf32>, vector<256x4xf32> -> vector<256x4xf32>
    %33 = arith.addf %29, %32 : vector<256x4xf32>
    %c0_50 = arith.constant 0 : index
    %c0_51 = arith.constant 0 : index
    %34 = vector.load %arg8[%c0_50, %c0_51] : memref<256x4xf32, #tpu.memory_space<vmem>>, vector<256x4xf32>
    tpu.vector_store %arg8[%c0_50, %c0_51], %33 {strides = array<i32>} : memref<256x4xf32, #tpu.memory_space<vmem>>, vector<256x4xf32>,
    %c1_52 = arith.constant 1 : index
    %c0_53 = arith.constant 0 : index
    %c0_54 = arith.constant 0 : index
    %35 = vector.load %arg7[%c1_52, %c0_53, %c0_54] : memref<18x18x4xf32, #tpu.memory_space<vmem>>, vector<16x16x4xf32>
    %36 = vector.shape_cast %35 : vector<16x16x4xf32> to vector<256x4xf32>
    %c0_55 = arith.constant 0 : index
    %c0_56 = arith.constant 0 : index
    %37 = vector.load %arg8[%c0_55, %c0_56] : memref<256x4xf32, #tpu.memory_space<vmem>>, vector<256x4xf32>
    %c3 = arith.constant 3 : index
    %c0_57 = arith.constant 0 : index
    %c0_58 = arith.constant 0 : index
    %38 = vector.load %arg2[%c3, %c0_57, %c0_58] : memref<9x4x4xf32, #tpu.memory_space<vmem>>, vector<1x4x4xf32>
    %39 = vector.shape_cast %38 : vector<1x4x4xf32> to vector<4x4xf32>
    %cst_59 = arith.constant dense<0.000000e+00> : vector<256x4xf32>
    %40 = tpu.matmul %36, %39, %cst_59 {dimension_numbers = #tpu.dot_dimension_numbers<[1], [0], [0], [1], [0, 0, 1, 1], [], []>} : vector<256x4xf32>, vector<4x4xf32>, vector<256x4xf32> -> vector<256x4xf32>
    %41 = arith.addf %37, %40 : vector<256x4xf32>
    %c0_60 = arith.constant 0 : index
    %c0_61 = arith.constant 0 : index
    %42 = vector.load %arg8[%c0_60, %c0_61] : memref<256x4xf32, #tpu.memory_space<vmem>>, vector<256x4xf32>
    tpu.vector_store %arg8[%c0_60, %c0_61], %41 {strides = array<i32>} : memref<256x4xf32, #tpu.memory_space<vmem>>, vector<256x4xf32>,
    %c1_62 = arith.constant 1 : index
    %c1_63 = arith.constant 1 : index
    %c0_64 = arith.constant 0 : index
    %43 = vector.load %arg7[%c1_62, %c1_63, %c0_64] : memref<18x18x4xf32, #tpu.memory_space<vmem>>, vector<16x16x4xf32>
    %44 = vector.shape_cast %43 : vector<16x16x4xf32> to vector<256x4xf32>
    %c0_65 = arith.constant 0 : index
    %c0_66 = arith.constant 0 : index
    %45 = vector.load %arg8[%c0_65, %c0_66] : memref<256x4xf32, #tpu.memory_space<vmem>>, vector<256x4xf32>
    %c4 = arith.constant 4 : index
    %c0_67 = arith.constant 0 : index
    %c0_68 = arith.constant 0 : index
    %46 = vector.load %arg2[%c4, %c0_67, %c0_68] : memref<9x4x4xf32, #tpu.memory_space<vmem>>, vector<1x4x4xf32>
    %47 = vector.shape_cast %46 : vector<1x4x4xf32> to vector<4x4xf32>
    %cst_69 = arith.constant dense<0.000000e+00> : vector<256x4xf32>
    %48 = tpu.matmul %44, %47, %cst_69 {dimension_numbers = #tpu.dot_dimension_numbers<[1], [0], [0], [1], [0, 0, 1, 1], [], []>} : vector<256x4xf32>, vector<4x4xf32>, vector<256x4xf32> -> vector<256x4xf32>
    %49 = arith.addf %45, %48 : vector<256x4xf32>
    %c0_70 = arith.constant 0 : index
    %c0_71 = arith.constant 0 : index
    %50 = vector.load %arg8[%c0_70, %c0_71] : memref<256x4xf32, #tpu.memory_space<vmem>>, vector<256x4xf32>
    tpu.vector_store %arg8[%c0_70, %c0_71], %49 {strides = array<i32>} : memref<256x4xf32, #tpu.memory_space<vmem>>, vector<256x4xf32>,
    %c1_72 = arith.constant 1 : index
    %c2_73 = arith.constant 2 : index
    %c0_74 = arith.constant 0 : index
    %51 = vector.load %arg7[%c1_72, %c2_73, %c0_74] : memref<18x18x4xf32, #tpu.memory_space<vmem>>, vector<16x16x4xf32>
    %52 = vector.shape_cast %51 : vector<16x16x4xf32> to vector<256x4xf32>
    %c0_75 = arith.constant 0 : index
    %c0_76 = arith.constant 0 : index
    %53 = vector.load %arg8[%c0_75, %c0_76] : memref<256x4xf32, #tpu.memory_space<vmem>>, vector<256x4xf32>
    %c5 = arith.constant 5 : index
    %c0_77 = arith.constant 0 : index
    %c0_78 = arith.constant 0 : index
    %54 = vector.load %arg2[%c5, %c0_77, %c0_78] : memref<9x4x4xf32, #tpu.memory_space<vmem>>, vector<1x4x4xf32>
    %55 = vector.shape_cast %54 : vector<1x4x4xf32> to vector<4x4xf32>
    %cst_79 = arith.constant dense<0.000000e+00> : vector<256x4xf32>
    %56 = tpu.matmul %52, %55, %cst_79 {dimension_numbers = #tpu.dot_dimension_numbers<[1], [0], [0], [1], [0, 0, 1, 1], [], []>} : vector<256x4xf32>, vector<4x4xf32>, vector<256x4xf32> -> vector<256x4xf32>
    %57 = arith.addf %53, %56 : vector<256x4xf32>
    %c0_80 = arith.constant 0 : index
    %c0_81 = arith.constant 0 : index
    %58 = vector.load %arg8[%c0_80, %c0_81] : memref<256x4xf32, #tpu.memory_space<vmem>>, vector<256x4xf32>
    tpu.vector_store %arg8[%c0_80, %c0_81], %57 {strides = array<i32>} : memref<256x4xf32, #tpu.memory_space<vmem>>, vector<256x4xf32>,
    %c2_82 = arith.constant 2 : index
    %c0_83 = arith.constant 0 : index
    %c0_84 = arith.constant 0 : index
    %59 = vector.load %arg7[%c2_82, %c0_83, %c0_84] : memref<18x18x4xf32, #tpu.memory_space<vmem>>, vector<16x16x4xf32>
    %60 = vector.shape_cast %59 : vector<16x16x4xf32> to vector<256x4xf32>
    %c0_85 = arith.constant 0 : index
    %c0_86 = arith.constant 0 : index
    %61 = vector.load %arg8[%c0_85, %c0_86] : memref<256x4xf32, #tpu.memory_space<vmem>>, vector<256x4xf32>
    %c6 = arith.constant 6 : index
    %c0_87 = arith.constant 0 : index
    %c0_88 = arith.constant 0 : index
    %62 = vector.load %arg2[%c6, %c0_87, %c0_88] : memref<9x4x4xf32, #tpu.memory_space<vmem>>, vector<1x4x4xf32>
    %63 = vector.shape_cast %62 : vector<1x4x4xf32> to vector<4x4xf32>
    %cst_89 = arith.constant dense<0.000000e+00> : vector<256x4xf32>
    %64 = tpu.matmul %60, %63, %cst_89 {dimension_numbers = #tpu.dot_dimension_numbers<[1], [0], [0], [1], [0, 0, 1, 1], [], []>} : vector<256x4xf32>, vector<4x4xf32>, vector<256x4xf32> -> vector<256x4xf32>
    %65 = arith.addf %61, %64 : vector<256x4xf32>
    %c0_90 = arith.constant 0 : index
    %c0_91 = arith.constant 0 : index
    %66 = vector.load %arg8[%c0_90, %c0_91] : memref<256x4xf32, #tpu.memory_space<vmem>>, vector<256x4xf32>
    tpu.vector_store %arg8[%c0_90, %c0_91], %65 {strides = array<i32>} : memref<256x4xf32, #tpu.memory_space<vmem>>, vector<256x4xf32>,
    %c2_92 = arith.constant 2 : index
    %c1_93 = arith.constant 1 : index
    %c0_94 = arith.constant 0 : index
    %67 = vector.load %arg7[%c2_92, %c1_93, %c0_94] : memref<18x18x4xf32, #tpu.memory_space<vmem>>, vector<16x16x4xf32>
    %68 = vector.shape_cast %67 : vector<16x16x4xf32> to vector<256x4xf32>
    %c0_95 = arith.constant 0 : index
    %c0_96 = arith.constant 0 : index
    %69 = vector.load %arg8[%c0_95, %c0_96] : memref<256x4xf32, #tpu.memory_space<vmem>>, vector<256x4xf32>
    %c7 = arith.constant 7 : index
    %c0_97 = arith.constant 0 : index
    %c0_98 = arith.constant 0 : index
    %70 = vector.load %arg2[%c7, %c0_97, %c0_98] : memref<9x4x4xf32, #tpu.memory_space<vmem>>, vector<1x4x4xf32>
    %71 = vector.shape_cast %70 : vector<1x4x4xf32> to vector<4x4xf32>
    %cst_99 = arith.constant dense<0.000000e+00> : vector<256x4xf32>
    %72 = tpu.matmul %68, %71, %cst_99 {dimension_numbers = #tpu.dot_dimension_numbers<[1], [0], [0], [1], [0, 0, 1, 1], [], []>} : vector<256x4xf32>, vector<4x4xf32>, vector<256x4xf32> -> vector<256x4xf32>
    %73 = arith.addf %69, %72 : vector<256x4xf32>
    %c0_100 = arith.constant 0 : index
    %c0_101 = arith.constant 0 : index
    %74 = vector.load %arg8[%c0_100, %c0_101] : memref<256x4xf32, #tpu.memory_space<vmem>>, vector<256x4xf32>
    tpu.vector_store %arg8[%c0_100, %c0_101], %73 {strides = array<i32>} : memref<256x4xf32, #tpu.memory_space<vmem>>, vector<256x4xf32>,
    %c2_102 = arith.constant 2 : index
    %c2_103 = arith.constant 2 : index
    %c0_104 = arith.constant 0 : index
    %75 = vector.load %arg7[%c2_102, %c2_103, %c0_104] : memref<18x18x4xf32, #tpu.memory_space<vmem>>, vector<16x16x4xf32>
    %76 = vector.shape_cast %75 : vector<16x16x4xf32> to vector<256x4xf32>
    %c0_105 = arith.constant 0 : index
    %c0_106 = arith.constant 0 : index
    %77 = vector.load %arg8[%c0_105, %c0_106] : memref<256x4xf32, #tpu.memory_space<vmem>>, vector<256x4xf32>
    %c8 = arith.constant 8 : index
    %c0_107 = arith.constant 0 : index
    %c0_108 = arith.constant 0 : index
    %78 = vector.load %arg2[%c8, %c0_107, %c0_108] : memref<9x4x4xf32, #tpu.memory_space<vmem>>, vector<1x4x4xf32>
    %79 = vector.shape_cast %78 : vector<1x4x4xf32> to vector<4x4xf32>
    %cst_109 = arith.constant dense<0.000000e+00> : vector<256x4xf32>
    %80 = tpu.matmul %76, %79, %cst_109 {dimension_numbers = #tpu.dot_dimension_numbers<[1], [0], [0], [1], [0, 0, 1, 1], [], []>} : vector<256x4xf32>, vector<4x4xf32>, vector<256x4xf32> -> vector<256x4xf32>
    %81 = arith.addf %77, %80 : vector<256x4xf32>
    %c0_110 = arith.constant 0 : index
    %c0_111 = arith.constant 0 : index
    %82 = vector.load %arg8[%c0_110, %c0_111] : memref<256x4xf32, #tpu.memory_space<vmem>>, vector<256x4xf32>
    tpu.vector_store %arg8[%c0_110, %c0_111], %81 {strides = array<i32>} : memref<256x4xf32, #tpu.memory_space<vmem>>, vector<256x4xf32>,
    %c0_112 = arith.constant 0 : index
    %c0_113 = arith.constant 0 : index
    %83 = vector.load %arg8[%c0_112, %c0_113] : memref<256x4xf32, #tpu.memory_space<vmem>>, vector<256x4xf32>
    %c0_114 = arith.constant 0 : index
    %c0_115 = arith.constant 0 : index
    %84 = vector.load %arg3[%c0_114, %c0_115] : memref<1x4xf32, #tpu.memory_space<vmem>>, vector<1x4xf32>
    %85 = vector.broadcast %84 : vector<1x4xf32> to vector<256x4xf32>
    %86 = arith.addf %83, %85 : vector<256x4xf32>
    %cst_116 = arith.constant 0.000000e+00 : f32
    %87 = vector.broadcast %cst_116 : f32 to vector<256x4xf32>
    %88 = arith.maximumf %86, %87 : vector<256x4xf32>
    %89 = vector.shape_cast %88 : vector<256x4xf32> to vector<16x16x4xf32>
    %c1_117 = arith.constant 1 : index
    %c1_118 = arith.constant 1 : index
    %c0_119 = arith.constant 0 : index
    %90 = vector.load %arg7[%c1_117, %c1_118, %c0_119] : memref<18x18x4xf32, #tpu.memory_space<vmem>>, vector<16x16x4xf32>
    tpu.vector_store %arg7[%c1_117, %c1_118, %c0_119], %89 {strides = array<i32>} : memref<18x18x4xf32, #tpu.memory_space<vmem>>, vector<16x16x4xf32>,
    %cst_120 = arith.constant 0.000000e+00 : f32
    %91 = vector.broadcast %cst_120 : f32 to vector<256x4xf32>
    %c0_121 = arith.constant 0 : index
    %c0_122 = arith.constant 0 : index
    %92 = vector.load %arg8[%c0_121, %c0_122] : memref<256x4xf32, #tpu.memory_space<vmem>>, vector<256x4xf32>
    tpu.vector_store %arg8[%c0_121, %c0_122], %91 {strides = array<i32>} : memref<256x4xf32, #tpu.memory_space<vmem>>, vector<256x4xf32>,
    %c0_123 = arith.constant 0 : index
    %c0_124 = arith.constant 0 : index
    %c0_125 = arith.constant 0 : index
    %93 = vector.load %arg7[%c0_123, %c0_124, %c0_125] : memref<18x18x4xf32, #tpu.memory_space<vmem>>, vector<16x16x4xf32>
    %94 = vector.shape_cast %93 : vector<16x16x4xf32> to vector<256x4xf32>
    %c0_126 = arith.constant 0 : index
    %c0_127 = arith.constant 0 : index
    %95 = vector.load %arg8[%c0_126, %c0_127] : memref<256x4xf32, #tpu.memory_space<vmem>>, vector<256x4xf32>
    %c0_128 = arith.constant 0 : index
    %c0_129 = arith.constant 0 : index
    %c0_130 = arith.constant 0 : index
    %96 = vector.load %arg4[%c0_128, %c0_129, %c0_130] : memref<9x4x4xf32, #tpu.memory_space<vmem>>, vector<1x4x4xf32>
    %97 = vector.shape_cast %96 : vector<1x4x4xf32> to vector<4x4xf32>
    %cst_131 = arith.constant dense<0.000000e+00> : vector<256x4xf32>
    %98 = tpu.matmul %94, %97, %cst_131 {dimension_numbers = #tpu.dot_dimension_numbers<[1], [0], [0], [1], [0, 0, 1, 1], [], []>} : vector<256x4xf32>, vector<4x4xf32>, vector<256x4xf32> -> vector<256x4xf32>
    %99 = arith.addf %95, %98 : vector<256x4xf32>
    %c0_132 = arith.constant 0 : index
    %c0_133 = arith.constant 0 : index
    %100 = vector.load %arg8[%c0_132, %c0_133] : memref<256x4xf32, #tpu.memory_space<vmem>>, vector<256x4xf32>
    tpu.vector_store %arg8[%c0_132, %c0_133], %99 {strides = array<i32>} : memref<256x4xf32, #tpu.memory_space<vmem>>, vector<256x4xf32>,
    %c0_134 = arith.constant 0 : index
    %c1_135 = arith.constant 1 : index
    %c0_136 = arith.constant 0 : index
    %101 = vector.load %arg7[%c0_134, %c1_135, %c0_136] : memref<18x18x4xf32, #tpu.memory_space<vmem>>, vector<16x16x4xf32>
    %102 = vector.shape_cast %101 : vector<16x16x4xf32> to vector<256x4xf32>
    %c0_137 = arith.constant 0 : index
    %c0_138 = arith.constant 0 : index
    %103 = vector.load %arg8[%c0_137, %c0_138] : memref<256x4xf32, #tpu.memory_space<vmem>>, vector<256x4xf32>
    %c1_139 = arith.constant 1 : index
    %c0_140 = arith.constant 0 : index
    %c0_141 = arith.constant 0 : index
    %104 = vector.load %arg4[%c1_139, %c0_140, %c0_141] : memref<9x4x4xf32, #tpu.memory_space<vmem>>, vector<1x4x4xf32>
    %105 = vector.shape_cast %104 : vector<1x4x4xf32> to vector<4x4xf32>
    %cst_142 = arith.constant dense<0.000000e+00> : vector<256x4xf32>
    %106 = tpu.matmul %102, %105, %cst_142 {dimension_numbers = #tpu.dot_dimension_numbers<[1], [0], [0], [1], [0, 0, 1, 1], [], []>} : vector<256x4xf32>, vector<4x4xf32>, vector<256x4xf32> -> vector<256x4xf32>
    %107 = arith.addf %103, %106 : vector<256x4xf32>
    %c0_143 = arith.constant 0 : index
    %c0_144 = arith.constant 0 : index
    %108 = vector.load %arg8[%c0_143, %c0_144] : memref<256x4xf32, #tpu.memory_space<vmem>>, vector<256x4xf32>
    tpu.vector_store %arg8[%c0_143, %c0_144], %107 {strides = array<i32>} : memref<256x4xf32, #tpu.memory_space<vmem>>, vector<256x4xf32>,
    %c0_145 = arith.constant 0 : index
    %c2_146 = arith.constant 2 : index
    %c0_147 = arith.constant 0 : index
    %109 = vector.load %arg7[%c0_145, %c2_146, %c0_147] : memref<18x18x4xf32, #tpu.memory_space<vmem>>, vector<16x16x4xf32>
    %110 = vector.shape_cast %109 : vector<16x16x4xf32> to vector<256x4xf32>
    %c0_148 = arith.constant 0 : index
    %c0_149 = arith.constant 0 : index
    %111 = vector.load %arg8[%c0_148, %c0_149] : memref<256x4xf32, #tpu.memory_space<vmem>>, vector<256x4xf32>
    %c2_150 = arith.constant 2 : index
    %c0_151 = arith.constant 0 : index
    %c0_152 = arith.constant 0 : index
    %112 = vector.load %arg4[%c2_150, %c0_151, %c0_152] : memref<9x4x4xf32, #tpu.memory_space<vmem>>, vector<1x4x4xf32>
    %113 = vector.shape_cast %112 : vector<1x4x4xf32> to vector<4x4xf32>
    %cst_153 = arith.constant dense<0.000000e+00> : vector<256x4xf32>
    %114 = tpu.matmul %110, %113, %cst_153 {dimension_numbers = #tpu.dot_dimension_numbers<[1], [0], [0], [1], [0, 0, 1, 1], [], []>} : vector<256x4xf32>, vector<4x4xf32>, vector<256x4xf32> -> vector<256x4xf32>
    %115 = arith.addf %111, %114 : vector<256x4xf32>
    %c0_154 = arith.constant 0 : index
    %c0_155 = arith.constant 0 : index
    %116 = vector.load %arg8[%c0_154, %c0_155] : memref<256x4xf32, #tpu.memory_space<vmem>>, vector<256x4xf32>
    tpu.vector_store %arg8[%c0_154, %c0_155], %115 {strides = array<i32>} : memref<256x4xf32, #tpu.memory_space<vmem>>, vector<256x4xf32>,
    %c1_156 = arith.constant 1 : index
    %c0_157 = arith.constant 0 : index
    %c0_158 = arith.constant 0 : index
    %117 = vector.load %arg7[%c1_156, %c0_157, %c0_158] : memref<18x18x4xf32, #tpu.memory_space<vmem>>, vector<16x16x4xf32>
    %118 = vector.shape_cast %117 : vector<16x16x4xf32> to vector<256x4xf32>
    %c0_159 = arith.constant 0 : index
    %c0_160 = arith.constant 0 : index
    %119 = vector.load %arg8[%c0_159, %c0_160] : memref<256x4xf32, #tpu.memory_space<vmem>>, vector<256x4xf32>
    %c3_161 = arith.constant 3 : index
    %c0_162 = arith.constant 0 : index
    %c0_163 = arith.constant 0 : index
    %120 = vector.load %arg4[%c3_161, %c0_162, %c0_163] : memref<9x4x4xf32, #tpu.memory_space<vmem>>, vector<1x4x4xf32>
    %121 = vector.shape_cast %120 : vector<1x4x4xf32> to vector<4x4xf32>
    %cst_164 = arith.constant dense<0.000000e+00> : vector<256x4xf32>
    %122 = tpu.matmul %118, %121, %cst_164 {dimension_numbers = #tpu.dot_dimension_numbers<[1], [0], [0], [1], [0, 0, 1, 1], [], []>} : vector<256x4xf32>, vector<4x4xf32>, vector<256x4xf32> -> vector<256x4xf32>
    %123 = arith.addf %119, %122 : vector<256x4xf32>
    %c0_165 = arith.constant 0 : index
    %c0_166 = arith.constant 0 : index
    %124 = vector.load %arg8[%c0_165, %c0_166] : memref<256x4xf32, #tpu.memory_space<vmem>>, vector<256x4xf32>
    tpu.vector_store %arg8[%c0_165, %c0_166], %123 {strides = array<i32>} : memref<256x4xf32, #tpu.memory_space<vmem>>, vector<256x4xf32>,
    %c1_167 = arith.constant 1 : index
    %c1_168 = arith.constant 1 : index
    %c0_169 = arith.constant 0 : index
    %125 = vector.load %arg7[%c1_167, %c1_168, %c0_169] : memref<18x18x4xf32, #tpu.memory_space<vmem>>, vector<16x16x4xf32>
    %126 = vector.shape_cast %125 : vector<16x16x4xf32> to vector<256x4xf32>
    %c0_170 = arith.constant 0 : index
    %c0_171 = arith.constant 0 : index
    %127 = vector.load %arg8[%c0_170, %c0_171] : memref<256x4xf32, #tpu.memory_space<vmem>>, vector<256x4xf32>
    %c4_172 = arith.constant 4 : index
    %c0_173 = arith.constant 0 : index
    %c0_174 = arith.constant 0 : index
    %128 = vector.load %arg4[%c4_172, %c0_173, %c0_174] : memref<9x4x4xf32, #tpu.memory_space<vmem>>, vector<1x4x4xf32>
    %129 = vector.shape_cast %128 : vector<1x4x4xf32> to vector<4x4xf32>
    %cst_175 = arith.constant dense<0.000000e+00> : vector<256x4xf32>
    %130 = tpu.matmul %126, %129, %cst_175 {dimension_numbers = #tpu.dot_dimension_numbers<[1], [0], [0], [1], [0, 0, 1, 1], [], []>} : vector<256x4xf32>, vector<4x4xf32>, vector<256x4xf32> -> vector<256x4xf32>
    %131 = arith.addf %127, %130 : vector<256x4xf32>
    %c0_176 = arith.constant 0 : index
    %c0_177 = arith.constant 0 : index
    %132 = vector.load %arg8[%c0_176, %c0_177] : memref<256x4xf32, #tpu.memory_space<vmem>>, vector<256x4xf32>
    tpu.vector_store %arg8[%c0_176, %c0_177], %131 {strides = array<i32>} : memref<256x4xf32, #tpu.memory_space<vmem>>, vector<256x4xf32>,
    %c1_178 = arith.constant 1 : index
    %c2_179 = arith.constant 2 : index
    %c0_180 = arith.constant 0 : index
    %133 = vector.load %arg7[%c1_178, %c2_179, %c0_180] : memref<18x18x4xf32, #tpu.memory_space<vmem>>, vector<16x16x4xf32>
    %134 = vector.shape_cast %133 : vector<16x16x4xf32> to vector<256x4xf32>
    %c0_181 = arith.constant 0 : index
    %c0_182 = arith.constant 0 : index
    %135 = vector.load %arg8[%c0_181, %c0_182] : memref<256x4xf32, #tpu.memory_space<vmem>>, vector<256x4xf32>
    %c5_183 = arith.constant 5 : index
    %c0_184 = arith.constant 0 : index
    %c0_185 = arith.constant 0 : index
    %136 = vector.load %arg4[%c5_183, %c0_184, %c0_185] : memref<9x4x4xf32, #tpu.memory_space<vmem>>, vector<1x4x4xf32>
    %137 = vector.shape_cast %136 : vector<1x4x4xf32> to vector<4x4xf32>
    %cst_186 = arith.constant dense<0.000000e+00> : vector<256x4xf32>
    %138 = tpu.matmul %134, %137, %cst_186 {dimension_numbers = #tpu.dot_dimension_numbers<[1], [0], [0], [1], [0, 0, 1, 1], [], []>} : vector<256x4xf32>, vector<4x4xf32>, vector<256x4xf32> -> vector<256x4xf32>
    %139 = arith.addf %135, %138 : vector<256x4xf32>
    %c0_187 = arith.constant 0 : index
    %c0_188 = arith.constant 0 : index
    %140 = vector.load %arg8[%c0_187, %c0_188] : memref<256x4xf32, #tpu.memory_space<vmem>>, vector<256x4xf32>
    tpu.vector_store %arg8[%c0_187, %c0_188], %139 {strides = array<i32>} : memref<256x4xf32, #tpu.memory_space<vmem>>, vector<256x4xf32>,
    %c2_189 = arith.constant 2 : index
    %c0_190 = arith.constant 0 : index
    %c0_191 = arith.constant 0 : index
    %141 = vector.load %arg7[%c2_189, %c0_190, %c0_191] : memref<18x18x4xf32, #tpu.memory_space<vmem>>, vector<16x16x4xf32>
    %142 = vector.shape_cast %141 : vector<16x16x4xf32> to vector<256x4xf32>
    %c0_192 = arith.constant 0 : index
    %c0_193 = arith.constant 0 : index
    %143 = vector.load %arg8[%c0_192, %c0_193] : memref<256x4xf32, #tpu.memory_space<vmem>>, vector<256x4xf32>
    %c6_194 = arith.constant 6 : index
    %c0_195 = arith.constant 0 : index
    %c0_196 = arith.constant 0 : index
    %144 = vector.load %arg4[%c6_194, %c0_195, %c0_196] : memref<9x4x4xf32, #tpu.memory_space<vmem>>, vector<1x4x4xf32>
    %145 = vector.shape_cast %144 : vector<1x4x4xf32> to vector<4x4xf32>
    %cst_197 = arith.constant dense<0.000000e+00> : vector<256x4xf32>
    %146 = tpu.matmul %142, %145, %cst_197 {dimension_numbers = #tpu.dot_dimension_numbers<[1], [0], [0], [1], [0, 0, 1, 1], [], []>} : vector<256x4xf32>, vector<4x4xf32>, vector<256x4xf32> -> vector<256x4xf32>
    %147 = arith.addf %143, %146 : vector<256x4xf32>
    %c0_198 = arith.constant 0 : index
    %c0_199 = arith.constant 0 : index
    %148 = vector.load %arg8[%c0_198, %c0_199] : memref<256x4xf32, #tpu.memory_space<vmem>>, vector<256x4xf32>
    tpu.vector_store %arg8[%c0_198, %c0_199], %147 {strides = array<i32>} : memref<256x4xf32, #tpu.memory_space<vmem>>, vector<256x4xf32>,
    %c2_200 = arith.constant 2 : index
    %c1_201 = arith.constant 1 : index
    %c0_202 = arith.constant 0 : index
    %149 = vector.load %arg7[%c2_200, %c1_201, %c0_202] : memref<18x18x4xf32, #tpu.memory_space<vmem>>, vector<16x16x4xf32>
    %150 = vector.shape_cast %149 : vector<16x16x4xf32> to vector<256x4xf32>
    %c0_203 = arith.constant 0 : index
    %c0_204 = arith.constant 0 : index
    %151 = vector.load %arg8[%c0_203, %c0_204] : memref<256x4xf32, #tpu.memory_space<vmem>>, vector<256x4xf32>
    %c7_205 = arith.constant 7 : index
    %c0_206 = arith.constant 0 : index
    %c0_207 = arith.constant 0 : index
    %152 = vector.load %arg4[%c7_205, %c0_206, %c0_207] : memref<9x4x4xf32, #tpu.memory_space<vmem>>, vector<1x4x4xf32>
    %153 = vector.shape_cast %152 : vector<1x4x4xf32> to vector<4x4xf32>
    %cst_208 = arith.constant dense<0.000000e+00> : vector<256x4xf32>
    %154 = tpu.matmul %150, %153, %cst_208 {dimension_numbers = #tpu.dot_dimension_numbers<[1], [0], [0], [1], [0, 0, 1, 1], [], []>} : vector<256x4xf32>, vector<4x4xf32>, vector<256x4xf32> -> vector<256x4xf32>
    %155 = arith.addf %151, %154 : vector<256x4xf32>
    %c0_209 = arith.constant 0 : index
    %c0_210 = arith.constant 0 : index
    %156 = vector.load %arg8[%c0_209, %c0_210] : memref<256x4xf32, #tpu.memory_space<vmem>>, vector<256x4xf32>
    tpu.vector_store %arg8[%c0_209, %c0_210], %155 {strides = array<i32>} : memref<256x4xf32, #tpu.memory_space<vmem>>, vector<256x4xf32>,
    %c2_211 = arith.constant 2 : index
    %c2_212 = arith.constant 2 : index
    %c0_213 = arith.constant 0 : index
    %157 = vector.load %arg7[%c2_211, %c2_212, %c0_213] : memref<18x18x4xf32, #tpu.memory_space<vmem>>, vector<16x16x4xf32>
    %158 = vector.shape_cast %157 : vector<16x16x4xf32> to vector<256x4xf32>
    %c0_214 = arith.constant 0 : index
    %c0_215 = arith.constant 0 : index
    %159 = vector.load %arg8[%c0_214, %c0_215] : memref<256x4xf32, #tpu.memory_space<vmem>>, vector<256x4xf32>
    %c8_216 = arith.constant 8 : index
    %c0_217 = arith.constant 0 : index
    %c0_218 = arith.constant 0 : index
    %160 = vector.load %arg4[%c8_216, %c0_217, %c0_218] : memref<9x4x4xf32, #tpu.memory_space<vmem>>, vector<1x4x4xf32>
    %161 = vector.shape_cast %160 : vector<1x4x4xf32> to vector<4x4xf32>
    %cst_219 = arith.constant dense<0.000000e+00> : vector<256x4xf32>
    %162 = tpu.matmul %158, %161, %cst_219 {dimension_numbers = #tpu.dot_dimension_numbers<[1], [0], [0], [1], [0, 0, 1, 1], [], []>} : vector<256x4xf32>, vector<4x4xf32>, vector<256x4xf32> -> vector<256x4xf32>
    %163 = arith.addf %159, %162 : vector<256x4xf32>
    %c0_220 = arith.constant 0 : index
    %c0_221 = arith.constant 0 : index
    %164 = vector.load %arg8[%c0_220, %c0_221] : memref<256x4xf32, #tpu.memory_space<vmem>>, vector<256x4xf32>
    tpu.vector_store %arg8[%c0_220, %c0_221], %163 {strides = array<i32>} : memref<256x4xf32, #tpu.memory_space<vmem>>, vector<256x4xf32>,
    %c0_222 = arith.constant 0 : index
    %c0_223 = arith.constant 0 : index
    %165 = vector.load %arg8[%c0_222, %c0_223] : memref<256x4xf32, #tpu.memory_space<vmem>>, vector<256x4xf32>
    %c0_224 = arith.constant 0 : index
    %c0_225 = arith.constant 0 : index
    %166 = vector.load %arg5[%c0_224, %c0_225] : memref<1x4xf32, #tpu.memory_space<vmem>>, vector<1x4xf32>
    %167 = vector.broadcast %166 : vector<1x4xf32> to vector<256x4xf32>
    %168 = arith.addf %165, %167 : vector<256x4xf32>
    %c0_226 = arith.constant 0 : index
    %c0_227 = arith.constant 0 : index
    %c0_228 = arith.constant 0 : index
    %c0_229 = arith.constant 0 : index
    %169 = vector.load %arg1[%c0_226, %c0_227, %c0_228, %c0_229] : memref<1x16x16x4xf32, #tpu.memory_space<vmem>>, vector<1x16x16x4xf32>
    %170 = vector.shape_cast %169 : vector<1x16x16x4xf32> to vector<16x16x4xf32>
    %171 = vector.shape_cast %168 : vector<256x4xf32> to vector<16x16x4xf32>
    %172 = arith.addf %170, %171 : vector<16x16x4xf32>
    %c0_230 = arith.constant 0 : index
    %c0_231 = arith.constant 0 : index
    %c0_232 = arith.constant 0 : index
    %c0_233 = arith.constant 0 : index
    %173 = vector.load %arg6[%c0_230, %c0_231, %c0_232, %c0_233] : memref<1x16x16x4xf32, #tpu.memory_space<vmem>>, vector<1x16x16x4xf32>
    %174 = vector.shape_cast %173 : vector<1x16x16x4xf32> to vector<16x16x4xf32>
    %175 = vector.shape_cast %172 : vector<16x16x4xf32> to vector<1x16x16x4xf32>
    tpu.vector_store %arg6[%c0_230, %c0_231, %c0_232, %c0_233], %175 {strides = array<i32>} : memref<1x16x16x4xf32, #tpu.memory_space<vmem>>, vector<1x16x16x4xf32>,
    return
  }
  func.func @transform_0(%arg0: i32) -> (i32, i32, i32, i32) {
    %c0_i32 = arith.constant 0 : i32
    %c0_i32_0 = arith.constant 0 : i32
    %c0_i32_1 = arith.constant 0 : i32
    %c0_i32_2 = arith.constant 0 : i32
    return %arg0, %c0_i32, %c0_i32_0, %c0_i32_1 : i32, i32, i32, i32
  }
  func.func @transform_1(%arg0: i32) -> (i32, i32, i32) {
    %c0_i32 = arith.constant 0 : i32
    %c0_i32_0 = arith.constant 0 : i32
    %c0_i32_1 = arith.constant 0 : i32
    %c0_i32_2 = arith.constant 0 : i32
    return %c0_i32, %c0_i32_0, %c0_i32_1 : i32, i32, i32
  }
  func.func @transform_2(%arg0: i32) -> (i32, i32) {
    %c0_i32 = arith.constant 0 : i32
    %c0_i32_0 = arith.constant 0 : i32
    %c0_i32_1 = arith.constant 0 : i32
    return %c0_i32, %c0_i32_0 : i32, i32
  }
  func.func @transform_3(%arg0: i32) -> (i32, i32, i32) {
    %c0_i32 = arith.constant 0 : i32
    %c0_i32_0 = arith.constant 0 : i32
    %c0_i32_1 = arith.constant 0 : i32
    %c0_i32_2 = arith.constant 0 : i32
    return %c0_i32, %c0_i32_0, %c0_i32_1 : i32, i32, i32
  }
  func.func @transform_4(%arg0: i32) -> (i32, i32) {
    %c0_i32 = arith.constant 0 : i32
    %c0_i32_0 = arith.constant 0 : i32
    %c0_i32_1 = arith.constant 0 : i32
    return %c0_i32, %c0_i32_0 : i32, i32
  }
  func.func @transform_5(%arg0: i32) -> (i32, i32, i32, i32) {
    %c0_i32 = arith.constant 0 : i32
    %c0_i32_0 = arith.constant 0 : i32
    %c0_i32_1 = arith.constant 0 : i32
    %c0_i32_2 = arith.constant 0 : i32
    return %arg0, %c0_i32, %c0_i32_0, %c0_i32_1 : i32, i32, i32, i32
  }
}

</mosaic_0001>

<llo_original>
// kernel: residual_block_nhwc.1
$region0: #{residual_block_nhwc.1}
  #allocation0 [shape = 'u32[]', space=smem, size = 0x4, offset = 0x4, fixed_abs, tag = 'smem constant byte address 0x4 - core index']
  #allocation1 [shape = 'u32[144,128]{1,0:T(1,128)}', space=vmem, size = 0x12000, scoped, tag = 'internal scratch']
  #allocation2 [shape = 'f32[18,18,4]{2,1,0:T(8,128)}', space=vmem, size = 0x36000, scoped, tag = 'scratch operand']
  #allocation3 [shape = 'f32[256,4]{1,0:T(8,128)}', space=vmem, size = 0x20000, scoped, tag = 'scratch operand']
  %s0 = inlined_call_operand.hbm [shape: f32[2,16,16,4], index: 0, kind: input, shape index: {}]
  %s1 = inlined_call_operand.hbm [shape: f32[9,4,4], index: 1, kind: input, shape index: {}]
  %s2 = inlined_call_operand.hbm [shape: f32[1,4], index: 2, kind: input, shape index: {}]
  %s3 = inlined_call_operand.hbm [shape: f32[9,4,4], index: 3, kind: input, shape index: {}]
  %s4 = inlined_call_operand.hbm [shape: f32[1,4], index: 4, kind: input, shape index: {}]
  %s5 = inlined_call_operand.hbm [shape: f32[2,16,16,4], index: 5, kind: output, shape index: {}]
  %s6 = sld [smem:[#allocation0]]
  $region73: #{residual_block_nhwc.1} parent=0
    _
  %s8 = ssub.s32 1, %s6
  %s9 = scalar_select 0, %s8, %s6
  $region1: #{residual_block_nhwc.1} parent=0
    #allocation4 [shape = 'u8[262144]{0}', space=vmem, size = 0x40000, scoped, tag = 'input window, operand 0']
    #allocation5 [shape = 's32[2]{0}', space=sflag, size = 0x8, scoped, tag = 'scoped memory for residual_block_nhwc.1']
    #allocation6 [shape = 's32[2]{0}', space=sflag, size = 0x8, scoped, tag = 'scoped memory for residual_block_nhwc.1']
    #allocation7 [shape = 'u8[18432]{0}', space=vmem, size = 0x4800, scoped, tag = 'input window, operand 1, single buffered']
    #allocation8 [shape = 's32[1]{0}', space=sflag, size = 0x4, scoped, tag = 'scoped memory for residual_block_nhwc.1']
    #allocation9 [shape = 'u8[512]{0}', space=vmem, size = 0x400, scoped, tag = 'input window, operand 2, single buffered']
    #allocation10 [shape = 'u8[18432]{0}', space=vmem, size = 0x4800, scoped, tag = 'input window, operand 3, single buffered']
    #allocation11 [shape = 's32[1]{0}', space=sflag, size = 0x4, scoped, tag = 'scoped memory for residual_block_nhwc.1']
    #allocation12 [shape = 'u8[512]{0}', space=vmem, size = 0x400, scoped, tag = 'input window, operand 4, single buffered']
    #allocation13 [shape = 'u8[262144]{0}', space=vmem, size = 0x40000, scoped, tag = 'output window, operand 0']
    %10 = vsyncpa [#allocation5], 0
    %s11 = scalar_lea.sflag [#allocation5], 1
    %12 = vsyncpa %s11, 0
    %13 = vsyncpa [#allocation8], 0
    %14 = vsyncpa [#allocation11], 0
    %15 = vsyncpa [#allocation6], 0
    %s16 = scalar_lea.sflag [#allocation6], 1
    %17 = vsyncpa %s16, 0
    loop: start=0, step=1, limit=4
    $region2: #{residual_block_nhwc.1} parent=1 // loop_pre_header
      _
    $region3: #{residual_block_nhwc.1} parent=1 // loop_header
      %s19 = sphi 0, %s23
      %p20 = scmp.ge.s32.totalorder %s19, 4
      %s29 = sphi 0, %s31
      %s32 = sphi 0, %s29
      %s33 = sphi 0, %s32
      %s49 = sphi 0, %s33
      %s53 = sphi 0, %s53
      %s55 = sphi 0, %s53
      %s56 = sphi 0, %s55
      %s70 = sphi 0, %s56
      %s74 = sphi 0, %s74
      %s76 = sphi 0, %s74
      %s77 = sphi 0, %s76
      %s91 = sphi 0, %s77
      %s95 = sphi 0, %s95
      %s97 = sphi 0, %s95
      %s98 = sphi 0, %s97
      %s112 = sphi 0, %s98
      %s116 = sphi 0, %s116
      %s118 = sphi 0, %s116
      %s119 = sphi 0, %s118
      %s133 = sphi 0, %s119
      %s139 = sphi 0, %s141
      %s142 = sphi 0, %s139
      %s143 = sphi 0, %s142
      %s159 = sphi 0, %s143
    $region4: #{residual_block_nhwc.1} parent=1 // loop_header_branch
      %22 = sbr.rel (%p20) target = $region8
    $region5: #{residual_block_nhwc.1} parent=1 // loop_body
      %s24 = ssub.s32 %s19, 1
      %s25 = ssub.s32 %s19, 2
      %s26 = sadd.s32 %s19, 1
      %s27 = ssub.s32 %s19, %s26
      %p28 = scmp.eq.s32.totalorder %s27, 0
      %s30 = sadd.s32 %s29, 1
      %s31 = scalar_select %p28, %s29, %s30
      %p34 = pneg %p28
      %p35 = scmp.eq.s32.totalorder %s19, 1
      %p36 = por %p34, %p35
      %p37 = scmp.ne.s32.totalorder %s29, %s32
      %p38 = scmp.eq.s32.totalorder %s19, 0
      %p39 = por %p37, %p38
      %p40 = scmp.ne.s32.totalorder %s29, %s32
      %p41 = scmp.eq.s32.totalorder %s24, 1
      %p42 = por %p40, %p41
      %p43 = scmp.ne.s32.totalorder %s32, %s33
      %p44 = scmp.eq.s32.totalorder %s24, 0
      %p45 = por %p43, %p44
      %p46 = scmp.ne.s32.totalorder %s32, %s33
      %p47 = scmp.eq.s32.totalorder %s25, 1
      %p48 = por %p46, %p47
      %p50 = scmp.ne.s32.totalorder %s33, %s49
      %p51 = scmp.eq.s32.totalorder %s25, 0
      %p52 = por %p50, %p51
      %s54 = sadd.s32 %s53, 1
      %p57 = scmp.eq.s32.totalorder %s19, 1
      %p58 = scmp.ne.s32.totalorder %s53, %s55
      %p59 = scmp.eq.s32.totalorder %s19, 0
      %p60 = por %p58, %p59
      %p61 = scmp.ne.s32.totalorder %s53, %s55
      %p62 = scmp.eq.s32.totalorder %s24, 1
      %p63 = por %p61, %p62
      %p64 = scmp.ne.s32.totalorder %s55, %s56
      %p65 = scmp.eq.s32.totalorder %s24, 0
      %p66 = por %p64, %p65
      %p67 = scmp.ne.s32.totalorder %s55, %s56
      %p68 = scmp.eq.s32.totalorder %s25, 1
      %p69 = por %p67, %p68
      %p71 = scmp.ne.s32.totalorder %s56, %s70
      %p72 = scmp.eq.s32.totalorder %s25, 0
      %p73 = por %p71, %p72
      %s75 = sadd.s32 %s74, 1
      %p78 = scmp.eq.s32.totalorder %s19, 1
      %p79 = scmp.ne.s32.totalorder %s74, %s76
      %p80 = scmp.eq.s32.totalorder %s19, 0
      %p81 = por %p79, %p80
      %p82 = scmp.ne.s32.totalorder %s74, %s76
      %p83 = scmp.eq.s32.totalorder %s24, 1
      %p84 = por %p82, %p83
      %p85 = scmp.ne.s32.totalorder %s76, %s77
      %p86 = scmp.eq.s32.totalorder %s24, 0
      %p87 = por %p85, %p86
      %p88 = scmp.ne.s32.totalorder %s76, %s77
      %p89 = scmp.eq.s32.totalorder %s25, 1
      %p90 = por %p88, %p89
      %p92 = scmp.ne.s32.totalorder %s77, %s91
      %p93 = scmp.eq.s32.totalorder %s25, 0
      %p94 = por %p92, %p93
      %s96 = sadd.s32 %s95, 1
      %p99 = scmp.eq.s32.totalorder %s19, 1
      %p100 = scmp.ne.s32.totalorder %s95, %s97
      %p101 = scmp.eq.s32.totalorder %s19, 0
      %p102 = por %p100, %p101
      %p103 = scmp.ne.s32.totalorder %s95, %s97
      %p104 = scmp.eq.s32.totalorder %s24, 1
      %p105 = por %p103, %p104
      %p106 = scmp.ne.s32.totalorder %s97, %s98
      %p107 = scmp.eq.s32.totalorder %s24, 0
      %p108 = por %p106, %p107
      %p109 = scmp.ne.s32.totalorder %s97, %s98
      %p110 = scmp.eq.s32.totalorder %s25, 1
      %p111 = por %p109, %p110
      %p113 = scmp.ne.s32.totalorder %s98, %s112
      %p114 = scmp.eq.s32.totalorder %s25, 0
      %p115 = por %p113, %p114
      %s117 = sadd.s32 %s116, 1
      %p120 = scmp.eq.s32.totalorder %s19, 1
      %p121 = scmp.ne.s32.totalorder %s116, %s118
      %p122 = scmp.eq.s32.totalorder %s19, 0
      %p123 = por %p121, %p122
      %p124 = scmp.ne.s32.totalorder %s116, %s118
      %p125 = scmp.eq.s32.totalorder %s24, 1
      %p126 = por %p124, %p125
      %p127 = scmp.ne.s32.totalorder %s118, %s119
      %p128 = scmp.eq.s32.totalorder %s24, 0
      %p129 = por %p127, %p128
      %p130 = scmp.ne.s32.totalorder %s118, %s119
      %p131 = scmp.eq.s32.totalorder %s25, 1
      %p132 = por %p130, %p131
      %p134 = scmp.ne.s32.totalorder %s119, %s133
      %p135 = scmp.eq.s32.totalorder %s25, 0
      %p136 = por %p134, %p135
      %s137 = ssub.s32 %s19, %s26
      %p138 = scmp.eq.s32.totalorder %s137, 0
      %s140 = sadd.s32 %s139, 1
      %s141 = scalar_select %p138, %s139, %s140
      %p144 = pneg %p138
      %p145 = scmp.eq.s32.totalorder %s19, 1
      %p146 = por %p144, %p145
      %p147 = scmp.ne.s32.totalorder %s139, %s142
      %p148 = scmp.eq.s32.totalorder %s19, 0
      %p149 = por %p147, %p148
      %p150 = scmp.ne.s32.totalorder %s139, %s142
      %p151 = scmp.eq.s32.totalorder %s24, 1
      %p152 = por %p150, %p151
      %p153 = scmp.ne.s32.totalorder %s142, %s143
      %p154 = scmp.eq.s32.totalorder %s24, 0
      %p155 = por %p153, %p154
      %p156 = scmp.ne.s32.totalorder %s142, %s143
      %p157 = scmp.eq.s32.totalorder %s25, 1
      %p158 = por %p156, %p157
      %p160 = scmp.ne.s32.totalorder %s143, %s159
      %p161 = scmp.eq.s32.totalorder %s25, 0
      %p162 = por %p160, %p161
      %p163 = scmp.le.s32.totalorder 1, %s19
      %p164 = scmp.lt.s32.totalorder %s19, 3
      %p165 = pnand %p163, %p164
      %p166 = pneg %p165
      // Predicated region
      $region9: #{residual_block_nhwc.1} parent=5 // pred_check
        _
      $region10: #{residual_block_nhwc.1} parent=5 // pred_check_branch
        %168 = sbr.rel (%p165) target = $region12
      $region11: #{residual_block_nhwc.1} parent=5 // pred_region
        %s169 = ssub.s32 %s19, 1
        // Predicated region
        $region13: #{residual_block_nhwc.1} parent=11 // pred_check
          %p170 = pneg %p66
        $region14: #{residual_block_nhwc.1} parent=11 // pred_check_branch
          %172 = sbr.rel (%p170) target = $region16
        $region15: #{residual_block_nhwc.1} parent=11 // pred_region
          %s174 = ssub.s32 576, 576
          %175 = vsyncadd [#allocation8], %s174
          %s176 = sshll.u32 [#allocation7], 4
          %s177 = int_to_ptr.vmem [resolvable:$true] %s176
          %182 = dma.hbm_to_vmem [thread:$0]  %s1, 576, %s177, [#allocation8], 64, 64, 4
        $region16: #{residual_block_nhwc.1} parent=11 // pred_fallthru
          _
        // Predicated region
        $region17: #{residual_block_nhwc.1} parent=11 // pred_check
          %p183 = pneg %p87
        $region18: #{residual_block_nhwc.1} parent=11 // pred_check_branch
          %185 = sbr.rel (%p183) target = $region20
        $region19: #{residual_block_nhwc.1} parent=11 // pred_region
          %s187 = ssub.s32 16, 16
          %188 = vsyncadd [#allocation8], %s187
          %s190 = sshll.u32 [#allocation9], 4
          %s191 = int_to_ptr.vmem [resolvable:$true] %s190
          %193 = dma.hbm_to_vmem [thread:$0]  %s2, 16, %s191, [#allocation8]
        $region20: #{residual_block_nhwc.1} parent=11 // pred_fallthru
          _
        // Predicated region
        $region21: #{residual_block_nhwc.1} parent=11 // pred_check
          %p194 = pneg %p108
        $region22: #{residual_block_nhwc.1} parent=11 // pred_check_branch
          %196 = sbr.rel (%p194) target = $region24
        $region23: #{residual_block_nhwc.1} parent=11 // pred_region
          %s198 = ssub.s32 576, 576
          %199 = vsyncadd [#allocation11], %s198
          %s200 = sshll.u32 [#allocation10], 4
          %s201 = int_to_ptr.vmem [resolvable:$true] %s200
          %206 = dma.hbm_to_vmem [thread:$0]  %s3, 576, %s201, [#allocation11], 64, 64, 4
        $region24: #{residual_block_nhwc.1} parent=11 // pred_fallthru
          _
        // Predicated region
        $region25: #{residual_block_nhwc.1} parent=11 // pred_check
          %p207 = pneg %p129
        $region26: #{residual_block_nhwc.1} parent=11 // pred_check_branch
          %209 = sbr.rel (%p207) target = $region28
        $region27: #{residual_block_nhwc.1} parent=11 // pred_region
          %s211 = ssub.s32 16, 16
          %212 = vsyncadd [#allocation11], %s211
          %s214 = sshll.u32 [#allocation12], 4
          %s215 = int_to_ptr.vmem [resolvable:$true] %s214
          %217 = dma.hbm_to_vmem [thread:$0]  %s4, 16, %s215, [#allocation11]
        $region28: #{residual_block_nhwc.1} parent=11 // pred_fallthru
          _
      $region12: #{residual_block_nhwc.1} parent=5 // pred_fallthru
        _
      %p218 = scmp.lt.s32.totalorder %s19, 2
      // Predicated region
      $region29: #{residual_block_nhwc.1} parent=5 // pred_check
        %p219 = pneg %p218
      $region30: #{residual_block_nhwc.1} parent=5 // pred_check_branch
        %221 = sbr.rel (%p219) target = $region32
      $region31: #{residual_block_nhwc.1} parent=5 // pred_region
        // Predicated region
        $region33: #{residual_block_nhwc.1} parent=31 // pred_check
          %p222 = pneg %p39
        $region34: #{residual_block_nhwc.1} parent=31 // pred_check_branch
          %224 = sbr.rel (%p222) target = $region36
        $region35: #{residual_block_nhwc.1} parent=31 // pred_region
          %s225 = sand.u32 %s29, 1
          %s226 = scalar_lea.sflag [#allocation5], %s225
          %s227 = sand.u32 %s29, 1
          %s228 = smul.addr %s227, 256
          %s229 = scalar_lea.vmem [#allocation4], %s228
          %s231 = ssub.s32 4096, 4096
          %232 = vsyncadd %s226, %s231
          %s233 = smul.addr %s19, 32
          %s234 = smul.addr %s233, 128
          %s235 = scalar_lea.hbm %s0, %s234
          %s236 = sshll.u32 %s229, 4
          %s237 = int_to_ptr.vmem [resolvable:$true] %s236
          %242 = dma.hbm_to_vmem [thread:$0]  %s235, 4096, %s237, %s226, 128, 128, 8
        $region36: #{residual_block_nhwc.1} parent=31 // pred_fallthru
          _
      $region32: #{residual_block_nhwc.1} parent=5 // pred_fallthru
        _
      %p243 = scmp.le.s32.totalorder 1, %s19
      %p244 = scmp.lt.s32.totalorder %s19, 3
      %p245 = pnand %p243, %p244
      %p246 = pneg %p245
      // Predicated region
      $region37: #{residual_block_nhwc.1} parent=5 // pred_check
        _
      $region38: #{residual_block_nhwc.1} parent=5 // pred_check_branch
        %248 = sbr.rel (%p245) target = $region40
      $region39: #{residual_block_nhwc.1} parent=5 // pred_region
        %s249 = ssub.s32 %s19, 1
        %s250 = sand.u32 %s32, 1
        %s251 = scalar_lea.sflag [#allocation5], %s250
        %s252 = sand.u32 %s32, 1
        %s253 = smul.addr %s252, 256
        %s254 = scalar_lea.vmem [#allocation4], %s253
        // Predicated region
        $region41: #{residual_block_nhwc.1} parent=39 // pred_check
          %p255 = pneg %p45
        $region42: #{residual_block_nhwc.1} parent=39 // pred_check_branch
          %257 = sbr.rel (%p255) target = $region44
        $region43: #{residual_block_nhwc.1} parent=39 // pred_region
          %258 = dma.done %s251, 4096
        $region44: #{residual_block_nhwc.1} parent=39 // pred_fallthru
          _
        // Predicated region
        $region45: #{residual_block_nhwc.1} parent=39 // pred_check
          %p259 = pneg %p66
        $region46: #{residual_block_nhwc.1} parent=39 // pred_check_branch
          %261 = sbr.rel (%p259) target = $region48
        $region47: #{residual_block_nhwc.1} parent=39 // pred_region
          %262 = dma.done [#allocation8], 576
        $region48: #{residual_block_nhwc.1} parent=39 // pred_fallthru
          _
        // Predicated region
        $region49: #{residual_block_nhwc.1} parent=39 // pred_check
          %p263 = pneg %p87
        $region50: #{residual_block_nhwc.1} parent=39 // pred_check_branch
          %265 = sbr.rel (%p263) target = $region52
        $region51: #{residual_block_nhwc.1} parent=39 // pred_region
          %266 = dma.done [#allocation8], 16
        $region52: #{residual_block_nhwc.1} parent=39 // pred_fallthru
          _
        // Predicated region
        $region53: #{residual_block_nhwc.1} parent=39 // pred_check
          %p267 = pneg %p108
        $region54: #{residual_block_nhwc.1} parent=39 // pred_check_branch
          %269 = sbr.rel (%p267) target = $region56
        $region55: #{residual_block_nhwc.1} parent=39 // pred_region
          %270 = dma.done [#allocation11], 576
        $region56: #{residual_block_nhwc.1} parent=39 // pred_fallthru
          _
        // Predicated region
        $region57: #{residual_block_nhwc.1} parent=39 // pred_check
          %p271 = pneg %p129
        $region58: #{residual_block_nhwc.1} parent=39 // pred_check_branch
          %273 = sbr.rel (%p271) target = $region60
        $region59: #{residual_block_nhwc.1} parent=39 // pred_region
          %274 = dma.done [#allocation11], 16
        $region60: #{residual_block_nhwc.1} parent=39 // pred_fallthru
          _
        %s275 = sand.u32 %s32, 1
        %s276 = scalar_lea.sflag [#allocation5], %s275
        %s277 = sand.u32 %s32, 1
        %s278 = smul.addr %s277, 256
        %s279 = scalar_lea.vmem [#allocation4], %s278
        %p280 = pneg %p45
        %p281 = pneg %p42
        %p282 = pneg %p66
        %p283 = pneg %p63
        %p284 = pneg %p87
        %p285 = pneg %p84
        %p286 = pneg %p108
        %p287 = pneg %p105
        %p288 = pneg %p129
        %p289 = pneg %p126
        %p290 = pneg %p155
        %p291 = pneg %p152
        %s292 = sand.u32 %s142, 1
        %s293 = scalar_lea.sflag [#allocation6], %s292
        %s294 = sand.u32 %s142, 1
        %s295 = smul.addr %s294, 256
        %s296 = scalar_lea.vmem [#allocation13], %s295
        %vm297 = vcmask 31744
        %298 = vst.msk [vmem:[#allocation2] sm:$0xff] %vm297, 0.0
        %299 = vst.msk [vmem:[#allocation2 + $0x8] sm:$0xff] %vm297, 0.0
        %vm300 = vcmask 25600
        %301 = vst.msk [vmem:[#allocation2 + $0x10] sm:$0x3] %vm300, 0.0
        %s302 = scalar_lea.vmem [#allocation2], 408
        %303 = vst.msk [vmem:[%s302] sm:$0xff] %vm297, 0.0
        %304 = vst.msk [vmem:[%s302 + $0x8] sm:$0xff] %vm297, 0.0
        %305 = vst.msk [vmem:[%s302 + $0x10] sm:$0x3] %vm300, 0.0
        %vm306 = vcmask 24576
        %307 = vst.msk [vmem:[#allocation2] sm:$0x1] %vm306, 0.0
        %308 = vst.msk [vmem:[#allocation2 + $0x18] sm:$0x1] %vm306, 0.0
        %309 = vst.msk [vmem:[#allocation2 + $0x30] sm:$0x1] %vm306, 0.0
        %310 = vst.msk [vmem:[#allocation2 + $0x48] sm:$0x1] %vm306, 0.0
        %311 = vst.msk [vmem:[#allocation2 + $0x60] sm:$0x1] %vm306, 0.0
        %312 = vst.msk [vmem:[#allocation2 + $0x78] sm:$0x1] %vm306, 0.0
        %313 = vst.msk [vmem:[#allocation2 + $0x90] sm:$0x1] %vm306, 0.0
        %314 = vst.msk [vmem:[#allocation2 + $0xa8] sm:$0x1] %vm306, 0.0
        %315 = vst.msk [vmem:[#allocation2 + $0xc0] sm:$0x1] %vm306, 0.0
        %316 = vst.msk [vmem:[#allocation2 + $0xd8] sm:$0x1] %vm306, 0.0
        %317 = vst.msk [vmem:[#allocation2 + $0xf0] sm:$0x1] %vm306, 0.0
        %318 = vst.msk [vmem:[#allocation2 + $0x108] sm:$0x1] %vm306, 0.0
        %319 = vst.msk [vmem:[#allocation2 + $0x120] sm:$0x1] %vm306, 0.0
        %320 = vst.msk [vmem:[#allocation2 + $0x138] sm:$0x1] %vm306, 0.0
        %321 = vst.msk [vmem:[#allocation2 + $0x150] sm:$0x1] %vm306, 0.0
        %322 = vst.msk [vmem:[#allocation2 + $0x168] sm:$0x1] %vm306, 0.0
        %323 = vst.msk [vmem:[#allocation2 + $0x180] sm:$0x1] %vm306, 0.0
        %324 = vst.msk [vmem:[#allocation2 + $0x198] sm:$0x1] %vm306, 0.0
        %325 = vst.msk [vmem:[#allocation2 + $0x11] sm:$0x1] %vm306, 0.0
        %326 = vst.msk [vmem:[#allocation2 + $0x29] sm:$0x1] %vm306, 0.0
        %327 = vst.msk [vmem:[#allocation2 + $0x41] sm:$0x1] %vm306, 0.0
        %328 = vst.msk [vmem:[#allocation2 + $0x59] sm:$0x1] %vm306, 0.0
        %329 = vst.msk [vmem:[#allocation2 + $0x71] sm:$0x1] %vm306, 0.0
        %330 = vst.msk [vmem:[#allocation2 + $0x89] sm:$0x1] %vm306, 0.0
        %331 = vst.msk [vmem:[#allocation2 + $0xa1] sm:$0x1] %vm306, 0.0
        %332 = vst.msk [vmem:[#allocation2 + $0xb9] sm:$0x1] %vm306, 0.0
        %333 = vst.msk [vmem:[#allocation2 + $0xd1] sm:$0x1] %vm306, 0.0
        %334 = vst.msk [vmem:[#allocation2 + $0xe9] sm:$0x1] %vm306, 0.0
        %335 = vst.msk [vmem:[#allocation2 + $0x101] sm:$0x1] %vm306, 0.0
        %336 = vst.msk [vmem:[#allocation2 + $0x119] sm:$0x1] %vm306, 0.0
        %337 = vst.msk [vmem:[#allocation2 + $0x131] sm:$0x1] %vm306, 0.0
        %338 = vst.msk [vmem:[#allocation2 + $0x149] sm:$0x1] %vm306, 0.0
        %339 = vst.msk [vmem:[#allocation2 + $0x161] sm:$0x1] %vm306, 0.0
        %340 = vst.msk [vmem:[#allocation2 + $0x179] sm:$0x1] %vm306, 0.0
        %341 = vst.msk [vmem:[#allocation2 + $0x191] sm:$0x1] %vm306, 0.0
        %342 = vst.msk [vmem:[#allocation2 + $0x1a9] sm:$0x1] %vm306, 0.0
        %v343 = vld [vmem:[%s254] sm:$0xff]
        %v344 = vld [vmem:[%s254 + $0x8] sm:$0xff]
        %v345 = vld [vmem:[%s254 + $0x10] sm:$0xff]
        %v346 = vld [vmem:[%s254 + $0x18] sm:$0xff]
        %v347 = vld [vmem:[%s254 + $0x20] sm:$0xff]
        %v348 = vld [vmem:[%s254 + $0x28] sm:$0xff]
        %v349 = vld [vmem:[%s254 + $0x30] sm:$0xff]
        %v350 = vld [vmem:[%s254 + $0x38] sm:$0xff]
        %v351 = vld [vmem:[%s254 + $0x40] sm:$0xff]
        %v352 = vld [vmem:[%s254 + $0x48] sm:$0xff]
        %v353 = vld [vmem:[%s254 + $0x50] sm:$0xff]
        %v354 = vld [vmem:[%s254 + $0x58] sm:$0xff]
        %v355 = vld [vmem:[%s254 + $0x60] sm:$0xff]
        %v356 = vld [vmem:[%s254 + $0x68] sm:$0xff]
        %v357 = vld [vmem:[%s254 + $0x70] sm:$0xff]
        %v358 = vld [vmem:[%s254 + $0x78] sm:$0xff]
        %v359 = vld [vmem:[%s254 + $0x80] sm:$0xff]
        %v360 = vld [vmem:[%s254 + $0x88] sm:$0xff]
        %v361 = vld [vmem:[%s254 + $0x90] sm:$0xff]
        %v362 = vld [vmem:[%s254 + $0x98] sm:$0xff]
        %v363 = vld [vmem:[%s254 + $0xa0] sm:$0xff]
        %v364 = vld [vmem:[%s254 + $0xa8] sm:$0xff]
        %v365 = vld [vmem:[%s254 + $0xb0] sm:$0xff]
        %v366 = vld [vmem:[%s254 + $0xb8] sm:$0xff]
        %v367 = vld [vmem:[%s254 + $0xc0] sm:$0xff]
        %v368 = vld [vmem:[%s254 + $0xc8] sm:$0xff]
        %v369 = vld [vmem:[%s254 + $0xd0] sm:$0xff]
        %v370 = vld [vmem:[%s254 + $0xd8] sm:$0xff]
        %v371 = vld [vmem:[%s254 + $0xe0] sm:$0xff]
        %v372 = vld [vmem:[%s254 + $0xe8] sm:$0xff]
        %v373 = vld [vmem:[%s254 + $0xf0] sm:$0xff]
        %v374 = vld [vmem:[%s254 + $0xf8] sm:$0xff]
        %s375 = scalar_lea.vmem [#allocation2], 24
        %376 = vst.msk [vmem:[%s375 + $0x1] sm:$0xff] %vm297, %v343
        %377 = vst.msk [vmem:[%s375 + $0x9] sm:$0xff] %vm297, %v344
        %378 = vst.msk [vmem:[%s375 + $0x19] sm:$0xff] %vm297, %v345
        %379 = vst.msk [vmem:[%s375 + $0x21] sm:$0xff] %vm297, %v346
        %380 = vst.msk [vmem:[%s375 + $0x31] sm:$0xff] %vm297, %v347
        %381 = vst.msk [vmem:[%s375 + $0x39] sm:$0xff] %vm297, %v348
        %382 = vst.msk [vmem:[%s375 + $0x49] sm:$0xff] %vm297, %v349
        %383 = vst.msk [vmem:[%s375 + $0x51] sm:$0xff] %vm297, %v350
        %384 = vst.msk [vmem:[%s375 + $0x61] sm:$0xff] %vm297, %v351
        %385 = vst.msk [vmem:[%s375 + $0x69] sm:$0xff] %vm297, %v352
        %386 = vst.msk [vmem:[%s375 + $0x79] sm:$0xff] %vm297, %v353
        %387 = vst.msk [vmem:[%s375 + $0x81] sm:$0xff] %vm297, %v354
        %388 = vst.msk [vmem:[%s375 + $0x91] sm:$0xff] %vm297, %v355
        %389 = vst.msk [vmem:[%s375 + $0x99] sm:$0xff] %vm297, %v356
        %390 = vst.msk [vmem:[%s375 + $0xa9] sm:$0xff] %vm297, %v357
        %391 = vst.msk [vmem:[%s375 + $0xb1] sm:$0xff] %vm297, %v358
        %392 = vst.msk [vmem:[%s375 + $0xc1] sm:$0xff] %vm297, %v359
        %393 = vst.msk [vmem:[%s375 + $0xc9] sm:$0xff] %vm297, %v360
        %394 = vst.msk [vmem:[%s375 + $0xd9] sm:$0xff] %vm297, %v361
        %395 = vst.msk [vmem:[%s375 + $0xe1] sm:$0xff] %vm297, %v362
        %396 = vst.msk [vmem:[%s375 + $0xf1] sm:$0xff] %vm297, %v363
        %397 = vst.msk [vmem:[%s375 + $0xf9] sm:$0xff] %vm297, %v364
        %398 = vst.msk [vmem:[%s375 + $0x109] sm:$0xff] %vm297, %v365
        %399 = vst.msk [vmem:[%s375 + $0x111] sm:$0xff] %vm297, %v366
        %400 = vst.msk [vmem:[%s375 + $0x121] sm:$0xff] %vm297, %v367
        %401 = vst.msk [vmem:[%s375 + $0x129] sm:$0xff] %vm297, %v368
        %402 = vst.msk [vmem:[%s375 + $0x139] sm:$0xff] %vm297, %v369
        %403 = vst.msk [vmem:[%s375 + $0x141] sm:$0xff] %vm297, %v370
        %404 = vst.msk [vmem:[%s375 + $0x151] sm:$0xff] %vm297, %v371
        %405 = vst.msk [vmem:[%s375 + $0x159] sm:$0xff] %vm297, %v372
        %406 = vst.msk [vmem:[%s375 + $0x169] sm:$0xff] %vm297, %v373
        %407 = vst.msk [vmem:[%s375 + $0x171] sm:$0xff] %vm297, %v374
        %408 = vst.msk [vmem:[#allocation3] sm:$0xff] %vm297, 0.0
        %409 = vst.msk [vmem:[#allocation3 + $0x8] sm:$0xff] %vm297, 0.0
        %410 = vst.msk [vmem:[#allocation3 + $0x10] sm:$0xff] %vm297, 0.0
        %411 = vst.msk [vmem:[#allocation3 + $0x18] sm:$0xff] %vm297, 0.0
        %412 = vst.msk [vmem:[#allocation3 + $0x20] sm:$0xff] %vm297, 0.0
        %413 = vst.msk [vmem:[#allocation3 + $0x28] sm:$0xff] %vm297, 0.0
        %414 = vst.msk [vmem:[#allocation3 + $0x30] sm:$0xff] %vm297, 0.0
        %415 = vst.msk [vmem:[#allocation3 + $0x38] sm:$0xff] %vm297, 0.0
        %416 = vst.msk [vmem:[#allocation3 + $0x40] sm:$0xff] %vm297, 0.0
        %417 = vst.msk [vmem:[#allocation3 + $0x48] sm:$0xff] %vm297, 0.0
        %418 = vst.msk [vmem:[#allocation3 + $0x50] sm:$0xff] %vm297, 0.0
        %419 = vst.msk [vmem:[#allocation3 + $0x58] sm:$0xff] %vm297, 0.0
        %420 = vst.msk [vmem:[#allocation3 + $0x60] sm:$0xff] %vm297, 0.0
        %421 = vst.msk [vmem:[#allocation3 + $0x68] sm:$0xff] %vm297, 0.0
        %422 = vst.msk [vmem:[#allocation3 + $0x70] sm:$0xff] %vm297, 0.0
        %423 = vst.msk [vmem:[#allocation3 + $0x78] sm:$0xff] %vm297, 0.0
        %424 = vst.msk [vmem:[#allocation3 + $0x80] sm:$0xff] %vm297, 0.0
        %425 = vst.msk [vmem:[#allocation3 + $0x88] sm:$0xff] %vm297, 0.0
        %426 = vst.msk [vmem:[#allocation3 + $0x90] sm:$0xff] %vm297, 0.0
        %427 = vst.msk [vmem:[#allocation3 + $0x98] sm:$0xff] %vm297, 0.0
        %428 = vst.msk [vmem:[#allocation3 + $0xa0] sm:$0xff] %vm297, 0.0
        %429 = vst.msk [vmem:[#allocation3 + $0xa8] sm:$0xff] %vm297, 0.0
        %430 = vst.msk [vmem:[#allocation3 + $0xb0] sm:$0xff] %vm297, 0.0
        %431 = vst.msk [vmem:[#allocation3 + $0xb8] sm:$0xff] %vm297, 0.0
        %432 = vst.msk [vmem:[#allocation3 + $0xc0] sm:$0xff] %vm297, 0.0
        %433 = vst.msk [vmem:[#allocation3 + $0xc8] sm:$0xff] %vm297, 0.0
        %434 = vst.msk [vmem:[#allocation3 + $0xd0] sm:$0xff] %vm297, 0.0
        %435 = vst.msk [vmem:[#allocation3 + $0xd8] sm:$0xff] %vm297, 0.0
        %436 = vst.msk [vmem:[#allocation3 + $0xe0] sm:$0xff] %vm297, 0.0
        %437 = vst.msk [vmem:[#allocation3 + $0xe8] sm:$0xff] %vm297, 0.0
        %438 = vst.msk [vmem:[#allocation3 + $0xf0] sm:$0xff] %vm297, 0.0
        %439 = vst.msk [vmem:[#allocation3 + $0xf8] sm:$0xff] %vm297, 0.0
        %v440 = vld [vmem:[#allocation2] sm:$0xff]
        %v441 = vld [vmem:[#allocation2 + $0x8] sm:$0xff]
        %v442 = vld [vmem:[#allocation2 + $0x18] sm:$0xff]
        %v443 = vld [vmem:[#allocation2 + $0x20] sm:$0xff]
        %v444 = vld [vmem:[#allocation2 + $0x30] sm:$0xff]
        %v445 = vld [vmem:[#allocation2 + $0x38] sm:$0xff]
        %v446 = vld [vmem:[#allocation2 + $0x48] sm:$0xff]
        %v447 = vld [vmem:[#allocation2 + $0x50] sm:$0xff]
        %v448 = vld [vmem:[#allocation2 + $0x60] sm:$0xff]
        %v449 = vld [vmem:[#allocation2 + $0x68] sm:$0xff]
        %v450 = vld [vmem:[#allocation2 + $0x78] sm:$0xff]
        %v451 = vld [vmem:[#allocation2 + $0x80] sm:$0xff]
        %v452 = vld [vmem:[#allocation2 + $0x90] sm:$0xff]
        %v453 = vld [vmem:[#allocation2 + $0x98] sm:$0xff]
        %v454 = vld [vmem:[#allocation2 + $0xa8] sm:$0xff]
        %v455 = vld [vmem:[#allocation2 + $0xb0] sm:$0xff]
        %v456 = vld [vmem:[#allocation2 + $0xc0] sm:$0xff]
        %v457 = vld [vmem:[#allocation2 + $0xc8] sm:$0xff]
        %v458 = vld [vmem:[#allocation2 + $0xd8] sm:$0xff]
        %v459 = vld [vmem:[#allocation2 + $0xe0] sm:$0xff]
        %v460 = vld [vmem:[#allocation2 + $0xf0] sm:$0xff]
        %v461 = vld [vmem:[#allocation2 + $0xf8] sm:$0xff]
        %v462 = vld [vmem:[#allocation2 + $0x108] sm:$0xff]
        %v463 = vld [vmem:[#allocation2 + $0x110] sm:$0xff]
        %v464 = vld [vmem:[#allocation2 + $0x120] sm:$0xff]
        %v465 = vld [vmem:[#allocation2 + $0x128] sm:$0xff]
        %v466 = vld [vmem:[#allocation2 + $0x138] sm:$0xff]
        %v467 = vld [vmem:[#allocation2 + $0x140] sm:$0xff]
        %v468 = vld [vmem:[#allocation2 + $0x150] sm:$0xff]
        %v469 = vld [vmem:[#allocation2 + $0x158] sm:$0xff]
        %v470 = vld [vmem:[#allocation2 + $0x168] sm:$0xff]
        %v471 = vld [vmem:[#allocation2 + $0x170] sm:$0xff]
        %v472 = vld [vmem:[#allocation3] sm:$0xff]
        %v473 = vld [vmem:[#allocation3 + $0x8] sm:$0xff]
        %v474 = vld [vmem:[#allocation3 + $0x10] sm:$0xff]
        %v475 = vld [vmem:[#allocation3 + $0x18] sm:$0xff]
        %v476 = vld [vmem:[#allocation3 + $0x20] sm:$0xff]
        %v477 = vld [vmem:[#allocation3 + $0x28] sm:$0xff]
        %v478 = vld [vmem:[#allocation3 + $0x30] sm:$0xff]
        %v479 = vld [vmem:[#allocation3 + $0x38] sm:$0xff]
        %v480 = vld [vmem:[#allocation3 + $0x40] sm:$0xff]
        %v481 = vld [vmem:[#allocation3 + $0x48] sm:$0xff]
        %v482 = vld [vmem:[#allocation3 + $0x50] sm:$0xff]
        %v483 = vld [vmem:[#allocation3 + $0x58] sm:$0xff]
        %v484 = vld [vmem:[#allocation3 + $0x60] sm:$0xff]
        %v485 = vld [vmem:[#allocation3 + $0x68] sm:$0xff]
        %v486 = vld [vmem:[#allocation3 + $0x70] sm:$0xff]
        %v487 = vld [vmem:[#allocation3 + $0x78] sm:$0xff]
        %v488 = vld [vmem:[#allocation3 + $0x80] sm:$0xff]
        %v489 = vld [vmem:[#allocation3 + $0x88] sm:$0xff]
        %v490 = vld [vmem:[#allocation3 + $0x90] sm:$0xff]
        %v491 = vld [vmem:[#allocation3 + $0x98] sm:$0xff]
        %v492 = vld [vmem:[#allocation3 + $0xa0] sm:$0xff]
        %v493 = vld [vmem:[#allocation3 + $0xa8] sm:$0xff]
        %v494 = vld [vmem:[#allocation3 + $0xb0] sm:$0xff]
        %v495 = vld [vmem:[#allocation3 + $0xb8] sm:$0xff]
        %v496 = vld [vmem:[#allocation3 + $0xc0] sm:$0xff]
        %v497 = vld [vmem:[#allocation3 + $0xc8] sm:$0xff]
        %v498 = vld [vmem:[#allocation3 + $0xd0] sm:$0xff]
        %v499 = vld [vmem:[#allocation3 + $0xd8] sm:$0xff]
        %v500 = vld [vmem:[#allocation3 + $0xe0] sm:$0xff]
        %v501 = vld [vmem:[#allocation3 + $0xe8] sm:$0xff]
        %v502 = vld [vmem:[#allocation3 + $0xf0] sm:$0xff]
        %v503 = vld [vmem:[#allocation3 + $0xf8] sm:$0xff]
        %v504 = vld [vmem:[#allocation7] sm:$0xf]
        %v506 = vsel %vm297, %v440, 0
        %v509 = vsel %vm297, %v441, 0
        %v512 = vsel %vm297, %v442, 0
        %v515 = vsel %vm297, %v443, 0
        %v518 = vsel %vm297, %v444, 0
        %v521 = vsel %vm297, %v445, 0
        %v524 = vsel %vm297, %v446, 0
        %v527 = vsel %vm297, %v447, 0
        %v530 = vsel %vm297, %v448, 0
        %v533 = vsel %vm297, %v449, 0
        %v536 = vsel %vm297, %v450, 0
        %v539 = vsel %vm297, %v451, 0
        %v542 = vsel %vm297, %v452, 0
        %v545 = vsel %vm297, %v453, 0
        %v548 = vsel %vm297, %v454, 0
        %v551 = vsel %vm297, %v455, 0
        %v554 = vsel %vm297, %v456, 0
        %v557 = vsel %vm297, %v457, 0
        %v560 = vsel %vm297, %v458, 0
        %v563 = vsel %vm297, %v459, 0
        %v566 = vsel %vm297, %v460, 0
        %v569 = vsel %vm297, %v461, 0
        %v572 = vsel %vm297, %v462, 0
        %v575 = vsel %vm297, %v463, 0
        %v578 = vsel %vm297, %v464, 0
        %v581 = vsel %vm297, %v465, 0
        %v584 = vsel %vm297, %v466, 0
        %v587 = vsel %vm297, %v467, 0
        %v590 = vsel %vm297, %v468, 0
        %v593 = vsel %vm297, %v469, 0
        %v596 = vsel %vm297, %v470, 0
        %v599 = vsel %vm297, %v471, 0
        %vm601 = vcmask 1043456
        %v603 = vsel %vm601, %v504, 0
        %605 = vmatprep.subr.mxu0 0.0
        %606 = vmatpush1.msra.mxu0 %v603
        %607 = vmatprep.subr.mxu0 0.0
        %608 = vmatpush1.msra.mxu0 0.0
        %609 = vmatprep.subr.mxu0 0.0
        %610 = vmatpush1.msra.mxu0 0.0
        %611 = vmatprep.subr.mxu0 0.0
        %612 = vmatpush1.msra.mxu0 0.0
        %613 = vmatprep.subr.mxu0 0.0
        %614 = vmatpush1.msra.mxu0 0.0
        %615 = vmatprep.subr.mxu0 0.0
        %616 = vmatpush1.msra.mxu0 0.0
        %617 = vmatprep.subr.mxu0 0.0
        %618 = vmatpush1.msra.mxu0 0.0
        %619 = vmatprep.subr.mxu0 0.0
        %620 = vmatpush1.msra.mxu0 0.0
        %621 = vmatprep.subr.mxu0 0.0
        %622 = vmatpush1.msra.mxu0 0.0
        %623 = vmatprep.subr.mxu0 0.0
        %624 = vmatpush1.msra.mxu0 0.0
        %625 = vmatprep.subr.mxu0 0.0
        %626 = vmatpush1.msra.mxu0 0.0
        %627 = vmatprep.subr.mxu0 0.0
        %628 = vmatpush1.msra.mxu0 0.0
        %629 = vmatprep.subr.mxu0 0.0
        %630 = vmatpush1.msra.mxu0 0.0
        %631 = vmatprep.subr.mxu0 0.0
        %632 = vmatpush1.msra.mxu0 0.0
        %633 = vmatprep.subr.mxu0 0.0
        %634 = vmatpush1.msra.mxu0 0.0
        %635 = vmatprep.subr.mxu0 0.0
        %636 = vmatpush1.msra.mxu0 0.0
        %637 = vmatprep.subr.mxu0 0.0
        %638 = vmatpush1.msra.mxu0 0.0
        %639 = vmatprep.subr.mxu0 0.0
        %640 = vmatpush1.msra.mxu0 0.0
        %641 = vmatprep.subr.mxu0 0.0
        %642 = vmatpush1.msra.mxu0 0.0
        %643 = vmatprep.subr.mxu0 0.0
        %644 = vmatpush1.msra.mxu0 0.0
        %645 = vmatprep.subr.mxu0 0.0
        %646 = vmatpush1.msra.mxu0 0.0
        %647 = vmatprep.subr.mxu0 0.0
        %648 = vmatpush1.msra.mxu0 0.0
        %649 = vmatprep.subr.mxu0 0.0
        %650 = vmatpush1.msra.mxu0 0.0
        %651 = vmatprep.subr.mxu0 0.0
        %652 = vmatpush1.msra.mxu0 0.0
        %653 = vmatprep.subr.mxu0 0.0
        %654 = vmatpush1.msra.mxu0 0.0
        %655 = vmatprep.subr.mxu0 0.0
        %656 = vmatpush1.msra.mxu0 0.0
        %657 = vmatprep.subr.mxu0 0.0
        %658 = vmatpush1.msra.mxu0 0.0
        %659 = vmatprep.subr.mxu0 0.0
        %660 = vmatpush1.msra.mxu0 0.0
        %661 = vmatprep.subr.mxu0 0.0
        %662 = vmatpush1.msra.mxu0 0.0
        %663 = vmatprep.subr.mxu0 0.0
        %664 = vmatpush1.msra.mxu0 0.0
        %665 = vmatprep.subr.mxu0 0.0
        %666 = vmatpush1.msra.mxu0 0.0
        %667 = vmatprep.subr.mxu0 0.0
        %668 = vmatpush1.msra.mxu0 0.0
        %669 = vmatprep.mubr.f32.mxu0 0.0
        %670 = vmatmul.mubr.f32.gmra.mrb[0].mxu0 %v506
        %v671 = vpop.f32.mrb[0].mxu0
        %v672 = vadd.f32 0.0, %v671
        %v673 = vpop.f32.mrb[0].mxu0
        %674 = vmatprep.mubr.f32.mxu0 0.0
        %675 = vmatmul.mubr.f32.gmra.mrb[0].mxu0 %v509
        %v676 = vpop.f32.mrb[0].mxu0
        %v677 = vadd.f32 0.0, %v676
        %v678 = vpop.f32.mrb[0].mxu0
        %679 = vmatprep.mubr.f32.mxu0 0.0
        %680 = vmatmul.mubr.f32.gmra.mrb[0].mxu0 %v512
        %v681 = vpop.f32.mrb[0].mxu0
        %v682 = vadd.f32 0.0, %v681
        %v683 = vpop.f32.mrb[0].mxu0
        %684 = vmatprep.mubr.f32.mxu0 0.0
        %685 = vmatmul.mubr.f32.gmra.mrb[0].mxu0 %v515
        %v686 = vpop.f32.mrb[0].mxu0
        %v687 = vadd.f32 0.0, %v686
        %v688 = vpop.f32.mrb[0].mxu0
        %689 = vmatprep.mubr.f32.mxu0 0.0
        %690 = vmatmul.mubr.f32.gmra.mrb[0].mxu0 %v518
        %v691 = vpop.f32.mrb[0].mxu0
        %v692 = vadd.f32 0.0, %v691
        %v693 = vpop.f32.mrb[0].mxu0
        %694 = vmatprep.mubr.f32.mxu0 0.0
        %695 = vmatmul.mubr.f32.gmra.mrb[0].mxu0 %v521
        %v696 = vpop.f32.mrb[0].mxu0
        %v697 = vadd.f32 0.0, %v696
        %v698 = vpop.f32.mrb[0].mxu0
        %699 = vmatprep.mubr.f32.mxu0 0.0
        %700 = vmatmul.mubr.f32.gmra.mrb[0].mxu0 %v524
        %v701 = vpop.f32.mrb[0].mxu0
        %v702 = vadd.f32 0.0, %v701
        %v703 = vpop.f32.mrb[0].mxu0
        %704 = vmatprep.mubr.f32.mxu0 0.0
        %705 = vmatmul.mubr.f32.gmra.mrb[0].mxu0 %v527
        %v706 = vpop.f32.mrb[0].mxu0
        %v707 = vadd.f32 0.0, %v706
        %v708 = vpop.f32.mrb[0].mxu0
        %709 = vmatprep.mubr.f32.mxu0 0.0
        %710 = vmatmul.mubr.f32.gmra.mrb[0].mxu0 %v530
        %v711 = vpop.f32.mrb[0].mxu0
        %v712 = vadd.f32 0.0, %v711
        %v713 = vpop.f32.mrb[0].mxu0
        %714 = vmatprep.mubr.f32.mxu0 0.0
        %715 = vmatmul.mubr.f32.gmra.mrb[0].mxu0 %v533
        %v716 = vpop.f32.mrb[0].mxu0
        %v717 = vadd.f32 0.0, %v716
        %v718 = vpop.f32.mrb[0].mxu0
        %719 = vmatprep.mubr.f32.mxu0 0.0
        %720 = vmatmul.mubr.f32.gmra.mrb[0].mxu0 %v536
        %v721 = vpop.f32.mrb[0].mxu0
        %v722 = vadd.f32 0.0, %v721
        %v723 = vpop.f32.mrb[0].mxu0
        %724 = vmatprep.mubr.f32.mxu0 0.0
        %725 = vmatmul.mubr.f32.gmra.mrb[0].mxu0 %v539
        %v726 = vpop.f32.mrb[0].mxu0
        %v727 = vadd.f32 0.0, %v726
        %v728 = vpop.f32.mrb[0].mxu0
        %729 = vmatprep.mubr.f32.mxu0 0.0
        %730 = vmatmul.mubr.f32.gmra.mrb[0].mxu0 %v542
        %v731 = vpop.f32.mrb[0].mxu0
        %v732 = vadd.f32 0.0, %v731
        %v733 = vpop.f32.mrb[0].mxu0
        %734 = vmatprep.mubr.f32.mxu0 0.0
        %735 = vmatmul.mubr.f32.gmra.mrb[0].mxu0 %v545
        %v736 = vpop.f32.mrb[0].mxu0
        %v737 = vadd.f32 0.0, %v736
        %v738 = vpop.f32.mrb[0].mxu0
        %739 = vmatprep.mubr.f32.mxu0 0.0
        %740 = vmatmul.mubr.f32.gmra.mrb[0].mxu0 %v548
        %v741 = vpop.f32.mrb[0].mxu0
        %v742 = vadd.f32 0.0, %v741
        %v743 = vpop.f32.mrb[0].mxu0
        %744 = vmatprep.mubr.f32.mxu0 0.0
        %745 = vmatmul.mubr.f32.gmra.mrb[0].mxu0 %v551
        %v746 = vpop.f32.mrb[0].mxu0
        %v747 = vadd.f32 0.0, %v746
        %v748 = vpop.f32.mrb[0].mxu0
        %749 = vmatprep.mubr.f32.mxu0 0.0
        %750 = vmatmul.mubr.f32.gmra.mrb[0].mxu0 %v554
        %v751 = vpop.f32.mrb[0].mxu0
        %v752 = vadd.f32 0.0, %v751
        %v753 = vpop.f32.mrb[0].mxu0
        %754 = vmatprep.mubr.f32.mxu0 0.0
        %755 = vmatmul.mubr.f32.gmra.mrb[0].mxu0 %v557
        %v756 = vpop.f32.mrb[0].mxu0
        %v757 = vadd.f32 0.0, %v756
        %v758 = vpop.f32.mrb[0].mxu0
        %759 = vmatprep.mubr.f32.mxu0 0.0
        %760 = vmatmul.mubr.f32.gmra.mrb[0].mxu0 %v560
        %v761 = vpop.f32.mrb[0].mxu0
        %v762 = vadd.f32 0.0, %v761
        %v763 = vpop.f32.mrb[0].mxu0
        %764 = vmatprep.mubr.f32.mxu0 0.0
        %765 = vmatmul.mubr.f32.gmra.mrb[0].mxu0 %v563
        %v766 = vpop.f32.mrb[0].mxu0
        %v767 = vadd.f32 0.0, %v766
        %v768 = vpop.f32.mrb[0].mxu0
        %769 = vmatprep.mubr.f32.mxu0 0.0
        %770 = vmatmul.mubr.f32.gmra.mrb[0].mxu0 %v566
        %v771 = vpop.f32.mrb[0].mxu0
        %v772 = vadd.f32 0.0, %v771
        %v773 = vpop.f32.mrb[0].mxu0
        %774 = vmatprep.mubr.f32.mxu0 0.0
        %775 = vmatmul.mubr.f32.gmra.mrb[0].mxu0 %v569
        %v776 = vpop.f32.mrb[0].mxu0
        %v777 = vadd.f32 0.0, %v776
        %v778 = vpop.f32.mrb[0].mxu0
        %779 = vmatprep.mubr.f32.mxu0 0.0
        %780 = vmatmul.mubr.f32.gmra.mrb[0].mxu0 %v572
        %v781 = vpop.f32.mrb[0].mxu0
        %v782 = vadd.f32 0.0, %v781
        %v783 = vpop.f32.mrb[0].mxu0
        %784 = vmatprep.mubr.f32.mxu0 0.0
        %785 = vmatmul.mubr.f32.gmra.mrb[0].mxu0 %v575
        %v786 = vpop.f32.mrb[0].mxu0
        %v787 = vadd.f32 0.0, %v786
        %v788 = vpop.f32.mrb[0].mxu0
        %789 = vmatprep.mubr.f32.mxu0 0.0
        %790 = vmatmul.mubr.f32.gmra.mrb[0].mxu0 %v578
        %v791 = vpop.f32.mrb[0].mxu0
        %v792 = vadd.f32 0.0, %v791
        %v793 = vpop.f32.mrb[0].mxu0
        %794 = vmatprep.mubr.f32.mxu0 0.0
        %795 = vmatmul.mubr.f32.gmra.mrb[0].mxu0 %v581
        %v796 = vpop.f32.mrb[0].mxu0
        %v797 = vadd.f32 0.0, %v796
        %v798 = vpop.f32.mrb[0].mxu0
        %799 = vmatprep.mubr.f32.mxu0 0.0
        %800 = vmatmul.mubr.f32.gmra.mrb[0].mxu0 %v584
        %v801 = vpop.f32.mrb[0].mxu0
        %v802 = vadd.f32 0.0, %v801
        %v803 = vpop.f32.mrb[0].mxu0
        %804 = vmatprep.mubr.f32.mxu0 0.0
        %805 = vmatmul.mubr.f32.gmra.mrb[0].mxu0 %v587
        %v806 = vpop.f32.mrb[0].mxu0
        %v807 = vadd.f32 0.0, %v806
        %v808 = vpop.f32.mrb[0].mxu0
        %809 = vmatprep.mubr.f32.mxu0 0.0
        %810 = vmatmul.mubr.f32.gmra.mrb[0].mxu0 %v590
        %v811 = vpop.f32.mrb[0].mxu0
        %v812 = vadd.f32 0.0, %v811
        %v813 = vpop.f32.mrb[0].mxu0
        %814 = vmatprep.mubr.f32.mxu0 0.0
        %815 = vmatmul.mubr.f32.gmra.mrb[0].mxu0 %v593
        %v816 = vpop.f32.mrb[0].mxu0
        %v817 = vadd.f32 0.0, %v816
        %v818 = vpop.f32.mrb[0].mxu0
        %819 = vmatprep.mubr.f32.mxu0 0.0
        %820 = vmatmul.mubr.f32.gmra.mrb[0].mxu0 %v596
        %v821 = vpop.f32.mrb[0].mxu0
        %v822 = vadd.f32 0.0, %v821
        %v823 = vpop.f32.mrb[0].mxu0
        %824 = vmatprep.mubr.f32.mxu0 0.0
        %825 = vmatmul.mubr.f32.gmra.mrb[0].mxu0 %v599
        %v826 = vpop.f32.mrb[0].mxu0
        %v827 = vadd.f32 0.0, %v826
        %v828 = vpop.f32.mrb[0].mxu0
        %829 = vdwg.mxu0
        %v830 = vadd.f32 %v472, %v672
        %v831 = vadd.f32 %v473, %v677
        %v832 = vadd.f32 %v474, %v682
        %v833 = vadd.f32 %v475, %v687
        %v834 = vadd.f32 %v476, %v692
        %v835 = vadd.f32 %v477, %v697
        %v836 = vadd.f32 %v478, %v702
        %v837 = vadd.f32 %v479, %v707
        %v838 = vadd.f32 %v480, %v712
        %v839 = vadd.f32 %v481, %v717
        %v840 = vadd.f32 %v482, %v722
        %v841 = vadd.f32 %v483, %v727
        %v842 = vadd.f32 %v484, %v732
        %v843 = vadd.f32 %v485, %v737
        %v844 = vadd.f32 %v486, %v742
        %v845 = vadd.f32 %v487, %v747
        %v846 = vadd.f32 %v488, %v752
        %v847 = vadd.f32 %v489, %v757
        %v848 = vadd.f32 %v490, %v762
        %v849 = vadd.f32 %v491, %v767
        %v850 = vadd.f32 %v492, %v772
        %v851 = vadd.f32 %v493, %v777
        %v852 = vadd.f32 %v494, %v782
        %v853 = vadd.f32 %v495, %v787
        %v854 = vadd.f32 %v496, %v792
        %v855 = vadd.f32 %v497, %v797
        %v856 = vadd.f32 %v498, %v802
        %v857 = vadd.f32 %v499, %v807
        %v858 = vadd.f32 %v500, %v812
        %v859 = vadd.f32 %v501, %v817
        %v860 = vadd.f32 %v502, %v822
        %v861 = vadd.f32 %v503, %v827
        %862 = vst.msk [vmem:[#allocation3] sm:$0xff] %vm297, %v830
        %863 = vst.msk [vmem:[#allocation3 + $0x8] sm:$0xff] %vm297, %v831
        %864 = vst.msk [vmem:[#allocation3 + $0x10] sm:$0xff] %vm297, %v832
        %865 = vst.msk [vmem:[#allocation3 + $0x18] sm:$0xff] %vm297, %v833
        %866 = vst.msk [vmem:[#allocation3 + $0x20] sm:$0xff] %vm297, %v834
        %867 = vst.msk [vmem:[#allocation3 + $0x28] sm:$0xff] %vm297, %v835
        %868 = vst.msk [vmem:[#allocation3 + $0x30] sm:$0xff] %vm297, %v836
        %869 = vst.msk [vmem:[#allocation3 + $0x38] sm:$0xff] %vm297, %v837
        %870 = vst.msk [vmem:[#allocation3 + $0x40] sm:$0xff] %vm297, %v838
        %871 = vst.msk [vmem:[#allocation3 + $0x48] sm:$0xff] %vm297, %v839
        %872 = vst.msk [vmem:[#allocation3 + $0x50] sm:$0xff] %vm297, %v840
        %873 = vst.msk [vmem:[#allocation3 + $0x58] sm:$0xff] %vm297, %v841
        %874 = vst.msk [vmem:[#allocation3 + $0x60] sm:$0xff] %vm297, %v842
        %875 = vst.msk [vmem:[#allocation3 + $0x68] sm:$0xff] %vm297, %v843
        %876 = vst.msk [vmem:[#allocation3 + $0x70] sm:$0xff] %vm297, %v844
        %877 = vst.msk [vmem:[#allocation3 + $0x78] sm:$0xff] %vm297, %v845
        %878 = vst.msk [vmem:[#allocation3 + $0x80] sm:$0xff] %vm297, %v846
        %879 = vst.msk [vmem:[#allocation3 + $0x88] sm:$0xff] %vm297, %v847
        %880 = vst.msk [vmem:[#allocation3 + $0x90] sm:$0xff] %vm297, %v848
        %881 = vst.msk [vmem:[#allocation3 + $0x98] sm:$0xff] %vm297, %v849
        %882 = vst.msk [vmem:[#allocation3 + $0xa0] sm:$0xff] %vm297, %v850
        %883 = vst.msk [vmem:[#allocation3 + $0xa8] sm:$0xff] %vm297, %v851
        %884 = vst.msk [vmem:[#allocation3 + $0xb0] sm:$0xff] %vm297, %v852
        %885 = vst.msk [vmem:[#allocation3 + $0xb8] sm:$0xff] %vm297, %v853
        %886 = vst.msk [vmem:[#allocation3 + $0xc0] sm:$0xff] %vm297, %v854
        %887 = vst.msk [vmem:[#allocation3 + $0xc8] sm:$0xff] %vm297, %v855
        %888 = vst.msk [vmem:[#allocation3 + $0xd0] sm:$0xff] %vm297, %v856
        %889 = vst.msk [vmem:[#allocation3 + $0xd8] sm:$0xff] %vm297, %v857
        %890 = vst.msk [vmem:[#allocation3 + $0xe0] sm:$0xff] %vm297, %v858
        %891 = vst.msk [vmem:[#allocation3 + $0xe8] sm:$0xff] %vm297, %v859
        %892 = vst.msk [vmem:[#allocation3 + $0xf0] sm:$0xff] %vm297, %v860
        %893 = vst.msk [vmem:[#allocation3 + $0xf8] sm:$0xff] %vm297, %v861
        %v894 = vld [vmem:[#allocation2 + $0x1] sm:$0xff]
        %v895 = vld [vmem:[#allocation2 + $0x9] sm:$0xff]
        %v896 = vld [vmem:[#allocation2 + $0x19] sm:$0xff]
        %v897 = vld [vmem:[#allocation2 + $0x21] sm:$0xff]
        %v898 = vld [vmem:[#allocation2 + $0x31] sm:$0xff]
        %v899 = vld [vmem:[#allocation2 + $0x39] sm:$0xff]
        %v900 = vld [vmem:[#allocation2 + $0x49] sm:$0xff]
        %v901 = vld [vmem:[#allocation2 + $0x51] sm:$0xff]
        %v902 = vld [vmem:[#allocation2 + $0x61] sm:$0xff]
        %v903 = vld [vmem:[#allocation2 + $0x69] sm:$0xff]
        %v904 = vld [vmem:[#allocation2 + $0x79] sm:$0xff]
        %v905 = vld [vmem:[#allocation2 + $0x81] sm:$0xff]
        %v906 = vld [vmem:[#allocation2 + $0x91] sm:$0xff]
        %v907 = vld [vmem:[#allocation2 + $0x99] sm:$0xff]
        %v908 = vld [vmem:[#allocation2 + $0xa9] sm:$0xff]
        %v909 = vld [vmem:[#allocation2 + $0xb1] sm:$0xff]
        %v910 = vld [vmem:[#allocation2 + $0xc1] sm:$0xff]
        %v911 = vld [vmem:[#allocation2 + $0xc9] sm:$0xff]
        %v912 = vld [vmem:[#allocation2 + $0xd9] sm:$0xff]
        %v913 = vld [vmem:[#allocation2 + $0xe1] sm:$0xff]
        %v914 = vld [vmem:[#allocation2 + $0xf1] sm:$0xff]
        %v915 = vld [vmem:[#allocation2 + $0xf9] sm:$0xff]
        %v916 = vld [vmem:[#allocation2 + $0x109] sm:$0xff]
        %v917 = vld [vmem:[#allocation2 + $0x111] sm:$0xff]
        %v918 = vld [vmem:[#allocation2 + $0x121] sm:$0xff]
        %v919 = vld [vmem:[#allocation2 + $0x129] sm:$0xff]
        %v920 = vld [vmem:[#allocation2 + $0x139] sm:$0xff]
        %v921 = vld [vmem:[#allocation2 + $0x141] sm:$0xff]
        %v922 = vld [vmem:[#allocation2 + $0x151] sm:$0xff]
        %v923 = vld [vmem:[#allocation2 + $0x159] sm:$0xff]
        %v924 = vld [vmem:[#allocation2 + $0x169] sm:$0xff]
        %v925 = vld [vmem:[#allocation2 + $0x171] sm:$0xff]
        %v926 = vld [vmem:[#allocation3] sm:$0xff]
        %v927 = vld [vmem:[#allocation3 + $0x8] sm:$0xff]
        %v928 = vld [vmem:[#allocation3 + $0x10] sm:$0xff]
        %v929 = vld [vmem:[#allocation3 + $0x18] sm:$0xff]
        %v930 = vld [vmem:[#allocation3 + $0x20] sm:$0xff]
        %v931 = vld [vmem:[#allocation3 + $0x28] sm:$0xff]
        %v932 = vld [vmem:[#allocation3 + $0x30] sm:$0xff]
        %v933 = vld [vmem:[#allocation3 + $0x38] sm:$0xff]
        %v934 = vld [vmem:[#allocation3 + $0x40] sm:$0xff]
        %v935 = vld [vmem:[#allocation3 + $0x48] sm:$0xff]
        %v936 = vld [vmem:[#allocation3 + $0x50] sm:$0xff]
        %v937 = vld [vmem:[#allocation3 + $0x58] sm:$0xff]
        %v938 = vld [vmem:[#allocation3 + $0x60] sm:$0xff]
        %v939 = vld [vmem:[#allocation3 + $0x68] sm:$0xff]
        %v940 = vld [vmem:[#allocation3 + $0x70] sm:$0xff]
        %v941 = vld [vmem:[#allocation3 + $0x78] sm:$0xff]
        %v942 = vld [vmem:[#allocation3 + $0x80] sm:$0xff]
        %v943 = vld [vmem:[#allocation3 + $0x88] sm:$0xff]
        %v944 = vld [vmem:[#allocation3 + $0x90] sm:$0xff]
        %v945 = vld [vmem:[#allocation3 + $0x98] sm:$0xff]
        %v946 = vld [vmem:[#allocation3 + $0xa0] sm:$0xff]
        %v947 = vld [vmem:[#allocation3 + $0xa8] sm:$0xff]
        %v948 = vld [vmem:[#allocation3 + $0xb0] sm:$0xff]
        %v949 = vld [vmem:[#allocation3 + $0xb8] sm:$0xff]
        %v950 = vld [vmem:[#allocation3 + $0xc0] sm:$0xff]
        %v951 = vld [vmem:[#allocation3 + $0xc8] sm:$0xff]
        %v952 = vld [vmem:[#allocation3 + $0xd0] sm:$0xff]
        %v953 = vld [vmem:[#allocation3 + $0xd8] sm:$0xff]
        %v954 = vld [vmem:[#allocation3 + $0xe0] sm:$0xff]
        %v955 = vld [vmem:[#allocation3 + $0xe8] sm:$0xff]
        %v956 = vld [vmem:[#allocation3 + $0xf0] sm:$0xff]
        %v957 = vld [vmem:[#allocation3 + $0xf8] sm:$0xff]
        %s958 = scalar_lea.vmem [#allocation7], 4
        %v959 = vld [vmem:[%s958] sm:$0xf]
        %v961 = vsel %vm297, %v894, 0
        %v964 = vsel %vm297, %v895, 0
        %v967 = vsel %vm297, %v896, 0
        %v970 = vsel %vm297, %v897, 0
        %v973 = vsel %vm297, %v898, 0
        %v976 = vsel %vm297, %v899, 0
        %v979 = vsel %vm297, %v900, 0
        %v982 = vsel %vm297, %v901, 0
        %v985 = vsel %vm297, %v902, 0
        %v988 = vsel %vm297, %v903, 0
        %v991 = vsel %vm297, %v904, 0
        %v994 = vsel %vm297, %v905, 0
        %v997 = vsel %vm297, %v906, 0
        %v1000 = vsel %vm297, %v907, 0
        %v1003 = vsel %vm297, %v908, 0
        %v1006 = vsel %vm297, %v909, 0
        %v1009 = vsel %vm297, %v910, 0
        %v1012 = vsel %vm297, %v911, 0
        %v1015 = vsel %vm297, %v912, 0
        %v1018 = vsel %vm297, %v913, 0
        %v1021 = vsel %vm297, %v914, 0
        %v1024 = vsel %vm297, %v915, 0
        %v1027 = vsel %vm297, %v916, 0
        %v1030 = vsel %vm297, %v917, 0
        %v1033 = vsel %vm297, %v918, 0
        %v1036 = vsel %vm297, %v919, 0
        %v1039 = vsel %vm297, %v920, 0
        %v1042 = vsel %vm297, %v921, 0
        %v1045 = vsel %vm297, %v922, 0
        %v1048 = vsel %vm297, %v923, 0
        %v1051 = vsel %vm297, %v924, 0
        %v1054 = vsel %vm297, %v925, 0
        %v1057 = vsel %vm601, %v959, 0
        %1059 = vmatprep.subr.mxu0 0.0
        %1060 = vmatpush1.msra.mxu0 %v1057
        %1061 = vmatprep.subr.mxu0 0.0
        %1062 = vmatpush1.msra.mxu0 0.0
        %1063 = vmatprep.subr.mxu0 0.0
        %1064 = vmatpush1.msra.mxu0 0.0
        %1065 = vmatprep.subr.mxu0 0.0
        %1066 = vmatpush1.msra.mxu0 0.0
        %1067 = vmatprep.subr.mxu0 0.0
        %1068 = vmatpush1.msra.mxu0 0.0
        %1069 = vmatprep.subr.mxu0 0.0
        %1070 = vmatpush1.msra.mxu0 0.0
        %1071 = vmatprep.subr.mxu0 0.0
        %1072 = vmatpush1.msra.mxu0 0.0
        %1073 = vmatprep.subr.mxu0 0.0
        %1074 = vmatpush1.msra.mxu0 0.0
        %1075 = vmatprep.subr.mxu0 0.0
        %1076 = vmatpush1.msra.mxu0 0.0
        %1077 = vmatprep.subr.mxu0 0.0
        %1078 = vmatpush1.msra.mxu0 0.0
        %1079 = vmatprep.subr.mxu0 0.0
        %1080 = vmatpush1.msra.mxu0 0.0
        %1081 = vmatprep.subr.mxu0 0.0
        %1082 = vmatpush1.msra.mxu0 0.0
        %1083 = vmatprep.subr.mxu0 0.0
        %1084 = vmatpush1.msra.mxu0 0.0
        %1085 = vmatprep.subr.mxu0 0.0
        %1086 = vmatpush1.msra.mxu0 0.0
        %1087 = vmatprep.subr.mxu0 0.0
        %1088 = vmatpush1.msra.mxu0 0.0
        %1089 = vmatprep.subr.mxu0 0.0
        %1090 = vmatpush1.msra.mxu0 0.0
        %1091 = vmatprep.subr.mxu0 0.0
        %1092 = vmatpush1.msra.mxu0 0.0
        %1093 = vmatprep.subr.mxu0 0.0
        %1094 = vmatpush1.msra.mxu0 0.0
        %1095 = vmatprep.subr.mxu0 0.0
        %1096 = vmatpush1.msra.mxu0 0.0
        %1097 = vmatprep.subr.mxu0 0.0
        %1098 = vmatpush1.msra.mxu0 0.0
        %1099 = vmatprep.subr.mxu0 0.0
        %1100 = vmatpush1.msra.mxu0 0.0
        %1101 = vmatprep.subr.mxu0 0.0
        %1102 = vmatpush1.msra.mxu0 0.0
        %1103 = vmatprep.subr.mxu0 0.0
        %1104 = vmatpush1.msra.mxu0 0.0
        %1105 = vmatprep.subr.mxu0 0.0
        %1106 = vmatpush1.msra.mxu0 0.0
        %1107 = vmatprep.subr.mxu0 0.0
        %1108 = vmatpush1.msra.mxu0 0.0
        %1109 = vmatprep.subr.mxu0 0.0
        %1110 = vmatpush1.msra.mxu0 0.0
        %1111 = vmatprep.subr.mxu0 0.0
        %1112 = vmatpush1.msra.mxu0 0.0
        %1113 = vmatprep.subr.mxu0 0.0
        %1114 = vmatpush1.msra.mxu0 0.0
        %1115 = vmatprep.subr.mxu0 0.0
        %1116 = vmatpush1.msra.mxu0 0.0
        %1117 = vmatprep.subr.mxu0 0.0
        %1118 = vmatpush1.msra.mxu0 0.0
        %1119 = vmatprep.subr.mxu0 0.0
        %1120 = vmatpush1.msra.mxu0 0.0
        %1121 = vmatprep.subr.mxu0 0.0
        %1122 = vmatpush1.msra.mxu0 0.0
        %1123 = vmatprep.mubr.f32.mxu0 0.0
        %1124 = vmatmul.mubr.f32.gmra.mrb[0].mxu0 %v961
        %v1125 = vpop.f32.mrb[0].mxu0
        %v1126 = vadd.f32 0.0, %v1125
        %v1127 = vpop.f32.mrb[0].mxu0
        %1128 = vmatprep.mubr.f32.mxu0 0.0
        %1129 = vmatmul.mubr.f32.gmra.mrb[0].mxu0 %v964
        %v1130 = vpop.f32.mrb[0].mxu0
        %v1131 = vadd.f32 0.0, %v1130
        %v1132 = vpop.f32.mrb[0].mxu0
        %1133 = vmatprep.mubr.f32.mxu0 0.0
        %1134 = vmatmul.mubr.f32.gmra.mrb[0].mxu0 %v967
        %v1135 = vpop.f32.mrb[0].mxu0
        %v1136 = vadd.f32 0.0, %v1135
        %v1137 = vpop.f32.mrb[0].mxu0
        %1138 = vmatprep.mubr.f32.mxu0 0.0
        %1139 = vmatmul.mubr.f32.gmra.mrb[0].mxu0 %v970
        %v1140 = vpop.f32.mrb[0].mxu0
        %v1141 = vadd.f32 0.0, %v1140
        %v1142 = vpop.f32.mrb[0].mxu0
        %1143 = vmatprep.mubr.f32.mxu0 0.0
        %1144 = vmatmul.mubr.f32.gmra.mrb[0].mxu0 %v973
        %v1145 = vpop.f32.mrb[0].mxu0
        %v1146 = vadd.f32 0.0, %v1145
        %v1147 = vpop.f32.mrb[0].mxu0
        %1148 = vmatprep.mubr.f32.mxu0 0.0
        %1149 = vmatmul.mubr.f32.gmra.mrb[0].mxu0 %v976
        %v1150 = vpop.f32.mrb[0].mxu0
        %v1151 = vadd.f32 0.0, %v1150
        %v1152 = vpop.f32.mrb[0].mxu0
        %1153 = vmatprep.mubr.f32.mxu0 0.0
        %1154 = vmatmul.mubr.f32.gmra.mrb[0].mxu0 %v979
        %v1155 = vpop.f32.mrb[0].mxu0
        %v1156 = vadd.f32 0.0, %v1155
        %v1157 = vpop.f32.mrb[0].mxu0
        %1158 = vmatprep.mubr.f32.mxu0 0.0
        %1159 = vmatmul.mubr.f32.gmra.mrb[0].mxu0 %v982
        %v1160 = vpop.f32.mrb[0].mxu0
        %v1161 = vadd.f32 0.0, %v1160
        %v1162 = vpop.f32.mrb[0].mxu0
        %1163 = vmatprep.mubr.f32.mxu0 0.0
        %1164 = vmatmul.mubr.f32.gmra.mrb[0].mxu0 %v985
        %v1165 = vpop.f32.mrb[0].mxu0
        %v1166 = vadd.f32 0.0, %v1165
        %v1167 = vpop.f32.mrb[0].mxu0
        %1168 = vmatprep.mubr.f32.mxu0 0.0
        %1169 = vmatmul.mubr.f32.gmra.mrb[0].mxu0 %v988
        %v1170 = vpop.f32.mrb[0].mxu0
        %v1171 = vadd.f32 0.0, %v1170
        %v1172 = vpop.f32.mrb[0].mxu0
        %1173 = vmatprep.mubr.f32.mxu0 0.0
        %1174 = vmatmul.mubr.f32.gmra.mrb[0].mxu0 %v991
        %v1175 = vpop.f32.mrb[0].mxu0
        %v1176 = vadd.f32 0.0, %v1175
        %v1177 = vpop.f32.mrb[0].mxu0
        %1178 = vmatprep.mubr.f32.mxu0 0.0
        %1179 = vmatmul.mubr.f32.gmra.mrb[0].mxu0 %v994
        %v1180 = vpop.f32.mrb[0].mxu0
        %v1181 = vadd.f32 0.0, %v1180
        %v1182 = vpop.f32.mrb[0].mxu0
        %1183 = vmatprep.mubr.f32.mxu0 0.0
        %1184 = vmatmul.mubr.f32.gmra.mrb[0].mxu0 %v997
        %v1185 = vpop.f32.mrb[0].mxu0
        %v1186 = vadd.f32 0.0, %v1185
        %v1187 = vpop.f32.mrb[0].mxu0
        %1188 = vmatprep.mubr.f32.mxu0 0.0
        %1189 = vmatmul.mubr.f32.gmra.mrb[0].mxu0 %v1000
        %v1190 = vpop.f32.mrb[0].mxu0
        %v1191 = vadd.f32 0.0, %v1190
        %v1192 = vpop.f32.mrb[0].mxu0
        %1193 = vmatprep.mubr.f32.mxu0 0.0
        %1194 = vmatmul.mubr.f32.gmra.mrb[0].mxu0 %v1003
        %v1195 = vpop.f32.mrb[0].mxu0
        %v1196 = vadd.f32 0.0, %v1195
        %v1197 = vpop.f32.mrb[0].mxu0
        %1198 = vmatprep.mubr.f32.mxu0 0.0
        %1199 = vmatmul.mubr.f32.gmra.mrb[0].mxu0 %v1006
        %v1200 = vpop.f32.mrb[0].mxu0
        %v1201 = vadd.f32 0.0, %v1200
        %v1202 = vpop.f32.mrb[0].mxu0
        %1203 = vmatprep.mubr.f32.mxu0 0.0
        %1204 = vmatmul.mubr.f32.gmra.mrb[0].mxu0 %v1009
        %v1205 = vpop.f32.mrb[0].mxu0
        %v1206 = vadd.f32 0.0, %v1205
        %v1207 = vpop.f32.mrb[0].mxu0
        %1208 = vmatprep.mubr.f32.mxu0 0.0
        %1209 = vmatmul.mubr.f32.gmra.mrb[0].mxu0 %v1012
        %v1210 = vpop.f32.mrb[0].mxu0
        %v1211 = vadd.f32 0.0, %v1210
        %v1212 = vpop.f32.mrb[0].mxu0
        %1213 = vmatprep.mubr.f32.mxu0 0.0
        %1214 = vmatmul.mubr.f32.gmra.mrb[0].mxu0 %v1015
        %v1215 = vpop.f32.mrb[0].mxu0
        %v1216 = vadd.f32 0.0, %v1215
        %v1217 = vpop.f32.mrb[0].mxu0
        %1218 = vmatprep.mubr.f32.mxu0 0.0
        %1219 = vmatmul.mubr.f32.gmra.mrb[0].mxu0 %v1018
        %v1220 = vpop.f32.mrb[0].mxu0
        %v1221 = vadd.f32 0.0, %v1220
        %v1222 = vpop.f32.mrb[0].mxu0
        %1223 = vmatprep.mubr.f32.mxu0 0.0
        %1224 = vmatmul.mubr.f32.gmra.mrb[0].mxu0 %v1021
        %v1225 = vpop.f32.mrb[0].mxu0
        %v1226 = vadd.f32 0.0, %v1225
        %v1227 = vpop.f32.mrb[0].mxu0
        %1228 = vmatprep.mubr.f32.mxu0 0.0
        %1229 = vmatmul.mubr.f32.gmra.mrb[0].mxu0 %v1024
        %v1230 = vpop.f32.mrb[0].mxu0
        %v1231 = vadd.f32 0.0, %v1230
        %v1232 = vpop.f32.mrb[0].mxu0
        %1233 = vmatprep.mubr.f32.mxu0 0.0
        %1234 = vmatmul.mubr.f32.gmra.mrb[0].mxu0 %v1027
        %v1235 = vpop.f32.mrb[0].mxu0
        %v1236 = vadd.f32 0.0, %v1235
        %v1237 = vpop.f32.mrb[0].mxu0
        %1238 = vmatprep.mubr.f32.mxu0 0.0
        %1239 = vmatmul.mubr.f32.gmra.mrb[0].mxu0 %v1030
        %v1240 = vpop.f32.mrb[0].mxu0
        %v1241 = vadd.f32 0.0, %v1240
        %v1242 = vpop.f32.mrb[0].mxu0
        %1243 = vmatprep.mubr.f32.mxu0 0.0
        %1244 = vmatmul.mubr.f32.gmra.mrb[0].mxu0 %v1033
        %v1245 = vpop.f32.mrb[0].mxu0
        %v1246 = vadd.f32 0.0, %v1245
        %v1247 = vpop.f32.mrb[0].mxu0
        %1248 = vmatprep.mubr.f32.mxu0 0.0
        %1249 = vmatmul.mubr.f32.gmra.mrb[0].mxu0 %v1036
        %v1250 = vpop.f32.mrb[0].mxu0
        %v1251 = vadd.f32 0.0, %v1250
        %v1252 = vpop.f32.mrb[0].mxu0
        %1253 = vmatprep.mubr.f32.mxu0 0.0
        %1254 = vmatmul.mubr.f32.gmra.mrb[0].mxu0 %v1039
        %v1255 = vpop.f32.mrb[0].mxu0
        %v1256 = vadd.f32 0.0, %v1255
        %v1257 = vpop.f32.mrb[0].mxu0
        %1258 = vmatprep.mubr.f32.mxu0 0.0
        %1259 = vmatmul.mubr.f32.gmra.mrb[0].mxu0 %v1042
        %v1260 = vpop.f32.mrb[0].mxu0
        %v1261 = vadd.f32 0.0, %v1260
        %v1262 = vpop.f32.mrb[0].mxu0
        %1263 = vmatprep.mubr.f32.mxu0 0.0
        %1264 = vmatmul.mubr.f32.gmra.mrb[0].mxu0 %v1045
        %v1265 = vpop.f32.mrb[0].mxu0
        %v1266 = vadd.f32 0.0, %v1265
        %v1267 = vpop.f32.mrb[0].mxu0
        %1268 = vmatprep.mubr.f32.mxu0 0.0
        %1269 = vmatmul.mubr.f32.gmra.mrb[0].mxu0 %v1048
        %v1270 = vpop.f32.mrb[0].mxu0
        %v1271 = vadd.f32 0.0, %v1270
        %v1272 = vpop.f32.mrb[0].mxu0
        %1273 = vmatprep.mubr.f32.mxu0 0.0
        %1274 = vmatmul.mubr.f32.gmra.mrb[0].mxu0 %v1051
        %v1275 = vpop.f32.mrb[0].mxu0
        %v1276 = vadd.f32 0.0, %v1275
        %v1277 = vpop.f32.mrb[0].mxu0
        %1278 = vmatprep.mubr.f32.mxu0 0.0
        %1279 = vmatmul.mubr.f32.gmra.mrb[0].mxu0 %v1054
        %v1280 = vpop.f32.mrb[0].mxu0
        %v1281 = vadd.f32 0.0, %v1280
        %v1282 = vpop.f32.mrb[0].mxu0
        %1283 = vdwg.mxu0
        %v1284 = vadd.f32 %v926, %v1126
        %v1285 = vadd.f32 %v927, %v1131
        %v1286 = vadd.f32 %v928, %v1136
        %v1287 = vadd.f32 %v929, %v1141
        %v1288 = vadd.f32 %v930, %v1146
        %v1289 = vadd.f32 %v931, %v1151
        %v1290 = vadd.f32 %v932, %v1156
        %v1291 = vadd.f32 %v933, %v1161
        %v1292 = vadd.f32 %v934, %v1166
        %v1293 = vadd.f32 %v935, %v1171
        %v1294 = vadd.f32 %v936, %v1176
        %v1295 = vadd.f32 %v937, %v1181
        %v1296 = vadd.f32 %v938, %v1186
        %v1297 = vadd.f32 %v939, %v1191
        %v1298 = vadd.f32 %v940, %v1196
        %v1299 = vadd.f32 %v941, %v1201
        %v1300 = vadd.f32 %v942, %v1206
        %v1301 = vadd.f32 %v943, %v1211
        %v1302 = vadd.f32 %v944, %v1216
        %v1303 = vadd.f32 %v945, %v1221
        %v1304 = vadd.f32 %v946, %v1226
        %v1305 = vadd.f32 %v947, %v1231
        %v1306 = vadd.f32 %v948, %v1236
        %v1307 = vadd.f32 %v949, %v1241
        %v1308 = vadd.f32 %v950, %v1246
        %v1309 = vadd.f32 %v951, %v1251
        %v1310 = vadd.f32 %v952, %v1256
        %v1311 = vadd.f32 %v953, %v1261
        %v1312 = vadd.f32 %v954, %v1266
        %v1313 = vadd.f32 %v955, %v1271
        %v1314 = vadd.f32 %v956, %v1276
        %v1315 = vadd.f32 %v957, %v1281
        %1316 = vst.msk [vmem:[#allocation3] sm:$0xff] %vm297, %v1284
        %1317 = vst.msk [vmem:[#allocation3 + $0x8] sm:$0xff] %vm297, %v1285
        %1318 = vst.msk [vmem:[#allocation3 + $0x10] sm:$0xff] %vm297, %v1286
        %1319 = vst.msk [vmem:[#allocation3 + $0x18] sm:$0xff] %vm297, %v1287
        %1320 = vst.msk [vmem:[#allocation3 + $0x20] sm:$0xff] %vm297, %v1288
        %1321 = vst.msk [vmem:[#allocation3 + $0x28] sm:$0xff] %vm297, %v1289
        %1322 = vst.msk [vmem:[#allocation3 + $0x30] sm:$0xff] %vm297, %v1290
        %1323 = vst.msk [vmem:[#allocation3 + $0x38] sm:$0xff] %vm297, %v1291
        %1324 = vst.msk [vmem:[#allocation3 + $0x40] sm:$0xff] %vm297, %v1292
        %1325 = vst.msk [vmem:[#allocation3 + $0x48] sm:$0xff] %vm297, %v1293
        %1326 = vst.msk [vmem:[#allocation3 + $0x50] sm:$0xff] %vm297, %v1294
        %1327 = vst.msk [vmem:[#allocation3 + $0x58] sm:$0xff] %vm297, %v1295
        %1328 = vst.msk [vmem:[#allocation3 + $0x60] sm:$0xff] %vm297, %v1296
        %1329 = vst.msk [vmem:[#allocation3 + $0x68] sm:$0xff] %vm297, %v1297
        %1330 = vst.msk [vmem:[#allocation3 + $0x70] sm:$0xff] %vm297, %v1298
        %1331 = vst.msk [vmem:[#allocation3 + $0x78] sm:$0xff] %vm297, %v1299
        %1332 = vst.msk [vmem:[#allocation3 + $0x80] sm:$0xff] %vm297, %v1300
        %1333 = vst.msk [vmem:[#allocation3 + $0x88] sm:$0xff] %vm297, %v1301
        %1334 = vst.msk [vmem:[#allocation3 + $0x90] sm:$0xff] %vm297, %v1302
        %1335 = vst.msk [vmem:[#allocation3 + $0x98] sm:$0xff] %vm297, %v1303
        %1336 = vst.msk [vmem:[#allocation3 + $0xa0] sm:$0xff] %vm297, %v1304
        %1337 = vst.msk [vmem:[#allocation3 + $0xa8] sm:$0xff] %vm297, %v1305
        %1338 = vst.msk [vmem:[#allocation3 + $0xb0] sm:$0xff] %vm297, %v1306
        %1339 = vst.msk [vmem:[#allocation3 + $0xb8] sm:$0xff] %vm297, %v1307
        %1340 = vst.msk [vmem:[#allocation3 + $0xc0] sm:$0xff] %vm297, %v1308
        %1341 = vst.msk [vmem:[#allocation3 + $0xc8] sm:$0xff] %vm297, %v1309
        %1342 = vst.msk [vmem:[#allocation3 + $0xd0] sm:$0xff] %vm297, %v1310
        %1343 = vst.msk [vmem:[#allocation3 + $0xd8] sm:$0xff] %vm297, %v1311
        %1344 = vst.msk [vmem:[#allocation3 + $0xe0] sm:$0xff] %vm297, %v1312
        %1345 = vst.msk [vmem:[#allocation3 + $0xe8] sm:$0xff] %vm297, %v1313
        %1346 = vst.msk [vmem:[#allocation3 + $0xf0] sm:$0xff] %vm297, %v1314
        %1347 = vst.msk [vmem:[#allocation3 + $0xf8] sm:$0xff] %vm297, %v1315
        %v1348 = vld [vmem:[#allocation2 + $0x2] sm:$0xff]
        %v1349 = vld [vmem:[#allocation2 + $0xa] sm:$0xff]
        %v1350 = vld [vmem:[#allocation2 + $0x1a] sm:$0xff]
        %v1351 = vld [vmem:[#allocation2 + $0x22] sm:$0xff]
        %v1352 = vld [vmem:[#allocation2 + $0x32] sm:$0xff]
        %v1353 = vld [vmem:[#allocation2 + $0x3a] sm:$0xff]
        %v1354 = vld [vmem:[#allocation2 + $0x4a] sm:$0xff]
        %v1355 = vld [vmem:[#allocation2 + $0x52] sm:$0xff]
        %v1356 = vld [vmem:[#allocation2 + $0x62] sm:$0xff]
        %v1357 = vld [vmem:[#allocation2 + $0x6a] sm:$0xff]
        %v1358 = vld [vmem:[#allocation2 + $0x7a] sm:$0xff]
        %v1359 = vld [vmem:[#allocation2 + $0x82] sm:$0xff]
        %v1360 = vld [vmem:[#allocation2 + $0x92] sm:$0xff]
        %v1361 = vld [vmem:[#allocation2 + $0x9a] sm:$0xff]
        %v1362 = vld [vmem:[#allocation2 + $0xaa] sm:$0xff]
        %v1363 = vld [vmem:[#allocation2 + $0xb2] sm:$0xff]
        %v1364 = vld [vmem:[#allocation2 + $0xc2] sm:$0xff]
        %v1365 = vld [vmem:[#allocation2 + $0xca] sm:$0xff]
        %v1366 = vld [vmem:[#allocation2 + $0xda] sm:$0xff]
        %v1367 = vld [vmem:[#allocation2 + $0xe2] sm:$0xff]
        %v1368 = vld [vmem:[#allocation2 + $0xf2] sm:$0xff]
        %v1369 = vld [vmem:[#allocation2 + $0xfa] sm:$0xff]
        %v1370 = vld [vmem:[#allocation2 + $0x10a] sm:$0xff]
        %v1371 = vld [vmem:[#allocation2 + $0x112] sm:$0xff]
        %v1372 = vld [vmem:[#allocation2 + $0x122] sm:$0xff]
        %v1373 = vld [vmem:[#allocation2 + $0x12a] sm:$0xff]
        %v1374 = vld [vmem:[#allocation2 + $0x13a] sm:$0xff]
        %v1375 = vld [vmem:[#allocation2 + $0x142] sm:$0xff]
        %v1376 = vld [vmem:[#allocation2 + $0x152] sm:$0xff]
        %v1377 = vld [vmem:[#allocation2 + $0x15a] sm:$0xff]
        %v1378 = vld [vmem:[#allocation2 + $0x16a] sm:$0xff]
        %v1379 = vld [vmem:[#allocation2 + $0x172] sm:$0xff]
        %v1380 = vld [vmem:[#allocation3] sm:$0xff]
        %v1381 = vld [vmem:[#allocation3 + $0x8] sm:$0xff]
        %v1382 = vld [vmem:[#allocation3 + $0x10] sm:$0xff]
        %v1383 = vld [vmem:[#allocation3 + $0x18] sm:$0xff]
        %v1384 = vld [vmem:[#allocation3 + $0x20] sm:$0xff]
        %v1385 = vld [vmem:[#allocation3 + $0x28] sm:$0xff]
        %v1386 = vld [vmem:[#allocation3 + $0x30] sm:$0xff]
        %v1387 = vld [vmem:[#allocation3 + $0x38] sm:$0xff]
        %v1388 = vld [vmem:[#allocation3 + $0x40] sm:$0xff]
        %v1389 = vld [vmem:[#allocation3 + $0x48] sm:$0xff]
        %v1390 = vld [vmem:[#allocation3 + $0x50] sm:$0xff]
        %v1391 = vld [vmem:[#allocation3 + $0x58] sm:$0xff]
        %v1392 = vld [vmem:[#allocation3 + $0x60] sm:$0xff]
        %v1393 = vld [vmem:[#allocation3 + $0x68] sm:$0xff]
        %v1394 = vld [vmem:[#allocation3 + $0x70] sm:$0xff]
        %v1395 = vld [vmem:[#allocation3 + $0x78] sm:$0xff]
        %v1396 = vld [vmem:[#allocation3 + $0x80] sm:$0xff]
        %v1397 = vld [vmem:[#allocation3 + $0x88] sm:$0xff]
        %v1398 = vld [vmem:[#allocation3 + $0x90] sm:$0xff]
        %v1399 = vld [vmem:[#allocation3 + $0x98] sm:$0xff]
        %v1400 = vld [vmem:[#allocation3 + $0xa0] sm:$0xff]
        %v1401 = vld [vmem:[#allocation3 + $0xa8] sm:$0xff]
        %v1402 = vld [vmem:[#allocation3 + $0xb0] sm:$0xff]
        %v1403 = vld [vmem:[#allocation3 + $0xb8] sm:$0xff]
        %v1404 = vld [vmem:[#allocation3 + $0xc0] sm:$0xff]
        %v1405 = vld [vmem:[#allocation3 + $0xc8] sm:$0xff]
        %v1406 = vld [vmem:[#allocation3 + $0xd0] sm:$0xff]
        %v1407 = vld [vmem:[#allocation3 + $0xd8] sm:$0xff]
        %v1408 = vld [vmem:[#allocation3 + $0xe0] sm:$0xff]
        %v1409 = vld [vmem:[#allocation3 + $0xe8] sm:$0xff]
        %v1410 = vld [vmem:[#allocation3 + $0xf0] sm:$0xff]
        %v1411 = vld [vmem:[#allocation3 + $0xf8] sm:$0xff]
        %s1412 = scalar_lea.vmem [#allocation7], 8
        %v1413 = vld [vmem:[%s1412] sm:$0xf]
        %v1415 = vsel %vm297, %v1348, 0
        %v1418 = vsel %vm297, %v1349, 0
        %v1421 = vsel %vm297, %v1350, 0
        %v1424 = vsel %vm297, %v1351, 0
        %v1427 = vsel %vm297, %v1352, 0
        %v1430 = vsel %vm297, %v1353, 0
        %v1433 = vsel %vm297, %v1354, 0
        %v1436 = vsel %vm297, %v1355, 0
        %v1439 = vsel %vm297, %v1356, 0
        %v1442 = vsel %vm297, %v1357, 0
        %v1445 = vsel %vm297, %v1358, 0
        %v1448 = vsel %vm297, %v1359, 0
        %v1451 = vsel %vm297, %v1360, 0
        %v1454 = vsel %vm297, %v1361, 0
        %v1457 = vsel %vm297, %v1362, 0
        %v1460 = vsel %vm297, %v1363, 0
        %v1463 = vsel %vm297, %v1364, 0
        %v1466 = vsel %vm297, %v1365, 0
        %v1469 = vsel %vm297, %v1366, 0
        %v1472 = vsel %vm297, %v1367, 0
        %v1475 = vsel %vm297, %v1368, 0
        %v1478 = vsel %vm297, %v1369, 0
        %v1481 = vsel %vm297, %v1370, 0
        %v1484 = vsel %vm297, %v1371, 0
        %v1487 = vsel %vm297, %v1372, 0
        %v1490 = vsel %vm297, %v1373, 0
        %v1493 = vsel %vm297, %v1374, 0
        %v1496 = vsel %vm297, %v1375, 0
        %v1499 = vsel %vm297, %v1376, 0
        %v1502 = vsel %vm297, %v1377, 0
        %v1505 = vsel %vm297, %v1378, 0
        %v1508 = vsel %vm297, %v1379, 0
        %v1511 = vsel %vm601, %v1413, 0
        %1513 = vmatprep.subr.mxu0 0.0
        %1514 = vmatpush1.msra.mxu0 %v1511
        %1515 = vmatprep.subr.mxu0 0.0
        %1516 = vmatpush1.msra.mxu0 0.0
        %1517 = vmatprep.subr.mxu0 0.0
        %1518 = vmatpush1.msra.mxu0 0.0
        %1519 = vmatprep.subr.mxu0 0.0
        %1520 = vmatpush1.msra.mxu0 0.0
        %1521 = vmatprep.subr.mxu0 0.0
        %1522 = vmatpush1.msra.mxu0 0.0
        %1523 = vmatprep.subr.mxu0 0.0
        %1524 = vmatpush1.msra.mxu0 0.0
        %1525 = vmatprep.subr.mxu0 0.0
        %1526 = vmatpush1.msra.mxu0 0.0
        %1527 = vmatprep.subr.mxu0 0.0
        %1528 = vmatpush1.msra.mxu0 0.0
        %1529 = vmatprep.subr.mxu0 0.0
        %1530 = vmatpush1.msra.mxu0 0.0
        %1531 = vmatprep.subr.mxu0 0.0
        %1532 = vmatpush1.msra.mxu0 0.0
        %1533 = vmatprep.subr.mxu0 0.0
        %1534 = vmatpush1.msra.mxu0 0.0
        %1535 = vmatprep.subr.mxu0 0.0
        %1536 = vmatpush1.msra.mxu0 0.0
        %1537 = vmatprep.subr.mxu0 0.0
        %1538 = vmatpush1.msra.mxu0 0.0
        %1539 = vmatprep.subr.mxu0 0.0
        %1540 = vmatpush1.msra.mxu0 0.0
        %1541 = vmatprep.subr.mxu0 0.0
        %1542 = vmatpush1.msra.mxu0 0.0
        %1543 = vmatprep.subr.mxu0 0.0
        %1544 = vmatpush1.msra.mxu0 0.0
        %1545 = vmatprep.subr.mxu0 0.0
        %1546 = vmatpush1.msra.mxu0 0.0
        %1547 = vmatprep.subr.mxu0 0.0
        %1548 = vmatpush1.msra.mxu0 0.0
        %1549 = vmatprep.subr.mxu0 0.0
        %1550 = vmatpush1.msra.mxu0 0.0
        %1551 = vmatprep.subr.mxu0 0.0
        %1552 = vmatpush1.msra.mxu0 0.0
        %1553 = vmatprep.subr.mxu0 0.0
        %1554 = vmatpush1.msra.mxu0 0.0
        %1555 = vmatprep.subr.mxu0 0.0
        %1556 = vmatpush1.msra.mxu0 0.0
        %1557 = vmatprep.subr.mxu0 0.0
        %1558 = vmatpush1.msra.mxu0 0.0
        %1559 = vmatprep.subr.mxu0 0.0
        %1560 = vmatpush1.msra.mxu0 0.0
        %1561 = vmatprep.subr.mxu0 0.0
        %1562 = vmatpush1.msra.mxu0 0.0
        %1563 = vmatprep.subr.mxu0 0.0
        %1564 = vmatpush1.msra.mxu0 0.0
        %1565 = vmatprep.subr.mxu0 0.0
        %1566 = vmatpush1.msra.mxu0 0.0
        %1567 = vmatprep.subr.mxu0 0.0
        %1568 = vmatpush1.msra.mxu0 0.0
        %1569 = vmatprep.subr.mxu0 0.0
        %1570 = vmatpush1.msra.mxu0 0.0
        %1571 = vmatprep.subr.mxu0 0.0
        %1572 = vmatpush1.msra.mxu0 0.0
        %1573 = vmatprep.subr.mxu0 0.0
        %1574 = vmatpush1.msra.mxu0 0.0
        %1575 = vmatprep.subr.mxu0 0.0
        %1576 = vmatpush1.msra.mxu0 0.0
        %1577 = vmatprep.mubr.f32.mxu0 0.0
        %1578 = vmatmul.mubr.f32.gmra.mrb[0].mxu0 %v1415
        %v1579 = vpop.f32.mrb[0].mxu0
        %v1580 = vadd.f32 0.0, %v1579
        %v1581 = vpop.f32.mrb[0].mxu0
        %1582 = vmatprep.mubr.f32.mxu0 0.0
        %1583 = vmatmul.mubr.f32.gmra.mrb[0].mxu0 %v1418
        %v1584 = vpop.f32.mrb[0].mxu0
        %v1585 = vadd.f32 0.0, %v1584
        %v1586 = vpop.f32.mrb[0].mxu0
        %1587 = vmatprep.mubr.f32.mxu0 0.0
        %1588 = vmatmul.mubr.f32.gmra.mrb[0].mxu0 %v1421
        %v1589 = vpop.f32.mrb[0].mxu0
        %v1590 = vadd.f32 0.0, %v1589
        %v1591 = vpop.f32.mrb[0].mxu0
        %1592 = vmatprep.mubr.f32.mxu0 0.0
        %1593 = vmatmul.mubr.f32.gmra.mrb[0].mxu0 %v1424
        %v1594 = vpop.f32.mrb[0].mxu0
        %v1595 = vadd.f32 0.0, %v1594
        %v1596 = vpop.f32.mrb[0].mxu0
        %1597 = vmatprep.mubr.f32.mxu0 0.0
        %1598 = vmatmul.mubr.f32.gmra.mrb[0].mxu0 %v1427
        %v1599 = vpop.f32.mrb[0].mxu0
        %v1600 = vadd.f32 0.0, %v1599
        %v1601 = vpop.f32.mrb[0].mxu0
        %1602 = vmatprep.mubr.f32.mxu0 0.0
        %1603 = vmatmul.mubr.f32.gmra.mrb[0].mxu0 %v1430
        %v1604 = vpop.f32.mrb[0].mxu0
        %v1605 = vadd.f32 0.0, %v1604
        %v1606 = vpop.f32.mrb[0].mxu0
        %1607 = vmatprep.mubr.f32.mxu0 0.0
        %1608 = vmatmul.mubr.f32.gmra.mrb[0].mxu0 %v1433
        %v1609 = vpop.f32.mrb[0].mxu0
        %v1610 = vadd.f32 0.0, %v1609
        %v1611 = vpop.f32.mrb[0].mxu0
        %1612 = vmatprep.mubr.f32.mxu0 0.0
        %1613 = vmatmul.mubr.f32.gmra.mrb[0].mxu0 %v1436
        %v1614 = vpop.f32.mrb[0].mxu0
        %v1615 = vadd.f32 0.0, %v1614
        %v1616 = vpop.f32.mrb[0].mxu0
        %1617 = vmatprep.mubr.f32.mxu0 0.0
        %1618 = vmatmul.mubr.f32.gmra.mrb[0].mxu0 %v1439
        %v1619 = vpop.f32.mrb[0].mxu0
        %v1620 = vadd.f32 0.0, %v1619
        %v1621 = vpop.f32.mrb[0].mxu0
        %1622 = vmatprep.mubr.f32.mxu0 0.0
        %1623 = vmatmul.mubr.f32.gmra.mrb[0].mxu0 %v1442
        %v1624 = vpop.f32.mrb[0].mxu0
        %v1625 = vadd.f32 0.0, %v1624
        %v1626 = vpop.f32.mrb[0].mxu0
        %1627 = vmatprep.mubr.f32.mxu0 0.0
        %1628 = vmatmul.mubr.f32.gmra.mrb[0].mxu0 %v1445
        %v1629 = vpop.f32.mrb[0].mxu0
        %v1630 = vadd.f32 0.0, %v1629
        %v1631 = vpop.f32.mrb[0].mxu0
        %1632 = vmatprep.mubr.f32.mxu0 0.0
        %1633 = vmatmul.mubr.f32.gmra.mrb[0].mxu0 %v1448
        %v1634 = vpop.f32.mrb[0].mxu0
        %v1635 = vadd.f32 0.0, %v1634
        %v1636 = vpop.f32.mrb[0].mxu0
        %1637 = vmatprep.mubr.f32.mxu0 0.0
        %1638 = vmatmul.mubr.f32.gmra.mrb[0].mxu0 %v1451
        %v1639 = vpop.f32.mrb[0].mxu0
        %v1640 = vadd.f32 0.0, %v1639
        %v1641 = vpop.f32.mrb[0].mxu0
        %1642 = vmatprep.mubr.f32.mxu0 0.0
        %1643 = vmatmul.mubr.f32.gmra.mrb[0].mxu0 %v1454
        %v1644 = vpop.f32.mrb[0].mxu0
        %v1645 = vadd.f32 0.0, %v1644
        %v1646 = vpop.f32.mrb[0].mxu0
        %1647 = vmatprep.mubr.f32.mxu0 0.0
        %1648 = vmatmul.mubr.f32.gmra.mrb[0].mxu0 %v1457
        %v1649 = vpop.f32.mrb[0].mxu0
        %v1650 = vadd.f32 0.0, %v1649
        %v1651 = vpop.f32.mrb[0].mxu0
        %1652 = vmatprep.mubr.f32.mxu0 0.0
        %1653 = vmatmul.mubr.f32.gmra.mrb[0].mxu0 %v1460
        %v1654 = vpop.f32.mrb[0].mxu0
        %v1655 = vadd.f32 0.0, %v1654
        %v1656 = vpop.f32.mrb[0].mxu0
        %1657 = vmatprep.mubr.f32.mxu0 0.0
        %1658 = vmatmul.mubr.f32.gmra.mrb[0].mxu0 %v1463
        %v1659 = vpop.f32.mrb[0].mxu0
        %v1660 = vadd.f32 0.0, %v1659
        %v1661 = vpop.f32.mrb[0].mxu0
        %1662 = vmatprep.mubr.f32.mxu0 0.0
        %1663 = vmatmul.mubr.f32.gmra.mrb[0].mxu0 %v1466
        %v1664 = vpop.f32.mrb[0].mxu0
        %v1665 = vadd.f32 0.0, %v1664
        %v1666 = vpop.f32.mrb[0].mxu0
        %1667 = vmatprep.mubr.f32.mxu0 0.0
        %1668 = vmatmul.mubr.f32.gmra.mrb[0].mxu0 %v1469
        %v1669 = vpop.f32.mrb[0].mxu0
        %v1670 = vadd.f32 0.0, %v1669
        %v1671 = vpop.f32.mrb[0].mxu0
        %1672 = vmatprep.mubr.f32.mxu0 0.0
        %1673 = vmatmul.mubr.f32.gmra.mrb[0].mxu0 %v1472
        %v1674 = vpop.f32.mrb[0].mxu0
        %v1675 = vadd.f32 0.0, %v1674
        %v1676 = vpop.f32.mrb[0].mxu0
        %1677 = vmatprep.mubr.f32.mxu0 0.0
        %1678 = vmatmul.mubr.f32.gmra.mrb[0].mxu0 %v1475
        %v1679 = vpop.f32.mrb[0].mxu0
        %v1680 = vadd.f32 0.0, %v1679
        %v1681 = vpop.f32.mrb[0].mxu0
        %1682 = vmatprep.mubr.f32.mxu0 0.0
        %1683 = vmatmul.mubr.f32.gmra.mrb[0].mxu0 %v1478
        %v1684 = vpop.f32.mrb[0].mxu0
        %v1685 = vadd.f32 0.0, %v1684
        %v1686 = vpop.f32.mrb[0].mxu0
        %1687 = vmatprep.mubr.f32.mxu0 0.0
        %1688 = vmatmul.mubr.f32.gmra.mrb[0].mxu0 %v1481
        %v1689 = vpop.f32.mrb[0].mxu0
        %v1690 = vadd.f32 0.0, %v1689
        %v1691 = vpop.f32.mrb[0].mxu0
        %1692 = vmatprep.mubr.f32.mxu0 0.0
        %1693 = vmatmul.mubr.f32.gmra.mrb[0].mxu0 %v1484
        %v1694 = vpop.f32.mrb[0].mxu0
        %v1695 = vadd.f32 0.0, %v1694
        %v1696 = vpop.f32.mrb[0].mxu0
        %1697 = vmatprep.mubr.f32.mxu0 0.0
        %1698 = vmatmul.mubr.f32.gmra.mrb[0].mxu0 %v1487
        %v1699 = vpop.f32.mrb[0].mxu0
        %v1700 = vadd.f32 0.0, %v1699
        %v1701 = vpop.f32.mrb[0].mxu0
        %1702 = vmatprep.mubr.f32.mxu0 0.0
        %1703 = vmatmul.mubr.f32.gmra.mrb[0].mxu0 %v1490
        %v1704 = vpop.f32.mrb[0].mxu0
        %v1705 = vadd.f32 0.0, %v1704
        %v1706 = vpop.f32.mrb[0].mxu0
        %1707 = vmatprep.mubr.f32.mxu0 0.0
        %1708 = vmatmul.mubr.f32.gmra.mrb[0].mxu0 %v1493
        %v1709 = vpop.f32.mrb[0].mxu0
        %v1710 = vadd.f32 0.0, %v1709
        %v1711 = vpop.f32.mrb[0].mxu0
        %1712 = vmatprep.mubr.f32.mxu0 0.0
        %1713 = vmatmul.mubr.f32.gmra.mrb[0].mxu0 %v1496
        %v1714 = vpop.f32.mrb[0].mxu0
        %v1715 = vadd.f32 0.0, %v1714
        %v1716 = vpop.f32.mrb[0].mxu0
        %1717 = vmatprep.mubr.f32.mxu0 0.0
        %1718 = vmatmul.mubr.f32.gmra.mrb[0].mxu0 %v1499
        %v1719 = vpop.f32.mrb[0].mxu0
        %v1720 = vadd.f32 0.0, %v1719
        %v1721 = vpop.f32.mrb[0].mxu0
        %1722 = vmatprep.mubr.f32.mxu0 0.0
        %1723 = vmatmul.mubr.f32.gmra.mrb[0].mxu0 %v1502
        %v1724 = vpop.f32.mrb[0].mxu0
        %v1725 = vadd.f32 0.0, %v1724
        %v1726 = vpop.f32.mrb[0].mxu0
        %1727 = vmatprep.mubr.f32.mxu0 0.0
        %1728 = vmatmul.mubr.f32.gmra.mrb[0].mxu0 %v1505
        %v1729 = vpop.f32.mrb[0].mxu0
        %v1730 = vadd.f32 0.0, %v1729
        %v1731 = vpop.f32.mrb[0].mxu0
        %1732 = vmatprep.mubr.f32.mxu0 0.0
        %1733 = vmatmul.mubr.f32.gmra.mrb[0].mxu0 %v1508
        %v1734 = vpop.f32.mrb[0].mxu0
        %v1735 = vadd.f32 0.0, %v1734
        %v1736 = vpop.f32.mrb[0].mxu0
        %1737 = vdwg.mxu0
        %v1738 = vadd.f32 %v1380, %v1580
        %v1739 = vadd.f32 %v1381, %v1585
        %v1740 = vadd.f32 %v1382, %v1590
        %v1741 = vadd.f32 %v1383, %v1595
        %v1742 = vadd.f32 %v1384, %v1600
        %v1743 = vadd.f32 %v1385, %v1605
        %v1744 = vadd.f32 %v1386, %v1610
        %v1745 = vadd.f32 %v1387, %v1615
        %v1746 = vadd.f32 %v1388, %v1620
        %v1747 = vadd.f32 %v1389, %v1625
        %v1748 = vadd.f32 %v1390, %v1630
        %v1749 = vadd.f32 %v1391, %v1635
        %v1750 = vadd.f32 %v1392, %v1640
        %v1751 = vadd.f32 %v1393, %v1645
        %v1752 = vadd.f32 %v1394, %v1650
        %v1753 = vadd.f32 %v1395, %v1655
        %v1754 = vadd.f32 %v1396, %v1660
        %v1755 = vadd.f32 %v1397, %v1665
        %v1756 = vadd.f32 %v1398, %v1670
        %v1757 = vadd.f32 %v1399, %v1675
        %v1758 = vadd.f32 %v1400, %v1680
        %v1759 = vadd.f32 %v1401, %v1685
        %v1760 = vadd.f32 %v1402, %v1690
        %v1761 = vadd.f32 %v1403, %v1695
        %v1762 = vadd.f32 %v1404, %v1700
        %v1763 = vadd.f32 %v1405, %v1705
        %v1764 = vadd.f32 %v1406, %v1710
        %v1765 = vadd.f32 %v1407, %v1715
        %v1766 = vadd.f32 %v1408, %v1720
        %v1767 = vadd.f32 %v1409, %v1725
        %v1768 = vadd.f32 %v1410, %v1730
        %v1769 = vadd.f32 %v1411, %v1735
        %1770 = vst.msk [vmem:[#allocation3] sm:$0xff] %vm297, %v1738
        %1771 = vst.msk [vmem:[#allocation3 + $0x8] sm:$0xff] %vm297, %v1739
        %1772 = vst.msk [vmem:[#allocation3 + $0x10] sm:$0xff] %vm297, %v1740
        %1773 = vst.msk [vmem:[#allocation3 + $0x18] sm:$0xff] %vm297, %v1741
        %1774 = vst.msk [vmem:[#allocation3 + $0x20] sm:$0xff] %vm297, %v1742
        %1775 = vst.msk [vmem:[#allocation3 + $0x28] sm:$0xff] %vm297, %v1743
        %1776 = vst.msk [vmem:[#allocation3 + $0x30] sm:$0xff] %vm297, %v1744
        %1777 = vst.msk [vmem:[#allocation3 + $0x38] sm:$0xff] %vm297, %v1745
        %1778 = vst.msk [vmem:[#allocation3 + $0x40] sm:$0xff] %vm297, %v1746
        %1779 = vst.msk [vmem:[#allocation3 + $0x48] sm:$0xff] %vm297, %v1747
        %1780 = vst.msk [vmem:[#allocation3 + $0x50] sm:$0xff] %vm297, %v1748
        %1781 = vst.msk [vmem:[#allocation3 + $0x58] sm:$0xff] %vm297, %v1749
        %1782 = vst.msk [vmem:[#allocation3 + $0x60] sm:$0xff] %vm297, %v1750
        %1783 = vst.msk [vmem:[#allocation3 + $0x68] sm:$0xff] %vm297, %v1751
        %1784 = vst.msk [vmem:[#allocation3 + $0x70] sm:$0xff] %vm297, %v1752
        %1785 = vst.msk [vmem:[#allocation3 + $0x78] sm:$0xff] %vm297, %v1753
        %1786 = vst.msk [vmem:[#allocation3 + $0x80] sm:$0xff] %vm297, %v1754
        %1787 = vst.msk [vmem:[#allocation3 + $0x88] sm:$0xff] %vm297, %v1755
        %1788 = vst.msk [vmem:[#allocation3 + $0x90] sm:$0xff] %vm297, %v1756
        %1789 = vst.msk [vmem:[#allocation3 + $0x98] sm:$0xff] %vm297, %v1757
        %1790 = vst.msk [vmem:[#allocation3 + $0xa0] sm:$0xff] %vm297, %v1758
        %1791 = vst.msk [vmem:[#allocation3 + $0xa8] sm:$0xff] %vm297, %v1759
        %1792 = vst.msk [vmem:[#allocation3 + $0xb0] sm:$0xff] %vm297, %v1760
        %1793 = vst.msk [vmem:[#allocation3 + $0xb8] sm:$0xff] %vm297, %v1761
        %1794 = vst.msk [vmem:[#allocation3 + $0xc0] sm:$0xff] %vm297, %v1762
        %1795 = vst.msk [vmem:[#allocation3 + $0xc8] sm:$0xff] %vm297, %v1763
        %1796 = vst.msk [vmem:[#allocation3 + $0xd0] sm:$0xff] %vm297, %v1764
        %1797 = vst.msk [vmem:[#allocation3 + $0xd8] sm:$0xff] %vm297, %v1765
        %1798 = vst.msk [vmem:[#allocation3 + $0xe0] sm:$0xff] %vm297, %v1766
        %1799 = vst.msk [vmem:[#allocation3 + $0xe8] sm:$0xff] %vm297, %v1767
        %1800 = vst.msk [vmem:[#allocation3 + $0xf0] sm:$0xff] %vm297, %v1768
        %1801 = vst.msk [vmem:[#allocation3 + $0xf8] sm:$0xff] %vm297, %v1769
        %v1802 = vld [vmem:[%s375] sm:$0xff]
        %v1803 = vld [vmem:[%s375 + $0x8] sm:$0xff]
        %v1804 = vld [vmem:[%s375 + $0x18] sm:$0xff]
        %v1805 = vld [vmem:[%s375 + $0x20] sm:$0xff]
        %v1806 = vld [vmem:[%s375 + $0x30] sm:$0xff]
        %v1807 = vld [vmem:[%s375 + $0x38] sm:$0xff]
        %v1808 = vld [vmem:[%s375 + $0x48] sm:$0xff]
        %v1809 = vld [vmem:[%s375 + $0x50] sm:$0xff]
        %v1810 = vld [vmem:[%s375 + $0x60] sm:$0xff]
        %v1811 = vld [vmem:[%s375 + $0x68] sm:$0xff]
        %v1812 = vld [vmem:[%s375 + $0x78] sm:$0xff]
        %v1813 = vld [vmem:[%s375 + $0x80] sm:$0xff]
        %v1814 = vld [vmem:[%s375 + $0x90] sm:$0xff]
        %v1815 = vld [vmem:[%s375 + $0x98] sm:$0xff]
        %v1816 = vld [vmem:[%s375 + $0xa8] sm:$0xff]
        %v1817 = vld [vmem:[%s375 + $0xb0] sm:$0xff]
        %v1818 = vld [vmem:[%s375 + $0xc0] sm:$0xff]
        %v1819 = vld [vmem:[%s375 + $0xc8] sm:$0xff]
        %v1820 = vld [vmem:[%s375 + $0xd8] sm:$0xff]
        %v1821 = vld [vmem:[%s375 + $0xe0] sm:$0xff]
        %v1822 = vld [vmem:[%s375 + $0xf0] sm:$0xff]
        %v1823 = vld [vmem:[%s375 + $0xf8] sm:$0xff]
        %v1824 = vld [vmem:[%s375 + $0x108] sm:$0xff]
        %v1825 = vld [vmem:[%s375 + $0x110] sm:$0xff]
        %v1826 = vld [vmem:[%s375 + $0x120] sm:$0xff]
        %v1827 = vld [vmem:[%s375 + $0x128] sm:$0xff]
        %v1828 = vld [vmem:[%s375 + $0x138] sm:$0xff]
        %v1829 = vld [vmem:[%s375 + $0x140] sm:$0xff]
        %v1830 = vld [vmem:[%s375 + $0x150] sm:$0xff]
        %v1831 = vld [vmem:[%s375 + $0x158] sm:$0xff]
        %v1832 = vld [vmem:[%s375 + $0x168] sm:$0xff]
        %v1833 = vld [vmem:[%s375 + $0x170] sm:$0xff]
        %v1834 = vld [vmem:[#allocation3] sm:$0xff]
        %v1835 = vld [vmem:[#allocation3 + $0x8] sm:$0xff]
        %v1836 = vld [vmem:[#allocation3 + $0x10] sm:$0xff]
        %v1837 = vld [vmem:[#allocation3 + $0x18] sm:$0xff]
        %v1838 = vld [vmem:[#allocation3 + $0x20] sm:$0xff]
        %v1839 = vld [vmem:[#allocation3 + $0x28] sm:$0xff]
        %v1840 = vld [vmem:[#allocation3 + $0x30] sm:$0xff]
        %v1841 = vld [vmem:[#allocation3 + $0x38] sm:$0xff]
        %v1842 = vld [vmem:[#allocation3 + $0x40] sm:$0xff]
        %v1843 = vld [vmem:[#allocation3 + $0x48] sm:$0xff]
        %v1844 = vld [vmem:[#allocation3 + $0x50] sm:$0xff]
        %v1845 = vld [vmem:[#allocation3 + $0x58] sm:$0xff]
        %v1846 = vld [vmem:[#allocation3 + $0x60] sm:$0xff]
        %v1847 = vld [vmem:[#allocation3 + $0x68] sm:$0xff]
        %v1848 = vld [vmem:[#allocation3 + $0x70] sm:$0xff]
        %v1849 = vld [vmem:[#allocation3 + $0x78] sm:$0xff]
        %v1850 = vld [vmem:[#allocation3 + $0x80] sm:$0xff]
        %v1851 = vld [vmem:[#allocation3 + $0x88] sm:$0xff]
        %v1852 = vld [vmem:[#allocation3 + $0x90] sm:$0xff]
        %v1853 = vld [vmem:[#allocation3 + $0x98] sm:$0xff]
        %v1854 = vld [vmem:[#allocation3 + $0xa0] sm:$0xff]
        %v1855 = vld [vmem:[#allocation3 + $0xa8] sm:$0xff]
        %v1856 = vld [vmem:[#allocation3 + $0xb0] sm:$0xff]
        %v1857 = vld [vmem:[#allocation3 + $0xb8] sm:$0xff]
        %v1858 = vld [vmem:[#allocation3 + $0xc0] sm:$0xff]
        %v1859 = vld [vmem:[#allocation3 + $0xc8] sm:$0xff]
        %v1860 = vld [vmem:[#allocation3 + $0xd0] sm:$0xff]
        %v1861 = vld [vmem:[#allocation3 + $0xd8] sm:$0xff]
        %v1862 = vld [vmem:[#allocation3 + $0xe0] sm:$0xff]
        %v1863 = vld [vmem:[#allocation3 + $0xe8] sm:$0xff]
        %v1864 = vld [vmem:[#allocation3 + $0xf0] sm:$0xff]
        %v1865 = vld [vmem:[#allocation3 + $0xf8] sm:$0xff]
        %s1866 = scalar_lea.vmem [#allocation7], 12
        %v1867 = vld [vmem:[%s1866] sm:$0xf]
        %v1869 = vsel %vm297, %v1802, 0
        %v1872 = vsel %vm297, %v1803, 0
        %v1875 = vsel %vm297, %v1804, 0
        %v1878 = vsel %vm297, %v1805, 0
        %v1881 = vsel %vm297, %v1806, 0
        %v1884 = vsel %vm297, %v1807, 0
        %v1887 = vsel %vm297, %v1808, 0
        %v1890 = vsel %vm297, %v1809, 0
        %v1893 = vsel %vm297, %v1810, 0
        %v1896 = vsel %vm297, %v1811, 0
        %v1899 = vsel %vm297, %v1812, 0
        %v1902 = vsel %vm297, %v1813, 0
        %v1905 = vsel %vm297, %v1814, 0
        %v1908 = vsel %vm297, %v1815, 0
        %v1911 = vsel %vm297, %v1816, 0
        %v1914 = vsel %vm297, %v1817, 0
        %v1917 = vsel %vm297, %v1818, 0
        %v1920 = vsel %vm297, %v1819, 0
        %v1923 = vsel %vm297, %v1820, 0
        %v1926 = vsel %vm297, %v1821, 0
        %v1929 = vsel %vm297, %v1822, 0
        %v1932 = vsel %vm297, %v1823, 0
        %v1935 = vsel %vm297, %v1824, 0
        %v1938 = vsel %vm297, %v1825, 0
        %v1941 = vsel %vm297, %v1826, 0
        %v1944 = vsel %vm297, %v1827, 0
        %v1947 = vsel %vm297, %v1828, 0
        %v1950 = vsel %vm297, %v1829, 0
        %v1953 = vsel %vm297, %v1830, 0
        %v1956 = vsel %vm297, %v1831, 0
        %v1959 = vsel %vm297, %v1832, 0
        %v1962 = vsel %vm297, %v1833, 0
        %v1965 = vsel %vm601, %v1867, 0
        %1967 = vmatprep.subr.mxu0 0.0
        %1968 = vmatpush1.msra.mxu0 %v1965
        %1969 = vmatprep.subr.mxu0 0.0
        %1970 = vmatpush1.msra.mxu0 0.0
        %1971 = vmatprep.subr.mxu0 0.0
        %1972 = vmatpush1.msra.mxu0 0.0
        %1973 = vmatprep.subr.mxu0 0.0
        %1974 = vmatpush1.msra.mxu0 0.0
        %1975 = vmatprep.subr.mxu0 0.0
        %1976 = vmatpush1.msra.mxu0 0.0
        %1977 = vmatprep.subr.mxu0 0.0
        %1978 = vmatpush1.msra.mxu0 0.0
        %1979 = vmatprep.subr.mxu0 0.0
        %1980 = vmatpush1.msra.mxu0 0.0
        %1981 = vmatprep.subr.mxu0 0.0
        %1982 = vmatpush1.msra.mxu0 0.0
        %1983 = vmatprep.subr.mxu0 0.0
        %1984 = vmatpush1.msra.mxu0 0.0
        %1985 = vmatprep.subr.mxu0 0.0
        %1986 = vmatpush1.msra.mxu0 0.0
        %1987 = vmatprep.subr.mxu0 0.0
        %1988 = vmatpush1.msra.mxu0 0.0
        %1989 = vmatprep.subr.mxu0 0.0
        %1990 = vmatpush1.msra.mxu0 0.0
        %1991 = vmatprep.subr.mxu0 0.0
        %1992 = vmatpush1.msra.mxu0 0.0
        %1993 = vmatprep.subr.mxu0 0.0
        %1994 = vmatpush1.msra.mxu0 0.0
        %1995 = vmatprep.subr.mxu0 0.0
        %1996 = vmatpush1.msra.mxu0 0.0
        %1997 = vmatprep.subr.mxu0 0.0
        %1998 = vmatpush1.msra.mxu0 0.0
        %1999 = vmatprep.subr.mxu0 0.0
        %2000 = vmatpush1.msra.mxu0 0.0
        %2001 = vmatprep.subr.mxu0 0.0
        %2002 = vmatpush1.msra.mxu0 0.0
        %2003 = vmatprep.subr.mxu0 0.0
        %2004 = vmatpush1.msra.mxu0 0.0
        %2005 = vmatprep.subr.mxu0 0.0
        %2006 = vmatpush1.msra.mxu0 0.0
        %2007 = vmatprep.subr.mxu0 0.0
        %2008 = vmatpush1.msra.mxu0 0.0
        %2009 = vmatprep.subr.mxu0 0.0
        %2010 = vmatpush1.msra.mxu0 0.0
        %2011 = vmatprep.subr.mxu0 0.0
        %2012 = vmatpush1.msra.mxu0 0.0
        %2013 = vmatprep.subr.mxu0 0.0
        %2014 = vmatpush1.msra.mxu0 0.0
        %2015 = vmatprep.subr.mxu0 0.0
        %2016 = vmatpush1.msra.mxu0 0.0
        %2017 = vmatprep.subr.mxu0 0.0
        %2018 = vmatpush1.msra.mxu0 0.0
        %2019 = vmatprep.subr.mxu0 0.0
        %2020 = vmatpush1.msra.mxu0 0.0
        %2021 = vmatprep.subr.mxu0 0.0
        %2022 = vmatpush1.msra.mxu0 0.0
        %2023 = vmatprep.subr.mxu0 0.0
        %2024 = vmatpush1.msra.mxu0 0.0
        %2025 = vmatprep.subr.mxu0 0.0
        %2026 = vmatpush1.msra.mxu0 0.0
        %2027 = vmatprep.subr.mxu0 0.0
        %2028 = vmatpush1.msra.mxu0 0.0
        %2029 = vmatprep.subr.mxu0 0.0
        %2030 = vmatpush1.msra.mxu0 0.0
        %2031 = vmatprep.mubr.f32.mxu0 0.0
        %2032 = vmatmul.mubr.f32.gmra.mrb[0].mxu0 %v1869
        %v2033 = vpop.f32.mrb[0].mxu0
        %v2034 = vadd.f32 0.0, %v2033
        %v2035 = vpop.f32.mrb[0].mxu0
        %2036 = vmatprep.mubr.f32.mxu0 0.0
        %2037 = vmatmul.mubr.f32.gmra.mrb[0].mxu0 %v1872
        %v2038 = vpop.f32.mrb[0].mxu0
        %v2039 = vadd.f32 0.0, %v2038
        %v2040 = vpop.f32.mrb[0].mxu0
        %2041 = vmatprep.mubr.f32.mxu0 0.0
        %2042 = vmatmul.mubr.f32.gmra.mrb[0].mxu0 %v1875
        %v2043 = vpop.f32.mrb[0].mxu0
        %v2044 = vadd.f32 0.0, %v2043
        %v2045 = vpop.f32.mrb[0].mxu0
        %2046 = vmatprep.mubr.f32.mxu0 0.0
        %2047 = vmatmul.mubr.f32.gmra.mrb[0].mxu0 %v1878
        %v2048 = vpop.f32.mrb[0].mxu0
        %v2049 = vadd.f32 0.0, %v2048
        %v2050 = vpop.f32.mrb[0].mxu0
        %2051 = vmatprep.mubr.f32.mxu0 0.0
        %2052 = vmatmul.mubr.f32.gmra.mrb[0].mxu0 %v1881
        %v2053 = vpop.f32.mrb[0].mxu0
        %v2054 = vadd.f32 0.0, %v2053
        %v2055 = vpop.f32.mrb[0].mxu0
        %2056 = vmatprep.mubr.f32.mxu0 0.0
        %2057 = vmatmul.mubr.f32.gmra.mrb[0].mxu0 %v1884
        %v2058 = vpop.f32.mrb[0].mxu0
        %v2059 = vadd.f32 0.0, %v2058
        %v2060 = vpop.f32.mrb[0].mxu0
        %2061 = vmatprep.mubr.f32.mxu0 0.0
        %2062 = vmatmul.mubr.f32.gmra.mrb[0].mxu0 %v1887
        %v2063 = vpop.f32.mrb[0].mxu0
        %v2064 = vadd.f32 0.0, %v2063
        %v2065 = vpop.f32.mrb[0].mxu0
        %2066 = vmatprep.mubr.f32.mxu0 0.0
        %2067 = vmatmul.mubr.f32.gmra.mrb[0].mxu0 %v1890
        %v2068 = vpop.f32.mrb[0].mxu0
        %v2069 = vadd.f32 0.0, %v2068
        %v2070 = vpop.f32.mrb[0].mxu0
        %2071 = vmatprep.mubr.f32.mxu0 0.0
        %2072 = vmatmul.mubr.f32.gmra.mrb[0].mxu0 %v1893
        %v2073 = vpop.f32.mrb[0].mxu0
        %v2074 = vadd.f32 0.0, %v2073
        %v2075 = vpop.f32.mrb[0].mxu0
        %2076 = vmatprep.mubr.f32.mxu0 0.0
        %2077 = vmatmul.mubr.f32.gmra.mrb[0].mxu0 %v1896
        %v2078 = vpop.f32.mrb[0].mxu0
        %v2079 = vadd.f32 0.0, %v2078
        %v2080 = vpop.f32.mrb[0].mxu0
        %2081 = vmatprep.mubr.f32.mxu0 0.0
        %2082 = vmatmul.mubr.f32.gmra.mrb[0].mxu0 %v1899
        %v2083 = vpop.f32.mrb[0].mxu0
        %v2084 = vadd.f32 0.0, %v2083
        %v2085 = vpop.f32.mrb[0].mxu0
        %2086 = vmatprep.mubr.f32.mxu0 0.0
        %2087 = vmatmul.mubr.f32.gmra.mrb[0].mxu0 %v1902
        %v2088 = vpop.f32.mrb[0].mxu0
        %v2089 = vadd.f32 0.0, %v2088
        %v2090 = vpop.f32.mrb[0].mxu0
        %2091 = vmatprep.mubr.f32.mxu0 0.0
        %2092 = vmatmul.mubr.f32.gmra.mrb[0].mxu0 %v1905
        %v2093 = vpop.f32.mrb[0].mxu0
        %v2094 = vadd.f32 0.0, %v2093
        %v2095 = vpop.f32.mrb[0].mxu0
        %2096 = vmatprep.mubr.f32.mxu0 0.0
        %2097 = vmatmul.mubr.f32.gmra.mrb[0].mxu0 %v1908
        %v2098 = vpop.f32.mrb[0].mxu0
        %v2099 = vadd.f32 0.0, %v2098
        %v2100 = vpop.f32.mrb[0].mxu0
        %2101 = vmatprep.mubr.f32.mxu0 0.0
        %2102 = vmatmul.mubr.f32.gmra.mrb[0].mxu0 %v1911
        %v2103 = vpop.f32.mrb[0].mxu0
        %v2104 = vadd.f32 0.0, %v2103
        %v2105 = vpop.f32.mrb[0].mxu0
        %2106 = vmatprep.mubr.f32.mxu0 0.0
        %2107 = vmatmul.mubr.f32.gmra.mrb[0].mxu0 %v1914
        %v2108 = vpop.f32.mrb[0].mxu0
        %v2109 = vadd.f32 0.0, %v2108
        %v2110 = vpop.f32.mrb[0].mxu0
        %2111 = vmatprep.mubr.f32.mxu0 0.0
        %2112 = vmatmul.mubr.f32.gmra.mrb[0].mxu0 %v1917
        %v2113 = vpop.f32.mrb[0].mxu0
        %v2114 = vadd.f32 0.0, %v2113
        %v2115 = vpop.f32.mrb[0].mxu0
        %2116 = vmatprep.mubr.f32.mxu0 0.0
        %2117 = vmatmul.mubr.f32.gmra.mrb[0].mxu0 %v1920
        %v2118 = vpop.f32.mrb[0].mxu0
        %v2119 = vadd.f32 0.0, %v2118
        %v2120 = vpop.f32.mrb[0].mxu0
        %2121 = vmatprep.mubr.f32.mxu0 0.0
        %2122 = vmatmul.mubr.f32.gmra.mrb[0].mxu0 %v1923
        %v2123 = vpop.f32.mrb[0].mxu0
        %v2124 = vadd.f32 0.0, %v2123
        %v2125 = vpop.f32.mrb[0].mxu0
        %2126 = vmatprep.mubr.f32.mxu0 0.0
        %2127 = vmatmul.mubr.f32.gmra.mrb[0].mxu0 %v1926
        %v2128 = vpop.f32.mrb[0].mxu0
        %v2129 = vadd.f32 0.0, %v2128
        %v2130 = vpop.f32.mrb[0].mxu0
        %2131 = vmatprep.mubr.f32.mxu0 0.0
        %2132 = vmatmul.mubr.f32.gmra.mrb[0].mxu0 %v1929
        %v2133 = vpop.f32.mrb[0].mxu0
        %v2134 = vadd.f32 0.0, %v2133
        %v2135 = vpop.f32.mrb[0].mxu0
        %2136 = vmatprep.mubr.f32.mxu0 0.0
        %2137 = vmatmul.mubr.f32.gmra.mrb[0].mxu0 %v1932
        %v2138 = vpop.f32.mrb[0].mxu0
        %v2139 = vadd.f32 0.0, %v2138
        %v2140 = vpop.f32.mrb[0].mxu0
        %2141 = vmatprep.mubr.f32.mxu0 0.0
        %2142 = vmatmul.mubr.f32.gmra.mrb[0].mxu0 %v1935
        %v2143 = vpop.f32.mrb[0].mxu0
        %v2144 = vadd.f32 0.0, %v2143
        %v2145 = vpop.f32.mrb[0].mxu0
        %2146 = vmatprep.mubr.f32.mxu0 0.0
        %2147 = vmatmul.mubr.f32.gmra.mrb[0].mxu0 %v1938
        %v2148 = vpop.f32.mrb[0].mxu0
        %v2149 = vadd.f32 0.0, %v2148
        %v2150 = vpop.f32.mrb[0].mxu0
        %2151 = vmatprep.mubr.f32.mxu0 0.0
        %2152 = vmatmul.mubr.f32.gmra.mrb[0].mxu0 %v1941
        %v2153 = vpop.f32.mrb[0].mxu0
        %v2154 = vadd.f32 0.0, %v2153
        %v2155 = vpop.f32.mrb[0].mxu0
        %2156 = vmatprep.mubr.f32.mxu0 0.0
        %2157 = vmatmul.mubr.f32.gmra.mrb[0].mxu0 %v1944
        %v2158 = vpop.f32.mrb[0].mxu0
        %v2159 = vadd.f32 0.0, %v2158
        %v2160 = vpop.f32.mrb[0].mxu0
        %2161 = vmatprep.mubr.f32.mxu0 0.0
        %2162 = vmatmul.mubr.f32.gmra.mrb[0].mxu0 %v1947
        %v2163 = vpop.f32.mrb[0].mxu0
        %v2164 = vadd.f32 0.0, %v2163
        %v2165 = vpop.f32.mrb[0].mxu0
        %2166 = vmatprep.mubr.f32.mxu0 0.0
        %2167 = vmatmul.mubr.f32.gmra.mrb[0].mxu0 %v1950
        %v2168 = vpop.f32.mrb[0].mxu0
        %v2169 = vadd.f32 0.0, %v2168
        %v2170 = vpop.f32.mrb[0].mxu0
        %2171 = vmatprep.mubr.f32.mxu0 0.0
        %2172 = vmatmul.mubr.f32.gmra.mrb[0].mxu0 %v1953
        %v2173 = vpop.f32.mrb[0].mxu0
        %v2174 = vadd.f32 0.0, %v2173
        %v2175 = vpop.f32.mrb[0].mxu0
        %2176 = vmatprep.mubr.f32.mxu0 0.0
        %2177 = vmatmul.mubr.f32.gmra.mrb[0].mxu0 %v1956
        %v2178 = vpop.f32.mrb[0].mxu0
        %v2179 = vadd.f32 0.0, %v2178
        %v2180 = vpop.f32.mrb[0].mxu0
        %2181 = vmatprep.mubr.f32.mxu0 0.0
        %2182 = vmatmul.mubr.f32.gmra.mrb[0].mxu0 %v1959
        %v2183 = vpop.f32.mrb[0].mxu0
        %v2184 = vadd.f32 0.0, %v2183
        %v2185 = vpop.f32.mrb[0].mxu0
        %2186 = vmatprep.mubr.f32.mxu0 0.0
        %2187 = vmatmul.mubr.f32.gmra.mrb[0].mxu0 %v1962
        %v2188 = vpop.f32.mrb[0].mxu0
        %v2189 = vadd.f32 0.0, %v2188
        %v2190 = vpop.f32.mrb[0].mxu0
        %2191 = vdwg.mxu0
        %v2192 = vadd.f32 %v1834, %v2034
        %v2193 = vadd.f32 %v1835, %v2039
        %v2194 = vadd.f32 %v1836, %v2044
        %v2195 = vadd.f32 %v1837, %v2049
        %v2196 = vadd.f32 %v1838, %v2054
        %v2197 = vadd.f32 %v1839, %v2059
        %v2198 = vadd.f32 %v1840, %v2064
        %v2199 = vadd.f32 %v1841, %v2069
        %v2200 = vadd.f32 %v1842, %v2074
        %v2201 = vadd.f32 %v1843, %v2079
        %v2202 = vadd.f32 %v1844, %v2084
        %v2203 = vadd.f32 %v1845, %v2089
        %v2204 = vadd.f32 %v1846, %v2094
        %v2205 = vadd.f32 %v1847, %v2099
        %v2206 = vadd.f32 %v1848, %v2104
        %v2207 = vadd.f32 %v1849, %v2109
        %v2208 = vadd.f32 %v1850, %v2114
        %v2209 = vadd.f32 %v1851, %v2119
        %v2210 = vadd.f32 %v1852, %v2124
        %v2211 = vadd.f32 %v1853, %v2129
        %v2212 = vadd.f32 %v1854, %v2134
        %v2213 = vadd.f32 %v1855, %v2139
        %v2214 = vadd.f32 %v1856, %v2144
        %v2215 = vadd.f32 %v1857, %v2149
        %v2216 = vadd.f32 %v1858, %v2154
        %v2217 = vadd.f32 %v1859, %v2159
        %v2218 = vadd.f32 %v1860, %v2164
        %v2219 = vadd.f32 %v1861, %v2169
        %v2220 = vadd.f32 %v1862, %v2174
        %v2221 = vadd.f32 %v1863, %v2179
        %v2222 = vadd.f32 %v1864, %v2184
        %v2223 = vadd.f32 %v1865, %v2189
        %2224 = vst.msk [vmem:[#allocation3] sm:$0xff] %vm297, %v2192
        %2225 = vst.msk [vmem:[#allocation3 + $0x8] sm:$0xff] %vm297, %v2193
        %2226 = vst.msk [vmem:[#allocation3 + $0x10] sm:$0xff] %vm297, %v2194
        %2227 = vst.msk [vmem:[#allocation3 + $0x18] sm:$0xff] %vm297, %v2195
        %2228 = vst.msk [vmem:[#allocation3 + $0x20] sm:$0xff] %vm297, %v2196
        %2229 = vst.msk [vmem:[#allocation3 + $0x28] sm:$0xff] %vm297, %v2197
        %2230 = vst.msk [vmem:[#allocation3 + $0x30] sm:$0xff] %vm297, %v2198
        %2231 = vst.msk [vmem:[#allocation3 + $0x38] sm:$0xff] %vm297, %v2199
        %2232 = vst.msk [vmem:[#allocation3 + $0x40] sm:$0xff] %vm297, %v2200
        %2233 = vst.msk [vmem:[#allocation3 + $0x48] sm:$0xff] %vm297, %v2201
        %2234 = vst.msk [vmem:[#allocation3 + $0x50] sm:$0xff] %vm297, %v2202
        %2235 = vst.msk [vmem:[#allocation3 + $0x58] sm:$0xff] %vm297, %v2203
        %2236 = vst.msk [vmem:[#allocation3 + $0x60] sm:$0xff] %vm297, %v2204
        %2237 = vst.msk [vmem:[#allocation3 + $0x68] sm:$0xff] %vm297, %v2205
        %2238 = vst.msk [vmem:[#allocation3 + $0x70] sm:$0xff] %vm297, %v2206
        %2239 = vst.msk [vmem:[#allocation3 + $0x78] sm:$0xff] %vm297, %v2207
        %2240 = vst.msk [vmem:[#allocation3 + $0x80] sm:$0xff] %vm297, %v2208
        %2241 = vst.msk [vmem:[#allocation3 + $0x88] sm:$0xff] %vm297, %v2209
        %2242 = vst.msk [vmem:[#allocation3 + $0x90] sm:$0xff] %vm297, %v2210
        %2243 = vst.msk [vmem:[#allocation3 + $0x98] sm:$0xff] %vm297, %v2211
        %2244 = vst.msk [vmem:[#allocation3 + $0xa0] sm:$0xff] %vm297, %v2212
        %2245 = vst.msk [vmem:[#allocation3 + $0xa8] sm:$0xff] %vm297, %v2213
        %2246 = vst.msk [vmem:[#allocation3 + $0xb0] sm:$0xff] %vm297, %v2214
        %2247 = vst.msk [vmem:[#allocation3 + $0xb8] sm:$0xff] %vm297, %v2215
        %2248 = vst.msk [vmem:[#allocation3 + $0xc0] sm:$0xff] %vm297, %v2216
        %2249 = vst.msk [vmem:[#allocation3 + $0xc8] sm:$0xff] %vm297, %v2217
        %2250 = vst.msk [vmem:[#allocation3 + $0xd0] sm:$0xff] %vm297, %v2218
        %2251 = vst.msk [vmem:[#allocation3 + $0xd8] sm:$0xff] %vm297, %v2219
        %2252 = vst.msk [vmem:[#allocation3 + $0xe0] sm:$0xff] %vm297, %v2220
        %2253 = vst.msk [vmem:[#allocation3 + $0xe8] sm:$0xff] %vm297, %v2221
        %2254 = vst.msk [vmem:[#allocation3 + $0xf0] sm:$0xff] %vm297, %v2222
        %2255 = vst.msk [vmem:[#allocation3 + $0xf8] sm:$0xff] %vm297, %v2223
        %v2256 = vld [vmem:[%s375 + $0x1] sm:$0xff]
        %v2257 = vld [vmem:[%s375 + $0x9] sm:$0xff]
        %v2258 = vld [vmem:[%s375 + $0x19] sm:$0xff]
        %v2259 = vld [vmem:[%s375 + $0x21] sm:$0xff]
        %v2260 = vld [vmem:[%s375 + $0x31] sm:$0xff]
        %v2261 = vld [vmem:[%s375 + $0x39] sm:$0xff]
        %v2262 = vld [vmem:[%s375 + $0x49] sm:$0xff]
        %v2263 = vld [vmem:[%s375 + $0x51] sm:$0xff]
        %v2264 = vld [vmem:[%s375 + $0x61] sm:$0xff]
        %v2265 = vld [vmem:[%s375 + $0x69] sm:$0xff]
        %v2266 = vld [vmem:[%s375 + $0x79] sm:$0xff]
        %v2267 = vld [vmem:[%s375 + $0x81] sm:$0xff]
        %v2268 = vld [vmem:[%s375 + $0x91] sm:$0xff]
        %v2269 = vld [vmem:[%s375 + $0x99] sm:$0xff]
        %v2270 = vld [vmem:[%s375 + $0xa9] sm:$0xff]
        %v2271 = vld [vmem:[%s375 + $0xb1] sm:$0xff]
        %v2272 = vld [vmem:[%s375 + $0xc1] sm:$0xff]
        %v2273 = vld [vmem:[%s375 + $0xc9] sm:$0xff]
        %v2274 = vld [vmem:[%s375 + $0xd9] sm:$0xff]
        %v2275 = vld [vmem:[%s375 + $0xe1] sm:$0xff]
        %v2276 = vld [vmem:[%s375 + $0xf1] sm:$0xff]
        %v2277 = vld [vmem:[%s375 + $0xf9] sm:$0xff]
        %v2278 = vld [vmem:[%s375 + $0x109] sm:$0xff]
        %v2279 = vld [vmem:[%s375 + $0x111] sm:$0xff]
        %v2280 = vld [vmem:[%s375 + $0x121] sm:$0xff]
        %v2281 = vld [vmem:[%s375 + $0x129] sm:$0xff]
        %v2282 = vld [vmem:[%s375 + $0x139] sm:$0xff]
        %v2283 = vld [vmem:[%s375 + $0x141] sm:$0xff]
        %v2284 = vld [vmem:[%s375 + $0x151] sm:$0xff]
        %v2285 = vld [vmem:[%s375 + $0x159] sm:$0xff]
        %v2286 = vld [vmem:[%s375 + $0x169] sm:$0xff]
        %v2287 = vld [vmem:[%s375 + $0x171] sm:$0xff]
        %v2288 = vld [vmem:[#allocation3] sm:$0xff]
        %v2289 = vld [vmem:[#allocation3 + $0x8] sm:$0xff]
        %v2290 = vld [vmem:[#allocation3 + $0x10] sm:$0xff]
        %v2291 = vld [vmem:[#allocation3 + $0x18] sm:$0xff]
        %v2292 = vld [vmem:[#allocation3 + $0x20] sm:$0xff]
        %v2293 = vld [vmem:[#allocation3 + $0x28] sm:$0xff]
        %v2294 = vld [vmem:[#allocation3 + $0x30] sm:$0xff]
        %v2295 = vld [vmem:[#allocation3 + $0x38] sm:$0xff]
        %v2296 = vld [vmem:[#allocation3 + $0x40] sm:$0xff]
        %v2297 = vld [vmem:[#allocation3 + $0x48] sm:$0xff]
        %v2298 = vld [vmem:[#allocation3 + $0x50] sm:$0xff]
        %v2299 = vld [vmem:[#allocation3 + $0x58] sm:$0xff]
        %v2300 = vld [vmem:[#allocation3 + $0x60] sm:$0xff]
        %v2301 = vld [vmem:[#allocation3 + $0x68] sm:$0xff]
        %v2302 = vld [vmem:[#allocation3 + $0x70] sm:$0xff]
        %v2303 = vld [vmem:[#allocation3 + $0x78] sm:$0xff]
        %v2304 = vld [vmem:[#allocation3 + $0x80] sm:$0xff]
        %v2305 = vld [vmem:[#allocation3 + $0x88] sm:$0xff]
        %v2306 = vld [vmem:[#allocation3 + $0x90] sm:$0xff]
        %v2307 = vld [vmem:[#allocation3 + $0x98] sm:$0xff]
        %v2308 = vld [vmem:[#allocation3 + $0xa0] sm:$0xff]
        %v2309 = vld [vmem:[#allocation3 + $0xa8] sm:$0xff]
        %v2310 = vld [vmem:[#allocation3 + $0xb0] sm:$0xff]
        %v2311 = vld [vmem:[#allocation3 + $0xb8] sm:$0xff]
        %v2312 = vld [vmem:[#allocation3 + $0xc0] sm:$0xff]
        %v2313 = vld [vmem:[#allocation3 + $0xc8] sm:$0xff]
        %v2314 = vld [vmem:[#allocation3 + $0xd0] sm:$0xff]
        %v2315 = vld [vmem:[#allocation3 + $0xd8] sm:$0xff]
        %v2316 = vld [vmem:[#allocation3 + $0xe0] sm:$0xff]
        %v2317 = vld [vmem:[#allocation3 + $0xe8] sm:$0xff]
        %v2318 = vld [vmem:[#allocation3 + $0xf0] sm:$0xff]
        %v2319 = vld [vmem:[#allocation3 + $0xf8] sm:$0xff]
        %s2320 = scalar_lea.vmem [#allocation7], 16
        %v2321 = vld [vmem:[%s2320] sm:$0xf]
        %v2323 = vsel %vm297, %v2256, 0
        %v2326 = vsel %vm297, %v2257, 0
        %v2329 = vsel %vm297, %v2258, 0
        %v2332 = vsel %vm297, %v2259, 0
        %v2335 = vsel %vm297, %v2260, 0
        %v2338 = vsel %vm297, %v2261, 0
        %v2341 = vsel %vm297, %v2262, 0
        %v2344 = vsel %vm297, %v2263, 0
        %v2347 = vsel %vm297, %v2264, 0
        %v2350 = vsel %vm297, %v2265, 0
        %v2353 = vsel %vm297, %v2266, 0
        %v2356 = vsel %vm297, %v2267, 0
        %v2359 = vsel %vm297, %v2268, 0
        %v2362 = vsel %vm297, %v2269, 0
        %v2365 = vsel %vm297, %v2270, 0
        %v2368 = vsel %vm297, %v2271, 0
        %v2371 = vsel %vm297, %v2272, 0
        %v2374 = vsel %vm297, %v2273, 0
        %v2377 = vsel %vm297, %v2274, 0
        %v2380 = vsel %vm297, %v2275, 0
        %v2383 = vsel %vm297, %v2276, 0
        %v2386 = vsel %vm297, %v2277, 0
        %v2389 = vsel %vm297, %v2278, 0
        %v2392 = vsel %vm297, %v2279, 0
        %v2395 = vsel %vm297, %v2280, 0
        %v2398 = vsel %vm297, %v2281, 0
        %v2401 = vsel %vm297, %v2282, 0
        %v2404 = vsel %vm297, %v2283, 0
        %v2407 = vsel %vm297, %v2284, 0
        %v2410 = vsel %vm297, %v2285, 0
        %v2413 = vsel %vm297, %v2286, 0
        %v2416 = vsel %vm297, %v2287, 0
        %v2419 = vsel %vm601, %v2321, 0
        %2421 = vmatprep.subr.mxu0 0.0
        %2422 = vmatpush1.msra.mxu0 %v2419
        %2423 = vmatprep.subr.mxu0 0.0
        %2424 = vmatpush1.msra.mxu0 0.0
        %2425 = vmatprep.subr.mxu0 0.0
        %2426 = vmatpush1.msra.mxu0 0.0
        %2427 = vmatprep.subr.mxu0 0.0
        %2428 = vmatpush1.msra.mxu0 0.0
        %2429 = vmatprep.subr.mxu0 0.0
        %2430 = vmatpush1.msra.mxu0 0.0
        %2431 = vmatprep.subr.mxu0 0.0
        %2432 = vmatpush1.msra.mxu0 0.0
        %2433 = vmatprep.subr.mxu0 0.0
        %2434 = vmatpush1.msra.mxu0 0.0
        %2435 = vmatprep.subr.mxu0 0.0
        %2436 = vmatpush1.msra.mxu0 0.0
        %2437 = vmatprep.subr.mxu0 0.0
        %2438 = vmatpush1.msra.mxu0 0.0
        %2439 = vmatprep.subr.mxu0 0.0
        %2440 = vmatpush1.msra.mxu0 0.0
        %2441 = vmatprep.subr.mxu0 0.0
        %2442 = vmatpush1.msra.mxu0 0.0
        %2443 = vmatprep.subr.mxu0 0.0
        %2444 = vmatpush1.msra.mxu0 0.0
        %2445 = vmatprep.subr.mxu0 0.0
        %2446 = vmatpush1.msra.mxu0 0.0
        %2447 = vmatprep.subr.mxu0 0.0
        %2448 = vmatpush1.msra.mxu0 0.0
        %2449 = vmatprep.subr.mxu0 0.0
        %2450 = vmatpush1.msra.mxu0 0.0
        %2451 = vmatprep.subr.mxu0 0.0
        %2452 = vmatpush1.msra.mxu0 0.0
        %2453 = vmatprep.subr.mxu0 0.0
        %2454 = vmatpush1.msra.mxu0 0.0
        %2455 = vmatprep.subr.mxu0 0.0
        %2456 = vmatpush1.msra.mxu0 0.0
        %2457 = vmatprep.subr.mxu0 0.0
        %2458 = vmatpush1.msra.mxu0 0.0
        %2459 = vmatprep.subr.mxu0 0.0
        %2460 = vmatpush1.msra.mxu0 0.0
        %2461 = vmatprep.subr.mxu0 0.0
        %2462 = vmatpush1.msra.mxu0 0.0
        %2463 = vmatprep.subr.mxu0 0.0
        %2464 = vmatpush1.msra.mxu0 0.0
        %2465 = vmatprep.subr.mxu0 0.0
        %2466 = vmatpush1.msra.mxu0 0.0
        %2467 = vmatprep.subr.mxu0 0.0
        %2468 = vmatpush1.msra.mxu0 0.0
        %2469 = vmatprep.subr.mxu0 0.0
        %2470 = vmatpush1.msra.mxu0 0.0
        %2471 = vmatprep.subr.mxu0 0.0
        %2472 = vmatpush1.msra.mxu0 0.0
        %2473 = vmatprep.subr.mxu0 0.0
        %2474 = vmatpush1.msra.mxu0 0.0
        %2475 = vmatprep.subr.mxu0 0.0
        %2476 = vmatpush1.msra.mxu0 0.0
        %2477 = vmatprep.subr.mxu0 0.0
        %2478 = vmatpush1.msra.mxu0 0.0
        %2479 = vmatprep.subr.mxu0 0.0
        %2480 = vmatpush1.msra.mxu0 0.0
        %2481 = vmatprep.subr.mxu0 0.0
        %2482 = vmatpush1.msra.mxu0 0.0
        %2483 = vmatprep.subr.mxu0 0.0
        %2484 = vmatpush1.msra.mxu0 0.0
        %2485 = vmatprep.mubr.f32.mxu0 0.0
        %2486 = vmatmul.mubr.f32.gmra.mrb[0].mxu0 %v2323
        %v2487 = vpop.f32.mrb[0].mxu0
        %v2488 = vadd.f32 0.0, %v2487
        %v2489 = vpop.f32.mrb[0].mxu0
        %2490 = vmatprep.mubr.f32.mxu0 0.0
        %2491 = vmatmul.mubr.f32.gmra.mrb[0].mxu0 %v2326
        %v2492 = vpop.f32.mrb[0].mxu0
        %v2493 = vadd.f32 0.0, %v2492
        %v2494 = vpop.f32.mrb[0].mxu0
        %2495 = vmatprep.mubr.f32.mxu0 0.0
        %2496 = vmatmul.mubr.f32.gmra.mrb[0].mxu0 %v2329
        %v2497 = vpop.f32.mrb[0].mxu0
        %v2498 = vadd.f32 0.0, %v2497
        %v2499 = vpop.f32.mrb[0].mxu0
        %2500 = vmatprep.mubr.f32.mxu0 0.0
        %2501 = vmatmul.mubr.f32.gmra.mrb[0].mxu0 %v2332
        %v2502 = vpop.f32.mrb[0].mxu0
        %v2503 = vadd.f32 0.0, %v2502
        %v2504 = vpop.f32.mrb[0].mxu0
        %2505 = vmatprep.mubr.f32.mxu0 0.0
        %2506 = vmatmul.mubr.f32.gmra.mrb[0].mxu0 %v2335
        %v2507 = vpop.f32.mrb[0].mxu0
        %v2508 = vadd.f32 0.0, %v2507
        %v2509 = vpop.f32.mrb[0].mxu0
        %2510 = vmatprep.mubr.f32.mxu0 0.0
        %2511 = vmatmul.mubr.f32.gmra.mrb[0].mxu0 %v2338
        %v2512 = vpop.f32.mrb[0].mxu0
        %v2513 = vadd.f32 0.0, %v2512
        %v2514 = vpop.f32.mrb[0].mxu0
        %2515 = vmatprep.mubr.f32.mxu0 0.0
        %2516 = vmatmul.mubr.f32.gmra.mrb[0].mxu0 %v2341
        %v2517 = vpop.f32.mrb[0].mxu0
        %v2518 = vadd.f32 0.0, %v2517
        %v2519 = vpop.f32.mrb[0].mxu0
        %2520 = vmatprep.mubr.f32.mxu0 0.0
        %2521 = vmatmul.mubr.f32.gmra.mrb[0].mxu0 %v2344
        %v2522 = vpop.f32.mrb[0].mxu0
        %v2523 = vadd.f32 0.0, %v2522
        %v2524 = vpop.f32.mrb[0].mxu0
        %2525 = vmatprep.mubr.f32.mxu0 0.0
        %2526 = vmatmul.mubr.f32.gmra.mrb[0].mxu0 %v2347
        %v2527 = vpop.f32.mrb[0].mxu0
        %v2528 = vadd.f32 0.0, %v2527
        %v2529 = vpop.f32.mrb[0].mxu0
        %2530 = vmatprep.mubr.f32.mxu0 0.0
        %2531 = vmatmul.mubr.f32.gmra.mrb[0].mxu0 %v2350
        %v2532 = vpop.f32.mrb[0].mxu0
        %v2533 = vadd.f32 0.0, %v2532
        %v2534 = vpop.f32.mrb[0].mxu0
        %2535 = vmatprep.mubr.f32.mxu0 0.0
        %2536 = vmatmul.mubr.f32.gmra.mrb[0].mxu0 %v2353
        %v2537 = vpop.f32.mrb[0].mxu0
        %v2538 = vadd.f32 0.0, %v2537
        %v2539 = vpop.f32.mrb[0].mxu0
        %2540 = vmatprep.mubr.f32.mxu0 0.0
        %2541 = vmatmul.mubr.f32.gmra.mrb[0].mxu0 %v2356
        %v2542 = vpop.f32.mrb[0].mxu0
        %v2543 = vadd.f32 0.0, %v2542
        %v2544 = vpop.f32.mrb[0].mxu0
        %2545 = vmatprep.mubr.f32.mxu0 0.0
        %2546 = vmatmul.mubr.f32.gmra.mrb[0].mxu0 %v2359
        %v2547 = vpop.f32.mrb[0].mxu0
        %v2548 = vadd.f32 0.0, %v2547
        %v2549 = vpop.f32.mrb[0].mxu0
        %2550 = vmatprep.mubr.f32.mxu0 0.0
        %2551 = vmatmul.mubr.f32.gmra.mrb[0].mxu0 %v2362
        %v2552 = vpop.f32.mrb[0].mxu0
        %v2553 = vadd.f32 0.0, %v2552
        %v2554 = vpop.f32.mrb[0].mxu0
        %2555 = vmatprep.mubr.f32.mxu0 0.0
        %2556 = vmatmul.mubr.f32.gmra.mrb[0].mxu0 %v2365
        %v2557 = vpop.f32.mrb[0].mxu0
        %v2558 = vadd.f32 0.0, %v2557
        %v2559 = vpop.f32.mrb[0].mxu0
        %2560 = vmatprep.mubr.f32.mxu0 0.0
        %2561 = vmatmul.mubr.f32.gmra.mrb[0].mxu0 %v2368
        %v2562 = vpop.f32.mrb[0].mxu0
        %v2563 = vadd.f32 0.0, %v2562
        %v2564 = vpop.f32.mrb[0].mxu0
        %2565 = vmatprep.mubr.f32.mxu0 0.0
        %2566 = vmatmul.mubr.f32.gmra.mrb[0].mxu0 %v2371
        %v2567 = vpop.f32.mrb[0].mxu0
        %v2568 = vadd.f32 0.0, %v2567
        %v2569 = vpop.f32.mrb[0].mxu0
        %2570 = vmatprep.mubr.f32.mxu0 0.0
        %2571 = vmatmul.mubr.f32.gmra.mrb[0].mxu0 %v2374
        %v2572 = vpop.f32.mrb[0].mxu0
        %v2573 = vadd.f32 0.0, %v2572
        %v2574 = vpop.f32.mrb[0].mxu0
        %2575 = vmatprep.mubr.f32.mxu0 0.0
        %2576 = vmatmul.mubr.f32.gmra.mrb[0].mxu0 %v2377
        %v2577 = vpop.f32.mrb[0].mxu0
        %v2578 = vadd.f32 0.0, %v2577
        %v2579 = vpop.f32.mrb[0].mxu0
        %2580 = vmatprep.mubr.f32.mxu0 0.0
        %2581 = vmatmul.mubr.f32.gmra.mrb[0].mxu0 %v2380
        %v2582 = vpop.f32.mrb[0].mxu0
        %v2583 = vadd.f32 0.0, %v2582
        %v2584 = vpop.f32.mrb[0].mxu0
        %2585 = vmatprep.mubr.f32.mxu0 0.0
        %2586 = vmatmul.mubr.f32.gmra.mrb[0].mxu0 %v2383
        %v2587 = vpop.f32.mrb[0].mxu0
        %v2588 = vadd.f32 0.0, %v2587
        %v2589 = vpop.f32.mrb[0].mxu0
        %2590 = vmatprep.mubr.f32.mxu0 0.0
        %2591 = vmatmul.mubr.f32.gmra.mrb[0].mxu0 %v2386
        %v2592 = vpop.f32.mrb[0].mxu0
        %v2593 = vadd.f32 0.0, %v2592
        %v2594 = vpop.f32.mrb[0].mxu0
        %2595 = vmatprep.mubr.f32.mxu0 0.0
        %2596 = vmatmul.mubr.f32.gmra.mrb[0].mxu0 %v2389
        %v2597 = vpop.f32.mrb[0].mxu0
        %v2598 = vadd.f32 0.0, %v2597
        %v2599 = vpop.f32.mrb[0].mxu0
        %2600 = vmatprep.mubr.f32.mxu0 0.0
        %2601 = vmatmul.mubr.f32.gmra.mrb[0].mxu0 %v2392
        %v2602 = vpop.f32.mrb[0].mxu0
        %v2603 = vadd.f32 0.0, %v2602
        %v2604 = vpop.f32.mrb[0].mxu0
        %2605 = vmatprep.mubr.f32.mxu0 0.0
        %2606 = vmatmul.mubr.f32.gmra.mrb[0].mxu0 %v2395
        %v2607 = vpop.f32.mrb[0].mxu0
        %v2608 = vadd.f32 0.0, %v2607
        %v2609 = vpop.f32.mrb[0].mxu0
        %2610 = vmatprep.mubr.f32.mxu0 0.0
        %2611 = vmatmul.mubr.f32.gmra.mrb[0].mxu0 %v2398
        %v2612 = vpop.f32.mrb[0].mxu0
        %v2613 = vadd.f32 0.0, %v2612
        %v2614 = vpop.f32.mrb[0].mxu0
        %2615 = vmatprep.mubr.f32.mxu0 0.0
        %2616 = vmatmul.mubr.f32.gmra.mrb[0].mxu0 %v2401
        %v2617 = vpop.f32.mrb[0].mxu0
        %v2618 = vadd.f32 0.0, %v2617
        %v2619 = vpop.f32.mrb[0].mxu0
        %2620 = vmatprep.mubr.f32.mxu0 0.0
        %2621 = vmatmul.mubr.f32.gmra.mrb[0].mxu0 %v2404
        %v2622 = vpop.f32.mrb[0].mxu0
        %v2623 = vadd.f32 0.0, %v2622
        %v2624 = vpop.f32.mrb[0].mxu0
        %2625 = vmatprep.mubr.f32.mxu0 0.0
        %2626 = vmatmul.mubr.f32.gmra.mrb[0].mxu0 %v2407
        %v2627 = vpop.f32.mrb[0].mxu0
        %v2628 = vadd.f32 0.0, %v2627
        %v2629 = vpop.f32.mrb[0].mxu0
        %2630 = vmatprep.mubr.f32.mxu0 0.0
        %2631 = vmatmul.mubr.f32.gmra.mrb[0].mxu0 %v2410
        %v2632 = vpop.f32.mrb[0].mxu0
        %v2633 = vadd.f32 0.0, %v2632
        %v2634 = vpop.f32.mrb[0].mxu0
        %2635 = vmatprep.mubr.f32.mxu0 0.0
        %2636 = vmatmul.mubr.f32.gmra.mrb[0].mxu0 %v2413
        %v2637 = vpop.f32.mrb[0].mxu0
        %v2638 = vadd.f32 0.0, %v2637
        %v2639 = vpop.f32.mrb[0].mxu0
        %2640 = vmatprep.mubr.f32.mxu0 0.0
        %2641 = vmatmul.mubr.f32.gmra.mrb[0].mxu0 %v2416
        %v2642 = vpop.f32.mrb[0].mxu0
        %v2643 = vadd.f32 0.0, %v2642
        %v2644 = vpop.f32.mrb[0].mxu0
        %2645 = vdwg.mxu0
        %v2646 = vadd.f32 %v2288, %v2488
        %v2647 = vadd.f32 %v2289, %v2493
        %v2648 = vadd.f32 %v2290, %v2498
        %v2649 = vadd.f32 %v2291, %v2503
        %v2650 = vadd.f32 %v2292, %v2508
        %v2651 = vadd.f32 %v2293, %v2513
        %v2652 = vadd.f32 %v2294, %v2518
        %v2653 = vadd.f32 %v2295, %v2523
        %v2654 = vadd.f32 %v2296, %v2528
        %v2655 = vadd.f32 %v2297, %v2533
        %v2656 = vadd.f32 %v2298, %v2538
        %v2657 = vadd.f32 %v2299, %v2543
        %v2658 = vadd.f32 %v2300, %v2548
        %v2659 = vadd.f32 %v2301, %v2553
        %v2660 = vadd.f32 %v2302, %v2558
        %v2661 = vadd.f32 %v2303, %v2563
        %v2662 = vadd.f32 %v2304, %v2568
        %v2663 = vadd.f32 %v2305, %v2573
        %v2664 = vadd.f32 %v2306, %v2578
        %v2665 = vadd.f32 %v2307, %v2583
        %v2666 = vadd.f32 %v2308, %v2588
        %v2667 = vadd.f32 %v2309, %v2593
        %v2668 = vadd.f32 %v2310, %v2598
        %v2669 = vadd.f32 %v2311, %v2603
        %v2670 = vadd.f32 %v2312, %v2608
        %v2671 = vadd.f32 %v2313, %v2613
        %v2672 = vadd.f32 %v2314, %v2618
        %v2673 = vadd.f32 %v2315, %v2623
        %v2674 = vadd.f32 %v2316, %v2628
        %v2675 = vadd.f32 %v2317, %v2633
        %v2676 = vadd.f32 %v2318, %v2638
        %v2677 = vadd.f32 %v2319, %v2643
        %2678 = vst.msk [vmem:[#allocation3] sm:$0xff] %vm297, %v2646
        %2679 = vst.msk [vmem:[#allocation3 + $0x8] sm:$0xff] %vm297, %v2647
        %2680 = vst.msk [vmem:[#allocation3 + $0x10] sm:$0xff] %vm297, %v2648
        %2681 = vst.msk [vmem:[#allocation3 + $0x18] sm:$0xff] %vm297, %v2649
        %2682 = vst.msk [vmem:[#allocation3 + $0x20] sm:$0xff] %vm297, %v2650
        %2683 = vst.msk [vmem:[#allocation3 + $0x28] sm:$0xff] %vm297, %v2651
        %2684 = vst.msk [vmem:[#allocation3 + $0x30] sm:$0xff] %vm297, %v2652
        %2685 = vst.msk [vmem:[#allocation3 + $0x38] sm:$0xff] %vm297, %v2653
        %2686 = vst.msk [vmem:[#allocation3 + $0x40] sm:$0xff] %vm297, %v2654
        %2687 = vst.msk [vmem:[#allocation3 + $0x48] sm:$0xff] %vm297, %v2655
        %2688 = vst.msk [vmem:[#allocation3 + $0x50] sm:$0xff] %vm297, %v2656
        %2689 = vst.msk [vmem:[#allocation3 + $0x58] sm:$0xff] %vm297, %v2657
        %2690 = vst.msk [vmem:[#allocation3 + $0x60] sm:$0xff] %vm297, %v2658
        %2691 = vst.msk [vmem:[#allocation3 + $0x68] sm:$0xff] %vm297, %v2659
        %2692 = vst.msk [vmem:[#allocation3 + $0x70] sm:$0xff] %vm297, %v2660
        %2693 = vst.msk [vmem:[#allocation3 + $0x78] sm:$0xff] %vm297, %v2661
        %2694 = vst.msk [vmem:[#allocation3 + $0x80] sm:$0xff] %vm297, %v2662
        %2695 = vst.msk [vmem:[#allocation3 + $0x88] sm:$0xff] %vm297, %v2663
        %2696 = vst.msk [vmem:[#allocation3 + $0x90] sm:$0xff] %vm297, %v2664
        %2697 = vst.msk [vmem:[#allocation3 + $0x98] sm:$0xff] %vm297, %v2665
        %2698 = vst.msk [vmem:[#allocation3 + $0xa0] sm:$0xff] %vm297, %v2666
        %2699 = vst.msk [vmem:[#allocation3 + $0xa8] sm:$0xff] %vm297, %v2667
        %2700 = vst.msk [vmem:[#allocation3 + $0xb0] sm:$0xff] %vm297, %v2668
        %2701 = vst.msk [vmem:[#allocation3 + $0xb8] sm:$0xff] %vm297, %v2669
        %2702 = vst.msk [vmem:[#allocation3 + $0xc0] sm:$0xff] %vm297, %v2670
        %2703 = vst.msk [vmem:[#allocation3 + $0xc8] sm:$0xff] %vm297, %v2671
        %2704 = vst.msk [vmem:[#allocation3 + $0xd0] sm:$0xff] %vm297, %v2672
        %2705 = vst.msk [vmem:[#allocation3 + $0xd8] sm:$0xff] %vm297, %v2673
        %2706 = vst.msk [vmem:[#allocation3 + $0xe0] sm:$0xff] %vm297, %v2674
        %2707 = vst.msk [vmem:[#allocation3 + $0xe8] sm:$0xff] %vm297, %v2675
        %2708 = vst.msk [vmem:[#allocation3 + $0xf0] sm:$0xff] %vm297, %v2676
        %2709 = vst.msk [vmem:[#allocation3 + $0xf8] sm:$0xff] %vm297, %v2677
        %v2710 = vld [vmem:[%s375 + $0x2] sm:$0xff]
        %v2711 = vld [vmem:[%s375 + $0xa] sm:$0xff]
        %v2712 = vld [vmem:[%s375 + $0x1a] sm:$0xff]
        %v2713 = vld [vmem:[%s375 + $0x22] sm:$0xff]
        %v2714 = vld [vmem:[%s375 + $0x32] sm:$0xff]
        %v2715 = vld [vmem:[%s375 + $0x3a] sm:$0xff]
        %v2716 = vld [vmem:[%s375 + $0x4a] sm:$0xff]
        %v2717 = vld [vmem:[%s375 + $0x52] sm:$0xff]
        %v2718 = vld [vmem:[%s375 + $0x62] sm:$0xff]
        %v2719 = vld [vmem:[%s375 + $0x6a] sm:$0xff]
        %v2720 = vld [vmem:[%s375 + $0x7a] sm:$0xff]
        %v2721 = vld [vmem:[%s375 + $0x82] sm:$0xff]
        %v2722 = vld [vmem:[%s375 + $0x92] sm:$0xff]
        %v2723 = vld [vmem:[%s375 + $0x9a] sm:$0xff]
        %v2724 = vld [vmem:[%s375 + $0xaa] sm:$0xff]
        %v2725 = vld [vmem:[%s375 + $0xb2] sm:$0xff]
        %v2726 = vld [vmem:[%s375 + $0xc2] sm:$0xff]
        %v2727 = vld [vmem:[%s375 + $0xca] sm:$0xff]
        %v2728 = vld [vmem:[%s375 + $0xda] sm:$0xff]
        %v2729 = vld [vmem:[%s375 + $0xe2] sm:$0xff]
        %v2730 = vld [vmem:[%s375 + $0xf2] sm:$0xff]
        %v2731 = vld [vmem:[%s375 + $0xfa] sm:$0xff]
        %v2732 = vld [vmem:[%s375 + $0x10a] sm:$0xff]
        %v2733 = vld [vmem:[%s375 + $0x112] sm:$0xff]
        %v2734 = vld [vmem:[%s375 + $0x122] sm:$0xff]
        %v2735 = vld [vmem:[%s375 + $0x12a] sm:$0xff]
        %v2736 = vld [vmem:[%s375 + $0x13a] sm:$0xff]
        %v2737 = vld [vmem:[%s375 + $0x142] sm:$0xff]
        %v2738 = vld [vmem:[%s375 + $0x152] sm:$0xff]
        %v2739 = vld [vmem:[%s375 + $0x15a] sm:$0xff]
        %v2740 = vld [vmem:[%s375 + $0x16a] sm:$0xff]
        %v2741 = vld [vmem:[%s375 + $0x172] sm:$0xff]
        %v2742 = vld [vmem:[#allocation3] sm:$0xff]
        %v2743 = vld [vmem:[#allocation3 + $0x8] sm:$0xff]
        %v2744 = vld [vmem:[#allocation3 + $0x10] sm:$0xff]
        %v2745 = vld [vmem:[#allocation3 + $0x18] sm:$0xff]
        %v2746 = vld [vmem:[#allocation3 + $0x20] sm:$0xff]
        %v2747 = vld [vmem:[#allocation3 + $0x28] sm:$0xff]
        %v2748 = vld [vmem:[#allocation3 + $0x30] sm:$0xff]
        %v2749 = vld [vmem:[#allocation3 + $0x38] sm:$0xff]
        %v2750 = vld [vmem:[#allocation3 + $0x40] sm:$0xff]
        %v2751 = vld [vmem:[#allocation3 + $0x48] sm:$0xff]
        %v2752 = vld [vmem:[#allocation3 + $0x50] sm:$0xff]
        %v2753 = vld [vmem:[#allocation3 + $0x58] sm:$0xff]
        %v2754 = vld [vmem:[#allocation3 + $0x60] sm:$0xff]
        %v2755 = vld [vmem:[#allocation3 + $0x68] sm:$0xff]
        %v2756 = vld [vmem:[#allocation3 + $0x70] sm:$0xff]
        %v2757 = vld [vmem:[#allocation3 + $0x78] sm:$0xff]
        %v2758 = vld [vmem:[#allocation3 + $0x80] sm:$0xff]
        %v2759 = vld [vmem:[#allocation3 + $0x88] sm:$0xff]
        %v2760 = vld [vmem:[#allocation3 + $0x90] sm:$0xff]
        %v2761 = vld [vmem:[#allocation3 + $0x98] sm:$0xff]
        %v2762 = vld [vmem:[#allocation3 + $0xa0] sm:$0xff]
        %v2763 = vld [vmem:[#allocation3 + $0xa8] sm:$0xff]
        %v2764 = vld [vmem:[#allocation3 + $0xb0] sm:$0xff]
        %v2765 = vld [vmem:[#allocation3 + $0xb8] sm:$0xff]
        %v2766 = vld [vmem:[#allocation3 + $0xc0] sm:$0xff]
        %v2767 = vld [vmem:[#allocation3 + $0xc8] sm:$0xff]
        %v2768 = vld [vmem:[#allocation3 + $0xd0] sm:$0xff]
        %v2769 = vld [vmem:[#allocation3 + $0xd8] sm:$0xff]
        %v2770 = vld [vmem:[#allocation3 + $0xe0] sm:$0xff]
        %v2771 = vld [vmem:[#allocation3 + $0xe8] sm:$0xff]
        %v2772 = vld [vmem:[#allocation3 + $0xf0] sm:$0xff]
        %v2773 = vld [vmem:[#allocation3 + $0xf8] sm:$0xff]
        %s2774 = scalar_lea.vmem [#allocation7], 20
        %v2775 = vld [vmem:[%s2774] sm:$0xf]
        %v2777 = vsel %vm297, %v2710, 0
        %v2780 = vsel %vm297, %v2711, 0
        %v2783 = vsel %vm297, %v2712, 0
        %v2786 = vsel %vm297, %v2713, 0
        %v2789 = vsel %vm297, %v2714, 0
        %v2792 = vsel %vm297, %v2715, 0
        %v2795 = vsel %vm297, %v2716, 0
        %v2798 = vsel %vm297, %v2717, 0
        %v2801 = vsel %vm297, %v2718, 0
        %v2804 = vsel %vm297, %v2719, 0
        %v2807 = vsel %vm297, %v2720, 0
        %v2810 = vsel %vm297, %v2721, 0
        %v2813 = vsel %vm297, %v2722, 0
        %v2816 = vsel %vm297, %v2723, 0
        %v2819 = vsel %vm297, %v2724, 0
        %v2822 = vsel %vm297, %v2725, 0
        %v2825 = vsel %vm297, %v2726, 0
        %v2828 = vsel %vm297, %v2727, 0
        %v2831 = vsel %vm297, %v2728, 0
        %v2834 = vsel %vm297, %v2729, 0
        %v2837 = vsel %vm297, %v2730, 0
        %v2840 = vsel %vm297, %v2731, 0
        %v2843 = vsel %vm297, %v2732, 0
        %v2846 = vsel %vm297, %v2733, 0
        %v2849 = vsel %vm297, %v2734, 0
        %v2852 = vsel %vm297, %v2735, 0
        %v2855 = vsel %vm297, %v2736, 0
        %v2858 = vsel %vm297, %v2737, 0
        %v2861 = vsel %vm297, %v2738, 0
        %v2864 = vsel %vm297, %v2739, 0
        %v2867 = vsel %vm297, %v2740, 0
        %v2870 = vsel %vm297, %v2741, 0
        %v2873 = vsel %vm601, %v2775, 0
        %2875 = vmatprep.subr.mxu0 0.0
        %2876 = vmatpush1.msra.mxu0 %v2873
        %2877 = vmatprep.subr.mxu0 0.0
        %2878 = vmatpush1.msra.mxu0 0.0
        %2879 = vmatprep.subr.mxu0 0.0
        %2880 = vmatpush1.msra.mxu0 0.0
        %2881 = vmatprep.subr.mxu0 0.0
        %2882 = vmatpush1.msra.mxu0 0.0
        %2883 = vmatprep.subr.mxu0 0.0
        %2884 = vmatpush1.msra.mxu0 0.0
        %2885 = vmatprep.subr.mxu0 0.0
        %2886 = vmatpush1.msra.mxu0 0.0
        %2887 = vmatprep.subr.mxu0 0.0
        %2888 = vmatpush1.msra.mxu0 0.0
        %2889 = vmatprep.subr.mxu0 0.0
        %2890 = vmatpush1.msra.mxu0 0.0
        %2891 = vmatprep.subr.mxu0 0.0
        %2892 = vmatpush1.msra.mxu0 0.0
        %2893 = vmatprep.subr.mxu0 0.0
        %2894 = vmatpush1.msra.mxu0 0.0
        %2895 = vmatprep.subr.mxu0 0.0
        %2896 = vmatpush1.msra.mxu0 0.0
        %2897 = vmatprep.subr.mxu0 0.0
        %2898 = vmatpush1.msra.mxu0 0.0
        %2899 = vmatprep.subr.mxu0 0.0
        %2900 = vmatpush1.msra.mxu0 0.0
        %2901 = vmatprep.subr.mxu0 0.0
        %2902 = vmatpush1.msra.mxu0 0.0
        %2903 = vmatprep.subr.mxu0 0.0
        %2904 = vmatpush1.msra.mxu0 0.0
        %2905 = vmatprep.subr.mxu0 0.0
        %2906 = vmatpush1.msra.mxu0 0.0
        %2907 = vmatprep.subr.mxu0 0.0
        %2908 = vmatpush1.msra.mxu0 0.0
        %2909 = vmatprep.subr.mxu0 0.0
        %2910 = vmatpush1.msra.mxu0 0.0
        %2911 = vmatprep.subr.mxu0 0.0
        %2912 = vmatpush1.msra.mxu0 0.0
        %2913 = vmatprep.subr.mxu0 0.0
        %2914 = vmatpush1.msra.mxu0 0.0
        %2915 = vmatprep.subr.mxu0 0.0
        %2916 = vmatpush1.msra.mxu0 0.0
        %2917 = vmatprep.subr.mxu0 0.0
        %2918 = vmatpush1.msra.mxu0 0.0
        %2919 = vmatprep.subr.mxu0 0.0
        %2920 = vmatpush1.msra.mxu0 0.0
        %2921 = vmatprep.subr.mxu0 0.0
        %2922 = vmatpush1.msra.mxu0 0.0
        %2923 = vmatprep.subr.mxu0 0.0
        %2924 = vmatpush1.msra.mxu0 0.0
        %2925 = vmatprep.subr.mxu0 0.0
        %2926 = vmatpush1.msra.mxu0 0.0
        %2927 = vmatprep.subr.mxu0 0.0
        %2928 = vmatpush1.msra.mxu0 0.0
        %2929 = vmatprep.subr.mxu0 0.0
        %2930 = vmatpush1.msra.mxu0 0.0
        %2931 = vmatprep.subr.mxu0 0.0
        %2932 = vmatpush1.msra.mxu0 0.0
        %2933 = vmatprep.subr.mxu0 0.0
        %2934 = vmatpush1.msra.mxu0 0.0
        %2935 = vmatprep.subr.mxu0 0.0
        %2936 = vmatpush1.msra.mxu0 0.0
        %2937 = vmatprep.subr.mxu0 0.0
        %2938 = vmatpush1.msra.mxu0 0.0
        %2939 = vmatprep.mubr.f32.mxu0 0.0
        %2940 = vmatmul.mubr.f32.gmra.mrb[0].mxu0 %v2777
        %v2941 = vpop.f32.mrb[0].mxu0
        %v2942 = vadd.f32 0.0, %v2941
        %v2943 = vpop.f32.mrb[0].mxu0
        %2944 = vmatprep.mubr.f32.mxu0 0.0
        %2945 = vmatmul.mubr.f32.gmra.mrb[0].mxu0 %v2780
        %v2946 = vpop.f32.mrb[0].mxu0
        %v2947 = vadd.f32 0.0, %v2946
        %v2948 = vpop.f32.mrb[0].mxu0
        %2949 = vmatprep.mubr.f32.mxu0 0.0
        %2950 = vmatmul.mubr.f32.gmra.mrb[0].mxu0 %v2783
        %v2951 = vpop.f32.mrb[0].mxu0
        %v2952 = vadd.f32 0.0, %v2951
        %v2953 = vpop.f32.mrb[0].mxu0
        %2954 = vmatprep.mubr.f32.mxu0 0.0
        %2955 = vmatmul.mubr.f32.gmra.mrb[0].mxu0 %v2786
        %v2956 = vpop.f32.mrb[0].mxu0
        %v2957 = vadd.f32 0.0, %v2956
        %v2958 = vpop.f32.mrb[0].mxu0
        %2959 = vmatprep.mubr.f32.mxu0 0.0
        %2960 = vmatmul.mubr.f32.gmra.mrb[0].mxu0 %v2789
        %v2961 = vpop.f32.mrb[0].mxu0
        %v2962 = vadd.f32 0.0, %v2961
        %v2963 = vpop.f32.mrb[0].mxu0
        %2964 = vmatprep.mubr.f32.mxu0 0.0
        %2965 = vmatmul.mubr.f32.gmra.mrb[0].mxu0 %v2792
        %v2966 = vpop.f32.mrb[0].mxu0
        %v2967 = vadd.f32 0.0, %v2966
        %v2968 = vpop.f32.mrb[0].mxu0
        %2969 = vmatprep.mubr.f32.mxu0 0.0
        %2970 = vmatmul.mubr.f32.gmra.mrb[0].mxu0 %v2795
        %v2971 = vpop.f32.mrb[0].mxu0
        %v2972 = vadd.f32 0.0, %v2971
        %v2973 = vpop.f32.mrb[0].mxu0
        %2974 = vmatprep.mubr.f32.mxu0 0.0
        %2975 = vmatmul.mubr.f32.gmra.mrb[0].mxu0 %v2798
        %v2976 = vpop.f32.mrb[0].mxu0
        %v2977 = vadd.f32 0.0, %v2976
        %v2978 = vpop.f32.mrb[0].mxu0
        %2979 = vmatprep.mubr.f32.mxu0 0.0
        %2980 = vmatmul.mubr.f32.gmra.mrb[0].mxu0 %v2801
        %v2981 = vpop.f32.mrb[0].mxu0
        %v2982 = vadd.f32 0.0, %v2981
        %v2983 = vpop.f32.mrb[0].mxu0
        %2984 = vmatprep.mubr.f32.mxu0 0.0
        %2985 = vmatmul.mubr.f32.gmra.mrb[0].mxu0 %v2804
        %v2986 = vpop.f32.mrb[0].mxu0
        %v2987 = vadd.f32 0.0, %v2986
        %v2988 = vpop.f32.mrb[0].mxu0
        %2989 = vmatprep.mubr.f32.mxu0 0.0
        %2990 = vmatmul.mubr.f32.gmra.mrb[0].mxu0 %v2807
        %v2991 = vpop.f32.mrb[0].mxu0
        %v2992 = vadd.f32 0.0, %v2991
        %v2993 = vpop.f32.mrb[0].mxu0
        %2994 = vmatprep.mubr.f32.mxu0 0.0
        %2995 = vmatmul.mubr.f32.gmra.mrb[0].mxu0 %v2810
        %v2996 = vpop.f32.mrb[0].mxu0
        %v2997 = vadd.f32 0.0, %v2996
        %v2998 = vpop.f32.mrb[0].mxu0
        %2999 = vmatprep.mubr.f32.mxu0 0.0
        %3000 = vmatmul.mubr.f32.gmra.mrb[0].mxu0 %v2813
        %v3001 = vpop.f32.mrb[0].mxu0
        %v3002 = vadd.f32 0.0, %v3001
        %v3003 = vpop.f32.mrb[0].mxu0
        %3004 = vmatprep.mubr.f32.mxu0 0.0
        %3005 = vmatmul.mubr.f32.gmra.mrb[0].mxu0 %v2816
        %v3006 = vpop.f32.mrb[0].mxu0
        %v3007 = vadd.f32 0.0, %v3006
        %v3008 = vpop.f32.mrb[0].mxu0
        %3009 = vmatprep.mubr.f32.mxu0 0.0
        %3010 = vmatmul.mubr.f32.gmra.mrb[0].mxu0 %v2819
        %v3011 = vpop.f32.mrb[0].mxu0
        %v3012 = vadd.f32 0.0, %v3011
        %v3013 = vpop.f32.mrb[0].mxu0
        %3014 = vmatprep.mubr.f32.mxu0 0.0
        %3015 = vmatmul.mubr.f32.gmra.mrb[0].mxu0 %v2822
        %v3016 = vpop.f32.mrb[0].mxu0
        %v3017 = vadd.f32 0.0, %v3016
        %v3018 = vpop.f32.mrb[0].mxu0
        %3019 = vmatprep.mubr.f32.mxu0 0.0
        %3020 = vmatmul.mubr.f32.gmra.mrb[0].mxu0 %v2825
        %v3021 = vpop.f32.mrb[0].mxu0
        %v3022 = vadd.f32 0.0, %v3021
        %v3023 = vpop.f32.mrb[0].mxu0
        %3024 = vmatprep.mubr.f32.mxu0 0.0
        %3025 = vmatmul.mubr.f32.gmra.mrb[0].mxu0 %v2828
        %v3026 = vpop.f32.mrb[0].mxu0
        %v3027 = vadd.f32 0.0, %v3026
        %v3028 = vpop.f32.mrb[0].mxu0
        %3029 = vmatprep.mubr.f32.mxu0 0.0
        %3030 = vmatmul.mubr.f32.gmra.mrb[0].mxu0 %v2831
        %v3031 = vpop.f32.mrb[0].mxu0
        %v3032 = vadd.f32 0.0, %v3031
        %v3033 = vpop.f32.mrb[0].mxu0
        %3034 = vmatprep.mubr.f32.mxu0 0.0
        %3035 = vmatmul.mubr.f32.gmra.mrb[0].mxu0 %v2834
        %v3036 = vpop.f32.mrb[0].mxu0
        %v3037 = vadd.f32 0.0, %v3036
        %v3038 = vpop.f32.mrb[0].mxu0
        %3039 = vmatprep.mubr.f32.mxu0 0.0
        %3040 = vmatmul.mubr.f32.gmra.mrb[0].mxu0 %v2837
        %v3041 = vpop.f32.mrb[0].mxu0
        %v3042 = vadd.f32 0.0, %v3041
        %v3043 = vpop.f32.mrb[0].mxu0
        %3044 = vmatprep.mubr.f32.mxu0 0.0
        %3045 = vmatmul.mubr.f32.gmra.mrb[0].mxu0 %v2840
        %v3046 = vpop.f32.mrb[0].mxu0
        %v3047 = vadd.f32 0.0, %v3046
        %v3048 = vpop.f32.mrb[0].mxu0
        %3049 = vmatprep.mubr.f32.mxu0 0.0
        %3050 = vmatmul.mubr.f32.gmra.mrb[0].mxu0 %v2843
        %v3051 = vpop.f32.mrb[0].mxu0
        %v3052 = vadd.f32 0.0, %v3051
        %v3053 = vpop.f32.mrb[0].mxu0
        %3054 = vmatprep.mubr.f32.mxu0 0.0
        %3055 = vmatmul.mubr.f32.gmra.mrb[0].mxu0 %v2846
        %v3056 = vpop.f32.mrb[0].mxu0
        %v3057 = vadd.f32 0.0, %v3056
        %v3058 = vpop.f32.mrb[0].mxu0
        %3059 = vmatprep.mubr.f32.mxu0 0.0
        %3060 = vmatmul.mubr.f32.gmra.mrb[0].mxu0 %v2849
        %v3061 = vpop.f32.mrb[0].mxu0
        %v3062 = vadd.f32 0.0, %v3061
        %v3063 = vpop.f32.mrb[0].mxu0
        %3064 = vmatprep.mubr.f32.mxu0 0.0
        %3065 = vmatmul.mubr.f32.gmra.mrb[0].mxu0 %v2852
        %v3066 = vpop.f32.mrb[0].mxu0
        %v3067 = vadd.f32 0.0, %v3066
        %v3068 = vpop.f32.mrb[0].mxu0
        %3069 = vmatprep.mubr.f32.mxu0 0.0
        %3070 = vmatmul.mubr.f32.gmra.mrb[0].mxu0 %v2855
        %v3071 = vpop.f32.mrb[0].mxu0
        %v3072 = vadd.f32 0.0, %v3071
        %v3073 = vpop.f32.mrb[0].mxu0
        %3074 = vmatprep.mubr.f32.mxu0 0.0
        %3075 = vmatmul.mubr.f32.gmra.mrb[0].mxu0 %v2858
        %v3076 = vpop.f32.mrb[0].mxu0
        %v3077 = vadd.f32 0.0, %v3076
        %v3078 = vpop.f32.mrb[0].mxu0
        %3079 = vmatprep.mubr.f32.mxu0 0.0
        %3080 = vmatmul.mubr.f32.gmra.mrb[0].mxu0 %v2861
        %v3081 = vpop.f32.mrb[0].mxu0
        %v3082 = vadd.f32 0.0, %v3081
        %v3083 = vpop.f32.mrb[0].mxu0
        %3084 = vmatprep.mubr.f32.mxu0 0.0
        %3085 = vmatmul.mubr.f32.gmra.mrb[0].mxu0 %v2864
        %v3086 = vpop.f32.mrb[0].mxu0
        %v3087 = vadd.f32 0.0, %v3086
        %v3088 = vpop.f32.mrb[0].mxu0
        %3089 = vmatprep.mubr.f32.mxu0 0.0
        %3090 = vmatmul.mubr.f32.gmra.mrb[0].mxu0 %v2867
        %v3091 = vpop.f32.mrb[0].mxu0
        %v3092 = vadd.f32 0.0, %v3091
        %v3093 = vpop.f32.mrb[0].mxu0
        %3094 = vmatprep.mubr.f32.mxu0 0.0
        %3095 = vmatmul.mubr.f32.gmra.mrb[0].mxu0 %v2870
        %v3096 = vpop.f32.mrb[0].mxu0
        %v3097 = vadd.f32 0.0, %v3096
        %v3098 = vpop.f32.mrb[0].mxu0
        %3099 = vdwg.mxu0
        %v3100 = vadd.f32 %v2742, %v2942
        %v3101 = vadd.f32 %v2743, %v2947
        %v3102 = vadd.f32 %v2744, %v2952
        %v3103 = vadd.f32 %v2745, %v2957
        %v3104 = vadd.f32 %v2746, %v2962
        %v3105 = vadd.f32 %v2747, %v2967
        %v3106 = vadd.f32 %v2748, %v2972
        %v3107 = vadd.f32 %v2749, %v2977
        %v3108 = vadd.f32 %v2750, %v2982
        %v3109 = vadd.f32 %v2751, %v2987
        %v3110 = vadd.f32 %v2752, %v2992
        %v3111 = vadd.f32 %v2753, %v2997
        %v3112 = vadd.f32 %v2754, %v3002
        %v3113 = vadd.f32 %v2755, %v3007
        %v3114 = vadd.f32 %v2756, %v3012
        %v3115 = vadd.f32 %v2757, %v3017
        %v3116 = vadd.f32 %v2758, %v3022
        %v3117 = vadd.f32 %v2759, %v3027
        %v3118 = vadd.f32 %v2760, %v3032
        %v3119 = vadd.f32 %v2761, %v3037
        %v3120 = vadd.f32 %v2762, %v3042
        %v3121 = vadd.f32 %v2763, %v3047
        %v3122 = vadd.f32 %v2764, %v3052
        %v3123 = vadd.f32 %v2765, %v3057
        %v3124 = vadd.f32 %v2766, %v3062
        %v3125 = vadd.f32 %v2767, %v3067
        %v3126 = vadd.f32 %v2768, %v3072
        %v3127 = vadd.f32 %v2769, %v3077
        %v3128 = vadd.f32 %v2770, %v3082
        %v3129 = vadd.f32 %v2771, %v3087
        %v3130 = vadd.f32 %v2772, %v3092
        %v3131 = vadd.f32 %v2773, %v3097
        %3132 = vst.msk [vmem:[#allocation3] sm:$0xff] %vm297, %v3100
        %3133 = vst.msk [vmem:[#allocation3 + $0x8] sm:$0xff] %vm297, %v3101
        %3134 = vst.msk [vmem:[#allocation3 + $0x10] sm:$0xff] %vm297, %v3102
        %3135 = vst.msk [vmem:[#allocation3 + $0x18] sm:$0xff] %vm297, %v3103
        %3136 = vst.msk [vmem:[#allocation3 + $0x20] sm:$0xff] %vm297, %v3104
        %3137 = vst.msk [vmem:[#allocation3 + $0x28] sm:$0xff] %vm297, %v3105
        %3138 = vst.msk [vmem:[#allocation3 + $0x30] sm:$0xff] %vm297, %v3106
        %3139 = vst.msk [vmem:[#allocation3 + $0x38] sm:$0xff] %vm297, %v3107
        %3140 = vst.msk [vmem:[#allocation3 + $0x40] sm:$0xff] %vm297, %v3108
        %3141 = vst.msk [vmem:[#allocation3 + $0x48] sm:$0xff] %vm297, %v3109
        %3142 = vst.msk [vmem:[#allocation3 + $0x50] sm:$0xff] %vm297, %v3110
        %3143 = vst.msk [vmem:[#allocation3 + $0x58] sm:$0xff] %vm297, %v3111
        %3144 = vst.msk [vmem:[#allocation3 + $0x60] sm:$0xff] %vm297, %v3112
        %3145 = vst.msk [vmem:[#allocation3 + $0x68] sm:$0xff] %vm297, %v3113
        %3146 = vst.msk [vmem:[#allocation3 + $0x70] sm:$0xff] %vm297, %v3114
        %3147 = vst.msk [vmem:[#allocation3 + $0x78] sm:$0xff] %vm297, %v3115
        %3148 = vst.msk [vmem:[#allocation3 + $0x80] sm:$0xff] %vm297, %v3116
        %3149 = vst.msk [vmem:[#allocation3 + $0x88] sm:$0xff] %vm297, %v3117
        %3150 = vst.msk [vmem:[#allocation3 + $0x90] sm:$0xff] %vm297, %v3118
        %3151 = vst.msk [vmem:[#allocation3 + $0x98] sm:$0xff] %vm297, %v3119
        %3152 = vst.msk [vmem:[#allocation3 + $0xa0] sm:$0xff] %vm297, %v3120
        %3153 = vst.msk [vmem:[#allocation3 + $0xa8] sm:$0xff] %vm297, %v3121
        %3154 = vst.msk [vmem:[#allocation3 + $0xb0] sm:$0xff] %vm297, %v3122
        %3155 = vst.msk [vmem:[#allocation3 + $0xb8] sm:$0xff] %vm297, %v3123
        %3156 = vst.msk [vmem:[#allocation3 + $0xc0] sm:$0xff] %vm297, %v3124
        %3157 = vst.msk [vmem:[#allocation3 + $0xc8] sm:$0xff] %vm297, %v3125
        %3158 = vst.msk [vmem:[#allocation3 + $0xd0] sm:$0xff] %vm297, %v3126
        %3159 = vst.msk [vmem:[#allocation3 + $0xd8] sm:$0xff] %vm297, %v3127
        %3160 = vst.msk [vmem:[#allocation3 + $0xe0] sm:$0xff] %vm297, %v3128
        %3161 = vst.msk [vmem:[#allocation3 + $0xe8] sm:$0xff] %vm297, %v3129
        %3162 = vst.msk [vmem:[#allocation3 + $0xf0] sm:$0xff] %vm297, %v3130
        %3163 = vst.msk [vmem:[#allocation3 + $0xf8] sm:$0xff] %vm297, %v3131
        %s3164 = scalar_lea.vmem [#allocation2], 48
        %v3165 = vld [vmem:[%s3164] sm:$0xff]
        %v3166 = vld [vmem:[%s3164 + $0x8] sm:$0xff]
        %v3167 = vld [vmem:[%s3164 + $0x18] sm:$0xff]
        %v3168 = vld [vmem:[%s3164 + $0x20] sm:$0xff]
        %v3169 = vld [vmem:[%s3164 + $0x30] sm:$0xff]
        %v3170 = vld [vmem:[%s3164 + $0x38] sm:$0xff]
        %v3171 = vld [vmem:[%s3164 + $0x48] sm:$0xff]
        %v3172 = vld [vmem:[%s3164 + $0x50] sm:$0xff]
        %v3173 = vld [vmem:[%s3164 + $0x60] sm:$0xff]
        %v3174 = vld [vmem:[%s3164 + $0x68] sm:$0xff]
        %v3175 = vld [vmem:[%s3164 + $0x78] sm:$0xff]
        %v3176 = vld [vmem:[%s3164 + $0x80] sm:$0xff]
        %v3177 = vld [vmem:[%s3164 + $0x90] sm:$0xff]
        %v3178 = vld [vmem:[%s3164 + $0x98] sm:$0xff]
        %v3179 = vld [vmem:[%s3164 + $0xa8] sm:$0xff]
        %v3180 = vld [vmem:[%s3164 + $0xb0] sm:$0xff]
        %v3181 = vld [vmem:[%s3164 + $0xc0] sm:$0xff]
        %v3182 = vld [vmem:[%s3164 + $0xc8] sm:$0xff]
        %v3183 = vld [vmem:[%s3164 + $0xd8] sm:$0xff]
        %v3184 = vld [vmem:[%s3164 + $0xe0] sm:$0xff]
        %v3185 = vld [vmem:[%s3164 + $0xf0] sm:$0xff]
        %v3186 = vld [vmem:[%s3164 + $0xf8] sm:$0xff]
        %v3187 = vld [vmem:[%s3164 + $0x108] sm:$0xff]
        %v3188 = vld [vmem:[%s3164 + $0x110] sm:$0xff]
        %v3189 = vld [vmem:[%s3164 + $0x120] sm:$0xff]
        %v3190 = vld [vmem:[%s3164 + $0x128] sm:$0xff]
        %v3191 = vld [vmem:[%s3164 + $0x138] sm:$0xff]
        %v3192 = vld [vmem:[%s3164 + $0x140] sm:$0xff]
        %v3193 = vld [vmem:[%s3164 + $0x150] sm:$0xff]
        %v3194 = vld [vmem:[%s3164 + $0x158] sm:$0xff]
        %v3195 = vld [vmem:[%s3164 + $0x168] sm:$0xff]
        %v3196 = vld [vmem:[%s3164 + $0x170] sm:$0xff]
        %v3197 = vld [vmem:[#allocation3] sm:$0xff]
        %v3198 = vld [vmem:[#allocation3 + $0x8] sm:$0xff]
        %v3199 = vld [vmem:[#allocation3 + $0x10] sm:$0xff]
        %v3200 = vld [vmem:[#allocation3 + $0x18] sm:$0xff]
        %v3201 = vld [vmem:[#allocation3 + $0x20] sm:$0xff]
        %v3202 = vld [vmem:[#allocation3 + $0x28] sm:$0xff]
        %v3203 = vld [vmem:[#allocation3 + $0x30] sm:$0xff]
        %v3204 = vld [vmem:[#allocation3 + $0x38] sm:$0xff]
        %v3205 = vld [vmem:[#allocation3 + $0x40] sm:$0xff]
        %v3206 = vld [vmem:[#allocation3 + $0x48] sm:$0xff]
        %v3207 = vld [vmem:[#allocation3 + $0x50] sm:$0xff]
        %v3208 = vld [vmem:[#allocation3 + $0x58] sm:$0xff]
        %v3209 = vld [vmem:[#allocation3 + $0x60] sm:$0xff]
        %v3210 = vld [vmem:[#allocation3 + $0x68] sm:$0xff]
        %v3211 = vld [vmem:[#allocation3 + $0x70] sm:$0xff]
        %v3212 = vld [vmem:[#allocation3 + $0x78] sm:$0xff]
        %v3213 = vld [vmem:[#allocation3 + $0x80] sm:$0xff]
        %v3214 = vld [vmem:[#allocation3 + $0x88] sm:$0xff]
        %v3215 = vld [vmem:[#allocation3 + $0x90] sm:$0xff]
        %v3216 = vld [vmem:[#allocation3 + $0x98] sm:$0xff]
        %v3217 = vld [vmem:[#allocation3 + $0xa0] sm:$0xff]
        %v3218 = vld [vmem:[#allocation3 + $0xa8] sm:$0xff]
        %v3219 = vld [vmem:[#allocation3 + $0xb0] sm:$0xff]
        %v3220 = vld [vmem:[#allocation3 + $0xb8] sm:$0xff]
        %v3221 = vld [vmem:[#allocation3 + $0xc0] sm:$0xff]
        %v3222 = vld [vmem:[#allocation3 + $0xc8] sm:$0xff]
        %v3223 = vld [vmem:[#allocation3 + $0xd0] sm:$0xff]
        %v3224 = vld [vmem:[#allocation3 + $0xd8] sm:$0xff]
        %v3225 = vld [vmem:[#allocation3 + $0xe0] sm:$0xff]
        %v3226 = vld [vmem:[#allocation3 + $0xe8] sm:$0xff]
        %v3227 = vld [vmem:[#allocation3 + $0xf0] sm:$0xff]
        %v3228 = vld [vmem:[#allocation3 + $0xf8] sm:$0xff]
        %s3229 = scalar_lea.vmem [#allocation7], 24
        %v3230 = vld [vmem:[%s3229] sm:$0xf]
        %v3232 = vsel %vm297, %v3165, 0
        %v3235 = vsel %vm297, %v3166, 0
        %v3238 = vsel %vm297, %v3167, 0
        %v3241 = vsel %vm297, %v3168, 0
        %v3244 = vsel %vm297, %v3169, 0
        %v3247 = vsel %vm297, %v3170, 0
        %v3250 = vsel %vm297, %v3171, 0
        %v3253 = vsel %vm297, %v3172, 0
        %v3256 = vsel %vm297, %v3173, 0
        %v3259 = vsel %vm297, %v3174, 0
        %v3262 = vsel %vm297, %v3175, 0
        %v3265 = vsel %vm297, %v3176, 0
        %v3268 = vsel %vm297, %v3177, 0
        %v3271 = vsel %vm297, %v3178, 0
        %v3274 = vsel %vm297, %v3179, 0
        %v3277 = vsel %vm297, %v3180, 0
        %v3280 = vsel %vm297, %v3181, 0
        %v3283 = vsel %vm297, %v3182, 0
        %v3286 = vsel %vm297, %v3183, 0
        %v3289 = vsel %vm297, %v3184, 0
        %v3292 = vsel %vm297, %v3185, 0
        %v3295 = vsel %vm297, %v3186, 0
        %v3298 = vsel %vm297, %v3187, 0
        %v3301 = vsel %vm297, %v3188, 0
        %v3304 = vsel %vm297, %v3189, 0
        %v3307 = vsel %vm297, %v3190, 0
        %v3310 = vsel %vm297, %v3191, 0
        %v3313 = vsel %vm297, %v3192, 0
        %v3316 = vsel %vm297, %v3193, 0
        %v3319 = vsel %vm297, %v3194, 0
        %v3322 = vsel %vm297, %v3195, 0
        %v3325 = vsel %vm297, %v3196, 0
        %v3328 = vsel %vm601, %v3230, 0
        %3330 = vmatprep.subr.mxu0 0.0
        %3331 = vmatpush1.msra.mxu0 %v3328
        %3332 = vmatprep.subr.mxu0 0.0
        %3333 = vmatpush1.msra.mxu0 0.0
        %3334 = vmatprep.subr.mxu0 0.0
        %3335 = vmatpush1.msra.mxu0 0.0
        %3336 = vmatprep.subr.mxu0 0.0
        %3337 = vmatpush1.msra.mxu0 0.0
        %3338 = vmatprep.subr.mxu0 0.0
        %3339 = vmatpush1.msra.mxu0 0.0
        %3340 = vmatprep.subr.mxu0 0.0
        %3341 = vmatpush1.msra.mxu0 0.0
        %3342 = vmatprep.subr.mxu0 0.0
        %3343 = vmatpush1.msra.mxu0 0.0
        %3344 = vmatprep.subr.mxu0 0.0
        %3345 = vmatpush1.msra.mxu0 0.0
        %3346 = vmatprep.subr.mxu0 0.0
        %3347 = vmatpush1.msra.mxu0 0.0
        %3348 = vmatprep.subr.mxu0 0.0
        %3349 = vmatpush1.msra.mxu0 0.0
        %3350 = vmatprep.subr.mxu0 0.0
        %3351 = vmatpush1.msra.mxu0 0.0
        %3352 = vmatprep.subr.mxu0 0.0
        %3353 = vmatpush1.msra.mxu0 0.0
        %3354 = vmatprep.subr.mxu0 0.0
        %3355 = vmatpush1.msra.mxu0 0.0
        %3356 = vmatprep.subr.mxu0 0.0
        %3357 = vmatpush1.msra.mxu0 0.0
        %3358 = vmatprep.subr.mxu0 0.0
        %3359 = vmatpush1.msra.mxu0 0.0
        %3360 = vmatprep.subr.mxu0 0.0
        %3361 = vmatpush1.msra.mxu0 0.0
        %3362 = vmatprep.subr.mxu0 0.0
        %3363 = vmatpush1.msra.mxu0 0.0
        %3364 = vmatprep.subr.mxu0 0.0
        %3365 = vmatpush1.msra.mxu0 0.0
        %3366 = vmatprep.subr.mxu0 0.0
        %3367 = vmatpush1.msra.mxu0 0.0
        %3368 = vmatprep.subr.mxu0 0.0
        %3369 = vmatpush1.msra.mxu0 0.0
        %3370 = vmatprep.subr.mxu0 0.0
        %3371 = vmatpush1.msra.mxu0 0.0
        %3372 = vmatprep.subr.mxu0 0.0
        %3373 = vmatpush1.msra.mxu0 0.0
        %3374 = vmatprep.subr.mxu0 0.0
        %3375 = vmatpush1.msra.mxu0 0.0
        %3376 = vmatprep.subr.mxu0 0.0
        %3377 = vmatpush1.msra.mxu0 0.0
        %3378 = vmatprep.subr.mxu0 0.0
        %3379 = vmatpush1.msra.mxu0 0.0
        %3380 = vmatprep.subr.mxu0 0.0
        %3381 = vmatpush1.msra.mxu0 0.0
        %3382 = vmatprep.subr.mxu0 0.0
        %3383 = vmatpush1.msra.mxu0 0.0
        %3384 = vmatprep.subr.mxu0 0.0
        %3385 = vmatpush1.msra.mxu0 0.0
        %3386 = vmatprep.subr.mxu0 0.0
        %3387 = vmatpush1.msra.mxu0 0.0
        %3388 = vmatprep.subr.mxu0 0.0
        %3389 = vmatpush1.msra.mxu0 0.0
        %3390 = vmatprep.subr.mxu0 0.0
        %3391 = vmatpush1.msra.mxu0 0.0
        %3392 = vmatprep.subr.mxu0 0.0
        %3393 = vmatpush1.msra.mxu0 0.0
        %3394 = vmatprep.mubr.f32.mxu0 0.0
        %3395 = vmatmul.mubr.f32.gmra.mrb[0].mxu0 %v3232
        %v3396 = vpop.f32.mrb[0].mxu0
        %v3397 = vadd.f32 0.0, %v3396
        %v3398 = vpop.f32.mrb[0].mxu0
        %3399 = vmatprep.mubr.f32.mxu0 0.0
        %3400 = vmatmul.mubr.f32.gmra.mrb[0].mxu0 %v3235
        %v3401 = vpop.f32.mrb[0].mxu0
        %v3402 = vadd.f32 0.0, %v3401
        %v3403 = vpop.f32.mrb[0].mxu0
        %3404 = vmatprep.mubr.f32.mxu0 0.0
        %3405 = vmatmul.mubr.f32.gmra.mrb[0].mxu0 %v3238
        %v3406 = vpop.f32.mrb[0].mxu0
        %v3407 = vadd.f32 0.0, %v3406
        %v3408 = vpop.f32.mrb[0].mxu0
        %3409 = vmatprep.mubr.f32.mxu0 0.0
        %3410 = vmatmul.mubr.f32.gmra.mrb[0].mxu0 %v3241
        %v3411 = vpop.f32.mrb[0].mxu0
        %v3412 = vadd.f32 0.0, %v3411
        %v3413 = vpop.f32.mrb[0].mxu0
        %3414 = vmatprep.mubr.f32.mxu0 0.0
        %3415 = vmatmul.mubr.f32.gmra.mrb[0].mxu0 %v3244
        %v3416 = vpop.f32.mrb[0].mxu0
        %v3417 = vadd.f32 0.0, %v3416
        %v3418 = vpop.f32.mrb[0].mxu0
        %3419 = vmatprep.mubr.f32.mxu0 0.0
        %3420 = vmatmul.mubr.f32.gmra.mrb[0].mxu0 %v3247
        %v3421 = vpop.f32.mrb[0].mxu0
        %v3422 = vadd.f32 0.0, %v3421
        %v3423 = vpop.f32.mrb[0].mxu0
        %3424 = vmatprep.mubr.f32.mxu0 0.0
        %3425 = vmatmul.mubr.f32.gmra.mrb[0].mxu0 %v3250
        %v3426 = vpop.f32.mrb[0].mxu0
        %v3427 = vadd.f32 0.0, %v3426
        %v3428 = vpop.f32.mrb[0].mxu0
        %3429 = vmatprep.mubr.f32.mxu0 0.0
        %3430 = vmatmul.mubr.f32.gmra.mrb[0].mxu0 %v3253
        %v3431 = vpop.f32.mrb[0].mxu0
        %v3432 = vadd.f32 0.0, %v3431
        %v3433 = vpop.f32.mrb[0].mxu0
        %3434 = vmatprep.mubr.f32.mxu0 0.0
        %3435 = vmatmul.mubr.f32.gmra.mrb[0].mxu0 %v3256
        %v3436 = vpop.f32.mrb[0].mxu0
        %v3437 = vadd.f32 0.0, %v3436
        %v3438 = vpop.f32.mrb[0].mxu0
        %3439 = vmatprep.mubr.f32.mxu0 0.0
        %3440 = vmatmul.mubr.f32.gmra.mrb[0].mxu0 %v3259
        %v3441 = vpop.f32.mrb[0].mxu0
        %v3442 = vadd.f32 0.0, %v3441
        %v3443 = vpop.f32.mrb[0].mxu0
        %3444 = vmatprep.mubr.f32.mxu0 0.0
        %3445 = vmatmul.mubr.f32.gmra.mrb[0].mxu0 %v3262
        %v3446 = vpop.f32.mrb[0].mxu0
        %v3447 = vadd.f32 0.0, %v3446
        %v3448 = vpop.f32.mrb[0].mxu0
        %3449 = vmatprep.mubr.f32.mxu0 0.0
        %3450 = vmatmul.mubr.f32.gmra.mrb[0].mxu0 %v3265
        %v3451 = vpop.f32.mrb[0].mxu0
        %v3452 = vadd.f32 0.0, %v3451
        %v3453 = vpop.f32.mrb[0].mxu0
        %3454 = vmatprep.mubr.f32.mxu0 0.0
        %3455 = vmatmul.mubr.f32.gmra.mrb[0].mxu0 %v3268
        %v3456 = vpop.f32.mrb[0].mxu0
        %v3457 = vadd.f32 0.0, %v3456
        %v3458 = vpop.f32.mrb[0].mxu0
        %3459 = vmatprep.mubr.f32.mxu0 0.0
        %3460 = vmatmul.mubr.f32.gmra.mrb[0].mxu0 %v3271
        %v3461 = vpop.f32.mrb[0].mxu0
        %v3462 = vadd.f32 0.0, %v3461
        %v3463 = vpop.f32.mrb[0].mxu0
        %3464 = vmatprep.mubr.f32.mxu0 0.0
        %3465 = vmatmul.mubr.f32.gmra.mrb[0].mxu0 %v3274
        %v3466 = vpop.f32.mrb[0].mxu0
        %v3467 = vadd.f32 0.0, %v3466
        %v3468 = vpop.f32.mrb[0].mxu0
        %3469 = vmatprep.mubr.f32.mxu0 0.0
        %3470 = vmatmul.mubr.f32.gmra.mrb[0].mxu0 %v3277
        %v3471 = vpop.f32.mrb[0].mxu0
        %v3472 = vadd.f32 0.0, %v3471
        %v3473 = vpop.f32.mrb[0].mxu0
        %3474 = vmatprep.mubr.f32.mxu0 0.0
        %3475 = vmatmul.mubr.f32.gmra.mrb[0].mxu0 %v3280
        %v3476 = vpop.f32.mrb[0].mxu0
        %v3477 = vadd.f32 0.0, %v3476
        %v3478 = vpop.f32.mrb[0].mxu0
        %3479 = vmatprep.mubr.f32.mxu0 0.0
        %3480 = vmatmul.mubr.f32.gmra.mrb[0].mxu0 %v3283
        %v3481 = vpop.f32.mrb[0].mxu0
        %v3482 = vadd.f32 0.0, %v3481
        %v3483 = vpop.f32.mrb[0].mxu0
        %3484 = vmatprep.mubr.f32.mxu0 0.0
        %3485 = vmatmul.mubr.f32.gmra.mrb[0].mxu0 %v3286
        %v3486 = vpop.f32.mrb[0].mxu0
        %v3487 = vadd.f32 0.0, %v3486
        %v3488 = vpop.f32.mrb[0].mxu0
        %3489 = vmatprep.mubr.f32.mxu0 0.0
        %3490 = vmatmul.mubr.f32.gmra.mrb[0].mxu0 %v3289
        %v3491 = vpop.f32.mrb[0].mxu0
        %v3492 = vadd.f32 0.0, %v3491
        %v3493 = vpop.f32.mrb[0].mxu0
        %3494 = vmatprep.mubr.f32.mxu0 0.0
        %3495 = vmatmul.mubr.f32.gmra.mrb[0].mxu0 %v3292
        %v3496 = vpop.f32.mrb[0].mxu0
        %v3497 = vadd.f32 0.0, %v3496
        %v3498 = vpop.f32.mrb[0].mxu0
        %3499 = vmatprep.mubr.f32.mxu0 0.0
        %3500 = vmatmul.mubr.f32.gmra.mrb[0].mxu0 %v3295
        %v3501 = vpop.f32.mrb[0].mxu0
        %v3502 = vadd.f32 0.0, %v3501
        %v3503 = vpop.f32.mrb[0].mxu0
        %3504 = vmatprep.mubr.f32.mxu0 0.0
        %3505 = vmatmul.mubr.f32.gmra.mrb[0].mxu0 %v3298
        %v3506 = vpop.f32.mrb[0].mxu0
        %v3507 = vadd.f32 0.0, %v3506
        %v3508 = vpop.f32.mrb[0].mxu0
        %3509 = vmatprep.mubr.f32.mxu0 0.0
        %3510 = vmatmul.mubr.f32.gmra.mrb[0].mxu0 %v3301
        %v3511 = vpop.f32.mrb[0].mxu0
        %v3512 = vadd.f32 0.0, %v3511
        %v3513 = vpop.f32.mrb[0].mxu0
        %3514 = vmatprep.mubr.f32.mxu0 0.0
        %3515 = vmatmul.mubr.f32.gmra.mrb[0].mxu0 %v3304
        %v3516 = vpop.f32.mrb[0].mxu0
        %v3517 = vadd.f32 0.0, %v3516
        %v3518 = vpop.f32.mrb[0].mxu0
        %3519 = vmatprep.mubr.f32.mxu0 0.0
        %3520 = vmatmul.mubr.f32.gmra.mrb[0].mxu0 %v3307
        %v3521 = vpop.f32.mrb[0].mxu0
        %v3522 = vadd.f32 0.0, %v3521
        %v3523 = vpop.f32.mrb[0].mxu0
        %3524 = vmatprep.mubr.f32.mxu0 0.0
        %3525 = vmatmul.mubr.f32.gmra.mrb[0].mxu0 %v3310
        %v3526 = vpop.f32.mrb[0].mxu0
        %v3527 = vadd.f32 0.0, %v3526
        %v3528 = vpop.f32.mrb[0].mxu0
        %3529 = vmatprep.mubr.f32.mxu0 0.0
        %3530 = vmatmul.mubr.f32.gmra.mrb[0].mxu0 %v3313
        %v3531 = vpop.f32.mrb[0].mxu0
        %v3532 = vadd.f32 0.0, %v3531
        %v3533 = vpop.f32.mrb[0].mxu0
        %3534 = vmatprep.mubr.f32.mxu0 0.0
        %3535 = vmatmul.mubr.f32.gmra.mrb[0].mxu0 %v3316
        %v3536 = vpop.f32.mrb[0].mxu0
        %v3537 = vadd.f32 0.0, %v3536
        %v3538 = vpop.f32.mrb[0].mxu0
        %3539 = vmatprep.mubr.f32.mxu0 0.0
        %3540 = vmatmul.mubr.f32.gmra.mrb[0].mxu0 %v3319
        %v3541 = vpop.f32.mrb[0].mxu0
        %v3542 = vadd.f32 0.0, %v3541
        %v3543 = vpop.f32.mrb[0].mxu0
        %3544 = vmatprep.mubr.f32.mxu0 0.0
        %3545 = vmatmul.mubr.f32.gmra.mrb[0].mxu0 %v3322
        %v3546 = vpop.f32.mrb[0].mxu0
        %v3547 = vadd.f32 0.0, %v3546
        %v3548 = vpop.f32.mrb[0].mxu0
        %3549 = vmatprep.mubr.f32.mxu0 0.0
        %3550 = vmatmul.mubr.f32.gmra.mrb[0].mxu0 %v3325
        %v3551 = vpop.f32.mrb[0].mxu0
        %v3552 = vadd.f32 0.0, %v3551
        %v3553 = vpop.f32.mrb[0].mxu0
        %3554 = vdwg.mxu0
        %v3555 = vadd.f32 %v3197, %v3397
        %v3556 = vadd.f32 %v3198, %v3402
        %v3557 = vadd.f32 %v3199, %v3407
        %v3558 = vadd.f32 %v3200, %v3412
        %v3559 = vadd.f32 %v3201, %v3417
        %v3560 = vadd.f32 %v3202, %v3422
        %v3561 = vadd.f32 %v3203, %v3427
        %v3562 = vadd.f32 %v3204, %v3432
        %v3563 = vadd.f32 %v3205, %v3437
        %v3564 = vadd.f32 %v3206, %v3442
        %v3565 = vadd.f32 %v3207, %v3447
        %v3566 = vadd.f32 %v3208, %v3452
        %v3567 = vadd.f32 %v3209, %v3457
        %v3568 = vadd.f32 %v3210, %v3462
        %v3569 = vadd.f32 %v3211, %v3467
        %v3570 = vadd.f32 %v3212, %v3472
        %v3571 = vadd.f32 %v3213, %v3477
        %v3572 = vadd.f32 %v3214, %v3482
        %v3573 = vadd.f32 %v3215, %v3487
        %v3574 = vadd.f32 %v3216, %v3492
        %v3575 = vadd.f32 %v3217, %v3497
        %v3576 = vadd.f32 %v3218, %v3502
        %v3577 = vadd.f32 %v3219, %v3507
        %v3578 = vadd.f32 %v3220, %v3512
        %v3579 = vadd.f32 %v3221, %v3517
        %v3580 = vadd.f32 %v3222, %v3522
        %v3581 = vadd.f32 %v3223, %v3527
        %v3582 = vadd.f32 %v3224, %v3532
        %v3583 = vadd.f32 %v3225, %v3537
        %v3584 = vadd.f32 %v3226, %v3542
        %v3585 = vadd.f32 %v3227, %v3547
        %v3586 = vadd.f32 %v3228, %v3552
        %3587 = vst.msk [vmem:[#allocation3] sm:$0xff] %vm297, %v3555
        %3588 = vst.msk [vmem:[#allocation3 + $0x8] sm:$0xff] %vm297, %v3556
        %3589 = vst.msk [vmem:[#allocation3 + $0x10] sm:$0xff] %vm297, %v3557
        %3590 = vst.msk [vmem:[#allocation3 + $0x18] sm:$0xff] %vm297, %v3558
        %3591 = vst.msk [vmem:[#allocation3 + $0x20] sm:$0xff] %vm297, %v3559
        %3592 = vst.msk [vmem:[#allocation3 + $0x28] sm:$0xff] %vm297, %v3560
        %3593 = vst.msk [vmem:[#allocation3 + $0x30] sm:$0xff] %vm297, %v3561
        %3594 = vst.msk [vmem:[#allocation3 + $0x38] sm:$0xff] %vm297, %v3562
        %3595 = vst.msk [vmem:[#allocation3 + $0x40] sm:$0xff] %vm297, %v3563
        %3596 = vst.msk [vmem:[#allocation3 + $0x48] sm:$0xff] %vm297, %v3564
        %3597 = vst.msk [vmem:[#allocation3 + $0x50] sm:$0xff] %vm297, %v3565
        %3598 = vst.msk [vmem:[#allocation3 + $0x58] sm:$0xff] %vm297, %v3566
        %3599 = vst.msk [vmem:[#allocation3 + $0x60] sm:$0xff] %vm297, %v3567
        %3600 = vst.msk [vmem:[#allocation3 + $0x68] sm:$0xff] %vm297, %v3568
        %3601 = vst.msk [vmem:[#allocation3 + $0x70] sm:$0xff] %vm297, %v3569
        %3602 = vst.msk [vmem:[#allocation3 + $0x78] sm:$0xff] %vm297, %v3570
        %3603 = vst.msk [vmem:[#allocation3 + $0x80] sm:$0xff] %vm297, %v3571
        %3604 = vst.msk [vmem:[#allocation3 + $0x88] sm:$0xff] %vm297, %v3572
        %3605 = vst.msk [vmem:[#allocation3 + $0x90] sm:$0xff] %vm297, %v3573
        %3606 = vst.msk [vmem:[#allocation3 + $0x98] sm:$0xff] %vm297, %v3574
        %3607 = vst.msk [vmem:[#allocation3 + $0xa0] sm:$0xff] %vm297, %v3575
        %3608 = vst.msk [vmem:[#allocation3 + $0xa8] sm:$0xff] %vm297, %v3576
        %3609 = vst.msk [vmem:[#allocation3 + $0xb0] sm:$0xff] %vm297, %v3577
        %3610 = vst.msk [vmem:[#allocation3 + $0xb8] sm:$0xff] %vm297, %v3578
        %3611 = vst.msk [vmem:[#allocation3 + $0xc0] sm:$0xff] %vm297, %v3579
        %3612 = vst.msk [vmem:[#allocation3 + $0xc8] sm:$0xff] %vm297, %v3580
        %3613 = vst.msk [vmem:[#allocation3 + $0xd0] sm:$0xff] %vm297, %v3581
        %3614 = vst.msk [vmem:[#allocation3 + $0xd8] sm:$0xff] %vm297, %v3582
        %3615 = vst.msk [vmem:[#allocation3 + $0xe0] sm:$0xff] %vm297, %v3583
        %3616 = vst.msk [vmem:[#allocation3 + $0xe8] sm:$0xff] %vm297, %v3584
        %3617 = vst.msk [vmem:[#allocation3 + $0xf0] sm:$0xff] %vm297, %v3585
        %3618 = vst.msk [vmem:[#allocation3 + $0xf8] sm:$0xff] %vm297, %v3586
        %v3619 = vld [vmem:[%s3164 + $0x1] sm:$0xff]
        %v3620 = vld [vmem:[%s3164 + $0x9] sm:$0xff]
        %v3621 = vld [vmem:[%s3164 + $0x19] sm:$0xff]
        %v3622 = vld [vmem:[%s3164 + $0x21] sm:$0xff]
        %v3623 = vld [vmem:[%s3164 + $0x31] sm:$0xff]
        %v3624 = vld [vmem:[%s3164 + $0x39] sm:$0xff]
        %v3625 = vld [vmem:[%s3164 + $0x49] sm:$0xff]
        %v3626 = vld [vmem:[%s3164 + $0x51] sm:$0xff]
        %v3627 = vld [vmem:[%s3164 + $0x61] sm:$0xff]
        %v3628 = vld [vmem:[%s3164 + $0x69] sm:$0xff]
        %v3629 = vld [vmem:[%s3164 + $0x79] sm:$0xff]
        %v3630 = vld [vmem:[%s3164 + $0x81] sm:$0xff]
        %v3631 = vld [vmem:[%s3164 + $0x91] sm:$0xff]
        %v3632 = vld [vmem:[%s3164 + $0x99] sm:$0xff]
        %v3633 = vld [vmem:[%s3164 + $0xa9] sm:$0xff]
        %v3634 = vld [vmem:[%s3164 + $0xb1] sm:$0xff]
        %v3635 = vld [vmem:[%s3164 + $0xc1] sm:$0xff]
        %v3636 = vld [vmem:[%s3164 + $0xc9] sm:$0xff]
        %v3637 = vld [vmem:[%s3164 + $0xd9] sm:$0xff]
        %v3638 = vld [vmem:[%s3164 + $0xe1] sm:$0xff]
        %v3639 = vld [vmem:[%s3164 + $0xf1] sm:$0xff]
        %v3640 = vld [vmem:[%s3164 + $0xf9] sm:$0xff]
        %v3641 = vld [vmem:[%s3164 + $0x109] sm:$0xff]
        %v3642 = vld [vmem:[%s3164 + $0x111] sm:$0xff]
        %v3643 = vld [vmem:[%s3164 + $0x121] sm:$0xff]
        %v3644 = vld [vmem:[%s3164 + $0x129] sm:$0xff]
        %v3645 = vld [vmem:[%s3164 + $0x139] sm:$0xff]
        %v3646 = vld [vmem:[%s3164 + $0x141] sm:$0xff]
        %v3647 = vld [vmem:[%s3164 + $0x151] sm:$0xff]
        %v3648 = vld [vmem:[%s3164 + $0x159] sm:$0xff]
        %v3649 = vld [vmem:[%s3164 + $0x169] sm:$0xff]
        %v3650 = vld [vmem:[%s3164 + $0x171] sm:$0xff]
        %v3651 = vld [vmem:[#allocation3] sm:$0xff]
        %v3652 = vld [vmem:[#allocation3 + $0x8] sm:$0xff]
        %v3653 = vld [vmem:[#allocation3 + $0x10] sm:$0xff]
        %v3654 = vld [vmem:[#allocation3 + $0x18] sm:$0xff]
        %v3655 = vld [vmem:[#allocation3 + $0x20] sm:$0xff]
        %v3656 = vld [vmem:[#allocation3 + $0x28] sm:$0xff]
        %v3657 = vld [vmem:[#allocation3 + $0x30] sm:$0xff]
        %v3658 = vld [vmem:[#allocation3 + $0x38] sm:$0xff]
        %v3659 = vld [vmem:[#allocation3 + $0x40] sm:$0xff]
        %v3660 = vld [vmem:[#allocation3 + $0x48] sm:$0xff]
        %v3661 = vld [vmem:[#allocation3 + $0x50] sm:$0xff]
        %v3662 = vld [vmem:[#allocation3 + $0x58] sm:$0xff]
        %v3663 = vld [vmem:[#allocation3 + $0x60] sm:$0xff]
        %v3664 = vld [vmem:[#allocation3 + $0x68] sm:$0xff]
        %v3665 = vld [vmem:[#allocation3 + $0x70] sm:$0xff]
        %v3666 = vld [vmem:[#allocation3 + $0x78] sm:$0xff]
        %v3667 = vld [vmem:[#allocation3 + $0x80] sm:$0xff]
        %v3668 = vld [vmem:[#allocation3 + $0x88] sm:$0xff]
        %v3669 = vld [vmem:[#allocation3 + $0x90] sm:$0xff]
        %v3670 = vld [vmem:[#allocation3 + $0x98] sm:$0xff]
        %v3671 = vld [vmem:[#allocation3 + $0xa0] sm:$0xff]
        %v3672 = vld [vmem:[#allocation3 + $0xa8] sm:$0xff]
        %v3673 = vld [vmem:[#allocation3 + $0xb0] sm:$0xff]
        %v3674 = vld [vmem:[#allocation3 + $0xb8] sm:$0xff]
        %v3675 = vld [vmem:[#allocation3 + $0xc0] sm:$0xff]
        %v3676 = vld [vmem:[#allocation3 + $0xc8] sm:$0xff]
        %v3677 = vld [vmem:[#allocation3 + $0xd0] sm:$0xff]
        %v3678 = vld [vmem:[#allocation3 + $0xd8] sm:$0xff]
        %v3679 = vld [vmem:[#allocation3 + $0xe0] sm:$0xff]
        %v3680 = vld [vmem:[#allocation3 + $0xe8] sm:$0xff]
        %v3681 = vld [vmem:[#allocation3 + $0xf0] sm:$0xff]
        %v3682 = vld [vmem:[#allocation3 + $0xf8] sm:$0xff]
        %s3683 = scalar_lea.vmem [#allocation7], 28
        %v3684 = vld [vmem:[%s3683] sm:$0xf]
        %v3686 = vsel %vm297, %v3619, 0
        %v3689 = vsel %vm297, %v3620, 0
        %v3692 = vsel %vm297, %v3621, 0
        %v3695 = vsel %vm297, %v3622, 0
        %v3698 = vsel %vm297, %v3623, 0
        %v3701 = vsel %vm297, %v3624, 0
        %v3704 = vsel %vm297, %v3625, 0
        %v3707 = vsel %vm297, %v3626, 0
        %v3710 = vsel %vm297, %v3627, 0
        %v3713 = vsel %vm297, %v3628, 0
        %v3716 = vsel %vm297, %v3629, 0
        %v3719 = vsel %vm297, %v3630, 0
        %v3722 = vsel %vm297, %v3631, 0
        %v3725 = vsel %vm297, %v3632, 0
        %v3728 = vsel %vm297, %v3633, 0
        %v3731 = vsel %vm297, %v3634, 0
        %v3734 = vsel %vm297, %v3635, 0
        %v3737 = vsel %vm297, %v3636, 0
        %v3740 = vsel %vm297, %v3637, 0
        %v3743 = vsel %vm297, %v3638, 0
        %v3746 = vsel %vm297, %v3639, 0
        %v3749 = vsel %vm297, %v3640, 0
        %v3752 = vsel %vm297, %v3641, 0
        %v3755 = vsel %vm297, %v3642, 0
        %v3758 = vsel %vm297, %v3643, 0
        %v3761 = vsel %vm297, %v3644, 0
        %v3764 = vsel %vm297, %v3645, 0
        %v3767 = vsel %vm297, %v3646, 0
        %v3770 = vsel %vm297, %v3647, 0
        %v3773 = vsel %vm297, %v3648, 0
        %v3776 = vsel %vm297, %v3649, 0
        %v3779 = vsel %vm297, %v3650, 0
        %v3782 = vsel %vm601, %v3684, 0
        %3784 = vmatprep.subr.mxu0 0.0
        %3785 = vmatpush1.msra.mxu0 %v3782
        %3786 = vmatprep.subr.mxu0 0.0
        %3787 = vmatpush1.msra.mxu0 0.0
        %3788 = vmatprep.subr.mxu0 0.0
        %3789 = vmatpush1.msra.mxu0 0.0
        %3790 = vmatprep.subr.mxu0 0.0
        %3791 = vmatpush1.msra.mxu0 0.0
        %3792 = vmatprep.subr.mxu0 0.0
        %3793 = vmatpush1.msra.mxu0 0.0
        %3794 = vmatprep.subr.mxu0 0.0
        %3795 = vmatpush1.msra.mxu0 0.0
        %3796 = vmatprep.subr.mxu0 0.0
        %3797 = vmatpush1.msra.mxu0 0.0
        %3798 = vmatprep.subr.mxu0 0.0
        %3799 = vmatpush1.msra.mxu0 0.0
        %3800 = vmatprep.subr.mxu0 0.0
        %3801 = vmatpush1.msra.mxu0 0.0
        %3802 = vmatprep.subr.mxu0 0.0
        %3803 = vmatpush1.msra.mxu0 0.0
        %3804 = vmatprep.subr.mxu0 0.0
        %3805 = vmatpush1.msra.mxu0 0.0
        %3806 = vmatprep.subr.mxu0 0.0
        %3807 = vmatpush1.msra.mxu0 0.0
        %3808 = vmatprep.subr.mxu0 0.0
        %3809 = vmatpush1.msra.mxu0 0.0
        %3810 = vmatprep.subr.mxu0 0.0
        %3811 = vmatpush1.msra.mxu0 0.0
        %3812 = vmatprep.subr.mxu0 0.0
        %3813 = vmatpush1.msra.mxu0 0.0
        %3814 = vmatprep.subr.mxu0 0.0
        %3815 = vmatpush1.msra.mxu0 0.0
        %3816 = vmatprep.subr.mxu0 0.0
        %3817 = vmatpush1.msra.mxu0 0.0
        %3818 = vmatprep.subr.mxu0 0.0
        %3819 = vmatpush1.msra.mxu0 0.0
        %3820 = vmatprep.subr.mxu0 0.0
        %3821 = vmatpush1.msra.mxu0 0.0
        %3822 = vmatprep.subr.mxu0 0.0
        %3823 = vmatpush1.msra.mxu0 0.0
        %3824 = vmatprep.subr.mxu0 0.0
        %3825 = vmatpush1.msra.mxu0 0.0
        %3826 = vmatprep.subr.mxu0 0.0
        %3827 = vmatpush1.msra.mxu0 0.0
        %3828 = vmatprep.subr.mxu0 0.0
        %3829 = vmatpush1.msra.mxu0 0.0
        %3830 = vmatprep.subr.mxu0 0.0
        %3831 = vmatpush1.msra.mxu0 0.0
        %3832 = vmatprep.subr.mxu0 0.0
        %3833 = vmatpush1.msra.mxu0 0.0
        %3834 = vmatprep.subr.mxu0 0.0
        %3835 = vmatpush1.msra.mxu0 0.0
        %3836 = vmatprep.subr.mxu0 0.0
        %3837 = vmatpush1.msra.mxu0 0.0
        %3838 = vmatprep.subr.mxu0 0.0
        %3839 = vmatpush1.msra.mxu0 0.0
        %3840 = vmatprep.subr.mxu0 0.0
        %3841 = vmatpush1.msra.mxu0 0.0
        %3842 = vmatprep.subr.mxu0 0.0
        %3843 = vmatpush1.msra.mxu0 0.0
        %3844 = vmatprep.subr.mxu0 0.0
        %3845 = vmatpush1.msra.mxu0 0.0
        %3846 = vmatprep.subr.mxu0 0.0
        %3847 = vmatpush1.msra.mxu0 0.0
        %3848 = vmatprep.mubr.f32.mxu0 0.0
        %3849 = vmatmul.mubr.f32.gmra.mrb[0].mxu0 %v3686
        %v3850 = vpop.f32.mrb[0].mxu0
        %v3851 = vadd.f32 0.0, %v3850
        %v3852 = vpop.f32.mrb[0].mxu0
        %3853 = vmatprep.mubr.f32.mxu0 0.0
        %3854 = vmatmul.mubr.f32.gmra.mrb[0].mxu0 %v3689
        %v3855 = vpop.f32.mrb[0].mxu0
        %v3856 = vadd.f32 0.0, %v3855
        %v3857 = vpop.f32.mrb[0].mxu0
        %3858 = vmatprep.mubr.f32.mxu0 0.0
        %3859 = vmatmul.mubr.f32.gmra.mrb[0].mxu0 %v3692
        %v3860 = vpop.f32.mrb[0].mxu0
        %v3861 = vadd.f32 0.0, %v3860
        %v3862 = vpop.f32.mrb[0].mxu0
        %3863 = vmatprep.mubr.f32.mxu0 0.0
        %3864 = vmatmul.mubr.f32.gmra.mrb[0].mxu0 %v3695
        %v3865 = vpop.f32.mrb[0].mxu0
        %v3866 = vadd.f32 0.0, %v3865
        %v3867 = vpop.f32.mrb[0].mxu0
        %3868 = vmatprep.mubr.f32.mxu0 0.0
        %3869 = vmatmul.mubr.f32.gmra.mrb[0].mxu0 %v3698
        %v3870 = vpop.f32.mrb[0].mxu0
        %v3871 = vadd.f32 0.0, %v3870
        %v3872 = vpop.f32.mrb[0].mxu0
        %3873 = vmatprep.mubr.f32.mxu0 0.0
        %3874 = vmatmul.mubr.f32.gmra.mrb[0].mxu0 %v3701
        %v3875 = vpop.f32.mrb[0].mxu0
        %v3876 = vadd.f32 0.0, %v3875
        %v3877 = vpop.f32.mrb[0].mxu0
        %3878 = vmatprep.mubr.f32.mxu0 0.0
        %3879 = vmatmul.mubr.f32.gmra.mrb[0].mxu0 %v3704
        %v3880 = vpop.f32.mrb[0].mxu0
        %v3881 = vadd.f32 0.0, %v3880
        %v3882 = vpop.f32.mrb[0].mxu0
        %3883 = vmatprep.mubr.f32.mxu0 0.0
        %3884 = vmatmul.mubr.f32.gmra.mrb[0].mxu0 %v3707
        %v3885 = vpop.f32.mrb[0].mxu0
        %v3886 = vadd.f32 0.0, %v3885
        %v3887 = vpop.f32.mrb[0].mxu0
        %3888 = vmatprep.mubr.f32.mxu0 0.0
        %3889 = vmatmul.mubr.f32.gmra.mrb[0].mxu0 %v3710
        %v3890 = vpop.f32.mrb[0].mxu0
        %v3891 = vadd.f32 0.0, %v3890
        %v3892 = vpop.f32.mrb[0].mxu0
        %3893 = vmatprep.mubr.f32.mxu0 0.0
        %3894 = vmatmul.mubr.f32.gmra.mrb[0].mxu0 %v3713
        %v3895 = vpop.f32.mrb[0].mxu0
        %v3896 = vadd.f32 0.0, %v3895
        %v3897 = vpop.f32.mrb[0].mxu0
        %3898 = vmatprep.mubr.f32.mxu0 0.0
        %3899 = vmatmul.mubr.f32.gmra.mrb[0].mxu0 %v3716
        %v3900 = vpop.f32.mrb[0].mxu0
        %v3901 = vadd.f32 0.0, %v3900
        %v3902 = vpop.f32.mrb[0].mxu0
        %3903 = vmatprep.mubr.f32.mxu0 0.0
        %3904 = vmatmul.mubr.f32.gmra.mrb[0].mxu0 %v3719
        %v3905 = vpop.f32.mrb[0].mxu0
        %v3906 = vadd.f32 0.0, %v3905
        %v3907 = vpop.f32.mrb[0].mxu0
        %3908 = vmatprep.mubr.f32.mxu0 0.0
        %3909 = vmatmul.mubr.f32.gmra.mrb[0].mxu0 %v3722
        %v3910 = vpop.f32.mrb[0].mxu0
        %v3911 = vadd.f32 0.0, %v3910
        %v3912 = vpop.f32.mrb[0].mxu0
        %3913 = vmatprep.mubr.f32.mxu0 0.0
        %3914 = vmatmul.mubr.f32.gmra.mrb[0].mxu0 %v3725
        %v3915 = vpop.f32.mrb[0].mxu0
        %v3916 = vadd.f32 0.0, %v3915
        %v3917 = vpop.f32.mrb[0].mxu0
        %3918 = vmatprep.mubr.f32.mxu0 0.0
        %3919 = vmatmul.mubr.f32.gmra.mrb[0].mxu0 %v3728
        %v3920 = vpop.f32.mrb[0].mxu0
        %v3921 = vadd.f32 0.0, %v3920
        %v3922 = vpop.f32.mrb[0].mxu0
        %3923 = vmatprep.mubr.f32.mxu0 0.0
        %3924 = vmatmul.mubr.f32.gmra.mrb[0].mxu0 %v3731
        %v3925 = vpop.f32.mrb[0].mxu0
        %v3926 = vadd.f32 0.0, %v3925
        %v3927 = vpop.f32.mrb[0].mxu0
        %3928 = vmatprep.mubr.f32.mxu0 0.0
        %3929 = vmatmul.mubr.f32.gmra.mrb[0].mxu0 %v3734
        %v3930 = vpop.f32.mrb[0].mxu0
        %v3931 = vadd.f32 0.0, %v3930
        %v3932 = vpop.f32.mrb[0].mxu0
        %3933 = vmatprep.mubr.f32.mxu0 0.0
        %3934 = vmatmul.mubr.f32.gmra.mrb[0].mxu0 %v3737
        %v3935 = vpop.f32.mrb[0].mxu0
        %v3936 = vadd.f32 0.0, %v3935
        %v3937 = vpop.f32.mrb[0].mxu0
        %3938 = vmatprep.mubr.f32.mxu0 0.0
        %3939 = vmatmul.mubr.f32.gmra.mrb[0].mxu0 %v3740
        %v3940 = vpop.f32.mrb[0].mxu0
        %v3941 = vadd.f32 0.0, %v3940
        %v3942 = vpop.f32.mrb[0].mxu0
        %3943 = vmatprep.mubr.f32.mxu0 0.0
        %3944 = vmatmul.mubr.f32.gmra.mrb[0].mxu0 %v3743
        %v3945 = vpop.f32.mrb[0].mxu0
        %v3946 = vadd.f32 0.0, %v3945
        %v3947 = vpop.f32.mrb[0].mxu0
        %3948 = vmatprep.mubr.f32.mxu0 0.0
        %3949 = vmatmul.mubr.f32.gmra.mrb[0].mxu0 %v3746
        %v3950 = vpop.f32.mrb[0].mxu0
        %v3951 = vadd.f32 0.0, %v3950
        %v3952 = vpop.f32.mrb[0].mxu0
        %3953 = vmatprep.mubr.f32.mxu0 0.0
        %3954 = vmatmul.mubr.f32.gmra.mrb[0].mxu0 %v3749
        %v3955 = vpop.f32.mrb[0].mxu0
        %v3956 = vadd.f32 0.0, %v3955
        %v3957 = vpop.f32.mrb[0].mxu0
        %3958 = vmatprep.mubr.f32.mxu0 0.0
        %3959 = vmatmul.mubr.f32.gmra.mrb[0].mxu0 %v3752
        %v3960 = vpop.f32.mrb[0].mxu0
        %v3961 = vadd.f32 0.0, %v3960
        %v3962 = vpop.f32.mrb[0].mxu0
        %3963 = vmatprep.mubr.f32.mxu0 0.0
        %3964 = vmatmul.mubr.f32.gmra.mrb[0].mxu0 %v3755
        %v3965 = vpop.f32.mrb[0].mxu0
        %v3966 = vadd.f32 0.0, %v3965
        %v3967 = vpop.f32.mrb[0].mxu0
        %3968 = vmatprep.mubr.f32.mxu0 0.0
        %3969 = vmatmul.mubr.f32.gmra.mrb[0].mxu0 %v3758
        %v3970 = vpop.f32.mrb[0].mxu0
        %v3971 = vadd.f32 0.0, %v3970
        %v3972 = vpop.f32.mrb[0].mxu0
        %3973 = vmatprep.mubr.f32.mxu0 0.0
        %3974 = vmatmul.mubr.f32.gmra.mrb[0].mxu0 %v3761
        %v3975 = vpop.f32.mrb[0].mxu0
        %v3976 = vadd.f32 0.0, %v3975
        %v3977 = vpop.f32.mrb[0].mxu0
        %3978 = vmatprep.mubr.f32.mxu0 0.0
        %3979 = vmatmul.mubr.f32.gmra.mrb[0].mxu0 %v3764
        %v3980 = vpop.f32.mrb[0].mxu0
        %v3981 = vadd.f32 0.0, %v3980
        %v3982 = vpop.f32.mrb[0].mxu0
        %3983 = vmatprep.mubr.f32.mxu0 0.0
        %3984 = vmatmul.mubr.f32.gmra.mrb[0].mxu0 %v3767
        %v3985 = vpop.f32.mrb[0].mxu0
        %v3986 = vadd.f32 0.0, %v3985
        %v3987 = vpop.f32.mrb[0].mxu0
        %3988 = vmatprep.mubr.f32.mxu0 0.0
        %3989 = vmatmul.mubr.f32.gmra.mrb[0].mxu0 %v3770
        %v3990 = vpop.f32.mrb[0].mxu0
        %v3991 = vadd.f32 0.0, %v3990
        %v3992 = vpop.f32.mrb[0].mxu0
        %3993 = vmatprep.mubr.f32.mxu0 0.0
        %3994 = vmatmul.mubr.f32.gmra.mrb[0].mxu0 %v3773
        %v3995 = vpop.f32.mrb[0].mxu0
        %v3996 = vadd.f32 0.0, %v3995
        %v3997 = vpop.f32.mrb[0].mxu0
        %3998 = vmatprep.mubr.f32.mxu0 0.0
        %3999 = vmatmul.mubr.f32.gmra.mrb[0].mxu0 %v3776
        %v4000 = vpop.f32.mrb[0].mxu0
        %v4001 = vadd.f32 0.0, %v4000
        %v4002 = vpop.f32.mrb[0].mxu0
        %4003 = vmatprep.mubr.f32.mxu0 0.0
        %4004 = vmatmul.mubr.f32.gmra.mrb[0].mxu0 %v3779
        %v4005 = vpop.f32.mrb[0].mxu0
        %v4006 = vadd.f32 0.0, %v4005
        %v4007 = vpop.f32.mrb[0].mxu0
        %4008 = vdwg.mxu0
        %v4009 = vadd.f32 %v3651, %v3851
        %v4010 = vadd.f32 %v3652, %v3856
        %v4011 = vadd.f32 %v3653, %v3861
        %v4012 = vadd.f32 %v3654, %v3866
        %v4013 = vadd.f32 %v3655, %v3871
        %v4014 = vadd.f32 %v3656, %v3876
        %v4015 = vadd.f32 %v3657, %v3881
        %v4016 = vadd.f32 %v3658, %v3886
        %v4017 = vadd.f32 %v3659, %v3891
        %v4018 = vadd.f32 %v3660, %v3896
        %v4019 = vadd.f32 %v3661, %v3901
        %v4020 = vadd.f32 %v3662, %v3906
        %v4021 = vadd.f32 %v3663, %v3911
        %v4022 = vadd.f32 %v3664, %v3916
        %v4023 = vadd.f32 %v3665, %v3921
        %v4024 = vadd.f32 %v3666, %v3926
        %v4025 = vadd.f32 %v3667, %v3931
        %v4026 = vadd.f32 %v3668, %v3936
        %v4027 = vadd.f32 %v3669, %v3941
        %v4028 = vadd.f32 %v3670, %v3946
        %v4029 = vadd.f32 %v3671, %v3951
        %v4030 = vadd.f32 %v3672, %v3956
        %v4031 = vadd.f32 %v3673, %v3961
        %v4032 = vadd.f32 %v3674, %v3966
        %v4033 = vadd.f32 %v3675, %v3971
        %v4034 = vadd.f32 %v3676, %v3976
        %v4035 = vadd.f32 %v3677, %v3981
        %v4036 = vadd.f32 %v3678, %v3986
        %v4037 = vadd.f32 %v3679, %v3991
        %v4038 = vadd.f32 %v3680, %v3996
        %v4039 = vadd.f32 %v3681, %v4001
        %v4040 = vadd.f32 %v3682, %v4006
        %4041 = vst.msk [vmem:[#allocation3] sm:$0xff] %vm297, %v4009
        %4042 = vst.msk [vmem:[#allocation3 + $0x8] sm:$0xff] %vm297, %v4010
        %4043 = vst.msk [vmem:[#allocation3 + $0x10] sm:$0xff] %vm297, %v4011
        %4044 = vst.msk [vmem:[#allocation3 + $0x18] sm:$0xff] %vm297, %v4012
        %4045 = vst.msk [vmem:[#allocation3 + $0x20] sm:$0xff] %vm297, %v4013
        %4046 = vst.msk [vmem:[#allocation3 + $0x28] sm:$0xff] %vm297, %v4014
        %4047 = vst.msk [vmem:[#allocation3 + $0x30] sm:$0xff] %vm297, %v4015
        %4048 = vst.msk [vmem:[#allocation3 + $0x38] sm:$0xff] %vm297, %v4016
        %4049 = vst.msk [vmem:[#allocation3 + $0x40] sm:$0xff] %vm297, %v4017
        %4050 = vst.msk [vmem:[#allocation3 + $0x48] sm:$0xff] %vm297, %v4018
        %4051 = vst.msk [vmem:[#allocation3 + $0x50] sm:$0xff] %vm297, %v4019
        %4052 = vst.msk [vmem:[#allocation3 + $0x58] sm:$0xff] %vm297, %v4020
        %4053 = vst.msk [vmem:[#allocation3 + $0x60] sm:$0xff] %vm297, %v4021
        %4054 = vst.msk [vmem:[#allocation3 + $0x68] sm:$0xff] %vm297, %v4022
        %4055 = vst.msk [vmem:[#allocation3 + $0x70] sm:$0xff] %vm297, %v4023
        %4056 = vst.msk [vmem:[#allocation3 + $0x78] sm:$0xff] %vm297, %v4024
        %4057 = vst.msk [vmem:[#allocation3 + $0x80] sm:$0xff] %vm297, %v4025
        %4058 = vst.msk [vmem:[#allocation3 + $0x88] sm:$0xff] %vm297, %v4026
        %4059 = vst.msk [vmem:[#allocation3 + $0x90] sm:$0xff] %vm297, %v4027
        %4060 = vst.msk [vmem:[#allocation3 + $0x98] sm:$0xff] %vm297, %v4028
        %4061 = vst.msk [vmem:[#allocation3 + $0xa0] sm:$0xff] %vm297, %v4029
        %4062 = vst.msk [vmem:[#allocation3 + $0xa8] sm:$0xff] %vm297, %v4030
        %4063 = vst.msk [vmem:[#allocation3 + $0xb0] sm:$0xff] %vm297, %v4031
        %4064 = vst.msk [vmem:[#allocation3 + $0xb8] sm:$0xff] %vm297, %v4032
        %4065 = vst.msk [vmem:[#allocation3 + $0xc0] sm:$0xff] %vm297, %v4033
        %4066 = vst.msk [vmem:[#allocation3 + $0xc8] sm:$0xff] %vm297, %v4034
        %4067 = vst.msk [vmem:[#allocation3 + $0xd0] sm:$0xff] %vm297, %v4035
        %4068 = vst.msk [vmem:[#allocation3 + $0xd8] sm:$0xff] %vm297, %v4036
        %4069 = vst.msk [vmem:[#allocation3 + $0xe0] sm:$0xff] %vm297, %v4037
        %4070 = vst.msk [vmem:[#allocation3 + $0xe8] sm:$0xff] %vm297, %v4038
        %4071 = vst.msk [vmem:[#allocation3 + $0xf0] sm:$0xff] %vm297, %v4039
        %4072 = vst.msk [vmem:[#allocation3 + $0xf8] sm:$0xff] %vm297, %v4040
        %v4073 = vld [vmem:[%s3164 + $0x2] sm:$0xff]
        %v4074 = vld [vmem:[%s3164 + $0xa] sm:$0xff]
        %v4075 = vld [vmem:[%s3164 + $0x1a] sm:$0xff]
        %v4076 = vld [vmem:[%s3164 + $0x22] sm:$0xff]
        %v4077 = vld [vmem:[%s3164 + $0x32] sm:$0xff]
        %v4078 = vld [vmem:[%s3164 + $0x3a] sm:$0xff]
        %v4079 = vld [vmem:[%s3164 + $0x4a] sm:$0xff]
        %v4080 = vld [vmem:[%s3164 + $0x52] sm:$0xff]
        %v4081 = vld [vmem:[%s3164 + $0x62] sm:$0xff]
        %v4082 = vld [vmem:[%s3164 + $0x6a] sm:$0xff]
        %v4083 = vld [vmem:[%s3164 + $0x7a] sm:$0xff]
        %v4084 = vld [vmem:[%s3164 + $0x82] sm:$0xff]
        %v4085 = vld [vmem:[%s3164 + $0x92] sm:$0xff]
        %v4086 = vld [vmem:[%s3164 + $0x9a] sm:$0xff]
        %v4087 = vld [vmem:[%s3164 + $0xaa] sm:$0xff]
        %v4088 = vld [vmem:[%s3164 + $0xb2] sm:$0xff]
        %v4089 = vld [vmem:[%s3164 + $0xc2] sm:$0xff]
        %v4090 = vld [vmem:[%s3164 + $0xca] sm:$0xff]
        %v4091 = vld [vmem:[%s3164 + $0xda] sm:$0xff]
        %v4092 = vld [vmem:[%s3164 + $0xe2] sm:$0xff]
        %v4093 = vld [vmem:[%s3164 + $0xf2] sm:$0xff]
        %v4094 = vld [vmem:[%s3164 + $0xfa] sm:$0xff]
        %v4095 = vld [vmem:[%s3164 + $0x10a] sm:$0xff]
        %v4096 = vld [vmem:[%s3164 + $0x112] sm:$0xff]
        %v4097 = vld [vmem:[%s3164 + $0x122] sm:$0xff]
        %v4098 = vld [vmem:[%s3164 + $0x12a] sm:$0xff]
        %v4099 = vld [vmem:[%s3164 + $0x13a] sm:$0xff]
        %v4100 = vld [vmem:[%s3164 + $0x142] sm:$0xff]
        %v4101 = vld [vmem:[%s3164 + $0x152] sm:$0xff]
        %v4102 = vld [vmem:[%s3164 + $0x15a] sm:$0xff]
        %v4103 = vld [vmem:[%s3164 + $0x16a] sm:$0xff]
        %v4104 = vld [vmem:[%s3164 + $0x172] sm:$0xff]
        %v4105 = vld [vmem:[#allocation3] sm:$0xff]
        %v4106 = vld [vmem:[#allocation3 + $0x8] sm:$0xff]
        %v4107 = vld [vmem:[#allocation3 + $0x10] sm:$0xff]
        %v4108 = vld [vmem:[#allocation3 + $0x18] sm:$0xff]
        %v4109 = vld [vmem:[#allocation3 + $0x20] sm:$0xff]
        %v4110 = vld [vmem:[#allocation3 + $0x28] sm:$0xff]
        %v4111 = vld [vmem:[#allocation3 + $0x30] sm:$0xff]
        %v4112 = vld [vmem:[#allocation3 + $0x38] sm:$0xff]
        %v4113 = vld [vmem:[#allocation3 + $0x40] sm:$0xff]
        %v4114 = vld [vmem:[#allocation3 + $0x48] sm:$0xff]
        %v4115 = vld [vmem:[#allocation3 + $0x50] sm:$0xff]
        %v4116 = vld [vmem:[#allocation3 + $0x58] sm:$0xff]
        %v4117 = vld [vmem:[#allocation3 + $0x60] sm:$0xff]
        %v4118 = vld [vmem:[#allocation3 + $0x68] sm:$0xff]
        %v4119 = vld [vmem:[#allocation3 + $0x70] sm:$0xff]
        %v4120 = vld [vmem:[#allocation3 + $0x78] sm:$0xff]
        %v4121 = vld [vmem:[#allocation3 + $0x80] sm:$0xff]
        %v4122 = vld [vmem:[#allocation3 + $0x88] sm:$0xff]
        %v4123 = vld [vmem:[#allocation3 + $0x90] sm:$0xff]
        %v4124 = vld [vmem:[#allocation3 + $0x98] sm:$0xff]
        %v4125 = vld [vmem:[#allocation3 + $0xa0] sm:$0xff]
        %v4126 = vld [vmem:[#allocation3 + $0xa8] sm:$0xff]
        %v4127 = vld [vmem:[#allocation3 + $0xb0] sm:$0xff]
        %v4128 = vld [vmem:[#allocation3 + $0xb8] sm:$0xff]
        %v4129 = vld [vmem:[#allocation3 + $0xc0] sm:$0xff]
        %v4130 = vld [vmem:[#allocation3 + $0xc8] sm:$0xff]
        %v4131 = vld [vmem:[#allocation3 + $0xd0] sm:$0xff]
        %v4132 = vld [vmem:[#allocation3 + $0xd8] sm:$0xff]
        %v4133 = vld [vmem:[#allocation3 + $0xe0] sm:$0xff]
        %v4134 = vld [vmem:[#allocation3 + $0xe8] sm:$0xff]
        %v4135 = vld [vmem:[#allocation3 + $0xf0] sm:$0xff]
        %v4136 = vld [vmem:[#allocation3 + $0xf8] sm:$0xff]
        %s4137 = scalar_lea.vmem [#allocation7], 32
        %v4138 = vld [vmem:[%s4137] sm:$0xf]
        %v4140 = vsel %vm297, %v4073, 0
        %v4143 = vsel %vm297, %v4074, 0
        %v4146 = vsel %vm297, %v4075, 0
        %v4149 = vsel %vm297, %v4076, 0
        %v4152 = vsel %vm297, %v4077, 0
        %v4155 = vsel %vm297, %v4078, 0
        %v4158 = vsel %vm297, %v4079, 0
        %v4161 = vsel %vm297, %v4080, 0
        %v4164 = vsel %vm297, %v4081, 0
        %v4167 = vsel %vm297, %v4082, 0
        %v4170 = vsel %vm297, %v4083, 0
        %v4173 = vsel %vm297, %v4084, 0
        %v4176 = vsel %vm297, %v4085, 0
        %v4179 = vsel %vm297, %v4086, 0
        %v4182 = vsel %vm297, %v4087, 0
        %v4185 = vsel %vm297, %v4088, 0
        %v4188 = vsel %vm297, %v4089, 0
        %v4191 = vsel %vm297, %v4090, 0
        %v4194 = vsel %vm297, %v4091, 0
        %v4197 = vsel %vm297, %v4092, 0
        %v4200 = vsel %vm297, %v4093, 0
        %v4203 = vsel %vm297, %v4094, 0
        %v4206 = vsel %vm297, %v4095, 0
        %v4209 = vsel %vm297, %v4096, 0
        %v4212 = vsel %vm297, %v4097, 0
        %v4215 = vsel %vm297, %v4098, 0
        %v4218 = vsel %vm297, %v4099, 0
        %v4221 = vsel %vm297, %v4100, 0
        %v4224 = vsel %vm297, %v4101, 0
        %v4227 = vsel %vm297, %v4102, 0
        %v4230 = vsel %vm297, %v4103, 0
        %v4233 = vsel %vm297, %v4104, 0
        %v4236 = vsel %vm601, %v4138, 0
        %4238 = vmatprep.subr.mxu0 0.0
        %4239 = vmatpush1.msra.mxu0 %v4236
        %4240 = vmatprep.subr.mxu0 0.0
        %4241 = vmatpush1.msra.mxu0 0.0
        %4242 = vmatprep.subr.mxu0 0.0
        %4243 = vmatpush1.msra.mxu0 0.0
        %4244 = vmatprep.subr.mxu0 0.0
        %4245 = vmatpush1.msra.mxu0 0.0
        %4246 = vmatprep.subr.mxu0 0.0
        %4247 = vmatpush1.msra.mxu0 0.0
        %4248 = vmatprep.subr.mxu0 0.0
        %4249 = vmatpush1.msra.mxu0 0.0
        %4250 = vmatprep.subr.mxu0 0.0
        %4251 = vmatpush1.msra.mxu0 0.0
        %4252 = vmatprep.subr.mxu0 0.0
        %4253 = vmatpush1.msra.mxu0 0.0
        %4254 = vmatprep.subr.mxu0 0.0
        %4255 = vmatpush1.msra.mxu0 0.0
        %4256 = vmatprep.subr.mxu0 0.0
        %4257 = vmatpush1.msra.mxu0 0.0
        %4258 = vmatprep.subr.mxu0 0.0
        %4259 = vmatpush1.msra.mxu0 0.0
        %4260 = vmatprep.subr.mxu0 0.0
        %4261 = vmatpush1.msra.mxu0 0.0
        %4262 = vmatprep.subr.mxu0 0.0
        %4263 = vmatpush1.msra.mxu0 0.0
        %4264 = vmatprep.subr.mxu0 0.0
        %4265 = vmatpush1.msra.mxu0 0.0
        %4266 = vmatprep.subr.mxu0 0.0
        %4267 = vmatpush1.msra.mxu0 0.0
        %4268 = vmatprep.subr.mxu0 0.0
        %4269 = vmatpush1.msra.mxu0 0.0
        %4270 = vmatprep.subr.mxu0 0.0
        %4271 = vmatpush1.msra.mxu0 0.0
        %4272 = vmatprep.subr.mxu0 0.0
        %4273 = vmatpush1.msra.mxu0 0.0
        %4274 = vmatprep.subr.mxu0 0.0
        %4275 = vmatpush1.msra.mxu0 0.0
        %4276 = vmatprep.subr.mxu0 0.0
        %4277 = vmatpush1.msra.mxu0 0.0
        %4278 = vmatprep.subr.mxu0 0.0
        %4279 = vmatpush1.msra.mxu0 0.0
        %4280 = vmatprep.subr.mxu0 0.0
        %4281 = vmatpush1.msra.mxu0 0.0
        %4282 = vmatprep.subr.mxu0 0.0
        %4283 = vmatpush1.msra.mxu0 0.0
        %4284 = vmatprep.subr.mxu0 0.0
        %4285 = vmatpush1.msra.mxu0 0.0
        %4286 = vmatprep.subr.mxu0 0.0
        %4287 = vmatpush1.msra.mxu0 0.0
        %4288 = vmatprep.subr.mxu0 0.0
        %4289 = vmatpush1.msra.mxu0 0.0
        %4290 = vmatprep.subr.mxu0 0.0
        %4291 = vmatpush1.msra.mxu0 0.0
        %4292 = vmatprep.subr.mxu0 0.0
        %4293 = vmatpush1.msra.mxu0 0.0
        %4294 = vmatprep.subr.mxu0 0.0
        %4295 = vmatpush1.msra.mxu0 0.0
        %4296 = vmatprep.subr.mxu0 0.0
        %4297 = vmatpush1.msra.mxu0 0.0
        %4298 = vmatprep.subr.mxu0 0.0
        %4299 = vmatpush1.msra.mxu0 0.0
        %4300 = vmatprep.subr.mxu0 0.0
        %4301 = vmatpush1.msra.mxu0 0.0
        %4302 = vmatprep.mubr.f32.mxu0 0.0
        %4303 = vmatmul.mubr.f32.gmra.mrb[0].mxu0 %v4140
        %v4304 = vpop.f32.mrb[0].mxu0
        %v4305 = vadd.f32 0.0, %v4304
        %v4306 = vpop.f32.mrb[0].mxu0
        %4307 = vmatprep.mubr.f32.mxu0 0.0
        %4308 = vmatmul.mubr.f32.gmra.mrb[0].mxu0 %v4143
        %v4309 = vpop.f32.mrb[0].mxu0
        %v4310 = vadd.f32 0.0, %v4309
        %v4311 = vpop.f32.mrb[0].mxu0
        %4312 = vmatprep.mubr.f32.mxu0 0.0
        %4313 = vmatmul.mubr.f32.gmra.mrb[0].mxu0 %v4146
        %v4314 = vpop.f32.mrb[0].mxu0
        %v4315 = vadd.f32 0.0, %v4314
        %v4316 = vpop.f32.mrb[0].mxu0
        %4317 = vmatprep.mubr.f32.mxu0 0.0
        %4318 = vmatmul.mubr.f32.gmra.mrb[0].mxu0 %v4149
        %v4319 = vpop.f32.mrb[0].mxu0
        %v4320 = vadd.f32 0.0, %v4319
        %v4321 = vpop.f32.mrb[0].mxu0
        %4322 = vmatprep.mubr.f32.mxu0 0.0
        %4323 = vmatmul.mubr.f32.gmra.mrb[0].mxu0 %v4152
        %v4324 = vpop.f32.mrb[0].mxu0
        %v4325 = vadd.f32 0.0, %v4324
        %v4326 = vpop.f32.mrb[0].mxu0
        %4327 = vmatprep.mubr.f32.mxu0 0.0
        %4328 = vmatmul.mubr.f32.gmra.mrb[0].mxu0 %v4155
        %v4329 = vpop.f32.mrb[0].mxu0
        %v4330 = vadd.f32 0.0, %v4329
        %v4331 = vpop.f32.mrb[0].mxu0
        %4332 = vmatprep.mubr.f32.mxu0 0.0
        %4333 = vmatmul.mubr.f32.gmra.mrb[0].mxu0 %v4158
        %v4334 = vpop.f32.mrb[0].mxu0
        %v4335 = vadd.f32 0.0, %v4334
        %v4336 = vpop.f32.mrb[0].mxu0
        %4337 = vmatprep.mubr.f32.mxu0 0.0
        %4338 = vmatmul.mubr.f32.gmra.mrb[0].mxu0 %v4161
        %v4339 = vpop.f32.mrb[0].mxu0
        %v4340 = vadd.f32 0.0, %v4339
        %v4341 = vpop.f32.mrb[0].mxu0
        %4342 = vmatprep.mubr.f32.mxu0 0.0
        %4343 = vmatmul.mubr.f32.gmra.mrb[0].mxu0 %v4164
        %v4344 = vpop.f32.mrb[0].mxu0
        %v4345 = vadd.f32 0.0, %v4344
        %v4346 = vpop.f32.mrb[0].mxu0
        %4347 = vmatprep.mubr.f32.mxu0 0.0
        %4348 = vmatmul.mubr.f32.gmra.mrb[0].mxu0 %v4167
        %v4349 = vpop.f32.mrb[0].mxu0
        %v4350 = vadd.f32 0.0, %v4349
        %v4351 = vpop.f32.mrb[0].mxu0
        %4352 = vmatprep.mubr.f32.mxu0 0.0
        %4353 = vmatmul.mubr.f32.gmra.mrb[0].mxu0 %v4170
        %v4354 = vpop.f32.mrb[0].mxu0
        %v4355 = vadd.f32 0.0, %v4354
        %v4356 = vpop.f32.mrb[0].mxu0
        %4357 = vmatprep.mubr.f32.mxu0 0.0
        %4358 = vmatmul.mubr.f32.gmra.mrb[0].mxu0 %v4173
        %v4359 = vpop.f32.mrb[0].mxu0
        %v4360 = vadd.f32 0.0, %v4359
        %v4361 = vpop.f32.mrb[0].mxu0
        %4362 = vmatprep.mubr.f32.mxu0 0.0
        %4363 = vmatmul.mubr.f32.gmra.mrb[0].mxu0 %v4176
        %v4364 = vpop.f32.mrb[0].mxu0
        %v4365 = vadd.f32 0.0, %v4364
        %v4366 = vpop.f32.mrb[0].mxu0
        %4367 = vmatprep.mubr.f32.mxu0 0.0
        %4368 = vmatmul.mubr.f32.gmra.mrb[0].mxu0 %v4179
        %v4369 = vpop.f32.mrb[0].mxu0
        %v4370 = vadd.f32 0.0, %v4369
        %v4371 = vpop.f32.mrb[0].mxu0
        %4372 = vmatprep.mubr.f32.mxu0 0.0
        %4373 = vmatmul.mubr.f32.gmra.mrb[0].mxu0 %v4182
        %v4374 = vpop.f32.mrb[0].mxu0
        %v4375 = vadd.f32 0.0, %v4374
        %v4376 = vpop.f32.mrb[0].mxu0
        %4377 = vmatprep.mubr.f32.mxu0 0.0
        %4378 = vmatmul.mubr.f32.gmra.mrb[0].mxu0 %v4185
        %v4379 = vpop.f32.mrb[0].mxu0
        %v4380 = vadd.f32 0.0, %v4379
        %v4381 = vpop.f32.mrb[0].mxu0
        %4382 = vmatprep.mubr.f32.mxu0 0.0
        %4383 = vmatmul.mubr.f32.gmra.mrb[0].mxu0 %v4188
        %v4384 = vpop.f32.mrb[0].mxu0
        %v4385 = vadd.f32 0.0, %v4384
        %v4386 = vpop.f32.mrb[0].mxu0
        %4387 = vmatprep.mubr.f32.mxu0 0.0
        %4388 = vmatmul.mubr.f32.gmra.mrb[0].mxu0 %v4191
        %v4389 = vpop.f32.mrb[0].mxu0
        %v4390 = vadd.f32 0.0, %v4389
        %v4391 = vpop.f32.mrb[0].mxu0
        %4392 = vmatprep.mubr.f32.mxu0 0.0
        %4393 = vmatmul.mubr.f32.gmra.mrb[0].mxu0 %v4194
        %v4394 = vpop.f32.mrb[0].mxu0
        %v4395 = vadd.f32 0.0, %v4394
        %v4396 = vpop.f32.mrb[0].mxu0
        %4397 = vmatprep.mubr.f32.mxu0 0.0
        %4398 = vmatmul.mubr.f32.gmra.mrb[0].mxu0 %v4197
        %v4399 = vpop.f32.mrb[0].mxu0
        %v4400 = vadd.f32 0.0, %v4399
        %v4401 = vpop.f32.mrb[0].mxu0
        %4402 = vmatprep.mubr.f32.mxu0 0.0
        %4403 = vmatmul.mubr.f32.gmra.mrb[0].mxu0 %v4200
        %v4404 = vpop.f32.mrb[0].mxu0
        %v4405 = vadd.f32 0.0, %v4404
        %v4406 = vpop.f32.mrb[0].mxu0
        %4407 = vmatprep.mubr.f32.mxu0 0.0
        %4408 = vmatmul.mubr.f32.gmra.mrb[0].mxu0 %v4203
        %v4409 = vpop.f32.mrb[0].mxu0
        %v4410 = vadd.f32 0.0, %v4409
        %v4411 = vpop.f32.mrb[0].mxu0
        %4412 = vmatprep.mubr.f32.mxu0 0.0
        %4413 = vmatmul.mubr.f32.gmra.mrb[0].mxu0 %v4206
        %v4414 = vpop.f32.mrb[0].mxu0
        %v4415 = vadd.f32 0.0, %v4414
        %v4416 = vpop.f32.mrb[0].mxu0
        %4417 = vmatprep.mubr.f32.mxu0 0.0
        %4418 = vmatmul.mubr.f32.gmra.mrb[0].mxu0 %v4209
        %v4419 = vpop.f32.mrb[0].mxu0
        %v4420 = vadd.f32 0.0, %v4419
        %v4421 = vpop.f32.mrb[0].mxu0
        %4422 = vmatprep.mubr.f32.mxu0 0.0
        %4423 = vmatmul.mubr.f32.gmra.mrb[0].mxu0 %v4212
        %v4424 = vpop.f32.mrb[0].mxu0
        %v4425 = vadd.f32 0.0, %v4424
        %v4426 = vpop.f32.mrb[0].mxu0
        %4427 = vmatprep.mubr.f32.mxu0 0.0
        %4428 = vmatmul.mubr.f32.gmra.mrb[0].mxu0 %v4215
        %v4429 = vpop.f32.mrb[0].mxu0
        %v4430 = vadd.f32 0.0, %v4429
        %v4431 = vpop.f32.mrb[0].mxu0
        %4432 = vmatprep.mubr.f32.mxu0 0.0
        %4433 = vmatmul.mubr.f32.gmra.mrb[0].mxu0 %v4218
        %v4434 = vpop.f32.mrb[0].mxu0
        %v4435 = vadd.f32 0.0, %v4434
        %v4436 = vpop.f32.mrb[0].mxu0
        %4437 = vmatprep.mubr.f32.mxu0 0.0
        %4438 = vmatmul.mubr.f32.gmra.mrb[0].mxu0 %v4221
        %v4439 = vpop.f32.mrb[0].mxu0
        %v4440 = vadd.f32 0.0, %v4439
        %v4441 = vpop.f32.mrb[0].mxu0
        %4442 = vmatprep.mubr.f32.mxu0 0.0
        %4443 = vmatmul.mubr.f32.gmra.mrb[0].mxu0 %v4224
        %v4444 = vpop.f32.mrb[0].mxu0
        %v4445 = vadd.f32 0.0, %v4444
        %v4446 = vpop.f32.mrb[0].mxu0
        %4447 = vmatprep.mubr.f32.mxu0 0.0
        %4448 = vmatmul.mubr.f32.gmra.mrb[0].mxu0 %v4227
        %v4449 = vpop.f32.mrb[0].mxu0
        %v4450 = vadd.f32 0.0, %v4449
        %v4451 = vpop.f32.mrb[0].mxu0
        %4452 = vmatprep.mubr.f32.mxu0 0.0
        %4453 = vmatmul.mubr.f32.gmra.mrb[0].mxu0 %v4230
        %v4454 = vpop.f32.mrb[0].mxu0
        %v4455 = vadd.f32 0.0, %v4454
        %v4456 = vpop.f32.mrb[0].mxu0
        %4457 = vmatprep.mubr.f32.mxu0 0.0
        %4458 = vmatmul.mubr.f32.gmra.mrb[0].mxu0 %v4233
        %v4459 = vpop.f32.mrb[0].mxu0
        %v4460 = vadd.f32 0.0, %v4459
        %v4461 = vpop.f32.mrb[0].mxu0
        %4462 = vdwg.mxu0
        %v4463 = vadd.f32 %v4105, %v4305
        %v4464 = vadd.f32 %v4106, %v4310
        %v4465 = vadd.f32 %v4107, %v4315
        %v4466 = vadd.f32 %v4108, %v4320
        %v4467 = vadd.f32 %v4109, %v4325
        %v4468 = vadd.f32 %v4110, %v4330
        %v4469 = vadd.f32 %v4111, %v4335
        %v4470 = vadd.f32 %v4112, %v4340
        %v4471 = vadd.f32 %v4113, %v4345
        %v4472 = vadd.f32 %v4114, %v4350
        %v4473 = vadd.f32 %v4115, %v4355
        %v4474 = vadd.f32 %v4116, %v4360
        %v4475 = vadd.f32 %v4117, %v4365
        %v4476 = vadd.f32 %v4118, %v4370
        %v4477 = vadd.f32 %v4119, %v4375
        %v4478 = vadd.f32 %v4120, %v4380
        %v4479 = vadd.f32 %v4121, %v4385
        %v4480 = vadd.f32 %v4122, %v4390
        %v4481 = vadd.f32 %v4123, %v4395
        %v4482 = vadd.f32 %v4124, %v4400
        %v4483 = vadd.f32 %v4125, %v4405
        %v4484 = vadd.f32 %v4126, %v4410
        %v4485 = vadd.f32 %v4127, %v4415
        %v4486 = vadd.f32 %v4128, %v4420
        %v4487 = vadd.f32 %v4129, %v4425
        %v4488 = vadd.f32 %v4130, %v4430
        %v4489 = vadd.f32 %v4131, %v4435
        %v4490 = vadd.f32 %v4132, %v4440
        %v4491 = vadd.f32 %v4133, %v4445
        %v4492 = vadd.f32 %v4134, %v4450
        %v4493 = vadd.f32 %v4135, %v4455
        %v4494 = vadd.f32 %v4136, %v4460
        %4495 = vst.msk [vmem:[#allocation3] sm:$0xff] %vm297, %v4463
        %4496 = vst.msk [vmem:[#allocation3 + $0x8] sm:$0xff] %vm297, %v4464
        %4497 = vst.msk [vmem:[#allocation3 + $0x10] sm:$0xff] %vm297, %v4465
        %4498 = vst.msk [vmem:[#allocation3 + $0x18] sm:$0xff] %vm297, %v4466
        %4499 = vst.msk [vmem:[#allocation3 + $0x20] sm:$0xff] %vm297, %v4467
        %4500 = vst.msk [vmem:[#allocation3 + $0x28] sm:$0xff] %vm297, %v4468
        %4501 = vst.msk [vmem:[#allocation3 + $0x30] sm:$0xff] %vm297, %v4469
        %4502 = vst.msk [vmem:[#allocation3 + $0x38] sm:$0xff] %vm297, %v4470
        %4503 = vst.msk [vmem:[#allocation3 + $0x40] sm:$0xff] %vm297, %v4471
        %4504 = vst.msk [vmem:[#allocation3 + $0x48] sm:$0xff] %vm297, %v4472
        %4505 = vst.msk [vmem:[#allocation3 + $0x50] sm:$0xff] %vm297, %v4473
        %4506 = vst.msk [vmem:[#allocation3 + $0x58] sm:$0xff] %vm297, %v4474
        %4507 = vst.msk [vmem:[#allocation3 + $0x60] sm:$0xff] %vm297, %v4475
        %4508 = vst.msk [vmem:[#allocation3 + $0x68] sm:$0xff] %vm297, %v4476
        %4509 = vst.msk [vmem:[#allocation3 + $0x70] sm:$0xff] %vm297, %v4477
        %4510 = vst.msk [vmem:[#allocation3 + $0x78] sm:$0xff] %vm297, %v4478
        %4511 = vst.msk [vmem:[#allocation3 + $0x80] sm:$0xff] %vm297, %v4479
        %4512 = vst.msk [vmem:[#allocation3 + $0x88] sm:$0xff] %vm297, %v4480
        %4513 = vst.msk [vmem:[#allocation3 + $0x90] sm:$0xff] %vm297, %v4481
        %4514 = vst.msk [vmem:[#allocation3 + $0x98] sm:$0xff] %vm297, %v4482
        %4515 = vst.msk [vmem:[#allocation3 + $0xa0] sm:$0xff] %vm297, %v4483
        %4516 = vst.msk [vmem:[#allocation3 + $0xa8] sm:$0xff] %vm297, %v4484
        %4517 = vst.msk [vmem:[#allocation3 + $0xb0] sm:$0xff] %vm297, %v4485
        %4518 = vst.msk [vmem:[#allocation3 + $0xb8] sm:$0xff] %vm297, %v4486
        %4519 = vst.msk [vmem:[#allocation3 + $0xc0] sm:$0xff] %vm297, %v4487
        %4520 = vst.msk [vmem:[#allocation3 + $0xc8] sm:$0xff] %vm297, %v4488
        %4521 = vst.msk [vmem:[#allocation3 + $0xd0] sm:$0xff] %vm297, %v4489
        %4522 = vst.msk [vmem:[#allocation3 + $0xd8] sm:$0xff] %vm297, %v4490
        %4523 = vst.msk [vmem:[#allocation3 + $0xe0] sm:$0xff] %vm297, %v4491
        %4524 = vst.msk [vmem:[#allocation3 + $0xe8] sm:$0xff] %vm297, %v4492
        %4525 = vst.msk [vmem:[#allocation3 + $0xf0] sm:$0xff] %vm297, %v4493
        %4526 = vst.msk [vmem:[#allocation3 + $0xf8] sm:$0xff] %vm297, %v4494
        %v4527 = vld [vmem:[#allocation3] sm:$0xff]
        %v4528 = vld [vmem:[#allocation3 + $0x8] sm:$0xff]
        %v4529 = vld [vmem:[#allocation3 + $0x10] sm:$0xff]
        %v4530 = vld [vmem:[#allocation3 + $0x18] sm:$0xff]
        %v4531 = vld [vmem:[#allocation3 + $0x20] sm:$0xff]
        %v4532 = vld [vmem:[#allocation3 + $0x28] sm:$0xff]
        %v4533 = vld [vmem:[#allocation3 + $0x30] sm:$0xff]
        %v4534 = vld [vmem:[#allocation3 + $0x38] sm:$0xff]
        %v4535 = vld [vmem:[#allocation3 + $0x40] sm:$0xff]
        %v4536 = vld [vmem:[#allocation3 + $0x48] sm:$0xff]
        %v4537 = vld [vmem:[#allocation3 + $0x50] sm:$0xff]
        %v4538 = vld [vmem:[#allocation3 + $0x58] sm:$0xff]
        %v4539 = vld [vmem:[#allocation3 + $0x60] sm:$0xff]
        %v4540 = vld [vmem:[#allocation3 + $0x68] sm:$0xff]
        %v4541 = vld [vmem:[#allocation3 + $0x70] sm:$0xff]
        %v4542 = vld [vmem:[#allocation3 + $0x78] sm:$0xff]
        %v4543 = vld [vmem:[#allocation3 + $0x80] sm:$0xff]
        %v4544 = vld [vmem:[#allocation3 + $0x88] sm:$0xff]
        %v4545 = vld [vmem:[#allocation3 + $0x90] sm:$0xff]
        %v4546 = vld [vmem:[#allocation3 + $0x98] sm:$0xff]
        %v4547 = vld [vmem:[#allocation3 + $0xa0] sm:$0xff]
        %v4548 = vld [vmem:[#allocation3 + $0xa8] sm:$0xff]
        %v4549 = vld [vmem:[#allocation3 + $0xb0] sm:$0xff]
        %v4550 = vld [vmem:[#allocation3 + $0xb8] sm:$0xff]
        %v4551 = vld [vmem:[#allocation3 + $0xc0] sm:$0xff]
        %v4552 = vld [vmem:[#allocation3 + $0xc8] sm:$0xff]
        %v4553 = vld [vmem:[#allocation3 + $0xd0] sm:$0xff]
        %v4554 = vld [vmem:[#allocation3 + $0xd8] sm:$0xff]
        %v4555 = vld [vmem:[#allocation3 + $0xe0] sm:$0xff]
        %v4556 = vld [vmem:[#allocation3 + $0xe8] sm:$0xff]
        %v4557 = vld [vmem:[#allocation3 + $0xf0] sm:$0xff]
        %v4558 = vld [vmem:[#allocation3 + $0xf8] sm:$0xff]
        %v4559 = vld [vmem:[#allocation9] sm:$0x1]
        %v4561 = vlaneseq
        %v4562 = vshrl.u32 %v4561, 7
        %v4563 = vsub.s32 0, %v4562
        %v4564 = vrot.slane %v4559, %v4563
        %v4566 = vadd.f32 %v4527, %v4564
        %v4567 = vadd.f32 %v4528, %v4564
        %v4568 = vadd.f32 %v4529, %v4564
        %v4569 = vadd.f32 %v4530, %v4564
        %v4570 = vadd.f32 %v4531, %v4564
        %v4571 = vadd.f32 %v4532, %v4564
        %v4572 = vadd.f32 %v4533, %v4564
        %v4573 = vadd.f32 %v4534, %v4564
        %v4574 = vadd.f32 %v4535, %v4564
        %v4575 = vadd.f32 %v4536, %v4564
        %v4576 = vadd.f32 %v4537, %v4564
        %v4577 = vadd.f32 %v4538, %v4564
        %v4578 = vadd.f32 %v4539, %v4564
        %v4579 = vadd.f32 %v4540, %v4564
        %v4580 = vadd.f32 %v4541, %v4564
        %v4581 = vadd.f32 %v4542, %v4564
        %v4582 = vadd.f32 %v4543, %v4564
        %v4583 = vadd.f32 %v4544, %v4564
        %v4584 = vadd.f32 %v4545, %v4564
        %v4585 = vadd.f32 %v4546, %v4564
        %v4586 = vadd.f32 %v4547, %v4564
        %v4587 = vadd.f32 %v4548, %v4564
        %v4588 = vadd.f32 %v4549, %v4564
        %v4589 = vadd.f32 %v4550, %v4564
        %v4590 = vadd.f32 %v4551, %v4564
        %v4591 = vadd.f32 %v4552, %v4564
        %v4592 = vadd.f32 %v4553, %v4564
        %v4593 = vadd.f32 %v4554, %v4564
        %v4594 = vadd.f32 %v4555, %v4564
        %v4595 = vadd.f32 %v4556, %v4564
        %v4596 = vadd.f32 %v4557, %v4564
        %v4597 = vadd.f32 %v4558, %v4564
        %v4598 = vmax.f32 %v4566, 0.0
        %v4599 = vmax.f32 %v4567, 0.0
        %v4600 = vmax.f32 %v4568, 0.0
        %v4601 = vmax.f32 %v4569, 0.0
        %v4602 = vmax.f32 %v4570, 0.0
        %v4603 = vmax.f32 %v4571, 0.0
        %v4604 = vmax.f32 %v4572, 0.0
        %v4605 = vmax.f32 %v4573, 0.0
        %v4606 = vmax.f32 %v4574, 0.0
        %v4607 = vmax.f32 %v4575, 0.0
        %v4608 = vmax.f32 %v4576, 0.0
        %v4609 = vmax.f32 %v4577, 0.0
        %v4610 = vmax.f32 %v4578, 0.0
        %v4611 = vmax.f32 %v4579, 0.0
        %v4612 = vmax.f32 %v4580, 0.0
        %v4613 = vmax.f32 %v4581, 0.0
        %v4614 = vmax.f32 %v4582, 0.0
        %v4615 = vmax.f32 %v4583, 0.0
        %v4616 = vmax.f32 %v4584, 0.0
        %v4617 = vmax.f32 %v4585, 0.0
        %v4618 = vmax.f32 %v4586, 0.0
        %v4619 = vmax.f32 %v4587, 0.0
        %v4620 = vmax.f32 %v4588, 0.0
        %v4621 = vmax.f32 %v4589, 0.0
        %v4622 = vmax.f32 %v4590, 0.0
        %v4623 = vmax.f32 %v4591, 0.0
        %v4624 = vmax.f32 %v4592, 0.0
        %v4625 = vmax.f32 %v4593, 0.0
        %v4626 = vmax.f32 %v4594, 0.0
        %v4627 = vmax.f32 %v4595, 0.0
        %v4628 = vmax.f32 %v4596, 0.0
        %v4629 = vmax.f32 %v4597, 0.0
        %4630 = vst.msk [vmem:[%s375 + $0x1] sm:$0xff] %vm297, %v4598
        %4631 = vst.msk [vmem:[%s375 + $0x9] sm:$0xff] %vm297, %v4599
        %4632 = vst.msk [vmem:[%s375 + $0x19] sm:$0xff] %vm297, %v4600
        %4633 = vst.msk [vmem:[%s375 + $0x21] sm:$0xff] %vm297, %v4601
        %4634 = vst.msk [vmem:[%s375 + $0x31] sm:$0xff] %vm297, %v4602
        %4635 = vst.msk [vmem:[%s375 + $0x39] sm:$0xff] %vm297, %v4603
        %4636 = vst.msk [vmem:[%s375 + $0x49] sm:$0xff] %vm297, %v4604
        %4637 = vst.msk [vmem:[%s375 + $0x51] sm:$0xff] %vm297, %v4605
        %4638 = vst.msk [vmem:[%s375 + $0x61] sm:$0xff] %vm297, %v4606
        %4639 = vst.msk [vmem:[%s375 + $0x69] sm:$0xff] %vm297, %v4607
        %4640 = vst.msk [vmem:[%s375 + $0x79] sm:$0xff] %vm297, %v4608
        %4641 = vst.msk [vmem:[%s375 + $0x81] sm:$0xff] %vm297, %v4609
        %4642 = vst.msk [vmem:[%s375 + $0x91] sm:$0xff] %vm297, %v4610
        %4643 = vst.msk [vmem:[%s375 + $0x99] sm:$0xff] %vm297, %v4611
        %4644 = vst.msk [vmem:[%s375 + $0xa9] sm:$0xff] %vm297, %v4612
        %4645 = vst.msk [vmem:[%s375 + $0xb1] sm:$0xff] %vm297, %v4613
        %4646 = vst.msk [vmem:[%s375 + $0xc1] sm:$0xff] %vm297, %v4614
        %4647 = vst.msk [vmem:[%s375 + $0xc9] sm:$0xff] %vm297, %v4615
        %4648 = vst.msk [vmem:[%s375 + $0xd9] sm:$0xff] %vm297, %v4616
        %4649 = vst.msk [vmem:[%s375 + $0xe1] sm:$0xff] %vm297, %v4617
        %4650 = vst.msk [vmem:[%s375 + $0xf1] sm:$0xff] %vm297, %v4618
        %4651 = vst.msk [vmem:[%s375 + $0xf9] sm:$0xff] %vm297, %v4619
        %4652 = vst.msk [vmem:[%s375 + $0x109] sm:$0xff] %vm297, %v4620
        %4653 = vst.msk [vmem:[%s375 + $0x111] sm:$0xff] %vm297, %v4621
        %4654 = vst.msk [vmem:[%s375 + $0x121] sm:$0xff] %vm297, %v4622
        %4655 = vst.msk [vmem:[%s375 + $0x129] sm:$0xff] %vm297, %v4623
        %4656 = vst.msk [vmem:[%s375 + $0x139] sm:$0xff] %vm297, %v4624
        %4657 = vst.msk [vmem:[%s375 + $0x141] sm:$0xff] %vm297, %v4625
        %4658 = vst.msk [vmem:[%s375 + $0x151] sm:$0xff] %vm297, %v4626
        %4659 = vst.msk [vmem:[%s375 + $0x159] sm:$0xff] %vm297, %v4627
        %4660 = vst.msk [vmem:[%s375 + $0x169] sm:$0xff] %vm297, %v4628
        %4661 = vst.msk [vmem:[%s375 + $0x171] sm:$0xff] %vm297, %v4629
        %4662 = vst.msk [vmem:[#allocation3] sm:$0xff] %vm297, 0.0
        %4663 = vst.msk [vmem:[#allocation3 + $0x8] sm:$0xff] %vm297, 0.0
        %4664 = vst.msk [vmem:[#allocation3 + $0x10] sm:$0xff] %vm297, 0.0
        %4665 = vst.msk [vmem:[#allocation3 + $0x18] sm:$0xff] %vm297, 0.0
        %4666 = vst.msk [vmem:[#allocation3 + $0x20] sm:$0xff] %vm297, 0.0
        %4667 = vst.msk [vmem:[#allocation3 + $0x28] sm:$0xff] %vm297, 0.0
        %4668 = vst.msk [vmem:[#allocation3 + $0x30] sm:$0xff] %vm297, 0.0
        %4669 = vst.msk [vmem:[#allocation3 + $0x38] sm:$0xff] %vm297, 0.0
        %4670 = vst.msk [vmem:[#allocation3 + $0x40] sm:$0xff] %vm297, 0.0
        %4671 = vst.msk [vmem:[#allocation3 + $0x48] sm:$0xff] %vm297, 0.0
        %4672 = vst.msk [vmem:[#allocation3 + $0x50] sm:$0xff] %vm297, 0.0
        %4673 = vst.msk [vmem:[#allocation3 + $0x58] sm:$0xff] %vm297, 0.0
        %4674 = vst.msk [vmem:[#allocation3 + $0x60] sm:$0xff] %vm297, 0.0
        %4675 = vst.msk [vmem:[#allocation3 + $0x68] sm:$0xff] %vm297, 0.0
        %4676 = vst.msk [vmem:[#allocation3 + $0x70] sm:$0xff] %vm297, 0.0
        %4677 = vst.msk [vmem:[#allocation3 + $0x78] sm:$0xff] %vm297, 0.0
        %4678 = vst.msk [vmem:[#allocation3 + $0x80] sm:$0xff] %vm297, 0.0
        %4679 = vst.msk [vmem:[#allocation3 + $0x88] sm:$0xff] %vm297, 0.0
        %4680 = vst.msk [vmem:[#allocation3 + $0x90] sm:$0xff] %vm297, 0.0
        %4681 = vst.msk [vmem:[#allocation3 + $0x98] sm:$0xff] %vm297, 0.0
        %4682 = vst.msk [vmem:[#allocation3 + $0xa0] sm:$0xff] %vm297, 0.0
        %4683 = vst.msk [vmem:[#allocation3 + $0xa8] sm:$0xff] %vm297, 0.0
        %4684 = vst.msk [vmem:[#allocation3 + $0xb0] sm:$0xff] %vm297, 0.0
        %4685 = vst.msk [vmem:[#allocation3 + $0xb8] sm:$0xff] %vm297, 0.0
        %4686 = vst.msk [vmem:[#allocation3 + $0xc0] sm:$0xff] %vm297, 0.0
        %4687 = vst.msk [vmem:[#allocation3 + $0xc8] sm:$0xff] %vm297, 0.0
        %4688 = vst.msk [vmem:[#allocation3 + $0xd0] sm:$0xff] %vm297, 0.0
        %4689 = vst.msk [vmem:[#allocation3 + $0xd8] sm:$0xff] %vm297, 0.0
        %4690 = vst.msk [vmem:[#allocation3 + $0xe0] sm:$0xff] %vm297, 0.0
        %4691 = vst.msk [vmem:[#allocation3 + $0xe8] sm:$0xff] %vm297, 0.0
        %4692 = vst.msk [vmem:[#allocation3 + $0xf0] sm:$0xff] %vm297, 0.0
        %4693 = vst.msk [vmem:[#allocation3 + $0xf8] sm:$0xff] %vm297, 0.0
        %v4694 = vld [vmem:[#allocation2] sm:$0xff]
        %v4695 = vld [vmem:[#allocation2 + $0x8] sm:$0xff]
        %v4696 = vld [vmem:[#allocation2 + $0x18] sm:$0xff]
        %v4697 = vld [vmem:[#allocation2 + $0x20] sm:$0xff]
        %v4698 = vld [vmem:[#allocation2 + $0x30] sm:$0xff]
        %v4699 = vld [vmem:[#allocation2 + $0x38] sm:$0xff]
        %v4700 = vld [vmem:[#allocation2 + $0x48] sm:$0xff]
        %v4701 = vld [vmem:[#allocation2 + $0x50] sm:$0xff]
        %v4702 = vld [vmem:[#allocation2 + $0x60] sm:$0xff]
        %v4703 = vld [vmem:[#allocation2 + $0x68] sm:$0xff]
        %v4704 = vld [vmem:[#allocation2 + $0x78] sm:$0xff]
        %v4705 = vld [vmem:[#allocation2 + $0x80] sm:$0xff]
        %v4706 = vld [vmem:[#allocation2 + $0x90] sm:$0xff]
        %v4707 = vld [vmem:[#allocation2 + $0x98] sm:$0xff]
        %v4708 = vld [vmem:[#allocation2 + $0xa8] sm:$0xff]
        %v4709 = vld [vmem:[#allocation2 + $0xb0] sm:$0xff]
        %v4710 = vld [vmem:[#allocation2 + $0xc0] sm:$0xff]
        %v4711 = vld [vmem:[#allocation2 + $0xc8] sm:$0xff]
        %v4712 = vld [vmem:[#allocation2 + $0xd8] sm:$0xff]
        %v4713 = vld [vmem:[#allocation2 + $0xe0] sm:$0xff]
        %v4714 = vld [vmem:[#allocation2 + $0xf0] sm:$0xff]
        %v4715 = vld [vmem:[#allocation2 + $0xf8] sm:$0xff]
        %v4716 = vld [vmem:[#allocation2 + $0x108] sm:$0xff]
        %v4717 = vld [vmem:[#allocation2 + $0x110] sm:$0xff]
        %v4718 = vld [vmem:[#allocation2 + $0x120] sm:$0xff]
        %v4719 = vld [vmem:[#allocation2 + $0x128] sm:$0xff]
        %v4720 = vld [vmem:[#allocation2 + $0x138] sm:$0xff]
        %v4721 = vld [vmem:[#allocation2 + $0x140] sm:$0xff]
        %v4722 = vld [vmem:[#allocation2 + $0x150] sm:$0xff]
        %v4723 = vld [vmem:[#allocation2 + $0x158] sm:$0xff]
        %v4724 = vld [vmem:[#allocation2 + $0x168] sm:$0xff]
        %v4725 = vld [vmem:[#allocation2 + $0x170] sm:$0xff]
        %v4726 = vld [vmem:[#allocation3] sm:$0xff]
        %v4727 = vld [vmem:[#allocation3 + $0x8] sm:$0xff]
        %v4728 = vld [vmem:[#allocation3 + $0x10] sm:$0xff]
        %v4729 = vld [vmem:[#allocation3 + $0x18] sm:$0xff]
        %v4730 = vld [vmem:[#allocation3 + $0x20] sm:$0xff]
        %v4731 = vld [vmem:[#allocation3 + $0x28] sm:$0xff]
        %v4732 = vld [vmem:[#allocation3 + $0x30] sm:$0xff]
        %v4733 = vld [vmem:[#allocation3 + $0x38] sm:$0xff]
        %v4734 = vld [vmem:[#allocation3 + $0x40] sm:$0xff]
        %v4735 = vld [vmem:[#allocation3 + $0x48] sm:$0xff]
        %v4736 = vld [vmem:[#allocation3 + $0x50] sm:$0xff]
        %v4737 = vld [vmem:[#allocation3 + $0x58] sm:$0xff]
        %v4738 = vld [vmem:[#allocation3 + $0x60] sm:$0xff]
        %v4739 = vld [vmem:[#allocation3 + $0x68] sm:$0xff]
        %v4740 = vld [vmem:[#allocation3 + $0x70] sm:$0xff]
        %v4741 = vld [vmem:[#allocation3 + $0x78] sm:$0xff]
        %v4742 = vld [vmem:[#allocation3 + $0x80] sm:$0xff]
        %v4743 = vld [vmem:[#allocation3 + $0x88] sm:$0xff]
        %v4744 = vld [vmem:[#allocation3 + $0x90] sm:$0xff]
        %v4745 = vld [vmem:[#allocation3 + $0x98] sm:$0xff]
        %v4746 = vld [vmem:[#allocation3 + $0xa0] sm:$0xff]
        %v4747 = vld [vmem:[#allocation3 + $0xa8] sm:$0xff]
        %v4748 = vld [vmem:[#allocation3 + $0xb0] sm:$0xff]
        %v4749 = vld [vmem:[#allocation3 + $0xb8] sm:$0xff]
        %v4750 = vld [vmem:[#allocation3 + $0xc0] sm:$0xff]
        %v4751 = vld [vmem:[#allocation3 + $0xc8] sm:$0xff]
        %v4752 = vld [vmem:[#allocation3 + $0xd0] sm:$0xff]
        %v4753 = vld [vmem:[#allocation3 + $0xd8] sm:$0xff]
        %v4754 = vld [vmem:[#allocation3 + $0xe0] sm:$0xff]
        %v4755 = vld [vmem:[#allocation3 + $0xe8] sm:$0xff]
        %v4756 = vld [vmem:[#allocation3 + $0xf0] sm:$0xff]
        %v4757 = vld [vmem:[#allocation3 + $0xf8] sm:$0xff]
        %v4758 = vld [vmem:[#allocation10] sm:$0xf]
        %v4760 = vsel %vm297, %v4694, 0
        %v4763 = vsel %vm297, %v4695, 0
        %v4766 = vsel %vm297, %v4696, 0
        %v4769 = vsel %vm297, %v4697, 0
        %v4772 = vsel %vm297, %v4698, 0
        %v4775 = vsel %vm297, %v4699, 0
        %v4778 = vsel %vm297, %v4700, 0
        %v4781 = vsel %vm297, %v4701, 0
        %v4784 = vsel %vm297, %v4702, 0
        %v4787 = vsel %vm297, %v4703, 0
        %v4790 = vsel %vm297, %v4704, 0
        %v4793 = vsel %vm297, %v4705, 0
        %v4796 = vsel %vm297, %v4706, 0
        %v4799 = vsel %vm297, %v4707, 0
        %v4802 = vsel %vm297, %v4708, 0
        %v4805 = vsel %vm297, %v4709, 0
        %v4808 = vsel %vm297, %v4710, 0
        %v4811 = vsel %vm297, %v4711, 0
        %v4814 = vsel %vm297, %v4712, 0
        %v4817 = vsel %vm297, %v4713, 0
        %v4820 = vsel %vm297, %v4714, 0
        %v4823 = vsel %vm297, %v4715, 0
        %v4826 = vsel %vm297, %v4716, 0
        %v4829 = vsel %vm297, %v4717, 0
        %v4832 = vsel %vm297, %v4718, 0
        %v4835 = vsel %vm297, %v4719, 0
        %v4838 = vsel %vm297, %v4720, 0
        %v4841 = vsel %vm297, %v4721, 0
        %v4844 = vsel %vm297, %v4722, 0
        %v4847 = vsel %vm297, %v4723, 0
        %v4850 = vsel %vm297, %v4724, 0
        %v4853 = vsel %vm297, %v4725, 0
        %v4856 = vsel %vm601, %v4758, 0
        %4858 = vmatprep.subr.mxu0 0.0
        %4859 = vmatpush1.msra.mxu0 %v4856
        %4860 = vmatprep.subr.mxu0 0.0
        %4861 = vmatpush1.msra.mxu0 0.0
        %4862 = vmatprep.subr.mxu0 0.0
        %4863 = vmatpush1.msra.mxu0 0.0
        %4864 = vmatprep.subr.mxu0 0.0
        %4865 = vmatpush1.msra.mxu0 0.0
        %4866 = vmatprep.subr.mxu0 0.0
        %4867 = vmatpush1.msra.mxu0 0.0
        %4868 = vmatprep.subr.mxu0 0.0
        %4869 = vmatpush1.msra.mxu0 0.0
        %4870 = vmatprep.subr.mxu0 0.0
        %4871 = vmatpush1.msra.mxu0 0.0
        %4872 = vmatprep.subr.mxu0 0.0
        %4873 = vmatpush1.msra.mxu0 0.0
        %4874 = vmatprep.subr.mxu0 0.0
        %4875 = vmatpush1.msra.mxu0 0.0
        %4876 = vmatprep.subr.mxu0 0.0
        %4877 = vmatpush1.msra.mxu0 0.0
        %4878 = vmatprep.subr.mxu0 0.0
        %4879 = vmatpush1.msra.mxu0 0.0
        %4880 = vmatprep.subr.mxu0 0.0
        %4881 = vmatpush1.msra.mxu0 0.0
        %4882 = vmatprep.subr.mxu0 0.0
        %4883 = vmatpush1.msra.mxu0 0.0
        %4884 = vmatprep.subr.mxu0 0.0
        %4885 = vmatpush1.msra.mxu0 0.0
        %4886 = vmatprep.subr.mxu0 0.0
        %4887 = vmatpush1.msra.mxu0 0.0
        %4888 = vmatprep.subr.mxu0 0.0
        %4889 = vmatpush1.msra.mxu0 0.0
        %4890 = vmatprep.subr.mxu0 0.0
        %4891 = vmatpush1.msra.mxu0 0.0
        %4892 = vmatprep.subr.mxu0 0.0
        %4893 = vmatpush1.msra.mxu0 0.0
        %4894 = vmatprep.subr.mxu0 0.0
        %4895 = vmatpush1.msra.mxu0 0.0
        %4896 = vmatprep.subr.mxu0 0.0
        %4897 = vmatpush1.msra.mxu0 0.0
        %4898 = vmatprep.subr.mxu0 0.0
        %4899 = vmatpush1.msra.mxu0 0.0
        %4900 = vmatprep.subr.mxu0 0.0
        %4901 = vmatpush1.msra.mxu0 0.0
        %4902 = vmatprep.subr.mxu0 0.0
        %4903 = vmatpush1.msra.mxu0 0.0
        %4904 = vmatprep.subr.mxu0 0.0
        %4905 = vmatpush1.msra.mxu0 0.0
        %4906 = vmatprep.subr.mxu0 0.0
        %4907 = vmatpush1.msra.mxu0 0.0
        %4908 = vmatprep.subr.mxu0 0.0
        %4909 = vmatpush1.msra.mxu0 0.0
        %4910 = vmatprep.subr.mxu0 0.0
        %4911 = vmatpush1.msra.mxu0 0.0
        %4912 = vmatprep.subr.mxu0 0.0
        %4913 = vmatpush1.msra.mxu0 0.0
        %4914 = vmatprep.subr.mxu0 0.0
        %4915 = vmatpush1.msra.mxu0 0.0
        %4916 = vmatprep.subr.mxu0 0.0
        %4917 = vmatpush1.msra.mxu0 0.0
        %4918 = vmatprep.subr.mxu0 0.0
        %4919 = vmatpush1.msra.mxu0 0.0
        %4920 = vmatprep.subr.mxu0 0.0
        %4921 = vmatpush1.msra.mxu0 0.0
        %4922 = vmatprep.mubr.f32.mxu0 0.0
        %4923 = vmatmul.mubr.f32.gmra.mrb[0].mxu0 %v4760
        %v4924 = vpop.f32.mrb[0].mxu0
        %v4925 = vadd.f32 0.0, %v4924
        %v4926 = vpop.f32.mrb[0].mxu0
        %4927 = vmatprep.mubr.f32.mxu0 0.0
        %4928 = vmatmul.mubr.f32.gmra.mrb[0].mxu0 %v4763
        %v4929 = vpop.f32.mrb[0].mxu0
        %v4930 = vadd.f32 0.0, %v4929
        %v4931 = vpop.f32.mrb[0].mxu0
        %4932 = vmatprep.mubr.f32.mxu0 0.0
        %4933 = vmatmul.mubr.f32.gmra.mrb[0].mxu0 %v4766
        %v4934 = vpop.f32.mrb[0].mxu0
        %v4935 = vadd.f32 0.0, %v4934
        %v4936 = vpop.f32.mrb[0].mxu0
        %4937 = vmatprep.mubr.f32.mxu0 0.0
        %4938 = vmatmul.mubr.f32.gmra.mrb[0].mxu0 %v4769
        %v4939 = vpop.f32.mrb[0].mxu0
        %v4940 = vadd.f32 0.0, %v4939
        %v4941 = vpop.f32.mrb[0].mxu0
        %4942 = vmatprep.mubr.f32.mxu0 0.0
        %4943 = vmatmul.mubr.f32.gmra.mrb[0].mxu0 %v4772
        %v4944 = vpop.f32.mrb[0].mxu0
        %v4945 = vadd.f32 0.0, %v4944
        %v4946 = vpop.f32.mrb[0].mxu0
        %4947 = vmatprep.mubr.f32.mxu0 0.0
        %4948 = vmatmul.mubr.f32.gmra.mrb[0].mxu0 %v4775
        %v4949 = vpop.f32.mrb[0].mxu0
        %v4950 = vadd.f32 0.0, %v4949
        %v4951 = vpop.f32.mrb[0].mxu0
        %4952 = vmatprep.mubr.f32.mxu0 0.0
        %4953 = vmatmul.mubr.f32.gmra.mrb[0].mxu0 %v4778
        %v4954 = vpop.f32.mrb[0].mxu0
        %v4955 = vadd.f32 0.0, %v4954
        %v4956 = vpop.f32.mrb[0].mxu0
        %4957 = vmatprep.mubr.f32.mxu0 0.0
        %4958 = vmatmul.mubr.f32.gmra.mrb[0].mxu0 %v4781
        %v4959 = vpop.f32.mrb[0].mxu0
        %v4960 = vadd.f32 0.0, %v4959
        %v4961 = vpop.f32.mrb[0].mxu0
        %4962 = vmatprep.mubr.f32.mxu0 0.0
        %4963 = vmatmul.mubr.f32.gmra.mrb[0].mxu0 %v4784
        %v4964 = vpop.f32.mrb[0].mxu0
        %v4965 = vadd.f32 0.0, %v4964
        %v4966 = vpop.f32.mrb[0].mxu0
        %4967 = vmatprep.mubr.f32.mxu0 0.0
        %4968 = vmatmul.mubr.f32.gmra.mrb[0].mxu0 %v4787
        %v4969 = vpop.f32.mrb[0].mxu0
        %v4970 = vadd.f32 0.0, %v4969
        %v4971 = vpop.f32.mrb[0].mxu0
        %4972 = vmatprep.mubr.f32.mxu0 0.0
        %4973 = vmatmul.mubr.f32.gmra.mrb[0].mxu0 %v4790
        %v4974 = vpop.f32.mrb[0].mxu0
        %v4975 = vadd.f32 0.0, %v4974
        %v4976 = vpop.f32.mrb[0].mxu0
        %4977 = vmatprep.mubr.f32.mxu0 0.0
        %4978 = vmatmul.mubr.f32.gmra.mrb[0].mxu0 %v4793
        %v4979 = vpop.f32.mrb[0].mxu0
        %v4980 = vadd.f32 0.0, %v4979
        %v4981 = vpop.f32.mrb[0].mxu0
        %4982 = vmatprep.mubr.f32.mxu0 0.0
        %4983 = vmatmul.mubr.f32.gmra.mrb[0].mxu0 %v4796
        %v4984 = vpop.f32.mrb[0].mxu0
        %v4985 = vadd.f32 0.0, %v4984
        %v4986 = vpop.f32.mrb[0].mxu0
        %4987 = vmatprep.mubr.f32.mxu0 0.0
        %4988 = vmatmul.mubr.f32.gmra.mrb[0].mxu0 %v4799
        %v4989 = vpop.f32.mrb[0].mxu0
        %v4990 = vadd.f32 0.0, %v4989
        %v4991 = vpop.f32.mrb[0].mxu0
        %4992 = vmatprep.mubr.f32.mxu0 0.0
        %4993 = vmatmul.mubr.f32.gmra.mrb[0].mxu0 %v4802
        %v4994 = vpop.f32.mrb[0].mxu0
        %v4995 = vadd.f32 0.0, %v4994
        %v4996 = vpop.f32.mrb[0].mxu0
        %4997 = vmatprep.mubr.f32.mxu0 0.0
        %4998 = vmatmul.mubr.f32.gmra.mrb[0].mxu0 %v4805
        %v4999 = vpop.f32.mrb[0].mxu0
        %v5000 = vadd.f32 0.0, %v4999
        %v5001 = vpop.f32.mrb[0].mxu0
        %5002 = vmatprep.mubr.f32.mxu0 0.0
        %5003 = vmatmul.mubr.f32.gmra.mrb[0].mxu0 %v4808
        %v5004 = vpop.f32.mrb[0].mxu0
        %v5005 = vadd.f32 0.0, %v5004
        %v5006 = vpop.f32.mrb[0].mxu0
        %5007 = vmatprep.mubr.f32.mxu0 0.0
        %5008 = vmatmul.mubr.f32.gmra.mrb[0].mxu0 %v4811
        %v5009 = vpop.f32.mrb[0].mxu0
        %v5010 = vadd.f32 0.0, %v5009
        %v5011 = vpop.f32.mrb[0].mxu0
        %5012 = vmatprep.mubr.f32.mxu0 0.0
        %5013 = vmatmul.mubr.f32.gmra.mrb[0].mxu0 %v4814
        %v5014 = vpop.f32.mrb[0].mxu0
        %v5015 = vadd.f32 0.0, %v5014
        %v5016 = vpop.f32.mrb[0].mxu0
        %5017 = vmatprep.mubr.f32.mxu0 0.0
        %5018 = vmatmul.mubr.f32.gmra.mrb[0].mxu0 %v4817
        %v5019 = vpop.f32.mrb[0].mxu0
        %v5020 = vadd.f32 0.0, %v5019
        %v5021 = vpop.f32.mrb[0].mxu0
        %5022 = vmatprep.mubr.f32.mxu0 0.0
        %5023 = vmatmul.mubr.f32.gmra.mrb[0].mxu0 %v4820
        %v5024 = vpop.f32.mrb[0].mxu0
        %v5025 = vadd.f32 0.0, %v5024
        %v5026 = vpop.f32.mrb[0].mxu0
        %5027 = vmatprep.mubr.f32.mxu0 0.0
        %5028 = vmatmul.mubr.f32.gmra.mrb[0].mxu0 %v4823
        %v5029 = vpop.f32.mrb[0].mxu0
        %v5030 = vadd.f32 0.0, %v5029
        %v5031 = vpop.f32.mrb[0].mxu0
        %5032 = vmatprep.mubr.f32.mxu0 0.0
        %5033 = vmatmul.mubr.f32.gmra.mrb[0].mxu0 %v4826
        %v5034 = vpop.f32.mrb[0].mxu0
        %v5035 = vadd.f32 0.0, %v5034
        %v5036 = vpop.f32.mrb[0].mxu0
        %5037 = vmatprep.mubr.f32.mxu0 0.0
        %5038 = vmatmul.mubr.f32.gmra.mrb[0].mxu0 %v4829
        %v5039 = vpop.f32.mrb[0].mxu0
        %v5040 = vadd.f32 0.0, %v5039
        %v5041 = vpop.f32.mrb[0].mxu0
        %5042 = vmatprep.mubr.f32.mxu0 0.0
        %5043 = vmatmul.mubr.f32.gmra.mrb[0].mxu0 %v4832
        %v5044 = vpop.f32.mrb[0].mxu0
        %v5045 = vadd.f32 0.0, %v5044
        %v5046 = vpop.f32.mrb[0].mxu0
        %5047 = vmatprep.mubr.f32.mxu0 0.0
        %5048 = vmatmul.mubr.f32.gmra.mrb[0].mxu0 %v4835
        %v5049 = vpop.f32.mrb[0].mxu0
        %v5050 = vadd.f32 0.0, %v5049
        %v5051 = vpop.f32.mrb[0].mxu0
        %5052 = vmatprep.mubr.f32.mxu0 0.0
        %5053 = vmatmul.mubr.f32.gmra.mrb[0].mxu0 %v4838
        %v5054 = vpop.f32.mrb[0].mxu0
        %v5055 = vadd.f32 0.0, %v5054
        %v5056 = vpop.f32.mrb[0].mxu0
        %5057 = vmatprep.mubr.f32.mxu0 0.0
        %5058 = vmatmul.mubr.f32.gmra.mrb[0].mxu0 %v4841
        %v5059 = vpop.f32.mrb[0].mxu0
        %v5060 = vadd.f32 0.0, %v5059
        %v5061 = vpop.f32.mrb[0].mxu0
        %5062 = vmatprep.mubr.f32.mxu0 0.0
        %5063 = vmatmul.mubr.f32.gmra.mrb[0].mxu0 %v4844
        %v5064 = vpop.f32.mrb[0].mxu0
        %v5065 = vadd.f32 0.0, %v5064
        %v5066 = vpop.f32.mrb[0].mxu0
        %5067 = vmatprep.mubr.f32.mxu0 0.0
        %5068 = vmatmul.mubr.f32.gmra.mrb[0].mxu0 %v4847
        %v5069 = vpop.f32.mrb[0].mxu0
        %v5070 = vadd.f32 0.0, %v5069
        %v5071 = vpop.f32.mrb[0].mxu0
        %5072 = vmatprep.mubr.f32.mxu0 0.0
        %5073 = vmatmul.mubr.f32.gmra.mrb[0].mxu0 %v4850
        %v5074 = vpop.f32.mrb[0].mxu0
        %v5075 = vadd.f32 0.0, %v5074
        %v5076 = vpop.f32.mrb[0].mxu0
        %5077 = vmatprep.mubr.f32.mxu0 0.0
        %5078 = vmatmul.mubr.f32.gmra.mrb[0].mxu0 %v4853
        %v5079 = vpop.f32.mrb[0].mxu0
        %v5080 = vadd.f32 0.0, %v5079
        %v5081 = vpop.f32.mrb[0].mxu0
        %5082 = vdwg.mxu0
        %v5083 = vadd.f32 %v4726, %v4925
        %v5084 = vadd.f32 %v4727, %v4930
        %v5085 = vadd.f32 %v4728, %v4935
        %v5086 = vadd.f32 %v4729, %v4940
        %v5087 = vadd.f32 %v4730, %v4945
        %v5088 = vadd.f32 %v4731, %v4950
        %v5089 = vadd.f32 %v4732, %v4955
        %v5090 = vadd.f32 %v4733, %v4960
        %v5091 = vadd.f32 %v4734, %v4965
        %v5092 = vadd.f32 %v4735, %v4970
        %v5093 = vadd.f32 %v4736, %v4975
        %v5094 = vadd.f32 %v4737, %v4980
        %v5095 = vadd.f32 %v4738, %v4985
        %v5096 = vadd.f32 %v4739, %v4990
        %v5097 = vadd.f32 %v4740, %v4995
        %v5098 = vadd.f32 %v4741, %v5000
        %v5099 = vadd.f32 %v4742, %v5005
        %v5100 = vadd.f32 %v4743, %v5010
        %v5101 = vadd.f32 %v4744, %v5015
        %v5102 = vadd.f32 %v4745, %v5020
        %v5103 = vadd.f32 %v4746, %v5025
        %v5104 = vadd.f32 %v4747, %v5030
        %v5105 = vadd.f32 %v4748, %v5035
        %v5106 = vadd.f32 %v4749, %v5040
        %v5107 = vadd.f32 %v4750, %v5045
        %v5108 = vadd.f32 %v4751, %v5050
        %v5109 = vadd.f32 %v4752, %v5055
        %v5110 = vadd.f32 %v4753, %v5060
        %v5111 = vadd.f32 %v4754, %v5065
        %v5112 = vadd.f32 %v4755, %v5070
        %v5113 = vadd.f32 %v4756, %v5075
        %v5114 = vadd.f32 %v4757, %v5080
        %5115 = vst.msk [vmem:[#allocation3] sm:$0xff] %vm297, %v5083
        %5116 = vst.msk [vmem:[#allocation3 + $0x8] sm:$0xff] %vm297, %v5084
        %5117 = vst.msk [vmem:[#allocation3 + $0x10] sm:$0xff] %vm297, %v5085
        %5118 = vst.msk [vmem:[#allocation3 + $0x18] sm:$0xff] %vm297, %v5086
        %5119 = vst.msk [vmem:[#allocation3 + $0x20] sm:$0xff] %vm297, %v5087
        %5120 = vst.msk [vmem:[#allocation3 + $0x28] sm:$0xff] %vm297, %v5088
        %5121 = vst.msk [vmem:[#allocation3 + $0x30] sm:$0xff] %vm297, %v5089
        %5122 = vst.msk [vmem:[#allocation3 + $0x38] sm:$0xff] %vm297, %v5090
        %5123 = vst.msk [vmem:[#allocation3 + $0x40] sm:$0xff] %vm297, %v5091
        %5124 = vst.msk [vmem:[#allocation3 + $0x48] sm:$0xff] %vm297, %v5092
        %5125 = vst.msk [vmem:[#allocation3 + $0x50] sm:$0xff] %vm297, %v5093
        %5126 = vst.msk [vmem:[#allocation3 + $0x58] sm:$0xff] %vm297, %v5094
        %5127 = vst.msk [vmem:[#allocation3 + $0x60] sm:$0xff] %vm297, %v5095
        %5128 = vst.msk [vmem:[#allocation3 + $0x68] sm:$0xff] %vm297, %v5096
        %5129 = vst.msk [vmem:[#allocation3 + $0x70] sm:$0xff] %vm297, %v5097
        %5130 = vst.msk [vmem:[#allocation3 + $0x78] sm:$0xff] %vm297, %v5098
        %5131 = vst.msk [vmem:[#allocation3 + $0x80] sm:$0xff] %vm297, %v5099
        %5132 = vst.msk [vmem:[#allocation3 + $0x88] sm:$0xff] %vm297, %v5100
        %5133 = vst.msk [vmem:[#allocation3 + $0x90] sm:$0xff] %vm297, %v5101
        %5134 = vst.msk [vmem:[#allocation3 + $0x98] sm:$0xff] %vm297, %v5102
        %5135 = vst.msk [vmem:[#allocation3 + $0xa0] sm:$0xff] %vm297, %v5103
        %5136 = vst.msk [vmem:[#allocation3 + $0xa8] sm:$0xff] %vm297, %v5104
        %5137 = vst.msk [vmem:[#allocation3 + $0xb0] sm:$0xff] %vm297, %v5105
        %5138 = vst.msk [vmem:[#allocation3 + $0xb8] sm:$0xff] %vm297, %v5106
        %5139 = vst.msk [vmem:[#allocation3 + $0xc0] sm:$0xff] %vm297, %v5107
        %5140 = vst.msk [vmem:[#allocation3 + $0xc8] sm:$0xff] %vm297, %v5108
        %5141 = vst.msk [vmem:[#allocation3 + $0xd0] sm:$0xff] %vm297, %v5109
        %5142 = vst.msk [vmem:[#allocation3 + $0xd8] sm:$0xff] %vm297, %v5110
        %5143 = vst.msk [vmem:[#allocation3 + $0xe0] sm:$0xff] %vm297, %v5111
        %5144 = vst.msk [vmem:[#allocation3 + $0xe8] sm:$0xff] %vm297, %v5112
        %5145 = vst.msk [vmem:[#allocation3 + $0xf0] sm:$0xff] %vm297, %v5113
        %5146 = vst.msk [vmem:[#allocation3 + $0xf8] sm:$0xff] %vm297, %v5114
        %v5147 = vld [vmem:[#allocation2 + $0x1] sm:$0xff]
        %v5148 = vld [vmem:[#allocation2 + $0x9] sm:$0xff]
        %v5149 = vld [vmem:[#allocation2 + $0x19] sm:$0xff]
        %v5150 = vld [vmem:[#allocation2 + $0x21] sm:$0xff]
        %v5151 = vld [vmem:[#allocation2 + $0x31] sm:$0xff]
        %v5152 = vld [vmem:[#allocation2 + $0x39] sm:$0xff]
        %v5153 = vld [vmem:[#allocation2 + $0x49] sm:$0xff]
        %v5154 = vld [vmem:[#allocation2 + $0x51] sm:$0xff]
        %v5155 = vld [vmem:[#allocation2 + $0x61] sm:$0xff]
        %v5156 = vld [vmem:[#allocation2 + $0x69] sm:$0xff]
        %v5157 = vld [vmem:[#allocation2 + $0x79] sm:$0xff]
        %v5158 = vld [vmem:[#allocation2 + $0x81] sm:$0xff]
        %v5159 = vld [vmem:[#allocation2 + $0x91] sm:$0xff]
        %v5160 = vld [vmem:[#allocation2 + $0x99] sm:$0xff]
        %v5161 = vld [vmem:[#allocation2 + $0xa9] sm:$0xff]
        %v5162 = vld [vmem:[#allocation2 + $0xb1] sm:$0xff]
        %v5163 = vld [vmem:[#allocation2 + $0xc1] sm:$0xff]
        %v5164 = vld [vmem:[#allocation2 + $0xc9] sm:$0xff]
        %v5165 = vld [vmem:[#allocation2 + $0xd9] sm:$0xff]
        %v5166 = vld [vmem:[#allocation2 + $0xe1] sm:$0xff]
        %v5167 = vld [vmem:[#allocation2 + $0xf1] sm:$0xff]
        %v5168 = vld [vmem:[#allocation2 + $0xf9] sm:$0xff]
        %v5169 = vld [vmem:[#allocation2 + $0x109] sm:$0xff]
        %v5170 = vld [vmem:[#allocation2 + $0x111] sm:$0xff]
        %v5171 = vld [vmem:[#allocation2 + $0x121] sm:$0xff]
        %v5172 = vld [vmem:[#allocation2 + $0x129] sm:$0xff]
        %v5173 = vld [vmem:[#allocation2 + $0x139] sm:$0xff]
        %v5174 = vld [vmem:[#allocation2 + $0x141] sm:$0xff]
        %v5175 = vld [vmem:[#allocation2 + $0x151] sm:$0xff]
        %v5176 = vld [vmem:[#allocation2 + $0x159] sm:$0xff]
        %v5177 = vld [vmem:[#allocation2 + $0x169] sm:$0xff]
        %v5178 = vld [vmem:[#allocation2 + $0x171] sm:$0xff]
        %v5179 = vld [vmem:[#allocation3] sm:$0xff]
        %v5180 = vld [vmem:[#allocation3 + $0x8] sm:$0xff]
        %v5181 = vld [vmem:[#allocation3 + $0x10] sm:$0xff]
        %v5182 = vld [vmem:[#allocation3 + $0x18] sm:$0xff]
        %v5183 = vld [vmem:[#allocation3 + $0x20] sm:$0xff]
        %v5184 = vld [vmem:[#allocation3 + $0x28] sm:$0xff]
        %v5185 = vld [vmem:[#allocation3 + $0x30] sm:$0xff]
        %v5186 = vld [vmem:[#allocation3 + $0x38] sm:$0xff]
        %v5187 = vld [vmem:[#allocation3 + $0x40] sm:$0xff]
        %v5188 = vld [vmem:[#allocation3 + $0x48] sm:$0xff]
        %v5189 = vld [vmem:[#allocation3 + $0x50] sm:$0xff]
        %v5190 = vld [vmem:[#allocation3 + $0x58] sm:$0xff]
        %v5191 = vld [vmem:[#allocation3 + $0x60] sm:$0xff]
        %v5192 = vld [vmem:[#allocation3 + $0x68] sm:$0xff]
        %v5193 = vld [vmem:[#allocation3 + $0x70] sm:$0xff]
        %v5194 = vld [vmem:[#allocation3 + $0x78] sm:$0xff]
        %v5195 = vld [vmem:[#allocation3 + $0x80] sm:$0xff]
        %v5196 = vld [vmem:[#allocation3 + $0x88] sm:$0xff]
        %v5197 = vld [vmem:[#allocation3 + $0x90] sm:$0xff]
        %v5198 = vld [vmem:[#allocation3 + $0x98] sm:$0xff]
        %v5199 = vld [vmem:[#allocation3 + $0xa0] sm:$0xff]
        %v5200 = vld [vmem:[#allocation3 + $0xa8] sm:$0xff]
        %v5201 = vld [vmem:[#allocation3 + $0xb0] sm:$0xff]
        %v5202 = vld [vmem:[#allocation3 + $0xb8] sm:$0xff]
        %v5203 = vld [vmem:[#allocation3 + $0xc0] sm:$0xff]
        %v5204 = vld [vmem:[#allocation3 + $0xc8] sm:$0xff]
        %v5205 = vld [vmem:[#allocation3 + $0xd0] sm:$0xff]
        %v5206 = vld [vmem:[#allocation3 + $0xd8] sm:$0xff]
        %v5207 = vld [vmem:[#allocation3 + $0xe0] sm:$0xff]
        %v5208 = vld [vmem:[#allocation3 + $0xe8] sm:$0xff]
        %v5209 = vld [vmem:[#allocation3 + $0xf0] sm:$0xff]
        %v5210 = vld [vmem:[#allocation3 + $0xf8] sm:$0xff]
        %s5211 = scalar_lea.vmem [#allocation10], 4
        %v5212 = vld [vmem:[%s5211] sm:$0xf]
        %v5214 = vsel %vm297, %v5147, 0
        %v5217 = vsel %vm297, %v5148, 0
        %v5220 = vsel %vm297, %v5149, 0
        %v5223 = vsel %vm297, %v5150, 0
        %v5226 = vsel %vm297, %v5151, 0
        %v5229 = vsel %vm297, %v5152, 0
        %v5232 = vsel %vm297, %v5153, 0
        %v5235 = vsel %vm297, %v5154, 0
        %v5238 = vsel %vm297, %v5155, 0
        %v5241 = vsel %vm297, %v5156, 0
        %v5244 = vsel %vm297, %v5157, 0
        %v5247 = vsel %vm297, %v5158, 0
        %v5250 = vsel %vm297, %v5159, 0
        %v5253 = vsel %vm297, %v5160, 0
        %v5256 = vsel %vm297, %v5161, 0
        %v5259 = vsel %vm297, %v5162, 0
        %v5262 = vsel %vm297, %v5163, 0
        %v5265 = vsel %vm297, %v5164, 0
        %v5268 = vsel %vm297, %v5165, 0
        %v5271 = vsel %vm297, %v5166, 0
        %v5274 = vsel %vm297, %v5167, 0
        %v5277 = vsel %vm297, %v5168, 0
        %v5280 = vsel %vm297, %v5169, 0
        %v5283 = vsel %vm297, %v5170, 0
        %v5286 = vsel %vm297, %v5171, 0
        %v5289 = vsel %vm297, %v5172, 0
        %v5292 = vsel %vm297, %v5173, 0
        %v5295 = vsel %vm297, %v5174, 0
        %v5298 = vsel %vm297, %v5175, 0
        %v5301 = vsel %vm297, %v5176, 0
        %v5304 = vsel %vm297, %v5177, 0
        %v5307 = vsel %vm297, %v5178, 0
        %v5310 = vsel %vm601, %v5212, 0
        %5312 = vmatprep.subr.mxu0 0.0
        %5313 = vmatpush1.msra.mxu0 %v5310
        %5314 = vmatprep.subr.mxu0 0.0
        %5315 = vmatpush1.msra.mxu0 0.0
        %5316 = vmatprep.subr.mxu0 0.0
        %5317 = vmatpush1.msra.mxu0 0.0
        %5318 = vmatprep.subr.mxu0 0.0
        %5319 = vmatpush1.msra.mxu0 0.0
        %5320 = vmatprep.subr.mxu0 0.0
        %5321 = vmatpush1.msra.mxu0 0.0
        %5322 = vmatprep.subr.mxu0 0.0
        %5323 = vmatpush1.msra.mxu0 0.0
        %5324 = vmatprep.subr.mxu0 0.0
        %5325 = vmatpush1.msra.mxu0 0.0
        %5326 = vmatprep.subr.mxu0 0.0
        %5327 = vmatpush1.msra.mxu0 0.0
        %5328 = vmatprep.subr.mxu0 0.0
        %5329 = vmatpush1.msra.mxu0 0.0
        %5330 = vmatprep.subr.mxu0 0.0
        %5331 = vmatpush1.msra.mxu0 0.0
        %5332 = vmatprep.subr.mxu0 0.0
        %5333 = vmatpush1.msra.mxu0 0.0
        %5334 = vmatprep.subr.mxu0 0.0
        %5335 = vmatpush1.msra.mxu0 0.0
        %5336 = vmatprep.subr.mxu0 0.0
        %5337 = vmatpush1.msra.mxu0 0.0
        %5338 = vmatprep.subr.mxu0 0.0
        %5339 = vmatpush1.msra.mxu0 0.0
        %5340 = vmatprep.subr.mxu0 0.0
        %5341 = vmatpush1.msra.mxu0 0.0
        %5342 = vmatprep.subr.mxu0 0.0
        %5343 = vmatpush1.msra.mxu0 0.0
        %5344 = vmatprep.subr.mxu0 0.0
        %5345 = vmatpush1.msra.mxu0 0.0
        %5346 = vmatprep.subr.mxu0 0.0
        %5347 = vmatpush1.msra.mxu0 0.0
        %5348 = vmatprep.subr.mxu0 0.0
        %5349 = vmatpush1.msra.mxu0 0.0
        %5350 = vmatprep.subr.mxu0 0.0
        %5351 = vmatpush1.msra.mxu0 0.0
        %5352 = vmatprep.subr.mxu0 0.0
        %5353 = vmatpush1.msra.mxu0 0.0
        %5354 = vmatprep.subr.mxu0 0.0
        %5355 = vmatpush1.msra.mxu0 0.0
        %5356 = vmatprep.subr.mxu0 0.0
        %5357 = vmatpush1.msra.mxu0 0.0
        %5358 = vmatprep.subr.mxu0 0.0
        %5359 = vmatpush1.msra.mxu0 0.0
        %5360 = vmatprep.subr.mxu0 0.0
        %5361 = vmatpush1.msra.mxu0 0.0
        %5362 = vmatprep.subr.mxu0 0.0
        %5363 = vmatpush1.msra.mxu0 0.0
        %5364 = vmatprep.subr.mxu0 0.0
        %5365 = vmatpush1.msra.mxu0 0.0
        %5366 = vmatprep.subr.mxu0 0.0
        %5367 = vmatpush1.msra.mxu0 0.0
        %5368 = vmatprep.subr.mxu0 0.0
        %5369 = vmatpush1.msra.mxu0 0.0
        %5370 = vmatprep.subr.mxu0 0.0
        %5371 = vmatpush1.msra.mxu0 0.0
        %5372 = vmatprep.subr.mxu0 0.0
        %5373 = vmatpush1.msra.mxu0 0.0
        %5374 = vmatprep.subr.mxu0 0.0
        %5375 = vmatpush1.msra.mxu0 0.0
        %5376 = vmatprep.mubr.f32.mxu0 0.0
        %5377 = vmatmul.mubr.f32.gmra.mrb[0].mxu0 %v5214
        %v5378 = vpop.f32.mrb[0].mxu0
        %v5379 = vadd.f32 0.0, %v5378
        %v5380 = vpop.f32.mrb[0].mxu0
        %5381 = vmatprep.mubr.f32.mxu0 0.0
        %5382 = vmatmul.mubr.f32.gmra.mrb[0].mxu0 %v5217
        %v5383 = vpop.f32.mrb[0].mxu0
        %v5384 = vadd.f32 0.0, %v5383
        %v5385 = vpop.f32.mrb[0].mxu0
        %5386 = vmatprep.mubr.f32.mxu0 0.0
        %5387 = vmatmul.mubr.f32.gmra.mrb[0].mxu0 %v5220
        %v5388 = vpop.f32.mrb[0].mxu0
        %v5389 = vadd.f32 0.0, %v5388
        %v5390 = vpop.f32.mrb[0].mxu0
        %5391 = vmatprep.mubr.f32.mxu0 0.0
        %5392 = vmatmul.mubr.f32.gmra.mrb[0].mxu0 %v5223
        %v5393 = vpop.f32.mrb[0].mxu0
        %v5394 = vadd.f32 0.0, %v5393
        %v5395 = vpop.f32.mrb[0].mxu0
        %5396 = vmatprep.mubr.f32.mxu0 0.0
        %5397 = vmatmul.mubr.f32.gmra.mrb[0].mxu0 %v5226
        %v5398 = vpop.f32.mrb[0].mxu0
        %v5399 = vadd.f32 0.0, %v5398
        %v5400 = vpop.f32.mrb[0].mxu0
        %5401 = vmatprep.mubr.f32.mxu0 0.0
        %5402 = vmatmul.mubr.f32.gmra.mrb[0].mxu0 %v5229
        %v5403 = vpop.f32.mrb[0].mxu0
        %v5404 = vadd.f32 0.0, %v5403
        %v5405 = vpop.f32.mrb[0].mxu0
        %5406 = vmatprep.mubr.f32.mxu0 0.0
        %5407 = vmatmul.mubr.f32.gmra.mrb[0].mxu0 %v5232
        %v5408 = vpop.f32.mrb[0].mxu0
        %v5409 = vadd.f32 0.0, %v5408
        %v5410 = vpop.f32.mrb[0].mxu0
        %5411 = vmatprep.mubr.f32.mxu0 0.0
        %5412 = vmatmul.mubr.f32.gmra.mrb[0].mxu0 %v5235
        %v5413 = vpop.f32.mrb[0].mxu0
        %v5414 = vadd.f32 0.0, %v5413
        %v5415 = vpop.f32.mrb[0].mxu0
        %5416 = vmatprep.mubr.f32.mxu0 0.0
        %5417 = vmatmul.mubr.f32.gmra.mrb[0].mxu0 %v5238
        %v5418 = vpop.f32.mrb[0].mxu0
        %v5419 = vadd.f32 0.0, %v5418
        %v5420 = vpop.f32.mrb[0].mxu0
        %5421 = vmatprep.mubr.f32.mxu0 0.0
        %5422 = vmatmul.mubr.f32.gmra.mrb[0].mxu0 %v5241
        %v5423 = vpop.f32.mrb[0].mxu0
        %v5424 = vadd.f32 0.0, %v5423
        %v5425 = vpop.f32.mrb[0].mxu0
        %5426 = vmatprep.mubr.f32.mxu0 0.0
        %5427 = vmatmul.mubr.f32.gmra.mrb[0].mxu0 %v5244
        %v5428 = vpop.f32.mrb[0].mxu0
        %v5429 = vadd.f32 0.0, %v5428
        %v5430 = vpop.f32.mrb[0].mxu0
        %5431 = vmatprep.mubr.f32.mxu0 0.0
        %5432 = vmatmul.mubr.f32.gmra.mrb[0].mxu0 %v5247
        %v5433 = vpop.f32.mrb[0].mxu0
        %v5434 = vadd.f32 0.0, %v5433
        %v5435 = vpop.f32.mrb[0].mxu0
        %5436 = vmatprep.mubr.f32.mxu0 0.0
        %5437 = vmatmul.mubr.f32.gmra.mrb[0].mxu0 %v5250
        %v5438 = vpop.f32.mrb[0].mxu0
        %v5439 = vadd.f32 0.0, %v5438
        %v5440 = vpop.f32.mrb[0].mxu0
        %5441 = vmatprep.mubr.f32.mxu0 0.0
        %5442 = vmatmul.mubr.f32.gmra.mrb[0].mxu0 %v5253
        %v5443 = vpop.f32.mrb[0].mxu0
        %v5444 = vadd.f32 0.0, %v5443
        %v5445 = vpop.f32.mrb[0].mxu0
        %5446 = vmatprep.mubr.f32.mxu0 0.0
        %5447 = vmatmul.mubr.f32.gmra.mrb[0].mxu0 %v5256
        %v5448 = vpop.f32.mrb[0].mxu0
        %v5449 = vadd.f32 0.0, %v5448
        %v5450 = vpop.f32.mrb[0].mxu0
        %5451 = vmatprep.mubr.f32.mxu0 0.0
        %5452 = vmatmul.mubr.f32.gmra.mrb[0].mxu0 %v5259
        %v5453 = vpop.f32.mrb[0].mxu0
        %v5454 = vadd.f32 0.0, %v5453
        %v5455 = vpop.f32.mrb[0].mxu0
        %5456 = vmatprep.mubr.f32.mxu0 0.0
        %5457 = vmatmul.mubr.f32.gmra.mrb[0].mxu0 %v5262
        %v5458 = vpop.f32.mrb[0].mxu0
        %v5459 = vadd.f32 0.0, %v5458
        %v5460 = vpop.f32.mrb[0].mxu0
        %5461 = vmatprep.mubr.f32.mxu0 0.0
        %5462 = vmatmul.mubr.f32.gmra.mrb[0].mxu0 %v5265
        %v5463 = vpop.f32.mrb[0].mxu0
        %v5464 = vadd.f32 0.0, %v5463
        %v5465 = vpop.f32.mrb[0].mxu0
        %5466 = vmatprep.mubr.f32.mxu0 0.0
        %5467 = vmatmul.mubr.f32.gmra.mrb[0].mxu0 %v5268
        %v5468 = vpop.f32.mrb[0].mxu0
        %v5469 = vadd.f32 0.0, %v5468
        %v5470 = vpop.f32.mrb[0].mxu0
        %5471 = vmatprep.mubr.f32.mxu0 0.0
        %5472 = vmatmul.mubr.f32.gmra.mrb[0].mxu0 %v5271
        %v5473 = vpop.f32.mrb[0].mxu0
        %v5474 = vadd.f32 0.0, %v5473
        %v5475 = vpop.f32.mrb[0].mxu0
        %5476 = vmatprep.mubr.f32.mxu0 0.0
        %5477 = vmatmul.mubr.f32.gmra.mrb[0].mxu0 %v5274
        %v5478 = vpop.f32.mrb[0].mxu0
        %v5479 = vadd.f32 0.0, %v5478
        %v5480 = vpop.f32.mrb[0].mxu0
        %5481 = vmatprep.mubr.f32.mxu0 0.0
        %5482 = vmatmul.mubr.f32.gmra.mrb[0].mxu0 %v5277
        %v5483 = vpop.f32.mrb[0].mxu0
        %v5484 = vadd.f32 0.0, %v5483
        %v5485 = vpop.f32.mrb[0].mxu0
        %5486 = vmatprep.mubr.f32.mxu0 0.0
        %5487 = vmatmul.mubr.f32.gmra.mrb[0].mxu0 %v5280
        %v5488 = vpop.f32.mrb[0].mxu0
        %v5489 = vadd.f32 0.0, %v5488
        %v5490 = vpop.f32.mrb[0].mxu0
        %5491 = vmatprep.mubr.f32.mxu0 0.0
        %5492 = vmatmul.mubr.f32.gmra.mrb[0].mxu0 %v5283
        %v5493 = vpop.f32.mrb[0].mxu0
        %v5494 = vadd.f32 0.0, %v5493
        %v5495 = vpop.f32.mrb[0].mxu0
        %5496 = vmatprep.mubr.f32.mxu0 0.0
        %5497 = vmatmul.mubr.f32.gmra.mrb[0].mxu0 %v5286
        %v5498 = vpop.f32.mrb[0].mxu0
        %v5499 = vadd.f32 0.0, %v5498
        %v5500 = vpop.f32.mrb[0].mxu0
        %5501 = vmatprep.mubr.f32.mxu0 0.0
        %5502 = vmatmul.mubr.f32.gmra.mrb[0].mxu0 %v5289
        %v5503 = vpop.f32.mrb[0].mxu0
        %v5504 = vadd.f32 0.0, %v5503
        %v5505 = vpop.f32.mrb[0].mxu0
        %5506 = vmatprep.mubr.f32.mxu0 0.0
        %5507 = vmatmul.mubr.f32.gmra.mrb[0].mxu0 %v5292
        %v5508 = vpop.f32.mrb[0].mxu0
        %v5509 = vadd.f32 0.0, %v5508
        %v5510 = vpop.f32.mrb[0].mxu0
        %5511 = vmatprep.mubr.f32.mxu0 0.0
        %5512 = vmatmul.mubr.f32.gmra.mrb[0].mxu0 %v5295
        %v5513 = vpop.f32.mrb[0].mxu0
        %v5514 = vadd.f32 0.0, %v5513
        %v5515 = vpop.f32.mrb[0].mxu0
        %5516 = vmatprep.mubr.f32.mxu0 0.0
        %5517 = vmatmul.mubr.f32.gmra.mrb[0].mxu0 %v5298
        %v5518 = vpop.f32.mrb[0].mxu0
        %v5519 = vadd.f32 0.0, %v5518
        %v5520 = vpop.f32.mrb[0].mxu0
        %5521 = vmatprep.mubr.f32.mxu0 0.0
        %5522 = vmatmul.mubr.f32.gmra.mrb[0].mxu0 %v5301
        %v5523 = vpop.f32.mrb[0].mxu0
        %v5524 = vadd.f32 0.0, %v5523
        %v5525 = vpop.f32.mrb[0].mxu0
        %5526 = vmatprep.mubr.f32.mxu0 0.0
        %5527 = vmatmul.mubr.f32.gmra.mrb[0].mxu0 %v5304
        %v5528 = vpop.f32.mrb[0].mxu0
        %v5529 = vadd.f32 0.0, %v5528
        %v5530 = vpop.f32.mrb[0].mxu0
        %5531 = vmatprep.mubr.f32.mxu0 0.0
        %5532 = vmatmul.mubr.f32.gmra.mrb[0].mxu0 %v5307
        %v5533 = vpop.f32.mrb[0].mxu0
        %v5534 = vadd.f32 0.0, %v5533
        %v5535 = vpop.f32.mrb[0].mxu0
        %5536 = vdwg.mxu0
        %v5537 = vadd.f32 %v5179, %v5379
        %v5538 = vadd.f32 %v5180, %v5384
        %v5539 = vadd.f32 %v5181, %v5389
        %v5540 = vadd.f32 %v5182, %v5394
        %v5541 = vadd.f32 %v5183, %v5399
        %v5542 = vadd.f32 %v5184, %v5404
        %v5543 = vadd.f32 %v5185, %v5409
        %v5544 = vadd.f32 %v5186, %v5414
        %v5545 = vadd.f32 %v5187, %v5419
        %v5546 = vadd.f32 %v5188, %v5424
        %v5547 = vadd.f32 %v5189, %v5429
        %v5548 = vadd.f32 %v5190, %v5434
        %v5549 = vadd.f32 %v5191, %v5439
        %v5550 = vadd.f32 %v5192, %v5444
        %v5551 = vadd.f32 %v5193, %v5449
        %v5552 = vadd.f32 %v5194, %v5454
        %v5553 = vadd.f32 %v5195, %v5459
        %v5554 = vadd.f32 %v5196, %v5464
        %v5555 = vadd.f32 %v5197, %v5469
        %v5556 = vadd.f32 %v5198, %v5474
        %v5557 = vadd.f32 %v5199, %v5479
        %v5558 = vadd.f32 %v5200, %v5484
        %v5559 = vadd.f32 %v5201, %v5489
        %v5560 = vadd.f32 %v5202, %v5494
        %v5561 = vadd.f32 %v5203, %v5499
        %v5562 = vadd.f32 %v5204, %v5504
        %v5563 = vadd.f32 %v5205, %v5509
        %v5564 = vadd.f32 %v5206, %v5514
        %v5565 = vadd.f32 %v5207, %v5519
        %v5566 = vadd.f32 %v5208, %v5524
        %v5567 = vadd.f32 %v5209, %v5529
        %v5568 = vadd.f32 %v5210, %v5534
        %5569 = vst.msk [vmem:[#allocation3] sm:$0xff] %vm297, %v5537
        %5570 = vst.msk [vmem:[#allocation3 + $0x8] sm:$0xff] %vm297, %v5538
        %5571 = vst.msk [vmem:[#allocation3 + $0x10] sm:$0xff] %vm297, %v5539
        %5572 = vst.msk [vmem:[#allocation3 + $0x18] sm:$0xff] %vm297, %v5540
        %5573 = vst.msk [vmem:[#allocation3 + $0x20] sm:$0xff] %vm297, %v5541
        %5574 = vst.msk [vmem:[#allocation3 + $0x28] sm:$0xff] %vm297, %v5542
        %5575 = vst.msk [vmem:[#allocation3 + $0x30] sm:$0xff] %vm297, %v5543
        %5576 = vst.msk [vmem:[#allocation3 + $0x38] sm:$0xff] %vm297, %v5544
        %5577 = vst.msk [vmem:[#allocation3 + $0x40] sm:$0xff] %vm297, %v5545
        %5578 = vst.msk [vmem:[#allocation3 + $0x48] sm:$0xff] %vm297, %v5546
        %5579 = vst.msk [vmem:[#allocation3 + $0x50] sm:$0xff] %vm297, %v5547
        %5580 = vst.msk [vmem:[#allocation3 + $0x58] sm:$0xff] %vm297, %v5548
        %5581 = vst.msk [vmem:[#allocation3 + $0x60] sm:$0xff] %vm297, %v5549
        %5582 = vst.msk [vmem:[#allocation3 + $0x68] sm:$0xff] %vm297, %v5550
        %5583 = vst.msk [vmem:[#allocation3 + $0x70] sm:$0xff] %vm297, %v5551
        %5584 = vst.msk [vmem:[#allocation3 + $0x78] sm:$0xff] %vm297, %v5552
        %5585 = vst.msk [vmem:[#allocation3 + $0x80] sm:$0xff] %vm297, %v5553
        %5586 = vst.msk [vmem:[#allocation3 + $0x88] sm:$0xff] %vm297, %v5554
        %5587 = vst.msk [vmem:[#allocation3 + $0x90] sm:$0xff] %vm297, %v5555
        %5588 = vst.msk [vmem:[#allocation3 + $0x98] sm:$0xff] %vm297, %v5556
        %5589 = vst.msk [vmem:[#allocation3 + $0xa0] sm:$0xff] %vm297, %v5557
        %5590 = vst.msk [vmem:[#allocation3 + $0xa8] sm:$0xff] %vm297, %v5558
        %5591 = vst.msk [vmem:[#allocation3 + $0xb0] sm:$0xff] %vm297, %v5559
        %5592 = vst.msk [vmem:[#allocation3 + $0xb8] sm:$0xff] %vm297, %v5560
        %5593 = vst.msk [vmem:[#allocation3 + $0xc0] sm:$0xff] %vm297, %v5561
        %5594 = vst.msk [vmem:[#allocation3 + $0xc8] sm:$0xff] %vm297, %v5562
        %5595 = vst.msk [vmem:[#allocation3 + $0xd0] sm:$0xff] %vm297, %v5563
        %5596 = vst.msk [vmem:[#allocation3 + $0xd8] sm:$0xff] %vm297, %v5564
        %5597 = vst.msk [vmem:[#allocation3 + $0xe0] sm:$0xff] %vm297, %v5565
        %5598 = vst.msk [vmem:[#allocation3 + $0xe8] sm:$0xff] %vm297, %v5566
        %5599 = vst.msk [vmem:[#allocation3 + $0xf0] sm:$0xff] %vm297, %v5567
        %5600 = vst.msk [vmem:[#allocation3 + $0xf8] sm:$0xff] %vm297, %v5568
        %v5601 = vld [vmem:[#allocation2 + $0x2] sm:$0xff]
        %v5602 = vld [vmem:[#allocation2 + $0xa] sm:$0xff]
        %v5603 = vld [vmem:[#allocation2 + $0x1a] sm:$0xff]
        %v5604 = vld [vmem:[#allocation2 + $0x22] sm:$0xff]
        %v5605 = vld [vmem:[#allocation2 + $0x32] sm:$0xff]
        %v5606 = vld [vmem:[#allocation2 + $0x3a] sm:$0xff]
        %v5607 = vld [vmem:[#allocation2 + $0x4a] sm:$0xff]
        %v5608 = vld [vmem:[#allocation2 + $0x52] sm:$0xff]
        %v5609 = vld [vmem:[#allocation2 + $0x62] sm:$0xff]
        %v5610 = vld [vmem:[#allocation2 + $0x6a] sm:$0xff]
        %v5611 = vld [vmem:[#allocation2 + $0x7a] sm:$0xff]
        %v5612 = vld [vmem:[#allocation2 + $0x82] sm:$0xff]
        %v5613 = vld [vmem:[#allocation2 + $0x92] sm:$0xff]
        %v5614 = vld [vmem:[#allocation2 + $0x9a] sm:$0xff]
        %v5615 = vld [vmem:[#allocation2 + $0xaa] sm:$0xff]
        %v5616 = vld [vmem:[#allocation2 + $0xb2] sm:$0xff]
        %v5617 = vld [vmem:[#allocation2 + $0xc2] sm:$0xff]
        %v5618 = vld [vmem:[#allocation2 + $0xca] sm:$0xff]
        %v5619 = vld [vmem:[#allocation2 + $0xda] sm:$0xff]
        %v5620 = vld [vmem:[#allocation2 + $0xe2] sm:$0xff]
        %v5621 = vld [vmem:[#allocation2 + $0xf2] sm:$0xff]
        %v5622 = vld [vmem:[#allocation2 + $0xfa] sm:$0xff]
        %v5623 = vld [vmem:[#allocation2 + $0x10a] sm:$0xff]
        %v5624 = vld [vmem:[#allocation2 + $0x112] sm:$0xff]
        %v5625 = vld [vmem:[#allocation2 + $0x122] sm:$0xff]
        %v5626 = vld [vmem:[#allocation2 + $0x12a] sm:$0xff]
        %v5627 = vld [vmem:[#allocation2 + $0x13a] sm:$0xff]
        %v5628 = vld [vmem:[#allocation2 + $0x142] sm:$0xff]
        %v5629 = vld [vmem:[#allocation2 + $0x152] sm:$0xff]
        %v5630 = vld [vmem:[#allocation2 + $0x15a] sm:$0xff]
        %v5631 = vld [vmem:[#allocation2 + $0x16a] sm:$0xff]
        %v5632 = vld [vmem:[#allocation2 + $0x172] sm:$0xff]
        %v5633 = vld [vmem:[#allocation3] sm:$0xff]
        %v5634 = vld [vmem:[#allocation3 + $0x8] sm:$0xff]
        %v5635 = vld [vmem:[#allocation3 + $0x10] sm:$0xff]
        %v5636 = vld [vmem:[#allocation3 + $0x18] sm:$0xff]
        %v5637 = vld [vmem:[#allocation3 + $0x20] sm:$0xff]
        %v5638 = vld [vmem:[#allocation3 + $0x28] sm:$0xff]
        %v5639 = vld [vmem:[#allocation3 + $0x30] sm:$0xff]
        %v5640 = vld [vmem:[#allocation3 + $0x38] sm:$0xff]
        %v5641 = vld [vmem:[#allocation3 + $0x40] sm:$0xff]
        %v5642 = vld [vmem:[#allocation3 + $0x48] sm:$0xff]
        %v5643 = vld [vmem:[#allocation3 + $0x50] sm:$0xff]
        %v5644 = vld [vmem:[#allocation3 + $0x58] sm:$0xff]
        %v5645 = vld [vmem:[#allocation3 + $0x60] sm:$0xff]
        %v5646 = vld [vmem:[#allocation3 + $0x68] sm:$0xff]
        %v5647 = vld [vmem:[#allocation3 + $0x70] sm:$0xff]
        %v5648 = vld [vmem:[#allocation3 + $0x78] sm:$0xff]
        %v5649 = vld [vmem:[#allocation3 + $0x80] sm:$0xff]
        %v5650 = vld [vmem:[#allocation3 + $0x88] sm:$0xff]
        %v5651 = vld [vmem:[#allocation3 + $0x90] sm:$0xff]
        %v5652 = vld [vmem:[#allocation3 + $0x98] sm:$0xff]
        %v5653 = vld [vmem:[#allocation3 + $0xa0] sm:$0xff]
        %v5654 = vld [vmem:[#allocation3 + $0xa8] sm:$0xff]
        %v5655 = vld [vmem:[#allocation3 + $0xb0] sm:$0xff]
        %v5656 = vld [vmem:[#allocation3 + $0xb8] sm:$0xff]
        %v5657 = vld [vmem:[#allocation3 + $0xc0] sm:$0xff]
        %v5658 = vld [vmem:[#allocation3 + $0xc8] sm:$0xff]
        %v5659 = vld [vmem:[#allocation3 + $0xd0] sm:$0xff]
        %v5660 = vld [vmem:[#allocation3 + $0xd8] sm:$0xff]
        %v5661 = vld [vmem:[#allocation3 + $0xe0] sm:$0xff]
        %v5662 = vld [vmem:[#allocation3 + $0xe8] sm:$0xff]
        %v5663 = vld [vmem:[#allocation3 + $0xf0] sm:$0xff]
        %v5664 = vld [vmem:[#allocation3 + $0xf8] sm:$0xff]
        %s5665 = scalar_lea.vmem [#allocation10], 8
        %v5666 = vld [vmem:[%s5665] sm:$0xf]
        %v5668 = vsel %vm297, %v5601, 0
        %v5671 = vsel %vm297, %v5602, 0
        %v5674 = vsel %vm297, %v5603, 0
        %v5677 = vsel %vm297, %v5604, 0
        %v5680 = vsel %vm297, %v5605, 0
        %v5683 = vsel %vm297, %v5606, 0
        %v5686 = vsel %vm297, %v5607, 0
        %v5689 = vsel %vm297, %v5608, 0
        %v5692 = vsel %vm297, %v5609, 0
        %v5695 = vsel %vm297, %v5610, 0
        %v5698 = vsel %vm297, %v5611, 0
        %v5701 = vsel %vm297, %v5612, 0
        %v5704 = vsel %vm297, %v5613, 0
        %v5707 = vsel %vm297, %v5614, 0
        %v5710 = vsel %vm297, %v5615, 0
        %v5713 = vsel %vm297, %v5616, 0
        %v5716 = vsel %vm297, %v5617, 0
        %v5719 = vsel %vm297, %v5618, 0
        %v5722 = vsel %vm297, %v5619, 0
        %v5725 = vsel %vm297, %v5620, 0
        %v5728 = vsel %vm297, %v5621, 0
        %v5731 = vsel %vm297, %v5622, 0
        %v5734 = vsel %vm297, %v5623, 0
        %v5737 = vsel %vm297, %v5624, 0
        %v5740 = vsel %vm297, %v5625, 0
        %v5743 = vsel %vm297, %v5626, 0
        %v5746 = vsel %vm297, %v5627, 0
        %v5749 = vsel %vm297, %v5628, 0
        %v5752 = vsel %vm297, %v5629, 0
        %v5755 = vsel %vm297, %v5630, 0
        %v5758 = vsel %vm297, %v5631, 0
        %v5761 = vsel %vm297, %v5632, 0
        %v5764 = vsel %vm601, %v5666, 0
        %5766 = vmatprep.subr.mxu0 0.0
        %5767 = vmatpush1.msra.mxu0 %v5764
        %5768 = vmatprep.subr.mxu0 0.0
        %5769 = vmatpush1.msra.mxu0 0.0
        %5770 = vmatprep.subr.mxu0 0.0
        %5771 = vmatpush1.msra.mxu0 0.0
        %5772 = vmatprep.subr.mxu0 0.0
        %5773 = vmatpush1.msra.mxu0 0.0
        %5774 = vmatprep.subr.mxu0 0.0
        %5775 = vmatpush1.msra.mxu0 0.0
        %5776 = vmatprep.subr.mxu0 0.0
        %5777 = vmatpush1.msra.mxu0 0.0
        %5778 = vmatprep.subr.mxu0 0.0
        %5779 = vmatpush1.msra.mxu0 0.0
        %5780 = vmatprep.subr.mxu0 0.0
        %5781 = vmatpush1.msra.mxu0 0.0
        %5782 = vmatprep.subr.mxu0 0.0
        %5783 = vmatpush1.msra.mxu0 0.0
        %5784 = vmatprep.subr.mxu0 0.0
        %5785 = vmatpush1.msra.mxu0 0.0
        %5786 = vmatprep.subr.mxu0 0.0
        %5787 = vmatpush1.msra.mxu0 0.0
        %5788 = vmatprep.subr.mxu0 0.0
        %5789 = vmatpush1.msra.mxu0 0.0
        %5790 = vmatprep.subr.mxu0 0.0
        %5791 = vmatpush1.msra.mxu0 0.0
        %5792 = vmatprep.subr.mxu0 0.0
        %5793 = vmatpush1.msra.mxu0 0.0
        %5794 = vmatprep.subr.mxu0 0.0
        %5795 = vmatpush1.msra.mxu0 0.0
        %5796 = vmatprep.subr.mxu0 0.0
        %5797 = vmatpush1.msra.mxu0 0.0
        %5798 = vmatprep.subr.mxu0 0.0
        %5799 = vmatpush1.msra.mxu0 0.0
        %5800 = vmatprep.subr.mxu0 0.0
        %5801 = vmatpush1.msra.mxu0 0.0
        %5802 = vmatprep.subr.mxu0 0.0
        %5803 = vmatpush1.msra.mxu0 0.0
        %5804 = vmatprep.subr.mxu0 0.0
        %5805 = vmatpush1.msra.mxu0 0.0
        %5806 = vmatprep.subr.mxu0 0.0
        %5807 = vmatpush1.msra.mxu0 0.0
        %5808 = vmatprep.subr.mxu0 0.0
        %5809 = vmatpush1.msra.mxu0 0.0
        %5810 = vmatprep.subr.mxu0 0.0
        %5811 = vmatpush1.msra.mxu0 0.0
        %5812 = vmatprep.subr.mxu0 0.0
        %5813 = vmatpush1.msra.mxu0 0.0
        %5814 = vmatprep.subr.mxu0 0.0
        %5815 = vmatpush1.msra.mxu0 0.0
        %5816 = vmatprep.subr.mxu0 0.0
        %5817 = vmatpush1.msra.mxu0 0.0
        %5818 = vmatprep.subr.mxu0 0.0
        %5819 = vmatpush1.msra.mxu0 0.0
        %5820 = vmatprep.subr.mxu0 0.0
        %5821 = vmatpush1.msra.mxu0 0.0
        %5822 = vmatprep.subr.mxu0 0.0
        %5823 = vmatpush1.msra.mxu0 0.0
        %5824 = vmatprep.subr.mxu0 0.0
        %5825 = vmatpush1.msra.mxu0 0.0
        %5826 = vmatprep.subr.mxu0 0.0
        %5827 = vmatpush1.msra.mxu0 0.0
        %5828 = vmatprep.subr.mxu0 0.0
        %5829 = vmatpush1.msra.mxu0 0.0
        %5830 = vmatprep.mubr.f32.mxu0 0.0
        %5831 = vmatmul.mubr.f32.gmra.mrb[0].mxu0 %v5668
        %v5832 = vpop.f32.mrb[0].mxu0
        %v5833 = vadd.f32 0.0, %v5832
        %v5834 = vpop.f32.mrb[0].mxu0
        %5835 = vmatprep.mubr.f32.mxu0 0.0
        %5836 = vmatmul.mubr.f32.gmra.mrb[0].mxu0 %v5671
        %v5837 = vpop.f32.mrb[0].mxu0
        %v5838 = vadd.f32 0.0, %v5837
        %v5839 = vpop.f32.mrb[0].mxu0
        %5840 = vmatprep.mubr.f32.mxu0 0.0
        %5841 = vmatmul.mubr.f32.gmra.mrb[0].mxu0 %v5674
        %v5842 = vpop.f32.mrb[0].mxu0
        %v5843 = vadd.f32 0.0, %v5842
        %v5844 = vpop.f32.mrb[0].mxu0
        %5845 = vmatprep.mubr.f32.mxu0 0.0
        %5846 = vmatmul.mubr.f32.gmra.mrb[0].mxu0 %v5677
        %v5847 = vpop.f32.mrb[0].mxu0
        %v5848 = vadd.f32 0.0, %v5847
        %v5849 = vpop.f32.mrb[0].mxu0
        %5850 = vmatprep.mubr.f32.mxu0 0.0
        %5851 = vmatmul.mubr.f32.gmra.mrb[0].mxu0 %v5680
        %v5852 = vpop.f32.mrb[0].mxu0
        %v5853 = vadd.f32 0.0, %v5852
        %v5854 = vpop.f32.mrb[0].mxu0
        %5855 = vmatprep.mubr.f32.mxu0 0.0
        %5856 = vmatmul.mubr.f32.gmra.mrb[0].mxu0 %v5683
        %v5857 = vpop.f32.mrb[0].mxu0
        %v5858 = vadd.f32 0.0, %v5857
        %v5859 = vpop.f32.mrb[0].mxu0
        %5860 = vmatprep.mubr.f32.mxu0 0.0
        %5861 = vmatmul.mubr.f32.gmra.mrb[0].mxu0 %v5686
        %v5862 = vpop.f32.mrb[0].mxu0
        %v5863 = vadd.f32 0.0, %v5862
        %v5864 = vpop.f32.mrb[0].mxu0
        %5865 = vmatprep.mubr.f32.mxu0 0.0
        %5866 = vmatmul.mubr.f32.gmra.mrb[0].mxu0 %v5689
        %v5867 = vpop.f32.mrb[0].mxu0
        %v5868 = vadd.f32 0.0, %v5867
        %v5869 = vpop.f32.mrb[0].mxu0
        %5870 = vmatprep.mubr.f32.mxu0 0.0
        %5871 = vmatmul.mubr.f32.gmra.mrb[0].mxu0 %v5692
        %v5872 = vpop.f32.mrb[0].mxu0
        %v5873 = vadd.f32 0.0, %v5872
        %v5874 = vpop.f32.mrb[0].mxu0
        %5875 = vmatprep.mubr.f32.mxu0 0.0
        %5876 = vmatmul.mubr.f32.gmra.mrb[0].mxu0 %v5695
        %v5877 = vpop.f32.mrb[0].mxu0
        %v5878 = vadd.f32 0.0, %v5877
        %v5879 = vpop.f32.mrb[0].mxu0
        %5880 = vmatprep.mubr.f32.mxu0 0.0
        %5881 = vmatmul.mubr.f32.gmra.mrb[0].mxu0 %v5698
        %v5882 = vpop.f32.mrb[0].mxu0
        %v5883 = vadd.f32 0.0, %v5882
        %v5884 = vpop.f32.mrb[0].mxu0
        %5885 = vmatprep.mubr.f32.mxu0 0.0
        %5886 = vmatmul.mubr.f32.gmra.mrb[0].mxu0 %v5701
        %v5887 = vpop.f32.mrb[0].mxu0
        %v5888 = vadd.f32 0.0, %v5887
        %v5889 = vpop.f32.mrb[0].mxu0
        %5890 = vmatprep.mubr.f32.mxu0 0.0
        %5891 = vmatmul.mubr.f32.gmra.mrb[0].mxu0 %v5704
        %v5892 = vpop.f32.mrb[0].mxu0
        %v5893 = vadd.f32 0.0, %v5892
        %v5894 = vpop.f32.mrb[0].mxu0
        %5895 = vmatprep.mubr.f32.mxu0 0.0
        %5896 = vmatmul.mubr.f32.gmra.mrb[0].mxu0 %v5707
        %v5897 = vpop.f32.mrb[0].mxu0
        %v5898 = vadd.f32 0.0, %v5897
        %v5899 = vpop.f32.mrb[0].mxu0
        %5900 = vmatprep.mubr.f32.mxu0 0.0
        %5901 = vmatmul.mubr.f32.gmra.mrb[0].mxu0 %v5710
        %v5902 = vpop.f32.mrb[0].mxu0
        %v5903 = vadd.f32 0.0, %v5902
        %v5904 = vpop.f32.mrb[0].mxu0
        %5905 = vmatprep.mubr.f32.mxu0 0.0
        %5906 = vmatmul.mubr.f32.gmra.mrb[0].mxu0 %v5713
        %v5907 = vpop.f32.mrb[0].mxu0
        %v5908 = vadd.f32 0.0, %v5907
        %v5909 = vpop.f32.mrb[0].mxu0
        %5910 = vmatprep.mubr.f32.mxu0 0.0
        %5911 = vmatmul.mubr.f32.gmra.mrb[0].mxu0 %v5716
        %v5912 = vpop.f32.mrb[0].mxu0
        %v5913 = vadd.f32 0.0, %v5912
        %v5914 = vpop.f32.mrb[0].mxu0
        %5915 = vmatprep.mubr.f32.mxu0 0.0
        %5916 = vmatmul.mubr.f32.gmra.mrb[0].mxu0 %v5719
        %v5917 = vpop.f32.mrb[0].mxu0
        %v5918 = vadd.f32 0.0, %v5917
        %v5919 = vpop.f32.mrb[0].mxu0
        %5920 = vmatprep.mubr.f32.mxu0 0.0
        %5921 = vmatmul.mubr.f32.gmra.mrb[0].mxu0 %v5722
        %v5922 = vpop.f32.mrb[0].mxu0
        %v5923 = vadd.f32 0.0, %v5922
        %v5924 = vpop.f32.mrb[0].mxu0
        %5925 = vmatprep.mubr.f32.mxu0 0.0
        %5926 = vmatmul.mubr.f32.gmra.mrb[0].mxu0 %v5725
        %v5927 = vpop.f32.mrb[0].mxu0
        %v5928 = vadd.f32 0.0, %v5927
        %v5929 = vpop.f32.mrb[0].mxu0
        %5930 = vmatprep.mubr.f32.mxu0 0.0
        %5931 = vmatmul.mubr.f32.gmra.mrb[0].mxu0 %v5728
        %v5932 = vpop.f32.mrb[0].mxu0
        %v5933 = vadd.f32 0.0, %v5932
        %v5934 = vpop.f32.mrb[0].mxu0
        %5935 = vmatprep.mubr.f32.mxu0 0.0
        %5936 = vmatmul.mubr.f32.gmra.mrb[0].mxu0 %v5731
        %v5937 = vpop.f32.mrb[0].mxu0
        %v5938 = vadd.f32 0.0, %v5937
        %v5939 = vpop.f32.mrb[0].mxu0
        %5940 = vmatprep.mubr.f32.mxu0 0.0
        %5941 = vmatmul.mubr.f32.gmra.mrb[0].mxu0 %v5734
        %v5942 = vpop.f32.mrb[0].mxu0
        %v5943 = vadd.f32 0.0, %v5942
        %v5944 = vpop.f32.mrb[0].mxu0
        %5945 = vmatprep.mubr.f32.mxu0 0.0
        %5946 = vmatmul.mubr.f32.gmra.mrb[0].mxu0 %v5737
        %v5947 = vpop.f32.mrb[0].mxu0
        %v5948 = vadd.f32 0.0, %v5947
        %v5949 = vpop.f32.mrb[0].mxu0
        %5950 = vmatprep.mubr.f32.mxu0 0.0
        %5951 = vmatmul.mubr.f32.gmra.mrb[0].mxu0 %v5740
        %v5952 = vpop.f32.mrb[0].mxu0
        %v5953 = vadd.f32 0.0, %v5952
        %v5954 = vpop.f32.mrb[0].mxu0
        %5955 = vmatprep.mubr.f32.mxu0 0.0
        %5956 = vmatmul.mubr.f32.gmra.mrb[0].mxu0 %v5743
        %v5957 = vpop.f32.mrb[0].mxu0
        %v5958 = vadd.f32 0.0, %v5957
        %v5959 = vpop.f32.mrb[0].mxu0
        %5960 = vmatprep.mubr.f32.mxu0 0.0
        %5961 = vmatmul.mubr.f32.gmra.mrb[0].mxu0 %v5746
        %v5962 = vpop.f32.mrb[0].mxu0
        %v5963 = vadd.f32 0.0, %v5962
        %v5964 = vpop.f32.mrb[0].mxu0
        %5965 = vmatprep.mubr.f32.mxu0 0.0
        %5966 = vmatmul.mubr.f32.gmra.mrb[0].mxu0 %v5749
        %v5967 = vpop.f32.mrb[0].mxu0
        %v5968 = vadd.f32 0.0, %v5967
        %v5969 = vpop.f32.mrb[0].mxu0
        %5970 = vmatprep.mubr.f32.mxu0 0.0
        %5971 = vmatmul.mubr.f32.gmra.mrb[0].mxu0 %v5752
        %v5972 = vpop.f32.mrb[0].mxu0
        %v5973 = vadd.f32 0.0, %v5972
        %v5974 = vpop.f32.mrb[0].mxu0
        %5975 = vmatprep.mubr.f32.mxu0 0.0
        %5976 = vmatmul.mubr.f32.gmra.mrb[0].mxu0 %v5755
        %v5977 = vpop.f32.mrb[0].mxu0
        %v5978 = vadd.f32 0.0, %v5977
        %v5979 = vpop.f32.mrb[0].mxu0
        %5980 = vmatprep.mubr.f32.mxu0 0.0
        %5981 = vmatmul.mubr.f32.gmra.mrb[0].mxu0 %v5758
        %v5982 = vpop.f32.mrb[0].mxu0
        %v5983 = vadd.f32 0.0, %v5982
        %v5984 = vpop.f32.mrb[0].mxu0
        %5985 = vmatprep.mubr.f32.mxu0 0.0
        %5986 = vmatmul.mubr.f32.gmra.mrb[0].mxu0 %v5761
        %v5987 = vpop.f32.mrb[0].mxu0
        %v5988 = vadd.f32 0.0, %v5987
        %v5989 = vpop.f32.mrb[0].mxu0
        %5990 = vdwg.mxu0
        %v5991 = vadd.f32 %v5633, %v5833
        %v5992 = vadd.f32 %v5634, %v5838
        %v5993 = vadd.f32 %v5635, %v5843
        %v5994 = vadd.f32 %v5636, %v5848
        %v5995 = vadd.f32 %v5637, %v5853
        %v5996 = vadd.f32 %v5638, %v5858
        %v5997 = vadd.f32 %v5639, %v5863
        %v5998 = vadd.f32 %v5640, %v5868
        %v5999 = vadd.f32 %v5641, %v5873
        %v6000 = vadd.f32 %v5642, %v5878
        %v6001 = vadd.f32 %v5643, %v5883
        %v6002 = vadd.f32 %v5644, %v5888
        %v6003 = vadd.f32 %v5645, %v5893
        %v6004 = vadd.f32 %v5646, %v5898
        %v6005 = vadd.f32 %v5647, %v5903
        %v6006 = vadd.f32 %v5648, %v5908
        %v6007 = vadd.f32 %v5649, %v5913
        %v6008 = vadd.f32 %v5650, %v5918
        %v6009 = vadd.f32 %v5651, %v5923
        %v6010 = vadd.f32 %v5652, %v5928
        %v6011 = vadd.f32 %v5653, %v5933
        %v6012 = vadd.f32 %v5654, %v5938
        %v6013 = vadd.f32 %v5655, %v5943
        %v6014 = vadd.f32 %v5656, %v5948
        %v6015 = vadd.f32 %v5657, %v5953
        %v6016 = vadd.f32 %v5658, %v5958
        %v6017 = vadd.f32 %v5659, %v5963
        %v6018 = vadd.f32 %v5660, %v5968
        %v6019 = vadd.f32 %v5661, %v5973
        %v6020 = vadd.f32 %v5662, %v5978
        %v6021 = vadd.f32 %v5663, %v5983
        %v6022 = vadd.f32 %v5664, %v5988
        %6023 = vst.msk [vmem:[#allocation3] sm:$0xff] %vm297, %v5991
        %6024 = vst.msk [vmem:[#allocation3 + $0x8] sm:$0xff] %vm297, %v5992
        %6025 = vst.msk [vmem:[#allocation3 + $0x10] sm:$0xff] %vm297, %v5993
        %6026 = vst.msk [vmem:[#allocation3 + $0x18] sm:$0xff] %vm297, %v5994
        %6027 = vst.msk [vmem:[#allocation3 + $0x20] sm:$0xff] %vm297, %v5995
        %6028 = vst.msk [vmem:[#allocation3 + $0x28] sm:$0xff] %vm297, %v5996
        %6029 = vst.msk [vmem:[#allocation3 + $0x30] sm:$0xff] %vm297, %v5997
        %6030 = vst.msk [vmem:[#allocation3 + $0x38] sm:$0xff] %vm297, %v5998
        %6031 = vst.msk [vmem:[#allocation3 + $0x40] sm:$0xff] %vm297, %v5999
        %6032 = vst.msk [vmem:[#allocation3 + $0x48] sm:$0xff] %vm297, %v6000
        %6033 = vst.msk [vmem:[#allocation3 + $0x50] sm:$0xff] %vm297, %v6001
        %6034 = vst.msk [vmem:[#allocation3 + $0x58] sm:$0xff] %vm297, %v6002
        %6035 = vst.msk [vmem:[#allocation3 + $0x60] sm:$0xff] %vm297, %v6003
        %6036 = vst.msk [vmem:[#allocation3 + $0x68] sm:$0xff] %vm297, %v6004
        %6037 = vst.msk [vmem:[#allocation3 + $0x70] sm:$0xff] %vm297, %v6005
        %6038 = vst.msk [vmem:[#allocation3 + $0x78] sm:$0xff] %vm297, %v6006
        %6039 = vst.msk [vmem:[#allocation3 + $0x80] sm:$0xff] %vm297, %v6007
        %6040 = vst.msk [vmem:[#allocation3 + $0x88] sm:$0xff] %vm297, %v6008
        %6041 = vst.msk [vmem:[#allocation3 + $0x90] sm:$0xff] %vm297, %v6009
        %6042 = vst.msk [vmem:[#allocation3 + $0x98] sm:$0xff] %vm297, %v6010
        %6043 = vst.msk [vmem:[#allocation3 + $0xa0] sm:$0xff] %vm297, %v6011
        %6044 = vst.msk [vmem:[#allocation3 + $0xa8] sm:$0xff] %vm297, %v6012
        %6045 = vst.msk [vmem:[#allocation3 + $0xb0] sm:$0xff] %vm297, %v6013
        %6046 = vst.msk [vmem:[#allocation3 + $0xb8] sm:$0xff] %vm297, %v6014
        %6047 = vst.msk [vmem:[#allocation3 + $0xc0] sm:$0xff] %vm297, %v6015
        %6048 = vst.msk [vmem:[#allocation3 + $0xc8] sm:$0xff] %vm297, %v6016
        %6049 = vst.msk [vmem:[#allocation3 + $0xd0] sm:$0xff] %vm297, %v6017
        %6050 = vst.msk [vmem:[#allocation3 + $0xd8] sm:$0xff] %vm297, %v6018
        %6051 = vst.msk [vmem:[#allocation3 + $0xe0] sm:$0xff] %vm297, %v6019
        %6052 = vst.msk [vmem:[#allocation3 + $0xe8] sm:$0xff] %vm297, %v6020
        %6053 = vst.msk [vmem:[#allocation3 + $0xf0] sm:$0xff] %vm297, %v6021
        %6054 = vst.msk [vmem:[#allocation3 + $0xf8] sm:$0xff] %vm297, %v6022
        %v6055 = vld [vmem:[%s375] sm:$0xff]
        %v6056 = vld [vmem:[%s375 + $0x8] sm:$0xff]
        %v6057 = vld [vmem:[%s375 + $0x18] sm:$0xff]
        %v6058 = vld [vmem:[%s375 + $0x20] sm:$0xff]
        %v6059 = vld [vmem:[%s375 + $0x30] sm:$0xff]
        %v6060 = vld [vmem:[%s375 + $0x38] sm:$0xff]
        %v6061 = vld [vmem:[%s375 + $0x48] sm:$0xff]
        %v6062 = vld [vmem:[%s375 + $0x50] sm:$0xff]
        %v6063 = vld [vmem:[%s375 + $0x60] sm:$0xff]
        %v6064 = vld [vmem:[%s375 + $0x68] sm:$0xff]
        %v6065 = vld [vmem:[%s375 + $0x78] sm:$0xff]
        %v6066 = vld [vmem:[%s375 + $0x80] sm:$0xff]
        %v6067 = vld [vmem:[%s375 + $0x90] sm:$0xff]
        %v6068 = vld [vmem:[%s375 + $0x98] sm:$0xff]
        %v6069 = vld [vmem:[%s375 + $0xa8] sm:$0xff]
        %v6070 = vld [vmem:[%s375 + $0xb0] sm:$0xff]
        %v6071 = vld [vmem:[%s375 + $0xc0] sm:$0xff]
        %v6072 = vld [vmem:[%s375 + $0xc8] sm:$0xff]
        %v6073 = vld [vmem:[%s375 + $0xd8] sm:$0xff]
        %v6074 = vld [vmem:[%s375 + $0xe0] sm:$0xff]
        %v6075 = vld [vmem:[%s375 + $0xf0] sm:$0xff]
        %v6076 = vld [vmem:[%s375 + $0xf8] sm:$0xff]
        %v6077 = vld [vmem:[%s375 + $0x108] sm:$0xff]
        %v6078 = vld [vmem:[%s375 + $0x110] sm:$0xff]
        %v6079 = vld [vmem:[%s375 + $0x120] sm:$0xff]
        %v6080 = vld [vmem:[%s375 + $0x128] sm:$0xff]
        %v6081 = vld [vmem:[%s375 + $0x138] sm:$0xff]
        %v6082 = vld [vmem:[%s375 + $0x140] sm:$0xff]
        %v6083 = vld [vmem:[%s375 + $0x150] sm:$0xff]
        %v6084 = vld [vmem:[%s375 + $0x158] sm:$0xff]
        %v6085 = vld [vmem:[%s375 + $0x168] sm:$0xff]
        %v6086 = vld [vmem:[%s375 + $0x170] sm:$0xff]
        %v6087 = vld [vmem:[#allocation3] sm:$0xff]
        %v6088 = vld [vmem:[#allocation3 + $0x8] sm:$0xff]
        %v6089 = vld [vmem:[#allocation3 + $0x10] sm:$0xff]
        %v6090 = vld [vmem:[#allocation3 + $0x18] sm:$0xff]
        %v6091 = vld [vmem:[#allocation3 + $0x20] sm:$0xff]
        %v6092 = vld [vmem:[#allocation3 + $0x28] sm:$0xff]
        %v6093 = vld [vmem:[#allocation3 + $0x30] sm:$0xff]
        %v6094 = vld [vmem:[#allocation3 + $0x38] sm:$0xff]
        %v6095 = vld [vmem:[#allocation3 + $0x40] sm:$0xff]
        %v6096 = vld [vmem:[#allocation3 + $0x48] sm:$0xff]
        %v6097 = vld [vmem:[#allocation3 + $0x50] sm:$0xff]
        %v6098 = vld [vmem:[#allocation3 + $0x58] sm:$0xff]
        %v6099 = vld [vmem:[#allocation3 + $0x60] sm:$0xff]
        %v6100 = vld [vmem:[#allocation3 + $0x68] sm:$0xff]
        %v6101 = vld [vmem:[#allocation3 + $0x70] sm:$0xff]
        %v6102 = vld [vmem:[#allocation3 + $0x78] sm:$0xff]
        %v6103 = vld [vmem:[#allocation3 + $0x80] sm:$0xff]
        %v6104 = vld [vmem:[#allocation3 + $0x88] sm:$0xff]
        %v6105 = vld [vmem:[#allocation3 + $0x90] sm:$0xff]
        %v6106 = vld [vmem:[#allocation3 + $0x98] sm:$0xff]
        %v6107 = vld [vmem:[#allocation3 + $0xa0] sm:$0xff]
        %v6108 = vld [vmem:[#allocation3 + $0xa8] sm:$0xff]
        %v6109 = vld [vmem:[#allocation3 + $0xb0] sm:$0xff]
        %v6110 = vld [vmem:[#allocation3 + $0xb8] sm:$0xff]
        %v6111 = vld [vmem:[#allocation3 + $0xc0] sm:$0xff]
        %v6112 = vld [vmem:[#allocation3 + $0xc8] sm:$0xff]
        %v6113 = vld [vmem:[#allocation3 + $0xd0] sm:$0xff]
        %v6114 = vld [vmem:[#allocation3 + $0xd8] sm:$0xff]
        %v6115 = vld [vmem:[#allocation3 + $0xe0] sm:$0xff]
        %v6116 = vld [vmem:[#allocation3 + $0xe8] sm:$0xff]
        %v6117 = vld [vmem:[#allocation3 + $0xf0] sm:$0xff]
        %v6118 = vld [vmem:[#allocation3 + $0xf8] sm:$0xff]
        %s6119 = scalar_lea.vmem [#allocation10], 12
        %v6120 = vld [vmem:[%s6119] sm:$0xf]
        %v6122 = vsel %vm297, %v6055, 0
        %v6125 = vsel %vm297, %v6056, 0
        %v6128 = vsel %vm297, %v6057, 0
        %v6131 = vsel %vm297, %v6058, 0
        %v6134 = vsel %vm297, %v6059, 0
        %v6137 = vsel %vm297, %v6060, 0
        %v6140 = vsel %vm297, %v6061, 0
        %v6143 = vsel %vm297, %v6062, 0
        %v6146 = vsel %vm297, %v6063, 0
        %v6149 = vsel %vm297, %v6064, 0
        %v6152 = vsel %vm297, %v6065, 0
        %v6155 = vsel %vm297, %v6066, 0
        %v6158 = vsel %vm297, %v6067, 0
        %v6161 = vsel %vm297, %v6068, 0
        %v6164 = vsel %vm297, %v6069, 0
        %v6167 = vsel %vm297, %v6070, 0
        %v6170 = vsel %vm297, %v6071, 0
        %v6173 = vsel %vm297, %v6072, 0
        %v6176 = vsel %vm297, %v6073, 0
        %v6179 = vsel %vm297, %v6074, 0
        %v6182 = vsel %vm297, %v6075, 0
        %v6185 = vsel %vm297, %v6076, 0
        %v6188 = vsel %vm297, %v6077, 0
        %v6191 = vsel %vm297, %v6078, 0
        %v6194 = vsel %vm297, %v6079, 0
        %v6197 = vsel %vm297, %v6080, 0
        %v6200 = vsel %vm297, %v6081, 0
        %v6203 = vsel %vm297, %v6082, 0
        %v6206 = vsel %vm297, %v6083, 0
        %v6209 = vsel %vm297, %v6084, 0
        %v6212 = vsel %vm297, %v6085, 0
        %v6215 = vsel %vm297, %v6086, 0
        %v6218 = vsel %vm601, %v6120, 0
        %6220 = vmatprep.subr.mxu0 0.0
        %6221 = vmatpush1.msra.mxu0 %v6218
        %6222 = vmatprep.subr.mxu0 0.0
        %6223 = vmatpush1.msra.mxu0 0.0
        %6224 = vmatprep.subr.mxu0 0.0
        %6225 = vmatpush1.msra.mxu0 0.0
        %6226 = vmatprep.subr.mxu0 0.0
        %6227 = vmatpush1.msra.mxu0 0.0
        %6228 = vmatprep.subr.mxu0 0.0
        %6229 = vmatpush1.msra.mxu0 0.0
        %6230 = vmatprep.subr.mxu0 0.0
        %6231 = vmatpush1.msra.mxu0 0.0
        %6232 = vmatprep.subr.mxu0 0.0
        %6233 = vmatpush1.msra.mxu0 0.0
        %6234 = vmatprep.subr.mxu0 0.0
        %6235 = vmatpush1.msra.mxu0 0.0
        %6236 = vmatprep.subr.mxu0 0.0
        %6237 = vmatpush1.msra.mxu0 0.0
        %6238 = vmatprep.subr.mxu0 0.0
        %6239 = vmatpush1.msra.mxu0 0.0
        %6240 = vmatprep.subr.mxu0 0.0
        %6241 = vmatpush1.msra.mxu0 0.0
        %6242 = vmatprep.subr.mxu0 0.0
        %6243 = vmatpush1.msra.mxu0 0.0
        %6244 = vmatprep.subr.mxu0 0.0
        %6245 = vmatpush1.msra.mxu0 0.0
        %6246 = vmatprep.subr.mxu0 0.0
        %6247 = vmatpush1.msra.mxu0 0.0
        %6248 = vmatprep.subr.mxu0 0.0
        %6249 = vmatpush1.msra.mxu0 0.0
        %6250 = vmatprep.subr.mxu0 0.0
        %6251 = vmatpush1.msra.mxu0 0.0
        %6252 = vmatprep.subr.mxu0 0.0
        %6253 = vmatpush1.msra.mxu0 0.0
        %6254 = vmatprep.subr.mxu0 0.0
        %6255 = vmatpush1.msra.mxu0 0.0
        %6256 = vmatprep.subr.mxu0 0.0
        %6257 = vmatpush1.msra.mxu0 0.0
        %6258 = vmatprep.subr.mxu0 0.0
        %6259 = vmatpush1.msra.mxu0 0.0
        %6260 = vmatprep.subr.mxu0 0.0
        %6261 = vmatpush1.msra.mxu0 0.0
        %6262 = vmatprep.subr.mxu0 0.0
        %6263 = vmatpush1.msra.mxu0 0.0
        %6264 = vmatprep.subr.mxu0 0.0
        %6265 = vmatpush1.msra.mxu0 0.0
        %6266 = vmatprep.subr.mxu0 0.0
        %6267 = vmatpush1.msra.mxu0 0.0
        %6268 = vmatprep.subr.mxu0 0.0
        %6269 = vmatpush1.msra.mxu0 0.0
        %6270 = vmatprep.subr.mxu0 0.0
        %6271 = vmatpush1.msra.mxu0 0.0
        %6272 = vmatprep.subr.mxu0 0.0
        %6273 = vmatpush1.msra.mxu0 0.0
        %6274 = vmatprep.subr.mxu0 0.0
        %6275 = vmatpush1.msra.mxu0 0.0
        %6276 = vmatprep.subr.mxu0 0.0
        %6277 = vmatpush1.msra.mxu0 0.0
        %6278 = vmatprep.subr.mxu0 0.0
        %6279 = vmatpush1.msra.mxu0 0.0
        %6280 = vmatprep.subr.mxu0 0.0
        %6281 = vmatpush1.msra.mxu0 0.0
        %6282 = vmatprep.subr.mxu0 0.0
        %6283 = vmatpush1.msra.mxu0 0.0
        %6284 = vmatprep.mubr.f32.mxu0 0.0
        %6285 = vmatmul.mubr.f32.gmra.mrb[0].mxu0 %v6122
        %v6286 = vpop.f32.mrb[0].mxu0
        %v6287 = vadd.f32 0.0, %v6286
        %v6288 = vpop.f32.mrb[0].mxu0
        %6289 = vmatprep.mubr.f32.mxu0 0.0
        %6290 = vmatmul.mubr.f32.gmra.mrb[0].mxu0 %v6125
        %v6291 = vpop.f32.mrb[0].mxu0
        %v6292 = vadd.f32 0.0, %v6291
        %v6293 = vpop.f32.mrb[0].mxu0
        %6294 = vmatprep.mubr.f32.mxu0 0.0
        %6295 = vmatmul.mubr.f32.gmra.mrb[0].mxu0 %v6128
        %v6296 = vpop.f32.mrb[0].mxu0
        %v6297 = vadd.f32 0.0, %v6296
        %v6298 = vpop.f32.mrb[0].mxu0
        %6299 = vmatprep.mubr.f32.mxu0 0.0
        %6300 = vmatmul.mubr.f32.gmra.mrb[0].mxu0 %v6131
        %v6301 = vpop.f32.mrb[0].mxu0
        %v6302 = vadd.f32 0.0, %v6301
        %v6303 = vpop.f32.mrb[0].mxu0
        %6304 = vmatprep.mubr.f32.mxu0 0.0
        %6305 = vmatmul.mubr.f32.gmra.mrb[0].mxu0 %v6134
        %v6306 = vpop.f32.mrb[0].mxu0
        %v6307 = vadd.f32 0.0, %v6306
        %v6308 = vpop.f32.mrb[0].mxu0
        %6309 = vmatprep.mubr.f32.mxu0 0.0
        %6310 = vmatmul.mubr.f32.gmra.mrb[0].mxu0 %v6137
        %v6311 = vpop.f32.mrb[0].mxu0
        %v6312 = vadd.f32 0.0, %v6311
        %v6313 = vpop.f32.mrb[0].mxu0
        %6314 = vmatprep.mubr.f32.mxu0 0.0
        %6315 = vmatmul.mubr.f32.gmra.mrb[0].mxu0 %v6140
        %v6316 = vpop.f32.mrb[0].mxu0
        %v6317 = vadd.f32 0.0, %v6316
        %v6318 = vpop.f32.mrb[0].mxu0
        %6319 = vmatprep.mubr.f32.mxu0 0.0
        %6320 = vmatmul.mubr.f32.gmra.mrb[0].mxu0 %v6143
        %v6321 = vpop.f32.mrb[0].mxu0
        %v6322 = vadd.f32 0.0, %v6321
        %v6323 = vpop.f32.mrb[0].mxu0
        %6324 = vmatprep.mubr.f32.mxu0 0.0
        %6325 = vmatmul.mubr.f32.gmra.mrb[0].mxu0 %v6146
        %v6326 = vpop.f32.mrb[0].mxu0
        %v6327 = vadd.f32 0.0, %v6326
        %v6328 = vpop.f32.mrb[0].mxu0
        %6329 = vmatprep.mubr.f32.mxu0 0.0
        %6330 = vmatmul.mubr.f32.gmra.mrb[0].mxu0 %v6149
        %v6331 = vpop.f32.mrb[0].mxu0
        %v6332 = vadd.f32 0.0, %v6331
        %v6333 = vpop.f32.mrb[0].mxu0
        %6334 = vmatprep.mubr.f32.mxu0 0.0
        %6335 = vmatmul.mubr.f32.gmra.mrb[0].mxu0 %v6152
        %v6336 = vpop.f32.mrb[0].mxu0
        %v6337 = vadd.f32 0.0, %v6336
        %v6338 = vpop.f32.mrb[0].mxu0
        %6339 = vmatprep.mubr.f32.mxu0 0.0
        %6340 = vmatmul.mubr.f32.gmra.mrb[0].mxu0 %v6155
        %v6341 = vpop.f32.mrb[0].mxu0
        %v6342 = vadd.f32 0.0, %v6341
        %v6343 = vpop.f32.mrb[0].mxu0
        %6344 = vmatprep.mubr.f32.mxu0 0.0
        %6345 = vmatmul.mubr.f32.gmra.mrb[0].mxu0 %v6158
        %v6346 = vpop.f32.mrb[0].mxu0
        %v6347 = vadd.f32 0.0, %v6346
        %v6348 = vpop.f32.mrb[0].mxu0
        %6349 = vmatprep.mubr.f32.mxu0 0.0
        %6350 = vmatmul.mubr.f32.gmra.mrb[0].mxu0 %v6161
        %v6351 = vpop.f32.mrb[0].mxu0
        %v6352 = vadd.f32 0.0, %v6351
        %v6353 = vpop.f32.mrb[0].mxu0
        %6354 = vmatprep.mubr.f32.mxu0 0.0
        %6355 = vmatmul.mubr.f32.gmra.mrb[0].mxu0 %v6164
        %v6356 = vpop.f32.mrb[0].mxu0
        %v6357 = vadd.f32 0.0, %v6356
        %v6358 = vpop.f32.mrb[0].mxu0
        %6359 = vmatprep.mubr.f32.mxu0 0.0
        %6360 = vmatmul.mubr.f32.gmra.mrb[0].mxu0 %v6167
        %v6361 = vpop.f32.mrb[0].mxu0
        %v6362 = vadd.f32 0.0, %v6361
        %v6363 = vpop.f32.mrb[0].mxu0
        %6364 = vmatprep.mubr.f32.mxu0 0.0
        %6365 = vmatmul.mubr.f32.gmra.mrb[0].mxu0 %v6170
        %v6366 = vpop.f32.mrb[0].mxu0
        %v6367 = vadd.f32 0.0, %v6366
        %v6368 = vpop.f32.mrb[0].mxu0
        %6369 = vmatprep.mubr.f32.mxu0 0.0
        %6370 = vmatmul.mubr.f32.gmra.mrb[0].mxu0 %v6173
        %v6371 = vpop.f32.mrb[0].mxu0
        %v6372 = vadd.f32 0.0, %v6371
        %v6373 = vpop.f32.mrb[0].mxu0
        %6374 = vmatprep.mubr.f32.mxu0 0.0
        %6375 = vmatmul.mubr.f32.gmra.mrb[0].mxu0 %v6176
        %v6376 = vpop.f32.mrb[0].mxu0
        %v6377 = vadd.f32 0.0, %v6376
        %v6378 = vpop.f32.mrb[0].mxu0
        %6379 = vmatprep.mubr.f32.mxu0 0.0
        %6380 = vmatmul.mubr.f32.gmra.mrb[0].mxu0 %v6179
        %v6381 = vpop.f32.mrb[0].mxu0
        %v6382 = vadd.f32 0.0, %v6381
        %v6383 = vpop.f32.mrb[0].mxu0
        %6384 = vmatprep.mubr.f32.mxu0 0.0
        %6385 = vmatmul.mubr.f32.gmra.mrb[0].mxu0 %v6182
        %v6386 = vpop.f32.mrb[0].mxu0
        %v6387 = vadd.f32 0.0, %v6386
        %v6388 = vpop.f32.mrb[0].mxu0
        %6389 = vmatprep.mubr.f32.mxu0 0.0
        %6390 = vmatmul.mubr.f32.gmra.mrb[0].mxu0 %v6185
        %v6391 = vpop.f32.mrb[0].mxu0
        %v6392 = vadd.f32 0.0, %v6391
        %v6393 = vpop.f32.mrb[0].mxu0
        %6394 = vmatprep.mubr.f32.mxu0 0.0
        %6395 = vmatmul.mubr.f32.gmra.mrb[0].mxu0 %v6188
        %v6396 = vpop.f32.mrb[0].mxu0
        %v6397 = vadd.f32 0.0, %v6396
        %v6398 = vpop.f32.mrb[0].mxu0
        %6399 = vmatprep.mubr.f32.mxu0 0.0
        %6400 = vmatmul.mubr.f32.gmra.mrb[0].mxu0 %v6191
        %v6401 = vpop.f32.mrb[0].mxu0
        %v6402 = vadd.f32 0.0, %v6401
        %v6403 = vpop.f32.mrb[0].mxu0
        %6404 = vmatprep.mubr.f32.mxu0 0.0
        %6405 = vmatmul.mubr.f32.gmra.mrb[0].mxu0 %v6194
        %v6406 = vpop.f32.mrb[0].mxu0
        %v6407 = vadd.f32 0.0, %v6406
        %v6408 = vpop.f32.mrb[0].mxu0
        %6409 = vmatprep.mubr.f32.mxu0 0.0
        %6410 = vmatmul.mubr.f32.gmra.mrb[0].mxu0 %v6197
        %v6411 = vpop.f32.mrb[0].mxu0
        %v6412 = vadd.f32 0.0, %v6411
        %v6413 = vpop.f32.mrb[0].mxu0
        %6414 = vmatprep.mubr.f32.mxu0 0.0
        %6415 = vmatmul.mubr.f32.gmra.mrb[0].mxu0 %v6200
        %v6416 = vpop.f32.mrb[0].mxu0
        %v6417 = vadd.f32 0.0, %v6416
        %v6418 = vpop.f32.mrb[0].mxu0
        %6419 = vmatprep.mubr.f32.mxu0 0.0
        %6420 = vmatmul.mubr.f32.gmra.mrb[0].mxu0 %v6203
        %v6421 = vpop.f32.mrb[0].mxu0
        %v6422 = vadd.f32 0.0, %v6421
        %v6423 = vpop.f32.mrb[0].mxu0
        %6424 = vmatprep.mubr.f32.mxu0 0.0
        %6425 = vmatmul.mubr.f32.gmra.mrb[0].mxu0 %v6206
        %v6426 = vpop.f32.mrb[0].mxu0
        %v6427 = vadd.f32 0.0, %v6426
        %v6428 = vpop.f32.mrb[0].mxu0
        %6429 = vmatprep.mubr.f32.mxu0 0.0
        %6430 = vmatmul.mubr.f32.gmra.mrb[0].mxu0 %v6209
        %v6431 = vpop.f32.mrb[0].mxu0
        %v6432 = vadd.f32 0.0, %v6431
        %v6433 = vpop.f32.mrb[0].mxu0
        %6434 = vmatprep.mubr.f32.mxu0 0.0
        %6435 = vmatmul.mubr.f32.gmra.mrb[0].mxu0 %v6212
        %v6436 = vpop.f32.mrb[0].mxu0
        %v6437 = vadd.f32 0.0, %v6436
        %v6438 = vpop.f32.mrb[0].mxu0
        %6439 = vmatprep.mubr.f32.mxu0 0.0
        %6440 = vmatmul.mubr.f32.gmra.mrb[0].mxu0 %v6215
        %v6441 = vpop.f32.mrb[0].mxu0
        %v6442 = vadd.f32 0.0, %v6441
        %v6443 = vpop.f32.mrb[0].mxu0
        %6444 = vdwg.mxu0
        %v6445 = vadd.f32 %v6087, %v6287
        %v6446 = vadd.f32 %v6088, %v6292
        %v6447 = vadd.f32 %v6089, %v6297
        %v6448 = vadd.f32 %v6090, %v6302
        %v6449 = vadd.f32 %v6091, %v6307
        %v6450 = vadd.f32 %v6092, %v6312
        %v6451 = vadd.f32 %v6093, %v6317
        %v6452 = vadd.f32 %v6094, %v6322
        %v6453 = vadd.f32 %v6095, %v6327
        %v6454 = vadd.f32 %v6096, %v6332
        %v6455 = vadd.f32 %v6097, %v6337
        %v6456 = vadd.f32 %v6098, %v6342
        %v6457 = vadd.f32 %v6099, %v6347
        %v6458 = vadd.f32 %v6100, %v6352
        %v6459 = vadd.f32 %v6101, %v6357
        %v6460 = vadd.f32 %v6102, %v6362
        %v6461 = vadd.f32 %v6103, %v6367
        %v6462 = vadd.f32 %v6104, %v6372
        %v6463 = vadd.f32 %v6105, %v6377
        %v6464 = vadd.f32 %v6106, %v6382
        %v6465 = vadd.f32 %v6107, %v6387
        %v6466 = vadd.f32 %v6108, %v6392
        %v6467 = vadd.f32 %v6109, %v6397
        %v6468 = vadd.f32 %v6110, %v6402
        %v6469 = vadd.f32 %v6111, %v6407
        %v6470 = vadd.f32 %v6112, %v6412
        %v6471 = vadd.f32 %v6113, %v6417
        %v6472 = vadd.f32 %v6114, %v6422
        %v6473 = vadd.f32 %v6115, %v6427
        %v6474 = vadd.f32 %v6116, %v6432
        %v6475 = vadd.f32 %v6117, %v6437
        %v6476 = vadd.f32 %v6118, %v6442
        %6477 = vst.msk [vmem:[#allocation3] sm:$0xff] %vm297, %v6445
        %6478 = vst.msk [vmem:[#allocation3 + $0x8] sm:$0xff] %vm297, %v6446
        %6479 = vst.msk [vmem:[#allocation3 + $0x10] sm:$0xff] %vm297, %v6447
        %6480 = vst.msk [vmem:[#allocation3 + $0x18] sm:$0xff] %vm297, %v6448
        %6481 = vst.msk [vmem:[#allocation3 + $0x20] sm:$0xff] %vm297, %v6449
        %6482 = vst.msk [vmem:[#allocation3 + $0x28] sm:$0xff] %vm297, %v6450
        %6483 = vst.msk [vmem:[#allocation3 + $0x30] sm:$0xff] %vm297, %v6451
        %6484 = vst.msk [vmem:[#allocation3 + $0x38] sm:$0xff] %vm297, %v6452
        %6485 = vst.msk [vmem:[#allocation3 + $0x40] sm:$0xff] %vm297, %v6453
        %6486 = vst.msk [vmem:[#allocation3 + $0x48] sm:$0xff] %vm297, %v6454
        %6487 = vst.msk [vmem:[#allocation3 + $0x50] sm:$0xff] %vm297, %v6455
        %6488 = vst.msk [vmem:[#allocation3 + $0x58] sm:$0xff] %vm297, %v6456
        %6489 = vst.msk [vmem:[#allocation3 + $0x60] sm:$0xff] %vm297, %v6457
        %6490 = vst.msk [vmem:[#allocation3 + $0x68] sm:$0xff] %vm297, %v6458
        %6491 = vst.msk [vmem:[#allocation3 + $0x70] sm:$0xff] %vm297, %v6459
        %6492 = vst.msk [vmem:[#allocation3 + $0x78] sm:$0xff] %vm297, %v6460
        %6493 = vst.msk [vmem:[#allocation3 + $0x80] sm:$0xff] %vm297, %v6461
        %6494 = vst.msk [vmem:[#allocation3 + $0x88] sm:$0xff] %vm297, %v6462
        %6495 = vst.msk [vmem:[#allocation3 + $0x90] sm:$0xff] %vm297, %v6463
        %6496 = vst.msk [vmem:[#allocation3 + $0x98] sm:$0xff] %vm297, %v6464
        %6497 = vst.msk [vmem:[#allocation3 + $0xa0] sm:$0xff] %vm297, %v6465
        %6498 = vst.msk [vmem:[#allocation3 + $0xa8] sm:$0xff] %vm297, %v6466
        %6499 = vst.msk [vmem:[#allocation3 + $0xb0] sm:$0xff] %vm297, %v6467
        %6500 = vst.msk [vmem:[#allocation3 + $0xb8] sm:$0xff] %vm297, %v6468
        %6501 = vst.msk [vmem:[#allocation3 + $0xc0] sm:$0xff] %vm297, %v6469
        %6502 = vst.msk [vmem:[#allocation3 + $0xc8] sm:$0xff] %vm297, %v6470
        %6503 = vst.msk [vmem:[#allocation3 + $0xd0] sm:$0xff] %vm297, %v6471
        %6504 = vst.msk [vmem:[#allocation3 + $0xd8] sm:$0xff] %vm297, %v6472
        %6505 = vst.msk [vmem:[#allocation3 + $0xe0] sm:$0xff] %vm297, %v6473
        %6506 = vst.msk [vmem:[#allocation3 + $0xe8] sm:$0xff] %vm297, %v6474
        %6507 = vst.msk [vmem:[#allocation3 + $0xf0] sm:$0xff] %vm297, %v6475
        %6508 = vst.msk [vmem:[#allocation3 + $0xf8] sm:$0xff] %vm297, %v6476
        %v6509 = vld [vmem:[%s375 + $0x1] sm:$0xff]
        %v6510 = vld [vmem:[%s375 + $0x9] sm:$0xff]
        %v6511 = vld [vmem:[%s375 + $0x19] sm:$0xff]
        %v6512 = vld [vmem:[%s375 + $0x21] sm:$0xff]
        %v6513 = vld [vmem:[%s375 + $0x31] sm:$0xff]
        %v6514 = vld [vmem:[%s375 + $0x39] sm:$0xff]
        %v6515 = vld [vmem:[%s375 + $0x49] sm:$0xff]
        %v6516 = vld [vmem:[%s375 + $0x51] sm:$0xff]
        %v6517 = vld [vmem:[%s375 + $0x61] sm:$0xff]
        %v6518 = vld [vmem:[%s375 + $0x69] sm:$0xff]
        %v6519 = vld [vmem:[%s375 + $0x79] sm:$0xff]
        %v6520 = vld [vmem:[%s375 + $0x81] sm:$0xff]
        %v6521 = vld [vmem:[%s375 + $0x91] sm:$0xff]
        %v6522 = vld [vmem:[%s375 + $0x99] sm:$0xff]
        %v6523 = vld [vmem:[%s375 + $0xa9] sm:$0xff]
        %v6524 = vld [vmem:[%s375 + $0xb1] sm:$0xff]
        %v6525 = vld [vmem:[%s375 + $0xc1] sm:$0xff]
        %v6526 = vld [vmem:[%s375 + $0xc9] sm:$0xff]
        %v6527 = vld [vmem:[%s375 + $0xd9] sm:$0xff]
        %v6528 = vld [vmem:[%s375 + $0xe1] sm:$0xff]
        %v6529 = vld [vmem:[%s375 + $0xf1] sm:$0xff]
        %v6530 = vld [vmem:[%s375 + $0xf9] sm:$0xff]
        %v6531 = vld [vmem:[%s375 + $0x109] sm:$0xff]
        %v6532 = vld [vmem:[%s375 + $0x111] sm:$0xff]
        %v6533 = vld [vmem:[%s375 + $0x121] sm:$0xff]
        %v6534 = vld [vmem:[%s375 + $0x129] sm:$0xff]
        %v6535 = vld [vmem:[%s375 + $0x139] sm:$0xff]
        %v6536 = vld [vmem:[%s375 + $0x141] sm:$0xff]
        %v6537 = vld [vmem:[%s375 + $0x151] sm:$0xff]
        %v6538 = vld [vmem:[%s375 + $0x159] sm:$0xff]
        %v6539 = vld [vmem:[%s375 + $0x169] sm:$0xff]
        %v6540 = vld [vmem:[%s375 + $0x171] sm:$0xff]
        %v6541 = vld [vmem:[#allocation3] sm:$0xff]
        %v6542 = vld [vmem:[#allocation3 + $0x8] sm:$0xff]
        %v6543 = vld [vmem:[#allocation3 + $0x10] sm:$0xff]
        %v6544 = vld [vmem:[#allocation3 + $0x18] sm:$0xff]
        %v6545 = vld [vmem:[#allocation3 + $0x20] sm:$0xff]
        %v6546 = vld [vmem:[#allocation3 + $0x28] sm:$0xff]
        %v6547 = vld [vmem:[#allocation3 + $0x30] sm:$0xff]
        %v6548 = vld [vmem:[#allocation3 + $0x38] sm:$0xff]
        %v6549 = vld [vmem:[#allocation3 + $0x40] sm:$0xff]
        %v6550 = vld [vmem:[#allocation3 + $0x48] sm:$0xff]
        %v6551 = vld [vmem:[#allocation3 + $0x50] sm:$0xff]
        %v6552 = vld [vmem:[#allocation3 + $0x58] sm:$0xff]
        %v6553 = vld [vmem:[#allocation3 + $0x60] sm:$0xff]
        %v6554 = vld [vmem:[#allocation3 + $0x68] sm:$0xff]
        %v6555 = vld [vmem:[#allocation3 + $0x70] sm:$0xff]
        %v6556 = vld [vmem:[#allocation3 + $0x78] sm:$0xff]
        %v6557 = vld [vmem:[#allocation3 + $0x80] sm:$0xff]
        %v6558 = vld [vmem:[#allocation3 + $0x88] sm:$0xff]
        %v6559 = vld [vmem:[#allocation3 + $0x90] sm:$0xff]
        %v6560 = vld [vmem:[#allocation3 + $0x98] sm:$0xff]
        %v6561 = vld [vmem:[#allocation3 + $0xa0] sm:$0xff]
        %v6562 = vld [vmem:[#allocation3 + $0xa8] sm:$0xff]
        %v6563 = vld [vmem:[#allocation3 + $0xb0] sm:$0xff]
        %v6564 = vld [vmem:[#allocation3 + $0xb8] sm:$0xff]
        %v6565 = vld [vmem:[#allocation3 + $0xc0] sm:$0xff]
        %v6566 = vld [vmem:[#allocation3 + $0xc8] sm:$0xff]
        %v6567 = vld [vmem:[#allocation3 + $0xd0] sm:$0xff]
        %v6568 = vld [vmem:[#allocation3 + $0xd8] sm:$0xff]
        %v6569 = vld [vmem:[#allocation3 + $0xe0] sm:$0xff]
        %v6570 = vld [vmem:[#allocation3 + $0xe8] sm:$0xff]
        %v6571 = vld [vmem:[#allocation3 + $0xf0] sm:$0xff]
        %v6572 = vld [vmem:[#allocation3 + $0xf8] sm:$0xff]
        %s6573 = scalar_lea.vmem [#allocation10], 16
        %v6574 = vld [vmem:[%s6573] sm:$0xf]
        %v6576 = vsel %vm297, %v6509, 0
        %v6579 = vsel %vm297, %v6510, 0
        %v6582 = vsel %vm297, %v6511, 0
        %v6585 = vsel %vm297, %v6512, 0
        %v6588 = vsel %vm297, %v6513, 0
        %v6591 = vsel %vm297, %v6514, 0
        %v6594 = vsel %vm297, %v6515, 0
        %v6597 = vsel %vm297, %v6516, 0
        %v6600 = vsel %vm297, %v6517, 0
        %v6603 = vsel %vm297, %v6518, 0
        %v6606 = vsel %vm297, %v6519, 0
        %v6609 = vsel %vm297, %v6520, 0
        %v6612 = vsel %vm297, %v6521, 0
        %v6615 = vsel %vm297, %v6522, 0
        %v6618 = vsel %vm297, %v6523, 0
        %v6621 = vsel %vm297, %v6524, 0
        %v6624 = vsel %vm297, %v6525, 0
        %v6627 = vsel %vm297, %v6526, 0
        %v6630 = vsel %vm297, %v6527, 0
        %v6633 = vsel %vm297, %v6528, 0
        %v6636 = vsel %vm297, %v6529, 0
        %v6639 = vsel %vm297, %v6530, 0
        %v6642 = vsel %vm297, %v6531, 0
        %v6645 = vsel %vm297, %v6532, 0
        %v6648 = vsel %vm297, %v6533, 0
        %v6651 = vsel %vm297, %v6534, 0
        %v6654 = vsel %vm297, %v6535, 0
        %v6657 = vsel %vm297, %v6536, 0
        %v6660 = vsel %vm297, %v6537, 0
        %v6663 = vsel %vm297, %v6538, 0
        %v6666 = vsel %vm297, %v6539, 0
        %v6669 = vsel %vm297, %v6540, 0
        %v6672 = vsel %vm601, %v6574, 0
        %6674 = vmatprep.subr.mxu0 0.0
        %6675 = vmatpush1.msra.mxu0 %v6672
        %6676 = vmatprep.subr.mxu0 0.0
        %6677 = vmatpush1.msra.mxu0 0.0
        %6678 = vmatprep.subr.mxu0 0.0
        %6679 = vmatpush1.msra.mxu0 0.0
        %6680 = vmatprep.subr.mxu0 0.0
        %6681 = vmatpush1.msra.mxu0 0.0
        %6682 = vmatprep.subr.mxu0 0.0
        %6683 = vmatpush1.msra.mxu0 0.0
        %6684 = vmatprep.subr.mxu0 0.0
        %6685 = vmatpush1.msra.mxu0 0.0
        %6686 = vmatprep.subr.mxu0 0.0
        %6687 = vmatpush1.msra.mxu0 0.0
        %6688 = vmatprep.subr.mxu0 0.0
        %6689 = vmatpush1.msra.mxu0 0.0
        %6690 = vmatprep.subr.mxu0 0.0
        %6691 = vmatpush1.msra.mxu0 0.0
        %6692 = vmatprep.subr.mxu0 0.0
        %6693 = vmatpush1.msra.mxu0 0.0
        %6694 = vmatprep.subr.mxu0 0.0
        %6695 = vmatpush1.msra.mxu0 0.0
        %6696 = vmatprep.subr.mxu0 0.0
        %6697 = vmatpush1.msra.mxu0 0.0
        %6698 = vmatprep.subr.mxu0 0.0
        %6699 = vmatpush1.msra.mxu0 0.0
        %6700 = vmatprep.subr.mxu0 0.0
        %6701 = vmatpush1.msra.mxu0 0.0
        %6702 = vmatprep.subr.mxu0 0.0
        %6703 = vmatpush1.msra.mxu0 0.0
        %6704 = vmatprep.subr.mxu0 0.0
        %6705 = vmatpush1.msra.mxu0 0.0
        %6706 = vmatprep.subr.mxu0 0.0
        %6707 = vmatpush1.msra.mxu0 0.0
        %6708 = vmatprep.subr.mxu0 0.0
        %6709 = vmatpush1.msra.mxu0 0.0
        %6710 = vmatprep.subr.mxu0 0.0
        %6711 = vmatpush1.msra.mxu0 0.0
        %6712 = vmatprep.subr.mxu0 0.0
        %6713 = vmatpush1.msra.mxu0 0.0
        %6714 = vmatprep.subr.mxu0 0.0
        %6715 = vmatpush1.msra.mxu0 0.0
        %6716 = vmatprep.subr.mxu0 0.0
        %6717 = vmatpush1.msra.mxu0 0.0
        %6718 = vmatprep.subr.mxu0 0.0
        %6719 = vmatpush1.msra.mxu0 0.0
        %6720 = vmatprep.subr.mxu0 0.0
        %6721 = vmatpush1.msra.mxu0 0.0
        %6722 = vmatprep.subr.mxu0 0.0
        %6723 = vmatpush1.msra.mxu0 0.0
        %6724 = vmatprep.subr.mxu0 0.0
        %6725 = vmatpush1.msra.mxu0 0.0
        %6726 = vmatprep.subr.mxu0 0.0
        %6727 = vmatpush1.msra.mxu0 0.0
        %6728 = vmatprep.subr.mxu0 0.0
        %6729 = vmatpush1.msra.mxu0 0.0
        %6730 = vmatprep.subr.mxu0 0.0
        %6731 = vmatpush1.msra.mxu0 0.0
        %6732 = vmatprep.subr.mxu0 0.0
        %6733 = vmatpush1.msra.mxu0 0.0
        %6734 = vmatprep.subr.mxu0 0.0
        %6735 = vmatpush1.msra.mxu0 0.0
        %6736 = vmatprep.subr.mxu0 0.0
        %6737 = vmatpush1.msra.mxu0 0.0
        %6738 = vmatprep.mubr.f32.mxu0 0.0
        %6739 = vmatmul.mubr.f32.gmra.mrb[0].mxu0 %v6576
        %v6740 = vpop.f32.mrb[0].mxu0
        %v6741 = vadd.f32 0.0, %v6740
        %v6742 = vpop.f32.mrb[0].mxu0
        %6743 = vmatprep.mubr.f32.mxu0 0.0
        %6744 = vmatmul.mubr.f32.gmra.mrb[0].mxu0 %v6579
        %v6745 = vpop.f32.mrb[0].mxu0
        %v6746 = vadd.f32 0.0, %v6745
        %v6747 = vpop.f32.mrb[0].mxu0
        %6748 = vmatprep.mubr.f32.mxu0 0.0
        %6749 = vmatmul.mubr.f32.gmra.mrb[0].mxu0 %v6582
        %v6750 = vpop.f32.mrb[0].mxu0
        %v6751 = vadd.f32 0.0, %v6750
        %v6752 = vpop.f32.mrb[0].mxu0
        %6753 = vmatprep.mubr.f32.mxu0 0.0
        %6754 = vmatmul.mubr.f32.gmra.mrb[0].mxu0 %v6585
        %v6755 = vpop.f32.mrb[0].mxu0
        %v6756 = vadd.f32 0.0, %v6755
        %v6757 = vpop.f32.mrb[0].mxu0
        %6758 = vmatprep.mubr.f32.mxu0 0.0
        %6759 = vmatmul.mubr.f32.gmra.mrb[0].mxu0 %v6588
        %v6760 = vpop.f32.mrb[0].mxu0
        %v6761 = vadd.f32 0.0, %v6760
        %v6762 = vpop.f32.mrb[0].mxu0
        %6763 = vmatprep.mubr.f32.mxu0 0.0
        %6764 = vmatmul.mubr.f32.gmra.mrb[0].mxu0 %v6591
        %v6765 = vpop.f32.mrb[0].mxu0
        %v6766 = vadd.f32 0.0, %v6765
        %v6767 = vpop.f32.mrb[0].mxu0
        %6768 = vmatprep.mubr.f32.mxu0 0.0
        %6769 = vmatmul.mubr.f32.gmra.mrb[0].mxu0 %v6594
        %v6770 = vpop.f32.mrb[0].mxu0
        %v6771 = vadd.f32 0.0, %v6770
        %v6772 = vpop.f32.mrb[0].mxu0
        %6773 = vmatprep.mubr.f32.mxu0 0.0
        %6774 = vmatmul.mubr.f32.gmra.mrb[0].mxu0 %v6597
        %v6775 = vpop.f32.mrb[0].mxu0
        %v6776 = vadd.f32 0.0, %v6775
        %v6777 = vpop.f32.mrb[0].mxu0
        %6778 = vmatprep.mubr.f32.mxu0 0.0
        %6779 = vmatmul.mubr.f32.gmra.mrb[0].mxu0 %v6600
        %v6780 = vpop.f32.mrb[0].mxu0
        %v6781 = vadd.f32 0.0, %v6780
        %v6782 = vpop.f32.mrb[0].mxu0
        %6783 = vmatprep.mubr.f32.mxu0 0.0
        %6784 = vmatmul.mubr.f32.gmra.mrb[0].mxu0 %v6603
        %v6785 = vpop.f32.mrb[0].mxu0
        %v6786 = vadd.f32 0.0, %v6785
        %v6787 = vpop.f32.mrb[0].mxu0
        %6788 = vmatprep.mubr.f32.mxu0 0.0
        %6789 = vmatmul.mubr.f32.gmra.mrb[0].mxu0 %v6606
        %v6790 = vpop.f32.mrb[0].mxu0
        %v6791 = vadd.f32 0.0, %v6790
        %v6792 = vpop.f32.mrb[0].mxu0
        %6793 = vmatprep.mubr.f32.mxu0 0.0
        %6794 = vmatmul.mubr.f32.gmra.mrb[0].mxu0 %v6609
        %v6795 = vpop.f32.mrb[0].mxu0
        %v6796 = vadd.f32 0.0, %v6795
        %v6797 = vpop.f32.mrb[0].mxu0
        %6798 = vmatprep.mubr.f32.mxu0 0.0
        %6799 = vmatmul.mubr.f32.gmra.mrb[0].mxu0 %v6612
        %v6800 = vpop.f32.mrb[0].mxu0
        %v6801 = vadd.f32 0.0, %v6800
        %v6802 = vpop.f32.mrb[0].mxu0
        %6803 = vmatprep.mubr.f32.mxu0 0.0
        %6804 = vmatmul.mubr.f32.gmra.mrb[0].mxu0 %v6615
        %v6805 = vpop.f32.mrb[0].mxu0
        %v6806 = vadd.f32 0.0, %v6805
        %v6807 = vpop.f32.mrb[0].mxu0
        %6808 = vmatprep.mubr.f32.mxu0 0.0
        %6809 = vmatmul.mubr.f32.gmra.mrb[0].mxu0 %v6618
        %v6810 = vpop.f32.mrb[0].mxu0
        %v6811 = vadd.f32 0.0, %v6810
        %v6812 = vpop.f32.mrb[0].mxu0
        %6813 = vmatprep.mubr.f32.mxu0 0.0
        %6814 = vmatmul.mubr.f32.gmra.mrb[0].mxu0 %v6621
        %v6815 = vpop.f32.mrb[0].mxu0
        %v6816 = vadd.f32 0.0, %v6815
        %v6817 = vpop.f32.mrb[0].mxu0
        %6818 = vmatprep.mubr.f32.mxu0 0.0
        %6819 = vmatmul.mubr.f32.gmra.mrb[0].mxu0 %v6624
        %v6820 = vpop.f32.mrb[0].mxu0
        %v6821 = vadd.f32 0.0, %v6820
        %v6822 = vpop.f32.mrb[0].mxu0
        %6823 = vmatprep.mubr.f32.mxu0 0.0
        %6824 = vmatmul.mubr.f32.gmra.mrb[0].mxu0 %v6627
        %v6825 = vpop.f32.mrb[0].mxu0
        %v6826 = vadd.f32 0.0, %v6825
        %v6827 = vpop.f32.mrb[0].mxu0
        %6828 = vmatprep.mubr.f32.mxu0 0.0
        %6829 = vmatmul.mubr.f32.gmra.mrb[0].mxu0 %v6630
        %v6830 = vpop.f32.mrb[0].mxu0
        %v6831 = vadd.f32 0.0, %v6830
        %v6832 = vpop.f32.mrb[0].mxu0
        %6833 = vmatprep.mubr.f32.mxu0 0.0
        %6834 = vmatmul.mubr.f32.gmra.mrb[0].mxu0 %v6633
        %v6835 = vpop.f32.mrb[0].mxu0
        %v6836 = vadd.f32 0.0, %v6835
        %v6837 = vpop.f32.mrb[0].mxu0
        %6838 = vmatprep.mubr.f32.mxu0 0.0
        %6839 = vmatmul.mubr.f32.gmra.mrb[0].mxu0 %v6636
        %v6840 = vpop.f32.mrb[0].mxu0
        %v6841 = vadd.f32 0.0, %v6840
        %v6842 = vpop.f32.mrb[0].mxu0
        %6843 = vmatprep.mubr.f32.mxu0 0.0
        %6844 = vmatmul.mubr.f32.gmra.mrb[0].mxu0 %v6639
        %v6845 = vpop.f32.mrb[0].mxu0
        %v6846 = vadd.f32 0.0, %v6845
        %v6847 = vpop.f32.mrb[0].mxu0
        %6848 = vmatprep.mubr.f32.mxu0 0.0
        %6849 = vmatmul.mubr.f32.gmra.mrb[0].mxu0 %v6642
        %v6850 = vpop.f32.mrb[0].mxu0
        %v6851 = vadd.f32 0.0, %v6850
        %v6852 = vpop.f32.mrb[0].mxu0
        %6853 = vmatprep.mubr.f32.mxu0 0.0
        %6854 = vmatmul.mubr.f32.gmra.mrb[0].mxu0 %v6645
        %v6855 = vpop.f32.mrb[0].mxu0
        %v6856 = vadd.f32 0.0, %v6855
        %v6857 = vpop.f32.mrb[0].mxu0
        %6858 = vmatprep.mubr.f32.mxu0 0.0
        %6859 = vmatmul.mubr.f32.gmra.mrb[0].mxu0 %v6648
        %v6860 = vpop.f32.mrb[0].mxu0
        %v6861 = vadd.f32 0.0, %v6860
        %v6862 = vpop.f32.mrb[0].mxu0
        %6863 = vmatprep.mubr.f32.mxu0 0.0
        %6864 = vmatmul.mubr.f32.gmra.mrb[0].mxu0 %v6651
        %v6865 = vpop.f32.mrb[0].mxu0
        %v6866 = vadd.f32 0.0, %v6865
        %v6867 = vpop.f32.mrb[0].mxu0
        %6868 = vmatprep.mubr.f32.mxu0 0.0
        %6869 = vmatmul.mubr.f32.gmra.mrb[0].mxu0 %v6654
        %v6870 = vpop.f32.mrb[0].mxu0
        %v6871 = vadd.f32 0.0, %v6870
        %v6872 = vpop.f32.mrb[0].mxu0
        %6873 = vmatprep.mubr.f32.mxu0 0.0
        %6874 = vmatmul.mubr.f32.gmra.mrb[0].mxu0 %v6657
        %v6875 = vpop.f32.mrb[0].mxu0
        %v6876 = vadd.f32 0.0, %v6875
        %v6877 = vpop.f32.mrb[0].mxu0
        %6878 = vmatprep.mubr.f32.mxu0 0.0
        %6879 = vmatmul.mubr.f32.gmra.mrb[0].mxu0 %v6660
        %v6880 = vpop.f32.mrb[0].mxu0
        %v6881 = vadd.f32 0.0, %v6880
        %v6882 = vpop.f32.mrb[0].mxu0
        %6883 = vmatprep.mubr.f32.mxu0 0.0
        %6884 = vmatmul.mubr.f32.gmra.mrb[0].mxu0 %v6663
        %v6885 = vpop.f32.mrb[0].mxu0
        %v6886 = vadd.f32 0.0, %v6885
        %v6887 = vpop.f32.mrb[0].mxu0
        %6888 = vmatprep.mubr.f32.mxu0 0.0
        %6889 = vmatmul.mubr.f32.gmra.mrb[0].mxu0 %v6666
        %v6890 = vpop.f32.mrb[0].mxu0
        %v6891 = vadd.f32 0.0, %v6890
        %v6892 = vpop.f32.mrb[0].mxu0
        %6893 = vmatprep.mubr.f32.mxu0 0.0
        %6894 = vmatmul.mubr.f32.gmra.mrb[0].mxu0 %v6669
        %v6895 = vpop.f32.mrb[0].mxu0
        %v6896 = vadd.f32 0.0, %v6895
        %v6897 = vpop.f32.mrb[0].mxu0
        %6898 = vdwg.mxu0
        %v6899 = vadd.f32 %v6541, %v6741
        %v6900 = vadd.f32 %v6542, %v6746
        %v6901 = vadd.f32 %v6543, %v6751
        %v6902 = vadd.f32 %v6544, %v6756
        %v6903 = vadd.f32 %v6545, %v6761
        %v6904 = vadd.f32 %v6546, %v6766
        %v6905 = vadd.f32 %v6547, %v6771
        %v6906 = vadd.f32 %v6548, %v6776
        %v6907 = vadd.f32 %v6549, %v6781
        %v6908 = vadd.f32 %v6550, %v6786
        %v6909 = vadd.f32 %v6551, %v6791
        %v6910 = vadd.f32 %v6552, %v6796
        %v6911 = vadd.f32 %v6553, %v6801
        %v6912 = vadd.f32 %v6554, %v6806
        %v6913 = vadd.f32 %v6555, %v6811
        %v6914 = vadd.f32 %v6556, %v6816
        %v6915 = vadd.f32 %v6557, %v6821
        %v6916 = vadd.f32 %v6558, %v6826
        %v6917 = vadd.f32 %v6559, %v6831
        %v6918 = vadd.f32 %v6560, %v6836
        %v6919 = vadd.f32 %v6561, %v6841
        %v6920 = vadd.f32 %v6562, %v6846
        %v6921 = vadd.f32 %v6563, %v6851
        %v6922 = vadd.f32 %v6564, %v6856
        %v6923 = vadd.f32 %v6565, %v6861
        %v6924 = vadd.f32 %v6566, %v6866
        %v6925 = vadd.f32 %v6567, %v6871
        %v6926 = vadd.f32 %v6568, %v6876
        %v6927 = vadd.f32 %v6569, %v6881
        %v6928 = vadd.f32 %v6570, %v6886
        %v6929 = vadd.f32 %v6571, %v6891
        %v6930 = vadd.f32 %v6572, %v6896
        %6931 = vst.msk [vmem:[#allocation3] sm:$0xff] %vm297, %v6899
        %6932 = vst.msk [vmem:[#allocation3 + $0x8] sm:$0xff] %vm297, %v6900
        %6933 = vst.msk [vmem:[#allocation3 + $0x10] sm:$0xff] %vm297, %v6901
        %6934 = vst.msk [vmem:[#allocation3 + $0x18] sm:$0xff] %vm297, %v6902
        %6935 = vst.msk [vmem:[#allocation3 + $0x20] sm:$0xff] %vm297, %v6903
        %6936 = vst.msk [vmem:[#allocation3 + $0x28] sm:$0xff] %vm297, %v6904
        %6937 = vst.msk [vmem:[#allocation3 + $0x30] sm:$0xff] %vm297, %v6905
        %6938 = vst.msk [vmem:[#allocation3 + $0x38] sm:$0xff] %vm297, %v6906
        %6939 = vst.msk [vmem:[#allocation3 + $0x40] sm:$0xff] %vm297, %v6907
        %6940 = vst.msk [vmem:[#allocation3 + $0x48] sm:$0xff] %vm297, %v6908
        %6941 = vst.msk [vmem:[#allocation3 + $0x50] sm:$0xff] %vm297, %v6909
        %6942 = vst.msk [vmem:[#allocation3 + $0x58] sm:$0xff] %vm297, %v6910
        %6943 = vst.msk [vmem:[#allocation3 + $0x60] sm:$0xff] %vm297, %v6911
        %6944 = vst.msk [vmem:[#allocation3 + $0x68] sm:$0xff] %vm297, %v6912
        %6945 = vst.msk [vmem:[#allocation3 + $0x70] sm:$0xff] %vm297, %v6913
        %6946 = vst.msk [vmem:[#allocation3 + $0x78] sm:$0xff] %vm297, %v6914
        %6947 = vst.msk [vmem:[#allocation3 + $0x80] sm:$0xff] %vm297, %v6915
        %6948 = vst.msk [vmem:[#allocation3 + $0x88] sm:$0xff] %vm297, %v6916
        %6949 = vst.msk [vmem:[#allocation3 + $0x90] sm:$0xff] %vm297, %v6917
        %6950 = vst.msk [vmem:[#allocation3 + $0x98] sm:$0xff] %vm297, %v6918
        %6951 = vst.msk [vmem:[#allocation3 + $0xa0] sm:$0xff] %vm297, %v6919
        %6952 = vst.msk [vmem:[#allocation3 + $0xa8] sm:$0xff] %vm297, %v6920
        %6953 = vst.msk [vmem:[#allocation3 + $0xb0] sm:$0xff] %vm297, %v6921
        %6954 = vst.msk [vmem:[#allocation3 + $0xb8] sm:$0xff] %vm297, %v6922
        %6955 = vst.msk [vmem:[#allocation3 + $0xc0] sm:$0xff] %vm297, %v6923
        %6956 = vst.msk [vmem:[#allocation3 + $0xc8] sm:$0xff] %vm297, %v6924
        %6957 = vst.msk [vmem:[#allocation3 + $0xd0] sm:$0xff] %vm297, %v6925
        %6958 = vst.msk [vmem:[#allocation3 + $0xd8] sm:$0xff] %vm297, %v6926
        %6959 = vst.msk [vmem:[#allocation3 + $0xe0] sm:$0xff] %vm297, %v6927
        %6960 = vst.msk [vmem:[#allocation3 + $0xe8] sm:$0xff] %vm297, %v6928
        %6961 = vst.msk [vmem:[#allocation3 + $0xf0] sm:$0xff] %vm297, %v6929
        %6962 = vst.msk [vmem:[#allocation3 + $0xf8] sm:$0xff] %vm297, %v6930
        %v6963 = vld [vmem:[%s375 + $0x2] sm:$0xff]
        %v6964 = vld [vmem:[%s375 + $0xa] sm:$0xff]
        %v6965 = vld [vmem:[%s375 + $0x1a] sm:$0xff]
        %v6966 = vld [vmem:[%s375 + $0x22] sm:$0xff]
        %v6967 = vld [vmem:[%s375 + $0x32] sm:$0xff]
        %v6968 = vld [vmem:[%s375 + $0x3a] sm:$0xff]
        %v6969 = vld [vmem:[%s375 + $0x4a] sm:$0xff]
        %v6970 = vld [vmem:[%s375 + $0x52] sm:$0xff]
        %v6971 = vld [vmem:[%s375 + $0x62] sm:$0xff]
        %v6972 = vld [vmem:[%s375 + $0x6a] sm:$0xff]
        %v6973 = vld [vmem:[%s375 + $0x7a] sm:$0xff]
        %v6974 = vld [vmem:[%s375 + $0x82] sm:$0xff]
        %v6975 = vld [vmem:[%s375 + $0x92] sm:$0xff]
        %v6976 = vld [vmem:[%s375 + $0x9a] sm:$0xff]
        %v6977 = vld [vmem:[%s375 + $0xaa] sm:$0xff]
        %v6978 = vld [vmem:[%s375 + $0xb2] sm:$0xff]
        %v6979 = vld [vmem:[%s375 + $0xc2] sm:$0xff]
        %v6980 = vld [vmem:[%s375 + $0xca] sm:$0xff]
        %v6981 = vld [vmem:[%s375 + $0xda] sm:$0xff]
        %v6982 = vld [vmem:[%s375 + $0xe2] sm:$0xff]
        %v6983 = vld [vmem:[%s375 + $0xf2] sm:$0xff]
        %v6984 = vld [vmem:[%s375 + $0xfa] sm:$0xff]
        %v6985 = vld [vmem:[%s375 + $0x10a] sm:$0xff]
        %v6986 = vld [vmem:[%s375 + $0x112] sm:$0xff]
        %v6987 = vld [vmem:[%s375 + $0x122] sm:$0xff]
        %v6988 = vld [vmem:[%s375 + $0x12a] sm:$0xff]
        %v6989 = vld [vmem:[%s375 + $0x13a] sm:$0xff]
        %v6990 = vld [vmem:[%s375 + $0x142] sm:$0xff]
        %v6991 = vld [vmem:[%s375 + $0x152] sm:$0xff]
        %v6992 = vld [vmem:[%s375 + $0x15a] sm:$0xff]
        %v6993 = vld [vmem:[%s375 + $0x16a] sm:$0xff]
        %v6994 = vld [vmem:[%s375 + $0x172] sm:$0xff]
        %v6995 = vld [vmem:[#allocation3] sm:$0xff]
        %v6996 = vld [vmem:[#allocation3 + $0x8] sm:$0xff]
        %v6997 = vld [vmem:[#allocation3 + $0x10] sm:$0xff]
        %v6998 = vld [vmem:[#allocation3 + $0x18] sm:$0xff]
        %v6999 = vld [vmem:[#allocation3 + $0x20] sm:$0xff]
        %v7000 = vld [vmem:[#allocation3 + $0x28] sm:$0xff]
        %v7001 = vld [vmem:[#allocation3 + $0x30] sm:$0xff]
        %v7002 = vld [vmem:[#allocation3 + $0x38] sm:$0xff]
        %v7003 = vld [vmem:[#allocation3 + $0x40] sm:$0xff]
        %v7004 = vld [vmem:[#allocation3 + $0x48] sm:$0xff]
        %v7005 = vld [vmem:[#allocation3 + $0x50] sm:$0xff]
        %v7006 = vld [vmem:[#allocation3 + $0x58] sm:$0xff]
        %v7007 = vld [vmem:[#allocation3 + $0x60] sm:$0xff]
        %v7008 = vld [vmem:[#allocation3 + $0x68] sm:$0xff]
        %v7009 = vld [vmem:[#allocation3 + $0x70] sm:$0xff]
        %v7010 = vld [vmem:[#allocation3 + $0x78] sm:$0xff]
        %v7011 = vld [vmem:[#allocation3 + $0x80] sm:$0xff]
        %v7012 = vld [vmem:[#allocation3 + $0x88] sm:$0xff]
        %v7013 = vld [vmem:[#allocation3 + $0x90] sm:$0xff]
        %v7014 = vld [vmem:[#allocation3 + $0x98] sm:$0xff]
        %v7015 = vld [vmem:[#allocation3 + $0xa0] sm:$0xff]
        %v7016 = vld [vmem:[#allocation3 + $0xa8] sm:$0xff]
        %v7017 = vld [vmem:[#allocation3 + $0xb0] sm:$0xff]
        %v7018 = vld [vmem:[#allocation3 + $0xb8] sm:$0xff]
        %v7019 = vld [vmem:[#allocation3 + $0xc0] sm:$0xff]
        %v7020 = vld [vmem:[#allocation3 + $0xc8] sm:$0xff]
        %v7021 = vld [vmem:[#allocation3 + $0xd0] sm:$0xff]
        %v7022 = vld [vmem:[#allocation3 + $0xd8] sm:$0xff]
        %v7023 = vld [vmem:[#allocation3 + $0xe0] sm:$0xff]
        %v7024 = vld [vmem:[#allocation3 + $0xe8] sm:$0xff]
        %v7025 = vld [vmem:[#allocation3 + $0xf0] sm:$0xff]
        %v7026 = vld [vmem:[#allocation3 + $0xf8] sm:$0xff]
        %s7027 = scalar_lea.vmem [#allocation10], 20
        %v7028 = vld [vmem:[%s7027] sm:$0xf]
        %v7030 = vsel %vm297, %v6963, 0
        %v7033 = vsel %vm297, %v6964, 0
        %v7036 = vsel %vm297, %v6965, 0
        %v7039 = vsel %vm297, %v6966, 0
        %v7042 = vsel %vm297, %v6967, 0
        %v7045 = vsel %vm297, %v6968, 0
        %v7048 = vsel %vm297, %v6969, 0
        %v7051 = vsel %vm297, %v6970, 0
        %v7054 = vsel %vm297, %v6971, 0
        %v7057 = vsel %vm297, %v6972, 0
        %v7060 = vsel %vm297, %v6973, 0
        %v7063 = vsel %vm297, %v6974, 0
        %v7066 = vsel %vm297, %v6975, 0
        %v7069 = vsel %vm297, %v6976, 0
        %v7072 = vsel %vm297, %v6977, 0
        %v7075 = vsel %vm297, %v6978, 0
        %v7078 = vsel %vm297, %v6979, 0
        %v7081 = vsel %vm297, %v6980, 0
        %v7084 = vsel %vm297, %v6981, 0
        %v7087 = vsel %vm297, %v6982, 0
        %v7090 = vsel %vm297, %v6983, 0
        %v7093 = vsel %vm297, %v6984, 0
        %v7096 = vsel %vm297, %v6985, 0
        %v7099 = vsel %vm297, %v6986, 0
        %v7102 = vsel %vm297, %v6987, 0
        %v7105 = vsel %vm297, %v6988, 0
        %v7108 = vsel %vm297, %v6989, 0
        %v7111 = vsel %vm297, %v6990, 0
        %v7114 = vsel %vm297, %v6991, 0
        %v7117 = vsel %vm297, %v6992, 0
        %v7120 = vsel %vm297, %v6993, 0
        %v7123 = vsel %vm297, %v6994, 0
        %v7126 = vsel %vm601, %v7028, 0
        %7128 = vmatprep.subr.mxu0 0.0
        %7129 = vmatpush1.msra.mxu0 %v7126
        %7130 = vmatprep.subr.mxu0 0.0
        %7131 = vmatpush1.msra.mxu0 0.0
        %7132 = vmatprep.subr.mxu0 0.0
        %7133 = vmatpush1.msra.mxu0 0.0
        %7134 = vmatprep.subr.mxu0 0.0
        %7135 = vmatpush1.msra.mxu0 0.0
        %7136 = vmatprep.subr.mxu0 0.0
        %7137 = vmatpush1.msra.mxu0 0.0
        %7138 = vmatprep.subr.mxu0 0.0
        %7139 = vmatpush1.msra.mxu0 0.0
        %7140 = vmatprep.subr.mxu0 0.0
        %7141 = vmatpush1.msra.mxu0 0.0
        %7142 = vmatprep.subr.mxu0 0.0
        %7143 = vmatpush1.msra.mxu0 0.0
        %7144 = vmatprep.subr.mxu0 0.0
        %7145 = vmatpush1.msra.mxu0 0.0
        %7146 = vmatprep.subr.mxu0 0.0
        %7147 = vmatpush1.msra.mxu0 0.0
        %7148 = vmatprep.subr.mxu0 0.0
        %7149 = vmatpush1.msra.mxu0 0.0
        %7150 = vmatprep.subr.mxu0 0.0
        %7151 = vmatpush1.msra.mxu0 0.0
        %7152 = vmatprep.subr.mxu0 0.0
        %7153 = vmatpush1.msra.mxu0 0.0
        %7154 = vmatprep.subr.mxu0 0.0
        %7155 = vmatpush1.msra.mxu0 0.0
        %7156 = vmatprep.subr.mxu0 0.0
        %7157 = vmatpush1.msra.mxu0 0.0
        %7158 = vmatprep.subr.mxu0 0.0
        %7159 = vmatpush1.msra.mxu0 0.0
        %7160 = vmatprep.subr.mxu0 0.0
        %7161 = vmatpush1.msra.mxu0 0.0
        %7162 = vmatprep.subr.mxu0 0.0
        %7163 = vmatpush1.msra.mxu0 0.0
        %7164 = vmatprep.subr.mxu0 0.0
        %7165 = vmatpush1.msra.mxu0 0.0
        %7166 = vmatprep.subr.mxu0 0.0
        %7167 = vmatpush1.msra.mxu0 0.0
        %7168 = vmatprep.subr.mxu0 0.0
        %7169 = vmatpush1.msra.mxu0 0.0
        %7170 = vmatprep.subr.mxu0 0.0
        %7171 = vmatpush1.msra.mxu0 0.0
        %7172 = vmatprep.subr.mxu0 0.0
        %7173 = vmatpush1.msra.mxu0 0.0
        %7174 = vmatprep.subr.mxu0 0.0
        %7175 = vmatpush1.msra.mxu0 0.0
        %7176 = vmatprep.subr.mxu0 0.0
        %7177 = vmatpush1.msra.mxu0 0.0
        %7178 = vmatprep.subr.mxu0 0.0
        %7179 = vmatpush1.msra.mxu0 0.0
        %7180 = vmatprep.subr.mxu0 0.0
        %7181 = vmatpush1.msra.mxu0 0.0
        %7182 = vmatprep.subr.mxu0 0.0
        %7183 = vmatpush1.msra.mxu0 0.0
        %7184 = vmatprep.subr.mxu0 0.0
        %7185 = vmatpush1.msra.mxu0 0.0
        %7186 = vmatprep.subr.mxu0 0.0
        %7187 = vmatpush1.msra.mxu0 0.0
        %7188 = vmatprep.subr.mxu0 0.0
        %7189 = vmatpush1.msra.mxu0 0.0
        %7190 = vmatprep.subr.mxu0 0.0
        %7191 = vmatpush1.msra.mxu0 0.0
        %7192 = vmatprep.mubr.f32.mxu0 0.0
        %7193 = vmatmul.mubr.f32.gmra.mrb[0].mxu0 %v7030
        %v7194 = vpop.f32.mrb[0].mxu0
        %v7195 = vadd.f32 0.0, %v7194
        %v7196 = vpop.f32.mrb[0].mxu0
        %7197 = vmatprep.mubr.f32.mxu0 0.0
        %7198 = vmatmul.mubr.f32.gmra.mrb[0].mxu0 %v7033
        %v7199 = vpop.f32.mrb[0].mxu0
        %v7200 = vadd.f32 0.0, %v7199
        %v7201 = vpop.f32.mrb[0].mxu0
        %7202 = vmatprep.mubr.f32.mxu0 0.0
        %7203 = vmatmul.mubr.f32.gmra.mrb[0].mxu0 %v7036
        %v7204 = vpop.f32.mrb[0].mxu0
        %v7205 = vadd.f32 0.0, %v7204
        %v7206 = vpop.f32.mrb[0].mxu0
        %7207 = vmatprep.mubr.f32.mxu0 0.0
        %7208 = vmatmul.mubr.f32.gmra.mrb[0].mxu0 %v7039
        %v7209 = vpop.f32.mrb[0].mxu0
        %v7210 = vadd.f32 0.0, %v7209
        %v7211 = vpop.f32.mrb[0].mxu0
        %7212 = vmatprep.mubr.f32.mxu0 0.0
        %7213 = vmatmul.mubr.f32.gmra.mrb[0].mxu0 %v7042
        %v7214 = vpop.f32.mrb[0].mxu0
        %v7215 = vadd.f32 0.0, %v7214
        %v7216 = vpop.f32.mrb[0].mxu0
        %7217 = vmatprep.mubr.f32.mxu0 0.0
        %7218 = vmatmul.mubr.f32.gmra.mrb[0].mxu0 %v7045
        %v7219 = vpop.f32.mrb[0].mxu0
        %v7220 = vadd.f32 0.0, %v7219
        %v7221 = vpop.f32.mrb[0].mxu0
        %7222 = vmatprep.mubr.f32.mxu0 0.0
        %7223 = vmatmul.mubr.f32.gmra.mrb[0].mxu0 %v7048
        %v7224 = vpop.f32.mrb[0].mxu0
        %v7225 = vadd.f32 0.0, %v7224
        %v7226 = vpop.f32.mrb[0].mxu0
        %7227 = vmatprep.mubr.f32.mxu0 0.0
        %7228 = vmatmul.mubr.f32.gmra.mrb[0].mxu0 %v7051
        %v7229 = vpop.f32.mrb[0].mxu0
        %v7230 = vadd.f32 0.0, %v7229
        %v7231 = vpop.f32.mrb[0].mxu0
        %7232 = vmatprep.mubr.f32.mxu0 0.0
        %7233 = vmatmul.mubr.f32.gmra.mrb[0].mxu0 %v7054
        %v7234 = vpop.f32.mrb[0].mxu0
        %v7235 = vadd.f32 0.0, %v7234
        %v7236 = vpop.f32.mrb[0].mxu0
        %7237 = vmatprep.mubr.f32.mxu0 0.0
        %7238 = vmatmul.mubr.f32.gmra.mrb[0].mxu0 %v7057
        %v7239 = vpop.f32.mrb[0].mxu0
        %v7240 = vadd.f32 0.0, %v7239
        %v7241 = vpop.f32.mrb[0].mxu0
        %7242 = vmatprep.mubr.f32.mxu0 0.0
        %7243 = vmatmul.mubr.f32.gmra.mrb[0].mxu0 %v7060
        %v7244 = vpop.f32.mrb[0].mxu0
        %v7245 = vadd.f32 0.0, %v7244
        %v7246 = vpop.f32.mrb[0].mxu0
        %7247 = vmatprep.mubr.f32.mxu0 0.0
        %7248 = vmatmul.mubr.f32.gmra.mrb[0].mxu0 %v7063
        %v7249 = vpop.f32.mrb[0].mxu0
        %v7250 = vadd.f32 0.0, %v7249
        %v7251 = vpop.f32.mrb[0].mxu0
        %7252 = vmatprep.mubr.f32.mxu0 0.0
        %7253 = vmatmul.mubr.f32.gmra.mrb[0].mxu0 %v7066
        %v7254 = vpop.f32.mrb[0].mxu0
        %v7255 = vadd.f32 0.0, %v7254
        %v7256 = vpop.f32.mrb[0].mxu0
        %7257 = vmatprep.mubr.f32.mxu0 0.0
        %7258 = vmatmul.mubr.f32.gmra.mrb[0].mxu0 %v7069
        %v7259 = vpop.f32.mrb[0].mxu0
        %v7260 = vadd.f32 0.0, %v7259
        %v7261 = vpop.f32.mrb[0].mxu0
        %7262 = vmatprep.mubr.f32.mxu0 0.0
        %7263 = vmatmul.mubr.f32.gmra.mrb[0].mxu0 %v7072
        %v7264 = vpop.f32.mrb[0].mxu0
        %v7265 = vadd.f32 0.0, %v7264
        %v7266 = vpop.f32.mrb[0].mxu0
        %7267 = vmatprep.mubr.f32.mxu0 0.0
        %7268 = vmatmul.mubr.f32.gmra.mrb[0].mxu0 %v7075
        %v7269 = vpop.f32.mrb[0].mxu0
        %v7270 = vadd.f32 0.0, %v7269
        %v7271 = vpop.f32.mrb[0].mxu0
        %7272 = vmatprep.mubr.f32.mxu0 0.0
        %7273 = vmatmul.mubr.f32.gmra.mrb[0].mxu0 %v7078
        %v7274 = vpop.f32.mrb[0].mxu0
        %v7275 = vadd.f32 0.0, %v7274
        %v7276 = vpop.f32.mrb[0].mxu0
        %7277 = vmatprep.mubr.f32.mxu0 0.0
        %7278 = vmatmul.mubr.f32.gmra.mrb[0].mxu0 %v7081
        %v7279 = vpop.f32.mrb[0].mxu0
        %v7280 = vadd.f32 0.0, %v7279
        %v7281 = vpop.f32.mrb[0].mxu0
        %7282 = vmatprep.mubr.f32.mxu0 0.0
        %7283 = vmatmul.mubr.f32.gmra.mrb[0].mxu0 %v7084
        %v7284 = vpop.f32.mrb[0].mxu0
        %v7285 = vadd.f32 0.0, %v7284
        %v7286 = vpop.f32.mrb[0].mxu0
        %7287 = vmatprep.mubr.f32.mxu0 0.0
        %7288 = vmatmul.mubr.f32.gmra.mrb[0].mxu0 %v7087
        %v7289 = vpop.f32.mrb[0].mxu0
        %v7290 = vadd.f32 0.0, %v7289
        %v7291 = vpop.f32.mrb[0].mxu0
        %7292 = vmatprep.mubr.f32.mxu0 0.0
        %7293 = vmatmul.mubr.f32.gmra.mrb[0].mxu0 %v7090
        %v7294 = vpop.f32.mrb[0].mxu0
        %v7295 = vadd.f32 0.0, %v7294
        %v7296 = vpop.f32.mrb[0].mxu0
        %7297 = vmatprep.mubr.f32.mxu0 0.0
        %7298 = vmatmul.mubr.f32.gmra.mrb[0].mxu0 %v7093
        %v7299 = vpop.f32.mrb[0].mxu0
        %v7300 = vadd.f32 0.0, %v7299
        %v7301 = vpop.f32.mrb[0].mxu0
        %7302 = vmatprep.mubr.f32.mxu0 0.0
        %7303 = vmatmul.mubr.f32.gmra.mrb[0].mxu0 %v7096
        %v7304 = vpop.f32.mrb[0].mxu0
        %v7305 = vadd.f32 0.0, %v7304
        %v7306 = vpop.f32.mrb[0].mxu0
        %7307 = vmatprep.mubr.f32.mxu0 0.0
        %7308 = vmatmul.mubr.f32.gmra.mrb[0].mxu0 %v7099
        %v7309 = vpop.f32.mrb[0].mxu0
        %v7310 = vadd.f32 0.0, %v7309
        %v7311 = vpop.f32.mrb[0].mxu0
        %7312 = vmatprep.mubr.f32.mxu0 0.0
        %7313 = vmatmul.mubr.f32.gmra.mrb[0].mxu0 %v7102
        %v7314 = vpop.f32.mrb[0].mxu0
        %v7315 = vadd.f32 0.0, %v7314
        %v7316 = vpop.f32.mrb[0].mxu0
        %7317 = vmatprep.mubr.f32.mxu0 0.0
        %7318 = vmatmul.mubr.f32.gmra.mrb[0].mxu0 %v7105
        %v7319 = vpop.f32.mrb[0].mxu0
        %v7320 = vadd.f32 0.0, %v7319
        %v7321 = vpop.f32.mrb[0].mxu0
        %7322 = vmatprep.mubr.f32.mxu0 0.0
        %7323 = vmatmul.mubr.f32.gmra.mrb[0].mxu0 %v7108
        %v7324 = vpop.f32.mrb[0].mxu0
        %v7325 = vadd.f32 0.0, %v7324
        %v7326 = vpop.f32.mrb[0].mxu0
        %7327 = vmatprep.mubr.f32.mxu0 0.0
        %7328 = vmatmul.mubr.f32.gmra.mrb[0].mxu0 %v7111
        %v7329 = vpop.f32.mrb[0].mxu0
        %v7330 = vadd.f32 0.0, %v7329
        %v7331 = vpop.f32.mrb[0].mxu0
        %7332 = vmatprep.mubr.f32.mxu0 0.0
        %7333 = vmatmul.mubr.f32.gmra.mrb[0].mxu0 %v7114
        %v7334 = vpop.f32.mrb[0].mxu0
        %v7335 = vadd.f32 0.0, %v7334
        %v7336 = vpop.f32.mrb[0].mxu0
        %7337 = vmatprep.mubr.f32.mxu0 0.0
        %7338 = vmatmul.mubr.f32.gmra.mrb[0].mxu0 %v7117
        %v7339 = vpop.f32.mrb[0].mxu0
        %v7340 = vadd.f32 0.0, %v7339
        %v7341 = vpop.f32.mrb[0].mxu0
        %7342 = vmatprep.mubr.f32.mxu0 0.0
        %7343 = vmatmul.mubr.f32.gmra.mrb[0].mxu0 %v7120
        %v7344 = vpop.f32.mrb[0].mxu0
        %v7345 = vadd.f32 0.0, %v7344
        %v7346 = vpop.f32.mrb[0].mxu0
        %7347 = vmatprep.mubr.f32.mxu0 0.0
        %7348 = vmatmul.mubr.f32.gmra.mrb[0].mxu0 %v7123
        %v7349 = vpop.f32.mrb[0].mxu0
        %v7350 = vadd.f32 0.0, %v7349
        %v7351 = vpop.f32.mrb[0].mxu0
        %7352 = vdwg.mxu0
        %v7353 = vadd.f32 %v6995, %v7195
        %v7354 = vadd.f32 %v6996, %v7200
        %v7355 = vadd.f32 %v6997, %v7205
        %v7356 = vadd.f32 %v6998, %v7210
        %v7357 = vadd.f32 %v6999, %v7215
        %v7358 = vadd.f32 %v7000, %v7220
        %v7359 = vadd.f32 %v7001, %v7225
        %v7360 = vadd.f32 %v7002, %v7230
        %v7361 = vadd.f32 %v7003, %v7235
        %v7362 = vadd.f32 %v7004, %v7240
        %v7363 = vadd.f32 %v7005, %v7245
        %v7364 = vadd.f32 %v7006, %v7250
        %v7365 = vadd.f32 %v7007, %v7255
        %v7366 = vadd.f32 %v7008, %v7260
        %v7367 = vadd.f32 %v7009, %v7265
        %v7368 = vadd.f32 %v7010, %v7270
        %v7369 = vadd.f32 %v7011, %v7275
        %v7370 = vadd.f32 %v7012, %v7280
        %v7371 = vadd.f32 %v7013, %v7285
        %v7372 = vadd.f32 %v7014, %v7290
        %v7373 = vadd.f32 %v7015, %v7295
        %v7374 = vadd.f32 %v7016, %v7300
        %v7375 = vadd.f32 %v7017, %v7305
        %v7376 = vadd.f32 %v7018, %v7310
        %v7377 = vadd.f32 %v7019, %v7315
        %v7378 = vadd.f32 %v7020, %v7320
        %v7379 = vadd.f32 %v7021, %v7325
        %v7380 = vadd.f32 %v7022, %v7330
        %v7381 = vadd.f32 %v7023, %v7335
        %v7382 = vadd.f32 %v7024, %v7340
        %v7383 = vadd.f32 %v7025, %v7345
        %v7384 = vadd.f32 %v7026, %v7350
        %7385 = vst.msk [vmem:[#allocation3] sm:$0xff] %vm297, %v7353
        %7386 = vst.msk [vmem:[#allocation3 + $0x8] sm:$0xff] %vm297, %v7354
        %7387 = vst.msk [vmem:[#allocation3 + $0x10] sm:$0xff] %vm297, %v7355
        %7388 = vst.msk [vmem:[#allocation3 + $0x18] sm:$0xff] %vm297, %v7356
        %7389 = vst.msk [vmem:[#allocation3 + $0x20] sm:$0xff] %vm297, %v7357
        %7390 = vst.msk [vmem:[#allocation3 + $0x28] sm:$0xff] %vm297, %v7358
        %7391 = vst.msk [vmem:[#allocation3 + $0x30] sm:$0xff] %vm297, %v7359
        %7392 = vst.msk [vmem:[#allocation3 + $0x38] sm:$0xff] %vm297, %v7360
        %7393 = vst.msk [vmem:[#allocation3 + $0x40] sm:$0xff] %vm297, %v7361
        %7394 = vst.msk [vmem:[#allocation3 + $0x48] sm:$0xff] %vm297, %v7362
        %7395 = vst.msk [vmem:[#allocation3 + $0x50] sm:$0xff] %vm297, %v7363
        %7396 = vst.msk [vmem:[#allocation3 + $0x58] sm:$0xff] %vm297, %v7364
        %7397 = vst.msk [vmem:[#allocation3 + $0x60] sm:$0xff] %vm297, %v7365
        %7398 = vst.msk [vmem:[#allocation3 + $0x68] sm:$0xff] %vm297, %v7366
        %7399 = vst.msk [vmem:[#allocation3 + $0x70] sm:$0xff] %vm297, %v7367
        %7400 = vst.msk [vmem:[#allocation3 + $0x78] sm:$0xff] %vm297, %v7368
        %7401 = vst.msk [vmem:[#allocation3 + $0x80] sm:$0xff] %vm297, %v7369
        %7402 = vst.msk [vmem:[#allocation3 + $0x88] sm:$0xff] %vm297, %v7370
        %7403 = vst.msk [vmem:[#allocation3 + $0x90] sm:$0xff] %vm297, %v7371
        %7404 = vst.msk [vmem:[#allocation3 + $0x98] sm:$0xff] %vm297, %v7372
        %7405 = vst.msk [vmem:[#allocation3 + $0xa0] sm:$0xff] %vm297, %v7373
        %7406 = vst.msk [vmem:[#allocation3 + $0xa8] sm:$0xff] %vm297, %v7374
        %7407 = vst.msk [vmem:[#allocation3 + $0xb0] sm:$0xff] %vm297, %v7375
        %7408 = vst.msk [vmem:[#allocation3 + $0xb8] sm:$0xff] %vm297, %v7376
        %7409 = vst.msk [vmem:[#allocation3 + $0xc0] sm:$0xff] %vm297, %v7377
        %7410 = vst.msk [vmem:[#allocation3 + $0xc8] sm:$0xff] %vm297, %v7378
        %7411 = vst.msk [vmem:[#allocation3 + $0xd0] sm:$0xff] %vm297, %v7379
        %7412 = vst.msk [vmem:[#allocation3 + $0xd8] sm:$0xff] %vm297, %v7380
        %7413 = vst.msk [vmem:[#allocation3 + $0xe0] sm:$0xff] %vm297, %v7381
        %7414 = vst.msk [vmem:[#allocation3 + $0xe8] sm:$0xff] %vm297, %v7382
        %7415 = vst.msk [vmem:[#allocation3 + $0xf0] sm:$0xff] %vm297, %v7383
        %7416 = vst.msk [vmem:[#allocation3 + $0xf8] sm:$0xff] %vm297, %v7384
        %v7417 = vld [vmem:[%s3164] sm:$0xff]
        %v7418 = vld [vmem:[%s3164 + $0x8] sm:$0xff]
        %v7419 = vld [vmem:[%s3164 + $0x18] sm:$0xff]
        %v7420 = vld [vmem:[%s3164 + $0x20] sm:$0xff]
        %v7421 = vld [vmem:[%s3164 + $0x30] sm:$0xff]
        %v7422 = vld [vmem:[%s3164 + $0x38] sm:$0xff]
        %v7423 = vld [vmem:[%s3164 + $0x48] sm:$0xff]
        %v7424 = vld [vmem:[%s3164 + $0x50] sm:$0xff]
        %v7425 = vld [vmem:[%s3164 + $0x60] sm:$0xff]
        %v7426 = vld [vmem:[%s3164 + $0x68] sm:$0xff]
        %v7427 = vld [vmem:[%s3164 + $0x78] sm:$0xff]
        %v7428 = vld [vmem:[%s3164 + $0x80] sm:$0xff]
        %v7429 = vld [vmem:[%s3164 + $0x90] sm:$0xff]
        %v7430 = vld [vmem:[%s3164 + $0x98] sm:$0xff]
        %v7431 = vld [vmem:[%s3164 + $0xa8] sm:$0xff]
        %v7432 = vld [vmem:[%s3164 + $0xb0] sm:$0xff]
        %v7433 = vld [vmem:[%s3164 + $0xc0] sm:$0xff]
        %v7434 = vld [vmem:[%s3164 + $0xc8] sm:$0xff]
        %v7435 = vld [vmem:[%s3164 + $0xd8] sm:$0xff]
        %v7436 = vld [vmem:[%s3164 + $0xe0] sm:$0xff]
        %v7437 = vld [vmem:[%s3164 + $0xf0] sm:$0xff]
        %v7438 = vld [vmem:[%s3164 + $0xf8] sm:$0xff]
        %v7439 = vld [vmem:[%s3164 + $0x108] sm:$0xff]
        %v7440 = vld [vmem:[%s3164 + $0x110] sm:$0xff]
        %v7441 = vld [vmem:[%s3164 + $0x120] sm:$0xff]
        %v7442 = vld [vmem:[%s3164 + $0x128] sm:$0xff]
        %v7443 = vld [vmem:[%s3164 + $0x138] sm:$0xff]
        %v7444 = vld [vmem:[%s3164 + $0x140] sm:$0xff]
        %v7445 = vld [vmem:[%s3164 + $0x150] sm:$0xff]
        %v7446 = vld [vmem:[%s3164 + $0x158] sm:$0xff]
        %v7447 = vld [vmem:[%s3164 + $0x168] sm:$0xff]
        %v7448 = vld [vmem:[%s3164 + $0x170] sm:$0xff]
        %v7449 = vld [vmem:[#allocation3] sm:$0xff]
        %v7450 = vld [vmem:[#allocation3 + $0x8] sm:$0xff]
        %v7451 = vld [vmem:[#allocation3 + $0x10] sm:$0xff]
        %v7452 = vld [vmem:[#allocation3 + $0x18] sm:$0xff]
        %v7453 = vld [vmem:[#allocation3 + $0x20] sm:$0xff]
        %v7454 = vld [vmem:[#allocation3 + $0x28] sm:$0xff]
        %v7455 = vld [vmem:[#allocation3 + $0x30] sm:$0xff]
        %v7456 = vld [vmem:[#allocation3 + $0x38] sm:$0xff]
        %v7457 = vld [vmem:[#allocation3 + $0x40] sm:$0xff]
        %v7458 = vld [vmem:[#allocation3 + $0x48] sm:$0xff]
        %v7459 = vld [vmem:[#allocation3 + $0x50] sm:$0xff]
        %v7460 = vld [vmem:[#allocation3 + $0x58] sm:$0xff]
        %v7461 = vld [vmem:[#allocation3 + $0x60] sm:$0xff]
        %v7462 = vld [vmem:[#allocation3 + $0x68] sm:$0xff]
        %v7463 = vld [vmem:[#allocation3 + $0x70] sm:$0xff]
        %v7464 = vld [vmem:[#allocation3 + $0x78] sm:$0xff]
        %v7465 = vld [vmem:[#allocation3 + $0x80] sm:$0xff]
        %v7466 = vld [vmem:[#allocation3 + $0x88] sm:$0xff]
        %v7467 = vld [vmem:[#allocation3 + $0x90] sm:$0xff]
        %v7468 = vld [vmem:[#allocation3 + $0x98] sm:$0xff]
        %v7469 = vld [vmem:[#allocation3 + $0xa0] sm:$0xff]
        %v7470 = vld [vmem:[#allocation3 + $0xa8] sm:$0xff]
        %v7471 = vld [vmem:[#allocation3 + $0xb0] sm:$0xff]
        %v7472 = vld [vmem:[#allocation3 + $0xb8] sm:$0xff]
        %v7473 = vld [vmem:[#allocation3 + $0xc0] sm:$0xff]
        %v7474 = vld [vmem:[#allocation3 + $0xc8] sm:$0xff]
        %v7475 = vld [vmem:[#allocation3 + $0xd0] sm:$0xff]
        %v7476 = vld [vmem:[#allocation3 + $0xd8] sm:$0xff]
        %v7477 = vld [vmem:[#allocation3 + $0xe0] sm:$0xff]
        %v7478 = vld [vmem:[#allocation3 + $0xe8] sm:$0xff]
        %v7479 = vld [vmem:[#allocation3 + $0xf0] sm:$0xff]
        %v7480 = vld [vmem:[#allocation3 + $0xf8] sm:$0xff]
        %s7481 = scalar_lea.vmem [#allocation10], 24
        %v7482 = vld [vmem:[%s7481] sm:$0xf]
        %v7484 = vsel %vm297, %v7417, 0
        %v7487 = vsel %vm297, %v7418, 0
        %v7490 = vsel %vm297, %v7419, 0
        %v7493 = vsel %vm297, %v7420, 0
        %v7496 = vsel %vm297, %v7421, 0
        %v7499 = vsel %vm297, %v7422, 0
        %v7502 = vsel %vm297, %v7423, 0
        %v7505 = vsel %vm297, %v7424, 0
        %v7508 = vsel %vm297, %v7425, 0
        %v7511 = vsel %vm297, %v7426, 0
        %v7514 = vsel %vm297, %v7427, 0
        %v7517 = vsel %vm297, %v7428, 0
        %v7520 = vsel %vm297, %v7429, 0
        %v7523 = vsel %vm297, %v7430, 0
        %v7526 = vsel %vm297, %v7431, 0
        %v7529 = vsel %vm297, %v7432, 0
        %v7532 = vsel %vm297, %v7433, 0
        %v7535 = vsel %vm297, %v7434, 0
        %v7538 = vsel %vm297, %v7435, 0
        %v7541 = vsel %vm297, %v7436, 0
        %v7544 = vsel %vm297, %v7437, 0
        %v7547 = vsel %vm297, %v7438, 0
        %v7550 = vsel %vm297, %v7439, 0
        %v7553 = vsel %vm297, %v7440, 0
        %v7556 = vsel %vm297, %v7441, 0
        %v7559 = vsel %vm297, %v7442, 0
        %v7562 = vsel %vm297, %v7443, 0
        %v7565 = vsel %vm297, %v7444, 0
        %v7568 = vsel %vm297, %v7445, 0
        %v7571 = vsel %vm297, %v7446, 0
        %v7574 = vsel %vm297, %v7447, 0
        %v7577 = vsel %vm297, %v7448, 0
        %v7580 = vsel %vm601, %v7482, 0
        %7582 = vmatprep.subr.mxu0 0.0
        %7583 = vmatpush1.msra.mxu0 %v7580
        %7584 = vmatprep.subr.mxu0 0.0
        %7585 = vmatpush1.msra.mxu0 0.0
        %7586 = vmatprep.subr.mxu0 0.0
        %7587 = vmatpush1.msra.mxu0 0.0
        %7588 = vmatprep.subr.mxu0 0.0
        %7589 = vmatpush1.msra.mxu0 0.0
        %7590 = vmatprep.subr.mxu0 0.0
        %7591 = vmatpush1.msra.mxu0 0.0
        %7592 = vmatprep.subr.mxu0 0.0
        %7593 = vmatpush1.msra.mxu0 0.0
        %7594 = vmatprep.subr.mxu0 0.0
        %7595 = vmatpush1.msra.mxu0 0.0
        %7596 = vmatprep.subr.mxu0 0.0
        %7597 = vmatpush1.msra.mxu0 0.0
        %7598 = vmatprep.subr.mxu0 0.0
        %7599 = vmatpush1.msra.mxu0 0.0
        %7600 = vmatprep.subr.mxu0 0.0
        %7601 = vmatpush1.msra.mxu0 0.0
        %7602 = vmatprep.subr.mxu0 0.0
        %7603 = vmatpush1.msra.mxu0 0.0
        %7604 = vmatprep.subr.mxu0 0.0
        %7605 = vmatpush1.msra.mxu0 0.0
        %7606 = vmatprep.subr.mxu0 0.0
        %7607 = vmatpush1.msra.mxu0 0.0
        %7608 = vmatprep.subr.mxu0 0.0
        %7609 = vmatpush1.msra.mxu0 0.0
        %7610 = vmatprep.subr.mxu0 0.0
        %7611 = vmatpush1.msra.mxu0 0.0
        %7612 = vmatprep.subr.mxu0 0.0
        %7613 = vmatpush1.msra.mxu0 0.0
        %7614 = vmatprep.subr.mxu0 0.0
        %7615 = vmatpush1.msra.mxu0 0.0
        %7616 = vmatprep.subr.mxu0 0.0
        %7617 = vmatpush1.msra.mxu0 0.0
        %7618 = vmatprep.subr.mxu0 0.0
        %7619 = vmatpush1.msra.mxu0 0.0
        %7620 = vmatprep.subr.mxu0 0.0
        %7621 = vmatpush1.msra.mxu0 0.0
        %7622 = vmatprep.subr.mxu0 0.0
        %7623 = vmatpush1.msra.mxu0 0.0
        %7624 = vmatprep.subr.mxu0 0.0
        %7625 = vmatpush1.msra.mxu0 0.0
        %7626 = vmatprep.subr.mxu0 0.0
        %7627 = vmatpush1.msra.mxu0 0.0
        %7628 = vmatprep.subr.mxu0 0.0
        %7629 = vmatpush1.msra.mxu0 0.0
        %7630 = vmatprep.subr.mxu0 0.0
        %7631 = vmatpush1.msra.mxu0 0.0
        %7632 = vmatprep.subr.mxu0 0.0
        %7633 = vmatpush1.msra.mxu0 0.0
        %7634 = vmatprep.subr.mxu0 0.0
        %7635 = vmatpush1.msra.mxu0 0.0
        %7636 = vmatprep.subr.mxu0 0.0
        %7637 = vmatpush1.msra.mxu0 0.0
        %7638 = vmatprep.subr.mxu0 0.0
        %7639 = vmatpush1.msra.mxu0 0.0
        %7640 = vmatprep.subr.mxu0 0.0
        %7641 = vmatpush1.msra.mxu0 0.0
        %7642 = vmatprep.subr.mxu0 0.0
        %7643 = vmatpush1.msra.mxu0 0.0
        %7644 = vmatprep.subr.mxu0 0.0
        %7645 = vmatpush1.msra.mxu0 0.0
        %7646 = vmatprep.mubr.f32.mxu0 0.0
        %7647 = vmatmul.mubr.f32.gmra.mrb[0].mxu0 %v7484
        %v7648 = vpop.f32.mrb[0].mxu0
        %v7649 = vadd.f32 0.0, %v7648
        %v7650 = vpop.f32.mrb[0].mxu0
        %7651 = vmatprep.mubr.f32.mxu0 0.0
        %7652 = vmatmul.mubr.f32.gmra.mrb[0].mxu0 %v7487
        %v7653 = vpop.f32.mrb[0].mxu0
        %v7654 = vadd.f32 0.0, %v7653
        %v7655 = vpop.f32.mrb[0].mxu0
        %7656 = vmatprep.mubr.f32.mxu0 0.0
        %7657 = vmatmul.mubr.f32.gmra.mrb[0].mxu0 %v7490
        %v7658 = vpop.f32.mrb[0].mxu0
        %v7659 = vadd.f32 0.0, %v7658
        %v7660 = vpop.f32.mrb[0].mxu0
        %7661 = vmatprep.mubr.f32.mxu0 0.0
        %7662 = vmatmul.mubr.f32.gmra.mrb[0].mxu0 %v7493
        %v7663 = vpop.f32.mrb[0].mxu0
        %v7664 = vadd.f32 0.0, %v7663
        %v7665 = vpop.f32.mrb[0].mxu0
        %7666 = vmatprep.mubr.f32.mxu0 0.0
        %7667 = vmatmul.mubr.f32.gmra.mrb[0].mxu0 %v7496
        %v7668 = vpop.f32.mrb[0].mxu0
        %v7669 = vadd.f32 0.0, %v7668
        %v7670 = vpop.f32.mrb[0].mxu0
        %7671 = vmatprep.mubr.f32.mxu0 0.0
        %7672 = vmatmul.mubr.f32.gmra.mrb[0].mxu0 %v7499
        %v7673 = vpop.f32.mrb[0].mxu0
        %v7674 = vadd.f32 0.0, %v7673
        %v7675 = vpop.f32.mrb[0].mxu0
        %7676 = vmatprep.mubr.f32.mxu0 0.0
        %7677 = vmatmul.mubr.f32.gmra.mrb[0].mxu0 %v7502
        %v7678 = vpop.f32.mrb[0].mxu0
        %v7679 = vadd.f32 0.0, %v7678
        %v7680 = vpop.f32.mrb[0].mxu0
        %7681 = vmatprep.mubr.f32.mxu0 0.0
        %7682 = vmatmul.mubr.f32.gmra.mrb[0].mxu0 %v7505
        %v7683 = vpop.f32.mrb[0].mxu0
        %v7684 = vadd.f32 0.0, %v7683
        %v7685 = vpop.f32.mrb[0].mxu0
        %7686 = vmatprep.mubr.f32.mxu0 0.0
        %7687 = vmatmul.mubr.f32.gmra.mrb[0].mxu0 %v7508
        %v7688 = vpop.f32.mrb[0].mxu0
        %v7689 = vadd.f32 0.0, %v7688
        %v7690 = vpop.f32.mrb[0].mxu0
        %7691 = vmatprep.mubr.f32.mxu0 0.0
        %7692 = vmatmul.mubr.f32.gmra.mrb[0].mxu0 %v7511
        %v7693 = vpop.f32.mrb[0].mxu0
        %v7694 = vadd.f32 0.0, %v7693
        %v7695 = vpop.f32.mrb[0].mxu0
        %7696 = vmatprep.mubr.f32.mxu0 0.0
        %7697 = vmatmul.mubr.f32.gmra.mrb[0].mxu0 %v7514
        %v7698 = vpop.f32.mrb[0].mxu0
        %v7699 = vadd.f32 0.0, %v7698
        %v7700 = vpop.f32.mrb[0].mxu0
        %7701 = vmatprep.mubr.f32.mxu0 0.0
        %7702 = vmatmul.mubr.f32.gmra.mrb[0].mxu0 %v7517
        %v7703 = vpop.f32.mrb[0].mxu0
        %v7704 = vadd.f32 0.0, %v7703
        %v7705 = vpop.f32.mrb[0].mxu0
        %7706 = vmatprep.mubr.f32.mxu0 0.0
        %7707 = vmatmul.mubr.f32.gmra.mrb[0].mxu0 %v7520
        %v7708 = vpop.f32.mrb[0].mxu0
        %v7709 = vadd.f32 0.0, %v7708
        %v7710 = vpop.f32.mrb[0].mxu0
        %7711 = vmatprep.mubr.f32.mxu0 0.0
        %7712 = vmatmul.mubr.f32.gmra.mrb[0].mxu0 %v7523
        %v7713 = vpop.f32.mrb[0].mxu0
        %v7714 = vadd.f32 0.0, %v7713
        %v7715 = vpop.f32.mrb[0].mxu0
        %7716 = vmatprep.mubr.f32.mxu0 0.0
        %7717 = vmatmul.mubr.f32.gmra.mrb[0].mxu0 %v7526
        %v7718 = vpop.f32.mrb[0].mxu0
        %v7719 = vadd.f32 0.0, %v7718
        %v7720 = vpop.f32.mrb[0].mxu0
        %7721 = vmatprep.mubr.f32.mxu0 0.0
        %7722 = vmatmul.mubr.f32.gmra.mrb[0].mxu0 %v7529
        %v7723 = vpop.f32.mrb[0].mxu0
        %v7724 = vadd.f32 0.0, %v7723
        %v7725 = vpop.f32.mrb[0].mxu0
        %7726 = vmatprep.mubr.f32.mxu0 0.0
        %7727 = vmatmul.mubr.f32.gmra.mrb[0].mxu0 %v7532
        %v7728 = vpop.f32.mrb[0].mxu0
        %v7729 = vadd.f32 0.0, %v7728
        %v7730 = vpop.f32.mrb[0].mxu0
        %7731 = vmatprep.mubr.f32.mxu0 0.0
        %7732 = vmatmul.mubr.f32.gmra.mrb[0].mxu0 %v7535
        %v7733 = vpop.f32.mrb[0].mxu0
        %v7734 = vadd.f32 0.0, %v7733
        %v7735 = vpop.f32.mrb[0].mxu0
        %7736 = vmatprep.mubr.f32.mxu0 0.0
        %7737 = vmatmul.mubr.f32.gmra.mrb[0].mxu0 %v7538
        %v7738 = vpop.f32.mrb[0].mxu0
        %v7739 = vadd.f32 0.0, %v7738
        %v7740 = vpop.f32.mrb[0].mxu0
        %7741 = vmatprep.mubr.f32.mxu0 0.0
        %7742 = vmatmul.mubr.f32.gmra.mrb[0].mxu0 %v7541
        %v7743 = vpop.f32.mrb[0].mxu0
        %v7744 = vadd.f32 0.0, %v7743
        %v7745 = vpop.f32.mrb[0].mxu0
        %7746 = vmatprep.mubr.f32.mxu0 0.0
        %7747 = vmatmul.mubr.f32.gmra.mrb[0].mxu0 %v7544
        %v7748 = vpop.f32.mrb[0].mxu0
        %v7749 = vadd.f32 0.0, %v7748
        %v7750 = vpop.f32.mrb[0].mxu0
        %7751 = vmatprep.mubr.f32.mxu0 0.0
        %7752 = vmatmul.mubr.f32.gmra.mrb[0].mxu0 %v7547
        %v7753 = vpop.f32.mrb[0].mxu0
        %v7754 = vadd.f32 0.0, %v7753
        %v7755 = vpop.f32.mrb[0].mxu0
        %7756 = vmatprep.mubr.f32.mxu0 0.0
        %7757 = vmatmul.mubr.f32.gmra.mrb[0].mxu0 %v7550
        %v7758 = vpop.f32.mrb[0].mxu0
        %v7759 = vadd.f32 0.0, %v7758
        %v7760 = vpop.f32.mrb[0].mxu0
        %7761 = vmatprep.mubr.f32.mxu0 0.0
        %7762 = vmatmul.mubr.f32.gmra.mrb[0].mxu0 %v7553
        %v7763 = vpop.f32.mrb[0].mxu0
        %v7764 = vadd.f32 0.0, %v7763
        %v7765 = vpop.f32.mrb[0].mxu0
        %7766 = vmatprep.mubr.f32.mxu0 0.0
        %7767 = vmatmul.mubr.f32.gmra.mrb[0].mxu0 %v7556
        %v7768 = vpop.f32.mrb[0].mxu0
        %v7769 = vadd.f32 0.0, %v7768
        %v7770 = vpop.f32.mrb[0].mxu0
        %7771 = vmatprep.mubr.f32.mxu0 0.0
        %7772 = vmatmul.mubr.f32.gmra.mrb[0].mxu0 %v7559
        %v7773 = vpop.f32.mrb[0].mxu0
        %v7774 = vadd.f32 0.0, %v7773
        %v7775 = vpop.f32.mrb[0].mxu0
        %7776 = vmatprep.mubr.f32.mxu0 0.0
        %7777 = vmatmul.mubr.f32.gmra.mrb[0].mxu0 %v7562
        %v7778 = vpop.f32.mrb[0].mxu0
        %v7779 = vadd.f32 0.0, %v7778
        %v7780 = vpop.f32.mrb[0].mxu0
        %7781 = vmatprep.mubr.f32.mxu0 0.0
        %7782 = vmatmul.mubr.f32.gmra.mrb[0].mxu0 %v7565
        %v7783 = vpop.f32.mrb[0].mxu0
        %v7784 = vadd.f32 0.0, %v7783
        %v7785 = vpop.f32.mrb[0].mxu0
        %7786 = vmatprep.mubr.f32.mxu0 0.0
        %7787 = vmatmul.mubr.f32.gmra.mrb[0].mxu0 %v7568
        %v7788 = vpop.f32.mrb[0].mxu0
        %v7789 = vadd.f32 0.0, %v7788
        %v7790 = vpop.f32.mrb[0].mxu0
        %7791 = vmatprep.mubr.f32.mxu0 0.0
        %7792 = vmatmul.mubr.f32.gmra.mrb[0].mxu0 %v7571
        %v7793 = vpop.f32.mrb[0].mxu0
        %v7794 = vadd.f32 0.0, %v7793
        %v7795 = vpop.f32.mrb[0].mxu0
        %7796 = vmatprep.mubr.f32.mxu0 0.0
        %7797 = vmatmul.mubr.f32.gmra.mrb[0].mxu0 %v7574
        %v7798 = vpop.f32.mrb[0].mxu0
        %v7799 = vadd.f32 0.0, %v7798
        %v7800 = vpop.f32.mrb[0].mxu0
        %7801 = vmatprep.mubr.f32.mxu0 0.0
        %7802 = vmatmul.mubr.f32.gmra.mrb[0].mxu0 %v7577
        %v7803 = vpop.f32.mrb[0].mxu0
        %v7804 = vadd.f32 0.0, %v7803
        %v7805 = vpop.f32.mrb[0].mxu0
        %7806 = vdwg.mxu0
        %v7807 = vadd.f32 %v7449, %v7649
        %v7808 = vadd.f32 %v7450, %v7654
        %v7809 = vadd.f32 %v7451, %v7659
        %v7810 = vadd.f32 %v7452, %v7664
        %v7811 = vadd.f32 %v7453, %v7669
        %v7812 = vadd.f32 %v7454, %v7674
        %v7813 = vadd.f32 %v7455, %v7679
        %v7814 = vadd.f32 %v7456, %v7684
        %v7815 = vadd.f32 %v7457, %v7689
        %v7816 = vadd.f32 %v7458, %v7694
        %v7817 = vadd.f32 %v7459, %v7699
        %v7818 = vadd.f32 %v7460, %v7704
        %v7819 = vadd.f32 %v7461, %v7709
        %v7820 = vadd.f32 %v7462, %v7714
        %v7821 = vadd.f32 %v7463, %v7719
        %v7822 = vadd.f32 %v7464, %v7724
        %v7823 = vadd.f32 %v7465, %v7729
        %v7824 = vadd.f32 %v7466, %v7734
        %v7825 = vadd.f32 %v7467, %v7739
        %v7826 = vadd.f32 %v7468, %v7744
        %v7827 = vadd.f32 %v7469, %v7749
        %v7828 = vadd.f32 %v7470, %v7754
        %v7829 = vadd.f32 %v7471, %v7759
        %v7830 = vadd.f32 %v7472, %v7764
        %v7831 = vadd.f32 %v7473, %v7769
        %v7832 = vadd.f32 %v7474, %v7774
        %v7833 = vadd.f32 %v7475, %v7779
        %v7834 = vadd.f32 %v7476, %v7784
        %v7835 = vadd.f32 %v7477, %v7789
        %v7836 = vadd.f32 %v7478, %v7794
        %v7837 = vadd.f32 %v7479, %v7799
        %v7838 = vadd.f32 %v7480, %v7804
        %7839 = vst.msk [vmem:[#allocation3] sm:$0xff] %vm297, %v7807
        %7840 = vst.msk [vmem:[#allocation3 + $0x8] sm:$0xff] %vm297, %v7808
        %7841 = vst.msk [vmem:[#allocation3 + $0x10] sm:$0xff] %vm297, %v7809
        %7842 = vst.msk [vmem:[#allocation3 + $0x18] sm:$0xff] %vm297, %v7810
        %7843 = vst.msk [vmem:[#allocation3 + $0x20] sm:$0xff] %vm297, %v7811
        %7844 = vst.msk [vmem:[#allocation3 + $0x28] sm:$0xff] %vm297, %v7812
        %7845 = vst.msk [vmem:[#allocation3 + $0x30] sm:$0xff] %vm297, %v7813
        %7846 = vst.msk [vmem:[#allocation3 + $0x38] sm:$0xff] %vm297, %v7814
        %7847 = vst.msk [vmem:[#allocation3 + $0x40] sm:$0xff] %vm297, %v7815
        %7848 = vst.msk [vmem:[#allocation3 + $0x48] sm:$0xff] %vm297, %v7816
        %7849 = vst.msk [vmem:[#allocation3 + $0x50] sm:$0xff] %vm297, %v7817
        %7850 = vst.msk [vmem:[#allocation3 + $0x58] sm:$0xff] %vm297, %v7818
        %7851 = vst.msk [vmem:[#allocation3 + $0x60] sm:$0xff] %vm297, %v7819
        %7852 = vst.msk [vmem:[#allocation3 + $0x68] sm:$0xff] %vm297, %v7820
        %7853 = vst.msk [vmem:[#allocation3 + $0x70] sm:$0xff] %vm297, %v7821
        %7854 = vst.msk [vmem:[#allocation3 + $0x78] sm:$0xff] %vm297, %v7822
        %7855 = vst.msk [vmem:[#allocation3 + $0x80] sm:$0xff] %vm297, %v7823
        %7856 = vst.msk [vmem:[#allocation3 + $0x88] sm:$0xff] %vm297, %v7824
        %7857 = vst.msk [vmem:[#allocation3 + $0x90] sm:$0xff] %vm297, %v7825
        %7858 = vst.msk [vmem:[#allocation3 + $0x98] sm:$0xff] %vm297, %v7826
        %7859 = vst.msk [vmem:[#allocation3 + $0xa0] sm:$0xff] %vm297, %v7827
        %7860 = vst.msk [vmem:[#allocation3 + $0xa8] sm:$0xff] %vm297, %v7828
        %7861 = vst.msk [vmem:[#allocation3 + $0xb0] sm:$0xff] %vm297, %v7829
        %7862 = vst.msk [vmem:[#allocation3 + $0xb8] sm:$0xff] %vm297, %v7830
        %7863 = vst.msk [vmem:[#allocation3 + $0xc0] sm:$0xff] %vm297, %v7831
        %7864 = vst.msk [vmem:[#allocation3 + $0xc8] sm:$0xff] %vm297, %v7832
        %7865 = vst.msk [vmem:[#allocation3 + $0xd0] sm:$0xff] %vm297, %v7833
        %7866 = vst.msk [vmem:[#allocation3 + $0xd8] sm:$0xff] %vm297, %v7834
        %7867 = vst.msk [vmem:[#allocation3 + $0xe0] sm:$0xff] %vm297, %v7835
        %7868 = vst.msk [vmem:[#allocation3 + $0xe8] sm:$0xff] %vm297, %v7836
        %7869 = vst.msk [vmem:[#allocation3 + $0xf0] sm:$0xff] %vm297, %v7837
        %7870 = vst.msk [vmem:[#allocation3 + $0xf8] sm:$0xff] %vm297, %v7838
        %v7871 = vld [vmem:[%s3164 + $0x1] sm:$0xff]
        %v7872 = vld [vmem:[%s3164 + $0x9] sm:$0xff]
        %v7873 = vld [vmem:[%s3164 + $0x19] sm:$0xff]
        %v7874 = vld [vmem:[%s3164 + $0x21] sm:$0xff]
        %v7875 = vld [vmem:[%s3164 + $0x31] sm:$0xff]
        %v7876 = vld [vmem:[%s3164 + $0x39] sm:$0xff]
        %v7877 = vld [vmem:[%s3164 + $0x49] sm:$0xff]
        %v7878 = vld [vmem:[%s3164 + $0x51] sm:$0xff]
        %v7879 = vld [vmem:[%s3164 + $0x61] sm:$0xff]
        %v7880 = vld [vmem:[%s3164 + $0x69] sm:$0xff]
        %v7881 = vld [vmem:[%s3164 + $0x79] sm:$0xff]
        %v7882 = vld [vmem:[%s3164 + $0x81] sm:$0xff]
        %v7883 = vld [vmem:[%s3164 + $0x91] sm:$0xff]
        %v7884 = vld [vmem:[%s3164 + $0x99] sm:$0xff]
        %v7885 = vld [vmem:[%s3164 + $0xa9] sm:$0xff]
        %v7886 = vld [vmem:[%s3164 + $0xb1] sm:$0xff]
        %v7887 = vld [vmem:[%s3164 + $0xc1] sm:$0xff]
        %v7888 = vld [vmem:[%s3164 + $0xc9] sm:$0xff]
        %v7889 = vld [vmem:[%s3164 + $0xd9] sm:$0xff]
        %v7890 = vld [vmem:[%s3164 + $0xe1] sm:$0xff]
        %v7891 = vld [vmem:[%s3164 + $0xf1] sm:$0xff]
        %v7892 = vld [vmem:[%s3164 + $0xf9] sm:$0xff]
        %v7893 = vld [vmem:[%s3164 + $0x109] sm:$0xff]
        %v7894 = vld [vmem:[%s3164 + $0x111] sm:$0xff]
        %v7895 = vld [vmem:[%s3164 + $0x121] sm:$0xff]
        %v7896 = vld [vmem:[%s3164 + $0x129] sm:$0xff]
        %v7897 = vld [vmem:[%s3164 + $0x139] sm:$0xff]
        %v7898 = vld [vmem:[%s3164 + $0x141] sm:$0xff]
        %v7899 = vld [vmem:[%s3164 + $0x151] sm:$0xff]
        %v7900 = vld [vmem:[%s3164 + $0x159] sm:$0xff]
        %v7901 = vld [vmem:[%s3164 + $0x169] sm:$0xff]
        %v7902 = vld [vmem:[%s3164 + $0x171] sm:$0xff]
        %v7903 = vld [vmem:[#allocation3] sm:$0xff]
        %v7904 = vld [vmem:[#allocation3 + $0x8] sm:$0xff]
        %v7905 = vld [vmem:[#allocation3 + $0x10] sm:$0xff]
        %v7906 = vld [vmem:[#allocation3 + $0x18] sm:$0xff]
        %v7907 = vld [vmem:[#allocation3 + $0x20] sm:$0xff]
        %v7908 = vld [vmem:[#allocation3 + $0x28] sm:$0xff]
        %v7909 = vld [vmem:[#allocation3 + $0x30] sm:$0xff]
        %v7910 = vld [vmem:[#allocation3 + $0x38] sm:$0xff]
        %v7911 = vld [vmem:[#allocation3 + $0x40] sm:$0xff]
        %v7912 = vld [vmem:[#allocation3 + $0x48] sm:$0xff]
        %v7913 = vld [vmem:[#allocation3 + $0x50] sm:$0xff]
        %v7914 = vld [vmem:[#allocation3 + $0x58] sm:$0xff]
        %v7915 = vld [vmem:[#allocation3 + $0x60] sm:$0xff]
        %v7916 = vld [vmem:[#allocation3 + $0x68] sm:$0xff]
        %v7917 = vld [vmem:[#allocation3 + $0x70] sm:$0xff]
        %v7918 = vld [vmem:[#allocation3 + $0x78] sm:$0xff]
        %v7919 = vld [vmem:[#allocation3 + $0x80] sm:$0xff]
        %v7920 = vld [vmem:[#allocation3 + $0x88] sm:$0xff]
        %v7921 = vld [vmem:[#allocation3 + $0x90] sm:$0xff]
        %v7922 = vld [vmem:[#allocation3 + $0x98] sm:$0xff]
        %v7923 = vld [vmem:[#allocation3 + $0xa0] sm:$0xff]
        %v7924 = vld [vmem:[#allocation3 + $0xa8] sm:$0xff]
        %v7925 = vld [vmem:[#allocation3 + $0xb0] sm:$0xff]
        %v7926 = vld [vmem:[#allocation3 + $0xb8] sm:$0xff]
        %v7927 = vld [vmem:[#allocation3 + $0xc0] sm:$0xff]
        %v7928 = vld [vmem:[#allocation3 + $0xc8] sm:$0xff]
        %v7929 = vld [vmem:[#allocation3 + $0xd0] sm:$0xff]
        %v7930 = vld [vmem:[#allocation3 + $0xd8] sm:$0xff]
        %v7931 = vld [vmem:[#allocation3 + $0xe0] sm:$0xff]
        %v7932 = vld [vmem:[#allocation3 + $0xe8] sm:$0xff]
        %v7933 = vld [vmem:[#allocation3 + $0xf0] sm:$0xff]
        %v7934 = vld [vmem:[#allocation3 + $0xf8] sm:$0xff]
        %s7935 = scalar_lea.vmem [#allocation10], 28
        %v7936 = vld [vmem:[%s7935] sm:$0xf]
        %v7938 = vsel %vm297, %v7871, 0
        %v7941 = vsel %vm297, %v7872, 0
        %v7944 = vsel %vm297, %v7873, 0
        %v7947 = vsel %vm297, %v7874, 0
        %v7950 = vsel %vm297, %v7875, 0
        %v7953 = vsel %vm297, %v7876, 0
        %v7956 = vsel %vm297, %v7877, 0
        %v7959 = vsel %vm297, %v7878, 0
        %v7962 = vsel %vm297, %v7879, 0
        %v7965 = vsel %vm297, %v7880, 0
        %v7968 = vsel %vm297, %v7881, 0
        %v7971 = vsel %vm297, %v7882, 0
        %v7974 = vsel %vm297, %v7883, 0
        %v7977 = vsel %vm297, %v7884, 0
        %v7980 = vsel %vm297, %v7885, 0
        %v7983 = vsel %vm297, %v7886, 0
        %v7986 = vsel %vm297, %v7887, 0
        %v7989 = vsel %vm297, %v7888, 0
        %v7992 = vsel %vm297, %v7889, 0
        %v7995 = vsel %vm297, %v7890, 0
        %v7998 = vsel %vm297, %v7891, 0
        %v8001 = vsel %vm297, %v7892, 0
        %v8004 = vsel %vm297, %v7893, 0
        %v8007 = vsel %vm297, %v7894, 0
        %v8010 = vsel %vm297, %v7895, 0
        %v8013 = vsel %vm297, %v7896, 0
        %v8016 = vsel %vm297, %v7897, 0
        %v8019 = vsel %vm297, %v7898, 0
        %v8022 = vsel %vm297, %v7899, 0
        %v8025 = vsel %vm297, %v7900, 0
        %v8028 = vsel %vm297, %v7901, 0
        %v8031 = vsel %vm297, %v7902, 0
        %v8034 = vsel %vm601, %v7936, 0
        %8036 = vmatprep.subr.mxu0 0.0
        %8037 = vmatpush1.msra.mxu0 %v8034
        %8038 = vmatprep.subr.mxu0 0.0
        %8039 = vmatpush1.msra.mxu0 0.0
        %8040 = vmatprep.subr.mxu0 0.0
        %8041 = vmatpush1.msra.mxu0 0.0
        %8042 = vmatprep.subr.mxu0 0.0
        %8043 = vmatpush1.msra.mxu0 0.0
        %8044 = vmatprep.subr.mxu0 0.0
        %8045 = vmatpush1.msra.mxu0 0.0
        %8046 = vmatprep.subr.mxu0 0.0
        %8047 = vmatpush1.msra.mxu0 0.0
        %8048 = vmatprep.subr.mxu0 0.0
        %8049 = vmatpush1.msra.mxu0 0.0
        %8050 = vmatprep.subr.mxu0 0.0
        %8051 = vmatpush1.msra.mxu0 0.0
        %8052 = vmatprep.subr.mxu0 0.0
        %8053 = vmatpush1.msra.mxu0 0.0
        %8054 = vmatprep.subr.mxu0 0.0
        %8055 = vmatpush1.msra.mxu0 0.0
        %8056 = vmatprep.subr.mxu0 0.0
        %8057 = vmatpush1.msra.mxu0 0.0
        %8058 = vmatprep.subr.mxu0 0.0
        %8059 = vmatpush1.msra.mxu0 0.0
        %8060 = vmatprep.subr.mxu0 0.0
        %8061 = vmatpush1.msra.mxu0 0.0
        %8062 = vmatprep.subr.mxu0 0.0
        %8063 = vmatpush1.msra.mxu0 0.0
        %8064 = vmatprep.subr.mxu0 0.0
        %8065 = vmatpush1.msra.mxu0 0.0
        %8066 = vmatprep.subr.mxu0 0.0
        %8067 = vmatpush1.msra.mxu0 0.0
        %8068 = vmatprep.subr.mxu0 0.0
        %8069 = vmatpush1.msra.mxu0 0.0
        %8070 = vmatprep.subr.mxu0 0.0
        %8071 = vmatpush1.msra.mxu0 0.0
        %8072 = vmatprep.subr.mxu0 0.0
        %8073 = vmatpush1.msra.mxu0 0.0
        %8074 = vmatprep.subr.mxu0 0.0
        %8075 = vmatpush1.msra.mxu0 0.0
        %8076 = vmatprep.subr.mxu0 0.0
        %8077 = vmatpush1.msra.mxu0 0.0
        %8078 = vmatprep.subr.mxu0 0.0
        %8079 = vmatpush1.msra.mxu0 0.0
        %8080 = vmatprep.subr.mxu0 0.0
        %8081 = vmatpush1.msra.mxu0 0.0
        %8082 = vmatprep.subr.mxu0 0.0
        %8083 = vmatpush1.msra.mxu0 0.0
        %8084 = vmatprep.subr.mxu0 0.0
        %8085 = vmatpush1.msra.mxu0 0.0
        %8086 = vmatprep.subr.mxu0 0.0
        %8087 = vmatpush1.msra.mxu0 0.0
        %8088 = vmatprep.subr.mxu0 0.0
        %8089 = vmatpush1.msra.mxu0 0.0
        %8090 = vmatprep.subr.mxu0 0.0
        %8091 = vmatpush1.msra.mxu0 0.0
        %8092 = vmatprep.subr.mxu0 0.0
        %8093 = vmatpush1.msra.mxu0 0.0
        %8094 = vmatprep.subr.mxu0 0.0
        %8095 = vmatpush1.msra.mxu0 0.0
        %8096 = vmatprep.subr.mxu0 0.0
        %8097 = vmatpush1.msra.mxu0 0.0
        %8098 = vmatprep.subr.mxu0 0.0
        %8099 = vmatpush1.msra.mxu0 0.0
        %8100 = vmatprep.mubr.f32.mxu0 0.0
        %8101 = vmatmul.mubr.f32.gmra.mrb[0].mxu0 %v7938
        %v8102 = vpop.f32.mrb[0].mxu0
        %v8103 = vadd.f32 0.0, %v8102
        %v8104 = vpop.f32.mrb[0].mxu0
        %8105 = vmatprep.mubr.f32.mxu0 0.0
        %8106 = vmatmul.mubr.f32.gmra.mrb[0].mxu0 %v7941
        %v8107 = vpop.f32.mrb[0].mxu0
        %v8108 = vadd.f32 0.0, %v8107
        %v8109 = vpop.f32.mrb[0].mxu0
        %8110 = vmatprep.mubr.f32.mxu0 0.0
        %8111 = vmatmul.mubr.f32.gmra.mrb[0].mxu0 %v7944
        %v8112 = vpop.f32.mrb[0].mxu0
        %v8113 = vadd.f32 0.0, %v8112
        %v8114 = vpop.f32.mrb[0].mxu0
        %8115 = vmatprep.mubr.f32.mxu0 0.0
        %8116 = vmatmul.mubr.f32.gmra.mrb[0].mxu0 %v7947
        %v8117 = vpop.f32.mrb[0].mxu0
        %v8118 = vadd.f32 0.0, %v8117
        %v8119 = vpop.f32.mrb[0].mxu0
        %8120 = vmatprep.mubr.f32.mxu0 0.0
        %8121 = vmatmul.mubr.f32.gmra.mrb[0].mxu0 %v7950
        %v8122 = vpop.f32.mrb[0].mxu0
        %v8123 = vadd.f32 0.0, %v8122
        %v8124 = vpop.f32.mrb[0].mxu0
        %8125 = vmatprep.mubr.f32.mxu0 0.0
        %8126 = vmatmul.mubr.f32.gmra.mrb[0].mxu0 %v7953
        %v8127 = vpop.f32.mrb[0].mxu0
        %v8128 = vadd.f32 0.0, %v8127
        %v8129 = vpop.f32.mrb[0].mxu0
        %8130 = vmatprep.mubr.f32.mxu0 0.0
        %8131 = vmatmul.mubr.f32.gmra.mrb[0].mxu0 %v7956
        %v8132 = vpop.f32.mrb[0].mxu0
        %v8133 = vadd.f32 0.0, %v8132
        %v8134 = vpop.f32.mrb[0].mxu0
        %8135 = vmatprep.mubr.f32.mxu0 0.0
        %8136 = vmatmul.mubr.f32.gmra.mrb[0].mxu0 %v7959
        %v8137 = vpop.f32.mrb[0].mxu0
        %v8138 = vadd.f32 0.0, %v8137
        %v8139 = vpop.f32.mrb[0].mxu0
        %8140 = vmatprep.mubr.f32.mxu0 0.0
        %8141 = vmatmul.mubr.f32.gmra.mrb[0].mxu0 %v7962
        %v8142 = vpop.f32.mrb[0].mxu0
        %v8143 = vadd.f32 0.0, %v8142
        %v8144 = vpop.f32.mrb[0].mxu0
        %8145 = vmatprep.mubr.f32.mxu0 0.0
        %8146 = vmatmul.mubr.f32.gmra.mrb[0].mxu0 %v7965
        %v8147 = vpop.f32.mrb[0].mxu0
        %v8148 = vadd.f32 0.0, %v8147
        %v8149 = vpop.f32.mrb[0].mxu0
        %8150 = vmatprep.mubr.f32.mxu0 0.0
        %8151 = vmatmul.mubr.f32.gmra.mrb[0].mxu0 %v7968
        %v8152 = vpop.f32.mrb[0].mxu0
        %v8153 = vadd.f32 0.0, %v8152
        %v8154 = vpop.f32.mrb[0].mxu0
        %8155 = vmatprep.mubr.f32.mxu0 0.0
        %8156 = vmatmul.mubr.f32.gmra.mrb[0].mxu0 %v7971
        %v8157 = vpop.f32.mrb[0].mxu0
        %v8158 = vadd.f32 0.0, %v8157
        %v8159 = vpop.f32.mrb[0].mxu0
        %8160 = vmatprep.mubr.f32.mxu0 0.0
        %8161 = vmatmul.mubr.f32.gmra.mrb[0].mxu0 %v7974
        %v8162 = vpop.f32.mrb[0].mxu0
        %v8163 = vadd.f32 0.0, %v8162
        %v8164 = vpop.f32.mrb[0].mxu0
        %8165 = vmatprep.mubr.f32.mxu0 0.0
        %8166 = vmatmul.mubr.f32.gmra.mrb[0].mxu0 %v7977
        %v8167 = vpop.f32.mrb[0].mxu0
        %v8168 = vadd.f32 0.0, %v8167
        %v8169 = vpop.f32.mrb[0].mxu0
        %8170 = vmatprep.mubr.f32.mxu0 0.0
        %8171 = vmatmul.mubr.f32.gmra.mrb[0].mxu0 %v7980
        %v8172 = vpop.f32.mrb[0].mxu0
        %v8173 = vadd.f32 0.0, %v8172
        %v8174 = vpop.f32.mrb[0].mxu0
        %8175 = vmatprep.mubr.f32.mxu0 0.0
        %8176 = vmatmul.mubr.f32.gmra.mrb[0].mxu0 %v7983
        %v8177 = vpop.f32.mrb[0].mxu0
        %v8178 = vadd.f32 0.0, %v8177
        %v8179 = vpop.f32.mrb[0].mxu0
        %8180 = vmatprep.mubr.f32.mxu0 0.0
        %8181 = vmatmul.mubr.f32.gmra.mrb[0].mxu0 %v7986
        %v8182 = vpop.f32.mrb[0].mxu0
        %v8183 = vadd.f32 0.0, %v8182
        %v8184 = vpop.f32.mrb[0].mxu0
        %8185 = vmatprep.mubr.f32.mxu0 0.0
        %8186 = vmatmul.mubr.f32.gmra.mrb[0].mxu0 %v7989
        %v8187 = vpop.f32.mrb[0].mxu0
        %v8188 = vadd.f32 0.0, %v8187
        %v8189 = vpop.f32.mrb[0].mxu0
        %8190 = vmatprep.mubr.f32.mxu0 0.0
        %8191 = vmatmul.mubr.f32.gmra.mrb[0].mxu0 %v7992
        %v8192 = vpop.f32.mrb[0].mxu0
        %v8193 = vadd.f32 0.0, %v8192
        %v8194 = vpop.f32.mrb[0].mxu0
        %8195 = vmatprep.mubr.f32.mxu0 0.0
        %8196 = vmatmul.mubr.f32.gmra.mrb[0].mxu0 %v7995
        %v8197 = vpop.f32.mrb[0].mxu0
        %v8198 = vadd.f32 0.0, %v8197
        %v8199 = vpop.f32.mrb[0].mxu0
        %8200 = vmatprep.mubr.f32.mxu0 0.0
        %8201 = vmatmul.mubr.f32.gmra.mrb[0].mxu0 %v7998
        %v8202 = vpop.f32.mrb[0].mxu0
        %v8203 = vadd.f32 0.0, %v8202
        %v8204 = vpop.f32.mrb[0].mxu0
        %8205 = vmatprep.mubr.f32.mxu0 0.0
        %8206 = vmatmul.mubr.f32.gmra.mrb[0].mxu0 %v8001
        %v8207 = vpop.f32.mrb[0].mxu0
        %v8208 = vadd.f32 0.0, %v8207
        %v8209 = vpop.f32.mrb[0].mxu0
        %8210 = vmatprep.mubr.f32.mxu0 0.0
        %8211 = vmatmul.mubr.f32.gmra.mrb[0].mxu0 %v8004
        %v8212 = vpop.f32.mrb[0].mxu0
        %v8213 = vadd.f32 0.0, %v8212
        %v8214 = vpop.f32.mrb[0].mxu0
        %8215 = vmatprep.mubr.f32.mxu0 0.0
        %8216 = vmatmul.mubr.f32.gmra.mrb[0].mxu0 %v8007
        %v8217 = vpop.f32.mrb[0].mxu0
        %v8218 = vadd.f32 0.0, %v8217
        %v8219 = vpop.f32.mrb[0].mxu0
        %8220 = vmatprep.mubr.f32.mxu0 0.0
        %8221 = vmatmul.mubr.f32.gmra.mrb[0].mxu0 %v8010
        %v8222 = vpop.f32.mrb[0].mxu0
        %v8223 = vadd.f32 0.0, %v8222
        %v8224 = vpop.f32.mrb[0].mxu0
        %8225 = vmatprep.mubr.f32.mxu0 0.0
        %8226 = vmatmul.mubr.f32.gmra.mrb[0].mxu0 %v8013
        %v8227 = vpop.f32.mrb[0].mxu0
        %v8228 = vadd.f32 0.0, %v8227
        %v8229 = vpop.f32.mrb[0].mxu0
        %8230 = vmatprep.mubr.f32.mxu0 0.0
        %8231 = vmatmul.mubr.f32.gmra.mrb[0].mxu0 %v8016
        %v8232 = vpop.f32.mrb[0].mxu0
        %v8233 = vadd.f32 0.0, %v8232
        %v8234 = vpop.f32.mrb[0].mxu0
        %8235 = vmatprep.mubr.f32.mxu0 0.0
        %8236 = vmatmul.mubr.f32.gmra.mrb[0].mxu0 %v8019
        %v8237 = vpop.f32.mrb[0].mxu0
        %v8238 = vadd.f32 0.0, %v8237
        %v8239 = vpop.f32.mrb[0].mxu0
        %8240 = vmatprep.mubr.f32.mxu0 0.0
        %8241 = vmatmul.mubr.f32.gmra.mrb[0].mxu0 %v8022
        %v8242 = vpop.f32.mrb[0].mxu0
        %v8243 = vadd.f32 0.0, %v8242
        %v8244 = vpop.f32.mrb[0].mxu0
        %8245 = vmatprep.mubr.f32.mxu0 0.0
        %8246 = vmatmul.mubr.f32.gmra.mrb[0].mxu0 %v8025
        %v8247 = vpop.f32.mrb[0].mxu0
        %v8248 = vadd.f32 0.0, %v8247
        %v8249 = vpop.f32.mrb[0].mxu0
        %8250 = vmatprep.mubr.f32.mxu0 0.0
        %8251 = vmatmul.mubr.f32.gmra.mrb[0].mxu0 %v8028
        %v8252 = vpop.f32.mrb[0].mxu0
        %v8253 = vadd.f32 0.0, %v8252
        %v8254 = vpop.f32.mrb[0].mxu0
        %8255 = vmatprep.mubr.f32.mxu0 0.0
        %8256 = vmatmul.mubr.f32.gmra.mrb[0].mxu0 %v8031
        %v8257 = vpop.f32.mrb[0].mxu0
        %v8258 = vadd.f32 0.0, %v8257
        %v8259 = vpop.f32.mrb[0].mxu0
        %8260 = vdwg.mxu0
        %v8261 = vadd.f32 %v7903, %v8103
        %v8262 = vadd.f32 %v7904, %v8108
        %v8263 = vadd.f32 %v7905, %v8113
        %v8264 = vadd.f32 %v7906, %v8118
        %v8265 = vadd.f32 %v7907, %v8123
        %v8266 = vadd.f32 %v7908, %v8128
        %v8267 = vadd.f32 %v7909, %v8133
        %v8268 = vadd.f32 %v7910, %v8138
        %v8269 = vadd.f32 %v7911, %v8143
        %v8270 = vadd.f32 %v7912, %v8148
        %v8271 = vadd.f32 %v7913, %v8153
        %v8272 = vadd.f32 %v7914, %v8158
        %v8273 = vadd.f32 %v7915, %v8163
        %v8274 = vadd.f32 %v7916, %v8168
        %v8275 = vadd.f32 %v7917, %v8173
        %v8276 = vadd.f32 %v7918, %v8178
        %v8277 = vadd.f32 %v7919, %v8183
        %v8278 = vadd.f32 %v7920, %v8188
        %v8279 = vadd.f32 %v7921, %v8193
        %v8280 = vadd.f32 %v7922, %v8198
        %v8281 = vadd.f32 %v7923, %v8203
        %v8282 = vadd.f32 %v7924, %v8208
        %v8283 = vadd.f32 %v7925, %v8213
        %v8284 = vadd.f32 %v7926, %v8218
        %v8285 = vadd.f32 %v7927, %v8223
        %v8286 = vadd.f32 %v7928, %v8228
        %v8287 = vadd.f32 %v7929, %v8233
        %v8288 = vadd.f32 %v7930, %v8238
        %v8289 = vadd.f32 %v7931, %v8243
        %v8290 = vadd.f32 %v7932, %v8248
        %v8291 = vadd.f32 %v7933, %v8253
        %v8292 = vadd.f32 %v7934, %v8258
        %8293 = vst.msk [vmem:[#allocation3] sm:$0xff] %vm297, %v8261
        %8294 = vst.msk [vmem:[#allocation3 + $0x8] sm:$0xff] %vm297, %v8262
        %8295 = vst.msk [vmem:[#allocation3 + $0x10] sm:$0xff] %vm297, %v8263
        %8296 = vst.msk [vmem:[#allocation3 + $0x18] sm:$0xff] %vm297, %v8264
        %8297 = vst.msk [vmem:[#allocation3 + $0x20] sm:$0xff] %vm297, %v8265
        %8298 = vst.msk [vmem:[#allocation3 + $0x28] sm:$0xff] %vm297, %v8266
        %8299 = vst.msk [vmem:[#allocation3 + $0x30] sm:$0xff] %vm297, %v8267
        %8300 = vst.msk [vmem:[#allocation3 + $0x38] sm:$0xff] %vm297, %v8268
        %8301 = vst.msk [vmem:[#allocation3 + $0x40] sm:$0xff] %vm297, %v8269
        %8302 = vst.msk [vmem:[#allocation3 + $0x48] sm:$0xff] %vm297, %v8270
        %8303 = vst.msk [vmem:[#allocation3 + $0x50] sm:$0xff] %vm297, %v8271
        %8304 = vst.msk [vmem:[#allocation3 + $0x58] sm:$0xff] %vm297, %v8272
        %8305 = vst.msk [vmem:[#allocation3 + $0x60] sm:$0xff] %vm297, %v8273
        %8306 = vst.msk [vmem:[#allocation3 + $0x68] sm:$0xff] %vm297, %v8274
        %8307 = vst.msk [vmem:[#allocation3 + $0x70] sm:$0xff] %vm297, %v8275
        %8308 = vst.msk [vmem:[#allocation3 + $0x78] sm:$0xff] %vm297, %v8276
        %8309 = vst.msk [vmem:[#allocation3 + $0x80] sm:$0xff] %vm297, %v8277
        %8310 = vst.msk [vmem:[#allocation3 + $0x88] sm:$0xff] %vm297, %v8278
        %8311 = vst.msk [vmem:[#allocation3 + $0x90] sm:$0xff] %vm297, %v8279
        %8312 = vst.msk [vmem:[#allocation3 + $0x98] sm:$0xff] %vm297, %v8280
        %8313 = vst.msk [vmem:[#allocation3 + $0xa0] sm:$0xff] %vm297, %v8281
        %8314 = vst.msk [vmem:[#allocation3 + $0xa8] sm:$0xff] %vm297, %v8282
        %8315 = vst.msk [vmem:[#allocation3 + $0xb0] sm:$0xff] %vm297, %v8283
        %8316 = vst.msk [vmem:[#allocation3 + $0xb8] sm:$0xff] %vm297, %v8284
        %8317 = vst.msk [vmem:[#allocation3 + $0xc0] sm:$0xff] %vm297, %v8285
        %8318 = vst.msk [vmem:[#allocation3 + $0xc8] sm:$0xff] %vm297, %v8286
        %8319 = vst.msk [vmem:[#allocation3 + $0xd0] sm:$0xff] %vm297, %v8287
        %8320 = vst.msk [vmem:[#allocation3 + $0xd8] sm:$0xff] %vm297, %v8288
        %8321 = vst.msk [vmem:[#allocation3 + $0xe0] sm:$0xff] %vm297, %v8289
        %8322 = vst.msk [vmem:[#allocation3 + $0xe8] sm:$0xff] %vm297, %v8290
        %8323 = vst.msk [vmem:[#allocation3 + $0xf0] sm:$0xff] %vm297, %v8291
        %8324 = vst.msk [vmem:[#allocation3 + $0xf8] sm:$0xff] %vm297, %v8292
        %v8325 = vld [vmem:[%s3164 + $0x2] sm:$0xff]
        %v8326 = vld [vmem:[%s3164 + $0xa] sm:$0xff]
        %v8327 = vld [vmem:[%s3164 + $0x1a] sm:$0xff]
        %v8328 = vld [vmem:[%s3164 + $0x22] sm:$0xff]
        %v8329 = vld [vmem:[%s3164 + $0x32] sm:$0xff]
        %v8330 = vld [vmem:[%s3164 + $0x3a] sm:$0xff]
        %v8331 = vld [vmem:[%s3164 + $0x4a] sm:$0xff]
        %v8332 = vld [vmem:[%s3164 + $0x52] sm:$0xff]
        %v8333 = vld [vmem:[%s3164 + $0x62] sm:$0xff]
        %v8334 = vld [vmem:[%s3164 + $0x6a] sm:$0xff]
        %v8335 = vld [vmem:[%s3164 + $0x7a] sm:$0xff]
        %v8336 = vld [vmem:[%s3164 + $0x82] sm:$0xff]
        %v8337 = vld [vmem:[%s3164 + $0x92] sm:$0xff]
        %v8338 = vld [vmem:[%s3164 + $0x9a] sm:$0xff]
        %v8339 = vld [vmem:[%s3164 + $0xaa] sm:$0xff]
        %v8340 = vld [vmem:[%s3164 + $0xb2] sm:$0xff]
        %v8341 = vld [vmem:[%s3164 + $0xc2] sm:$0xff]
        %v8342 = vld [vmem:[%s3164 + $0xca] sm:$0xff]
        %v8343 = vld [vmem:[%s3164 + $0xda] sm:$0xff]
        %v8344 = vld [vmem:[%s3164 + $0xe2] sm:$0xff]
        %v8345 = vld [vmem:[%s3164 + $0xf2] sm:$0xff]
        %v8346 = vld [vmem:[%s3164 + $0xfa] sm:$0xff]
        %v8347 = vld [vmem:[%s3164 + $0x10a] sm:$0xff]
        %v8348 = vld [vmem:[%s3164 + $0x112] sm:$0xff]
        %v8349 = vld [vmem:[%s3164 + $0x122] sm:$0xff]
        %v8350 = vld [vmem:[%s3164 + $0x12a] sm:$0xff]
        %v8351 = vld [vmem:[%s3164 + $0x13a] sm:$0xff]
        %v8352 = vld [vmem:[%s3164 + $0x142] sm:$0xff]
        %v8353 = vld [vmem:[%s3164 + $0x152] sm:$0xff]
        %v8354 = vld [vmem:[%s3164 + $0x15a] sm:$0xff]
        %v8355 = vld [vmem:[%s3164 + $0x16a] sm:$0xff]
        %v8356 = vld [vmem:[%s3164 + $0x172] sm:$0xff]
        %v8357 = vld [vmem:[#allocation3] sm:$0xff]
        %v8358 = vld [vmem:[#allocation3 + $0x8] sm:$0xff]
        %v8359 = vld [vmem:[#allocation3 + $0x10] sm:$0xff]
        %v8360 = vld [vmem:[#allocation3 + $0x18] sm:$0xff]
        %v8361 = vld [vmem:[#allocation3 + $0x20] sm:$0xff]
        %v8362 = vld [vmem:[#allocation3 + $0x28] sm:$0xff]
        %v8363 = vld [vmem:[#allocation3 + $0x30] sm:$0xff]
        %v8364 = vld [vmem:[#allocation3 + $0x38] sm:$0xff]
        %v8365 = vld [vmem:[#allocation3 + $0x40] sm:$0xff]
        %v8366 = vld [vmem:[#allocation3 + $0x48] sm:$0xff]
        %v8367 = vld [vmem:[#allocation3 + $0x50] sm:$0xff]
        %v8368 = vld [vmem:[#allocation3 + $0x58] sm:$0xff]
        %v8369 = vld [vmem:[#allocation3 + $0x60] sm:$0xff]
        %v8370 = vld [vmem:[#allocation3 + $0x68] sm:$0xff]
        %v8371 = vld [vmem:[#allocation3 + $0x70] sm:$0xff]
        %v8372 = vld [vmem:[#allocation3 + $0x78] sm:$0xff]
        %v8373 = vld [vmem:[#allocation3 + $0x80] sm:$0xff]
        %v8374 = vld [vmem:[#allocation3 + $0x88] sm:$0xff]
        %v8375 = vld [vmem:[#allocation3 + $0x90] sm:$0xff]
        %v8376 = vld [vmem:[#allocation3 + $0x98] sm:$0xff]
        %v8377 = vld [vmem:[#allocation3 + $0xa0] sm:$0xff]
        %v8378 = vld [vmem:[#allocation3 + $0xa8] sm:$0xff]
        %v8379 = vld [vmem:[#allocation3 + $0xb0] sm:$0xff]
        %v8380 = vld [vmem:[#allocation3 + $0xb8] sm:$0xff]
        %v8381 = vld [vmem:[#allocation3 + $0xc0] sm:$0xff]
        %v8382 = vld [vmem:[#allocation3 + $0xc8] sm:$0xff]
        %v8383 = vld [vmem:[#allocation3 + $0xd0] sm:$0xff]
        %v8384 = vld [vmem:[#allocation3 + $0xd8] sm:$0xff]
        %v8385 = vld [vmem:[#allocation3 + $0xe0] sm:$0xff]
        %v8386 = vld [vmem:[#allocation3 + $0xe8] sm:$0xff]
        %v8387 = vld [vmem:[#allocation3 + $0xf0] sm:$0xff]
        %v8388 = vld [vmem:[#allocation3 + $0xf8] sm:$0xff]
        %s8389 = scalar_lea.vmem [#allocation10], 32
        %v8390 = vld [vmem:[%s8389] sm:$0xf]
        %v8392 = vsel %vm297, %v8325, 0
        %v8395 = vsel %vm297, %v8326, 0
        %v8398 = vsel %vm297, %v8327, 0
        %v8401 = vsel %vm297, %v8328, 0
        %v8404 = vsel %vm297, %v8329, 0
        %v8407 = vsel %vm297, %v8330, 0
        %v8410 = vsel %vm297, %v8331, 0
        %v8413 = vsel %vm297, %v8332, 0
        %v8416 = vsel %vm297, %v8333, 0
        %v8419 = vsel %vm297, %v8334, 0
        %v8422 = vsel %vm297, %v8335, 0
        %v8425 = vsel %vm297, %v8336, 0
        %v8428 = vsel %vm297, %v8337, 0
        %v8431 = vsel %vm297, %v8338, 0
        %v8434 = vsel %vm297, %v8339, 0
        %v8437 = vsel %vm297, %v8340, 0
        %v8440 = vsel %vm297, %v8341, 0
        %v8443 = vsel %vm297, %v8342, 0
        %v8446 = vsel %vm297, %v8343, 0
        %v8449 = vsel %vm297, %v8344, 0
        %v8452 = vsel %vm297, %v8345, 0
        %v8455 = vsel %vm297, %v8346, 0
        %v8458 = vsel %vm297, %v8347, 0
        %v8461 = vsel %vm297, %v8348, 0
        %v8464 = vsel %vm297, %v8349, 0
        %v8467 = vsel %vm297, %v8350, 0
        %v8470 = vsel %vm297, %v8351, 0
        %v8473 = vsel %vm297, %v8352, 0
        %v8476 = vsel %vm297, %v8353, 0
        %v8479 = vsel %vm297, %v8354, 0
        %v8482 = vsel %vm297, %v8355, 0
        %v8485 = vsel %vm297, %v8356, 0
        %v8488 = vsel %vm601, %v8390, 0
        %8490 = vmatprep.subr.mxu0 0.0
        %8491 = vmatpush1.msra.mxu0 %v8488
        %8492 = vmatprep.subr.mxu0 0.0
        %8493 = vmatpush1.msra.mxu0 0.0
        %8494 = vmatprep.subr.mxu0 0.0
        %8495 = vmatpush1.msra.mxu0 0.0
        %8496 = vmatprep.subr.mxu0 0.0
        %8497 = vmatpush1.msra.mxu0 0.0
        %8498 = vmatprep.subr.mxu0 0.0
        %8499 = vmatpush1.msra.mxu0 0.0
        %8500 = vmatprep.subr.mxu0 0.0
        %8501 = vmatpush1.msra.mxu0 0.0
        %8502 = vmatprep.subr.mxu0 0.0
        %8503 = vmatpush1.msra.mxu0 0.0
        %8504 = vmatprep.subr.mxu0 0.0
        %8505 = vmatpush1.msra.mxu0 0.0
        %8506 = vmatprep.subr.mxu0 0.0
        %8507 = vmatpush1.msra.mxu0 0.0
        %8508 = vmatprep.subr.mxu0 0.0
        %8509 = vmatpush1.msra.mxu0 0.0
        %8510 = vmatprep.subr.mxu0 0.0
        %8511 = vmatpush1.msra.mxu0 0.0
        %8512 = vmatprep.subr.mxu0 0.0
        %8513 = vmatpush1.msra.mxu0 0.0
        %8514 = vmatprep.subr.mxu0 0.0
        %8515 = vmatpush1.msra.mxu0 0.0
        %8516 = vmatprep.subr.mxu0 0.0
        %8517 = vmatpush1.msra.mxu0 0.0
        %8518 = vmatprep.subr.mxu0 0.0
        %8519 = vmatpush1.msra.mxu0 0.0
        %8520 = vmatprep.subr.mxu0 0.0
        %8521 = vmatpush1.msra.mxu0 0.0
        %8522 = vmatprep.subr.mxu0 0.0
        %8523 = vmatpush1.msra.mxu0 0.0
        %8524 = vmatprep.subr.mxu0 0.0
        %8525 = vmatpush1.msra.mxu0 0.0
        %8526 = vmatprep.subr.mxu0 0.0
        %8527 = vmatpush1.msra.mxu0 0.0
        %8528 = vmatprep.subr.mxu0 0.0
        %8529 = vmatpush1.msra.mxu0 0.0
        %8530 = vmatprep.subr.mxu0 0.0
        %8531 = vmatpush1.msra.mxu0 0.0
        %8532 = vmatprep.subr.mxu0 0.0
        %8533 = vmatpush1.msra.mxu0 0.0
        %8534 = vmatprep.subr.mxu0 0.0
        %8535 = vmatpush1.msra.mxu0 0.0
        %8536 = vmatprep.subr.mxu0 0.0
        %8537 = vmatpush1.msra.mxu0 0.0
        %8538 = vmatprep.subr.mxu0 0.0
        %8539 = vmatpush1.msra.mxu0 0.0
        %8540 = vmatprep.subr.mxu0 0.0
        %8541 = vmatpush1.msra.mxu0 0.0
        %8542 = vmatprep.subr.mxu0 0.0
        %8543 = vmatpush1.msra.mxu0 0.0
        %8544 = vmatprep.subr.mxu0 0.0
        %8545 = vmatpush1.msra.mxu0 0.0
        %8546 = vmatprep.subr.mxu0 0.0
        %8547 = vmatpush1.msra.mxu0 0.0
        %8548 = vmatprep.subr.mxu0 0.0
        %8549 = vmatpush1.msra.mxu0 0.0
        %8550 = vmatprep.subr.mxu0 0.0
        %8551 = vmatpush1.msra.mxu0 0.0
        %8552 = vmatprep.subr.mxu0 0.0
        %8553 = vmatpush1.msra.mxu0 0.0
        %8554 = vmatprep.mubr.f32.mxu0 0.0
        %8555 = vmatmul.mubr.f32.gmra.mrb[0].mxu0 %v8392
        %v8556 = vpop.f32.mrb[0].mxu0
        %v8557 = vadd.f32 0.0, %v8556
        %v8558 = vpop.f32.mrb[0].mxu0
        %8559 = vmatprep.mubr.f32.mxu0 0.0
        %8560 = vmatmul.mubr.f32.gmra.mrb[0].mxu0 %v8395
        %v8561 = vpop.f32.mrb[0].mxu0
        %v8562 = vadd.f32 0.0, %v8561
        %v8563 = vpop.f32.mrb[0].mxu0
        %8564 = vmatprep.mubr.f32.mxu0 0.0
        %8565 = vmatmul.mubr.f32.gmra.mrb[0].mxu0 %v8398
        %v8566 = vpop.f32.mrb[0].mxu0
        %v8567 = vadd.f32 0.0, %v8566
        %v8568 = vpop.f32.mrb[0].mxu0
        %8569 = vmatprep.mubr.f32.mxu0 0.0
        %8570 = vmatmul.mubr.f32.gmra.mrb[0].mxu0 %v8401
        %v8571 = vpop.f32.mrb[0].mxu0
        %v8572 = vadd.f32 0.0, %v8571
        %v8573 = vpop.f32.mrb[0].mxu0
        %8574 = vmatprep.mubr.f32.mxu0 0.0
        %8575 = vmatmul.mubr.f32.gmra.mrb[0].mxu0 %v8404
        %v8576 = vpop.f32.mrb[0].mxu0
        %v8577 = vadd.f32 0.0, %v8576
        %v8578 = vpop.f32.mrb[0].mxu0
        %8579 = vmatprep.mubr.f32.mxu0 0.0
        %8580 = vmatmul.mubr.f32.gmra.mrb[0].mxu0 %v8407
        %v8581 = vpop.f32.mrb[0].mxu0
        %v8582 = vadd.f32 0.0, %v8581
        %v8583 = vpop.f32.mrb[0].mxu0
        %8584 = vmatprep.mubr.f32.mxu0 0.0
        %8585 = vmatmul.mubr.f32.gmra.mrb[0].mxu0 %v8410
        %v8586 = vpop.f32.mrb[0].mxu0
        %v8587 = vadd.f32 0.0, %v8586
        %v8588 = vpop.f32.mrb[0].mxu0
        %8589 = vmatprep.mubr.f32.mxu0 0.0
        %8590 = vmatmul.mubr.f32.gmra.mrb[0].mxu0 %v8413
        %v8591 = vpop.f32.mrb[0].mxu0
        %v8592 = vadd.f32 0.0, %v8591
        %v8593 = vpop.f32.mrb[0].mxu0
        %8594 = vmatprep.mubr.f32.mxu0 0.0
        %8595 = vmatmul.mubr.f32.gmra.mrb[0].mxu0 %v8416
        %v8596 = vpop.f32.mrb[0].mxu0
        %v8597 = vadd.f32 0.0, %v8596
        %v8598 = vpop.f32.mrb[0].mxu0
        %8599 = vmatprep.mubr.f32.mxu0 0.0
        %8600 = vmatmul.mubr.f32.gmra.mrb[0].mxu0 %v8419
        %v8601 = vpop.f32.mrb[0].mxu0
        %v8602 = vadd.f32 0.0, %v8601
        %v8603 = vpop.f32.mrb[0].mxu0
        %8604 = vmatprep.mubr.f32.mxu0 0.0
        %8605 = vmatmul.mubr.f32.gmra.mrb[0].mxu0 %v8422
        %v8606 = vpop.f32.mrb[0].mxu0
        %v8607 = vadd.f32 0.0, %v8606
        %v8608 = vpop.f32.mrb[0].mxu0
        %8609 = vmatprep.mubr.f32.mxu0 0.0
        %8610 = vmatmul.mubr.f32.gmra.mrb[0].mxu0 %v8425
        %v8611 = vpop.f32.mrb[0].mxu0
        %v8612 = vadd.f32 0.0, %v8611
        %v8613 = vpop.f32.mrb[0].mxu0
        %8614 = vmatprep.mubr.f32.mxu0 0.0
        %8615 = vmatmul.mubr.f32.gmra.mrb[0].mxu0 %v8428
        %v8616 = vpop.f32.mrb[0].mxu0
        %v8617 = vadd.f32 0.0, %v8616
        %v8618 = vpop.f32.mrb[0].mxu0
        %8619 = vmatprep.mubr.f32.mxu0 0.0
        %8620 = vmatmul.mubr.f32.gmra.mrb[0].mxu0 %v8431
        %v8621 = vpop.f32.mrb[0].mxu0
        %v8622 = vadd.f32 0.0, %v8621
        %v8623 = vpop.f32.mrb[0].mxu0
        %8624 = vmatprep.mubr.f32.mxu0 0.0
        %8625 = vmatmul.mubr.f32.gmra.mrb[0].mxu0 %v8434
        %v8626 = vpop.f32.mrb[0].mxu0
        %v8627 = vadd.f32 0.0, %v8626
        %v8628 = vpop.f32.mrb[0].mxu0
        %8629 = vmatprep.mubr.f32.mxu0 0.0
        %8630 = vmatmul.mubr.f32.gmra.mrb[0].mxu0 %v8437
        %v8631 = vpop.f32.mrb[0].mxu0
        %v8632 = vadd.f32 0.0, %v8631
        %v8633 = vpop.f32.mrb[0].mxu0
        %8634 = vmatprep.mubr.f32.mxu0 0.0
        %8635 = vmatmul.mubr.f32.gmra.mrb[0].mxu0 %v8440
        %v8636 = vpop.f32.mrb[0].mxu0
        %v8637 = vadd.f32 0.0, %v8636
        %v8638 = vpop.f32.mrb[0].mxu0
        %8639 = vmatprep.mubr.f32.mxu0 0.0
        %8640 = vmatmul.mubr.f32.gmra.mrb[0].mxu0 %v8443
        %v8641 = vpop.f32.mrb[0].mxu0
        %v8642 = vadd.f32 0.0, %v8641
        %v8643 = vpop.f32.mrb[0].mxu0
        %8644 = vmatprep.mubr.f32.mxu0 0.0
        %8645 = vmatmul.mubr.f32.gmra.mrb[0].mxu0 %v8446
        %v8646 = vpop.f32.mrb[0].mxu0
        %v8647 = vadd.f32 0.0, %v8646
        %v8648 = vpop.f32.mrb[0].mxu0
        %8649 = vmatprep.mubr.f32.mxu0 0.0
        %8650 = vmatmul.mubr.f32.gmra.mrb[0].mxu0 %v8449
        %v8651 = vpop.f32.mrb[0].mxu0
        %v8652 = vadd.f32 0.0, %v8651
        %v8653 = vpop.f32.mrb[0].mxu0
        %8654 = vmatprep.mubr.f32.mxu0 0.0
        %8655 = vmatmul.mubr.f32.gmra.mrb[0].mxu0 %v8452
        %v8656 = vpop.f32.mrb[0].mxu0
        %v8657 = vadd.f32 0.0, %v8656
        %v8658 = vpop.f32.mrb[0].mxu0
        %8659 = vmatprep.mubr.f32.mxu0 0.0
        %8660 = vmatmul.mubr.f32.gmra.mrb[0].mxu0 %v8455
        %v8661 = vpop.f32.mrb[0].mxu0
        %v8662 = vadd.f32 0.0, %v8661
        %v8663 = vpop.f32.mrb[0].mxu0
        %8664 = vmatprep.mubr.f32.mxu0 0.0
        %8665 = vmatmul.mubr.f32.gmra.mrb[0].mxu0 %v8458
        %v8666 = vpop.f32.mrb[0].mxu0
        %v8667 = vadd.f32 0.0, %v8666
        %v8668 = vpop.f32.mrb[0].mxu0
        %8669 = vmatprep.mubr.f32.mxu0 0.0
        %8670 = vmatmul.mubr.f32.gmra.mrb[0].mxu0 %v8461
        %v8671 = vpop.f32.mrb[0].mxu0
        %v8672 = vadd.f32 0.0, %v8671
        %v8673 = vpop.f32.mrb[0].mxu0
        %8674 = vmatprep.mubr.f32.mxu0 0.0
        %8675 = vmatmul.mubr.f32.gmra.mrb[0].mxu0 %v8464
        %v8676 = vpop.f32.mrb[0].mxu0
        %v8677 = vadd.f32 0.0, %v8676
        %v8678 = vpop.f32.mrb[0].mxu0
        %8679 = vmatprep.mubr.f32.mxu0 0.0
        %8680 = vmatmul.mubr.f32.gmra.mrb[0].mxu0 %v8467
        %v8681 = vpop.f32.mrb[0].mxu0
        %v8682 = vadd.f32 0.0, %v8681
        %v8683 = vpop.f32.mrb[0].mxu0
        %8684 = vmatprep.mubr.f32.mxu0 0.0
        %8685 = vmatmul.mubr.f32.gmra.mrb[0].mxu0 %v8470
        %v8686 = vpop.f32.mrb[0].mxu0
        %v8687 = vadd.f32 0.0, %v8686
        %v8688 = vpop.f32.mrb[0].mxu0
        %8689 = vmatprep.mubr.f32.mxu0 0.0
        %8690 = vmatmul.mubr.f32.gmra.mrb[0].mxu0 %v8473
        %v8691 = vpop.f32.mrb[0].mxu0
        %v8692 = vadd.f32 0.0, %v8691
        %v8693 = vpop.f32.mrb[0].mxu0
        %8694 = vmatprep.mubr.f32.mxu0 0.0
        %8695 = vmatmul.mubr.f32.gmra.mrb[0].mxu0 %v8476
        %v8696 = vpop.f32.mrb[0].mxu0
        %v8697 = vadd.f32 0.0, %v8696
        %v8698 = vpop.f32.mrb[0].mxu0
        %8699 = vmatprep.mubr.f32.mxu0 0.0
        %8700 = vmatmul.mubr.f32.gmra.mrb[0].mxu0 %v8479
        %v8701 = vpop.f32.mrb[0].mxu0
        %v8702 = vadd.f32 0.0, %v8701
        %v8703 = vpop.f32.mrb[0].mxu0
        %8704 = vmatprep.mubr.f32.mxu0 0.0
        %8705 = vmatmul.mubr.f32.gmra.mrb[0].mxu0 %v8482
        %v8706 = vpop.f32.mrb[0].mxu0
        %v8707 = vadd.f32 0.0, %v8706
        %v8708 = vpop.f32.mrb[0].mxu0
        %8709 = vmatprep.mubr.f32.mxu0 0.0
        %8710 = vmatmul.mubr.f32.gmra.mrb[0].mxu0 %v8485
        %v8711 = vpop.f32.mrb[0].mxu0
        %v8712 = vadd.f32 0.0, %v8711
        %v8713 = vpop.f32.mrb[0].mxu0
        %8714 = vdwg.mxu0
        %v8715 = vadd.f32 %v8357, %v8557
        %v8716 = vadd.f32 %v8358, %v8562
        %v8717 = vadd.f32 %v8359, %v8567
        %v8718 = vadd.f32 %v8360, %v8572
        %v8719 = vadd.f32 %v8361, %v8577
        %v8720 = vadd.f32 %v8362, %v8582
        %v8721 = vadd.f32 %v8363, %v8587
        %v8722 = vadd.f32 %v8364, %v8592
        %v8723 = vadd.f32 %v8365, %v8597
        %v8724 = vadd.f32 %v8366, %v8602
        %v8725 = vadd.f32 %v8367, %v8607
        %v8726 = vadd.f32 %v8368, %v8612
        %v8727 = vadd.f32 %v8369, %v8617
        %v8728 = vadd.f32 %v8370, %v8622
        %v8729 = vadd.f32 %v8371, %v8627
        %v8730 = vadd.f32 %v8372, %v8632
        %v8731 = vadd.f32 %v8373, %v8637
        %v8732 = vadd.f32 %v8374, %v8642
        %v8733 = vadd.f32 %v8375, %v8647
        %v8734 = vadd.f32 %v8376, %v8652
        %v8735 = vadd.f32 %v8377, %v8657
        %v8736 = vadd.f32 %v8378, %v8662
        %v8737 = vadd.f32 %v8379, %v8667
        %v8738 = vadd.f32 %v8380, %v8672
        %v8739 = vadd.f32 %v8381, %v8677
        %v8740 = vadd.f32 %v8382, %v8682
        %v8741 = vadd.f32 %v8383, %v8687
        %v8742 = vadd.f32 %v8384, %v8692
        %v8743 = vadd.f32 %v8385, %v8697
        %v8744 = vadd.f32 %v8386, %v8702
        %v8745 = vadd.f32 %v8387, %v8707
        %v8746 = vadd.f32 %v8388, %v8712
        %8747 = vst.msk [vmem:[#allocation3] sm:$0xff] %vm297, %v8715
        %8748 = vst.msk [vmem:[#allocation3 + $0x8] sm:$0xff] %vm297, %v8716
        %8749 = vst.msk [vmem:[#allocation3 + $0x10] sm:$0xff] %vm297, %v8717
        %8750 = vst.msk [vmem:[#allocation3 + $0x18] sm:$0xff] %vm297, %v8718
        %8751 = vst.msk [vmem:[#allocation3 + $0x20] sm:$0xff] %vm297, %v8719
        %8752 = vst.msk [vmem:[#allocation3 + $0x28] sm:$0xff] %vm297, %v8720
        %8753 = vst.msk [vmem:[#allocation3 + $0x30] sm:$0xff] %vm297, %v8721
        %8754 = vst.msk [vmem:[#allocation3 + $0x38] sm:$0xff] %vm297, %v8722
        %8755 = vst.msk [vmem:[#allocation3 + $0x40] sm:$0xff] %vm297, %v8723
        %8756 = vst.msk [vmem:[#allocation3 + $0x48] sm:$0xff] %vm297, %v8724
        %8757 = vst.msk [vmem:[#allocation3 + $0x50] sm:$0xff] %vm297, %v8725
        %8758 = vst.msk [vmem:[#allocation3 + $0x58] sm:$0xff] %vm297, %v8726
        %8759 = vst.msk [vmem:[#allocation3 + $0x60] sm:$0xff] %vm297, %v8727
        %8760 = vst.msk [vmem:[#allocation3 + $0x68] sm:$0xff] %vm297, %v8728
        %8761 = vst.msk [vmem:[#allocation3 + $0x70] sm:$0xff] %vm297, %v8729
        %8762 = vst.msk [vmem:[#allocation3 + $0x78] sm:$0xff] %vm297, %v8730
        %8763 = vst.msk [vmem:[#allocation3 + $0x80] sm:$0xff] %vm297, %v8731
        %8764 = vst.msk [vmem:[#allocation3 + $0x88] sm:$0xff] %vm297, %v8732
        %8765 = vst.msk [vmem:[#allocation3 + $0x90] sm:$0xff] %vm297, %v8733
        %8766 = vst.msk [vmem:[#allocation3 + $0x98] sm:$0xff] %vm297, %v8734
        %8767 = vst.msk [vmem:[#allocation3 + $0xa0] sm:$0xff] %vm297, %v8735
        %8768 = vst.msk [vmem:[#allocation3 + $0xa8] sm:$0xff] %vm297, %v8736
        %8769 = vst.msk [vmem:[#allocation3 + $0xb0] sm:$0xff] %vm297, %v8737
        %8770 = vst.msk [vmem:[#allocation3 + $0xb8] sm:$0xff] %vm297, %v8738
        %8771 = vst.msk [vmem:[#allocation3 + $0xc0] sm:$0xff] %vm297, %v8739
        %8772 = vst.msk [vmem:[#allocation3 + $0xc8] sm:$0xff] %vm297, %v8740
        %8773 = vst.msk [vmem:[#allocation3 + $0xd0] sm:$0xff] %vm297, %v8741
        %8774 = vst.msk [vmem:[#allocation3 + $0xd8] sm:$0xff] %vm297, %v8742
        %8775 = vst.msk [vmem:[#allocation3 + $0xe0] sm:$0xff] %vm297, %v8743
        %8776 = vst.msk [vmem:[#allocation3 + $0xe8] sm:$0xff] %vm297, %v8744
        %8777 = vst.msk [vmem:[#allocation3 + $0xf0] sm:$0xff] %vm297, %v8745
        %8778 = vst.msk [vmem:[#allocation3 + $0xf8] sm:$0xff] %vm297, %v8746
        %v8779 = vld [vmem:[#allocation3] sm:$0xff]
        %v8780 = vld [vmem:[#allocation3 + $0x8] sm:$0xff]
        %v8781 = vld [vmem:[#allocation3 + $0x10] sm:$0xff]
        %v8782 = vld [vmem:[#allocation3 + $0x18] sm:$0xff]
        %v8783 = vld [vmem:[#allocation3 + $0x20] sm:$0xff]
        %v8784 = vld [vmem:[#allocation3 + $0x28] sm:$0xff]
        %v8785 = vld [vmem:[#allocation3 + $0x30] sm:$0xff]
        %v8786 = vld [vmem:[#allocation3 + $0x38] sm:$0xff]
        %v8787 = vld [vmem:[#allocation3 + $0x40] sm:$0xff]
        %v8788 = vld [vmem:[#allocation3 + $0x48] sm:$0xff]
        %v8789 = vld [vmem:[#allocation3 + $0x50] sm:$0xff]
        %v8790 = vld [vmem:[#allocation3 + $0x58] sm:$0xff]
        %v8791 = vld [vmem:[#allocation3 + $0x60] sm:$0xff]
        %v8792 = vld [vmem:[#allocation3 + $0x68] sm:$0xff]
        %v8793 = vld [vmem:[#allocation3 + $0x70] sm:$0xff]
        %v8794 = vld [vmem:[#allocation3 + $0x78] sm:$0xff]
        %v8795 = vld [vmem:[#allocation3 + $0x80] sm:$0xff]
        %v8796 = vld [vmem:[#allocation3 + $0x88] sm:$0xff]
        %v8797 = vld [vmem:[#allocation3 + $0x90] sm:$0xff]
        %v8798 = vld [vmem:[#allocation3 + $0x98] sm:$0xff]
        %v8799 = vld [vmem:[#allocation3 + $0xa0] sm:$0xff]
        %v8800 = vld [vmem:[#allocation3 + $0xa8] sm:$0xff]
        %v8801 = vld [vmem:[#allocation3 + $0xb0] sm:$0xff]
        %v8802 = vld [vmem:[#allocation3 + $0xb8] sm:$0xff]
        %v8803 = vld [vmem:[#allocation3 + $0xc0] sm:$0xff]
        %v8804 = vld [vmem:[#allocation3 + $0xc8] sm:$0xff]
        %v8805 = vld [vmem:[#allocation3 + $0xd0] sm:$0xff]
        %v8806 = vld [vmem:[#allocation3 + $0xd8] sm:$0xff]
        %v8807 = vld [vmem:[#allocation3 + $0xe0] sm:$0xff]
        %v8808 = vld [vmem:[#allocation3 + $0xe8] sm:$0xff]
        %v8809 = vld [vmem:[#allocation3 + $0xf0] sm:$0xff]
        %v8810 = vld [vmem:[#allocation3 + $0xf8] sm:$0xff]
        %v8811 = vld [vmem:[#allocation12] sm:$0x1]
        %v8813 = vlaneseq
        %v8814 = vshrl.u32 %v8813, 7
        %v8815 = vsub.s32 0, %v8814
        %v8816 = vrot.slane %v8811, %v8815
        %v8818 = vadd.f32 %v8779, %v8816
        %v8819 = vadd.f32 %v8780, %v8816
        %v8820 = vadd.f32 %v8781, %v8816
        %v8821 = vadd.f32 %v8782, %v8816
        %v8822 = vadd.f32 %v8783, %v8816
        %v8823 = vadd.f32 %v8784, %v8816
        %v8824 = vadd.f32 %v8785, %v8816
        %v8825 = vadd.f32 %v8786, %v8816
        %v8826 = vadd.f32 %v8787, %v8816
        %v8827 = vadd.f32 %v8788, %v8816
        %v8828 = vadd.f32 %v8789, %v8816
        %v8829 = vadd.f32 %v8790, %v8816
        %v8830 = vadd.f32 %v8791, %v8816
        %v8831 = vadd.f32 %v8792, %v8816
        %v8832 = vadd.f32 %v8793, %v8816
        %v8833 = vadd.f32 %v8794, %v8816
        %v8834 = vadd.f32 %v8795, %v8816
        %v8835 = vadd.f32 %v8796, %v8816
        %v8836 = vadd.f32 %v8797, %v8816
        %v8837 = vadd.f32 %v8798, %v8816
        %v8838 = vadd.f32 %v8799, %v8816
        %v8839 = vadd.f32 %v8800, %v8816
        %v8840 = vadd.f32 %v8801, %v8816
        %v8841 = vadd.f32 %v8802, %v8816
        %v8842 = vadd.f32 %v8803, %v8816
        %v8843 = vadd.f32 %v8804, %v8816
        %v8844 = vadd.f32 %v8805, %v8816
        %v8845 = vadd.f32 %v8806, %v8816
        %v8846 = vadd.f32 %v8807, %v8816
        %v8847 = vadd.f32 %v8808, %v8816
        %v8848 = vadd.f32 %v8809, %v8816
        %v8849 = vadd.f32 %v8810, %v8816
        %v8850 = vld [vmem:[%s254] sm:$0xff]
        %v8851 = vld [vmem:[%s254 + $0x8] sm:$0xff]
        %v8852 = vld [vmem:[%s254 + $0x10] sm:$0xff]
        %v8853 = vld [vmem:[%s254 + $0x18] sm:$0xff]
        %v8854 = vld [vmem:[%s254 + $0x20] sm:$0xff]
        %v8855 = vld [vmem:[%s254 + $0x28] sm:$0xff]
        %v8856 = vld [vmem:[%s254 + $0x30] sm:$0xff]
        %v8857 = vld [vmem:[%s254 + $0x38] sm:$0xff]
        %v8858 = vld [vmem:[%s254 + $0x40] sm:$0xff]
        %v8859 = vld [vmem:[%s254 + $0x48] sm:$0xff]
        %v8860 = vld [vmem:[%s254 + $0x50] sm:$0xff]
        %v8861 = vld [vmem:[%s254 + $0x58] sm:$0xff]
        %v8862 = vld [vmem:[%s254 + $0x60] sm:$0xff]
        %v8863 = vld [vmem:[%s254 + $0x68] sm:$0xff]
        %v8864 = vld [vmem:[%s254 + $0x70] sm:$0xff]
        %v8865 = vld [vmem:[%s254 + $0x78] sm:$0xff]
        %v8866 = vld [vmem:[%s254 + $0x80] sm:$0xff]
        %v8867 = vld [vmem:[%s254 + $0x88] sm:$0xff]
        %v8868 = vld [vmem:[%s254 + $0x90] sm:$0xff]
        %v8869 = vld [vmem:[%s254 + $0x98] sm:$0xff]
        %v8870 = vld [vmem:[%s254 + $0xa0] sm:$0xff]
        %v8871 = vld [vmem:[%s254 + $0xa8] sm:$0xff]
        %v8872 = vld [vmem:[%s254 + $0xb0] sm:$0xff]
        %v8873 = vld [vmem:[%s254 + $0xb8] sm:$0xff]
        %v8874 = vld [vmem:[%s254 + $0xc0] sm:$0xff]
        %v8875 = vld [vmem:[%s254 + $0xc8] sm:$0xff]
        %v8876 = vld [vmem:[%s254 + $0xd0] sm:$0xff]
        %v8877 = vld [vmem:[%s254 + $0xd8] sm:$0xff]
        %v8878 = vld [vmem:[%s254 + $0xe0] sm:$0xff]
        %v8879 = vld [vmem:[%s254 + $0xe8] sm:$0xff]
        %v8880 = vld [vmem:[%s254 + $0xf0] sm:$0xff]
        %v8881 = vld [vmem:[%s254 + $0xf8] sm:$0xff]
        %v8882 = vadd.f32 %v8850, %v8818
        %v8883 = vadd.f32 %v8851, %v8819
        %v8884 = vadd.f32 %v8852, %v8820
        %v8885 = vadd.f32 %v8853, %v8821
        %v8886 = vadd.f32 %v8854, %v8822
        %v8887 = vadd.f32 %v8855, %v8823
        %v8888 = vadd.f32 %v8856, %v8824
        %v8889 = vadd.f32 %v8857, %v8825
        %v8890 = vadd.f32 %v8858, %v8826
        %v8891 = vadd.f32 %v8859, %v8827
        %v8892 = vadd.f32 %v8860, %v8828
        %v8893 = vadd.f32 %v8861, %v8829
        %v8894 = vadd.f32 %v8862, %v8830
        %v8895 = vadd.f32 %v8863, %v8831
        %v8896 = vadd.f32 %v8864, %v8832
        %v8897 = vadd.f32 %v8865, %v8833
        %v8898 = vadd.f32 %v8866, %v8834
        %v8899 = vadd.f32 %v8867, %v8835
        %v8900 = vadd.f32 %v8868, %v8836
        %v8901 = vadd.f32 %v8869, %v8837
        %v8902 = vadd.f32 %v8870, %v8838
        %v8903 = vadd.f32 %v8871, %v8839
        %v8904 = vadd.f32 %v8872, %v8840
        %v8905 = vadd.f32 %v8873, %v8841
        %v8906 = vadd.f32 %v8874, %v8842
        %v8907 = vadd.f32 %v8875, %v8843
        %v8908 = vadd.f32 %v8876, %v8844
        %v8909 = vadd.f32 %v8877, %v8845
        %v8910 = vadd.f32 %v8878, %v8846
        %v8911 = vadd.f32 %v8879, %v8847
        %v8912 = vadd.f32 %v8880, %v8848
        %v8913 = vadd.f32 %v8881, %v8849
        %8914 = vst.msk [vmem:[%s296] sm:$0xff] %vm297, %v8882
        %8915 = vst.msk [vmem:[%s296 + $0x8] sm:$0xff] %vm297, %v8883
        %8916 = vst.msk [vmem:[%s296 + $0x10] sm:$0xff] %vm297, %v8884
        %8917 = vst.msk [vmem:[%s296 + $0x18] sm:$0xff] %vm297, %v8885
        %8918 = vst.msk [vmem:[%s296 + $0x20] sm:$0xff] %vm297, %v8886
        %8919 = vst.msk [vmem:[%s296 + $0x28] sm:$0xff] %vm297, %v8887
        %8920 = vst.msk [vmem:[%s296 + $0x30] sm:$0xff] %vm297, %v8888
        %8921 = vst.msk [vmem:[%s296 + $0x38] sm:$0xff] %vm297, %v8889
        %8922 = vst.msk [vmem:[%s296 + $0x40] sm:$0xff] %vm297, %v8890
        %8923 = vst.msk [vmem:[%s296 + $0x48] sm:$0xff] %vm297, %v8891
        %8924 = vst.msk [vmem:[%s296 + $0x50] sm:$0xff] %vm297, %v8892
        %8925 = vst.msk [vmem:[%s296 + $0x58] sm:$0xff] %vm297, %v8893
        %8926 = vst.msk [vmem:[%s296 + $0x60] sm:$0xff] %vm297, %v8894
        %8927 = vst.msk [vmem:[%s296 + $0x68] sm:$0xff] %vm297, %v8895
        %8928 = vst.msk [vmem:[%s296 + $0x70] sm:$0xff] %vm297, %v8896
        %8929 = vst.msk [vmem:[%s296 + $0x78] sm:$0xff] %vm297, %v8897
        %8930 = vst.msk [vmem:[%s296 + $0x80] sm:$0xff] %vm297, %v8898
        %8931 = vst.msk [vmem:[%s296 + $0x88] sm:$0xff] %vm297, %v8899
        %8932 = vst.msk [vmem:[%s296 + $0x90] sm:$0xff] %vm297, %v8900
        %8933 = vst.msk [vmem:[%s296 + $0x98] sm:$0xff] %vm297, %v8901
        %8934 = vst.msk [vmem:[%s296 + $0xa0] sm:$0xff] %vm297, %v8902
        %8935 = vst.msk [vmem:[%s296 + $0xa8] sm:$0xff] %vm297, %v8903
        %8936 = vst.msk [vmem:[%s296 + $0xb0] sm:$0xff] %vm297, %v8904
        %8937 = vst.msk [vmem:[%s296 + $0xb8] sm:$0xff] %vm297, %v8905
        %8938 = vst.msk [vmem:[%s296 + $0xc0] sm:$0xff] %vm297, %v8906
        %8939 = vst.msk [vmem:[%s296 + $0xc8] sm:$0xff] %vm297, %v8907
        %8940 = vst.msk [vmem:[%s296 + $0xd0] sm:$0xff] %vm297, %v8908
        %8941 = vst.msk [vmem:[%s296 + $0xd8] sm:$0xff] %vm297, %v8909
        %8942 = vst.msk [vmem:[%s296 + $0xe0] sm:$0xff] %vm297, %v8910
        %8943 = vst.msk [vmem:[%s296 + $0xe8] sm:$0xff] %vm297, %v8911
        %8944 = vst.msk [vmem:[%s296 + $0xf0] sm:$0xff] %vm297, %v8912
        %8945 = vst.msk [vmem:[%s296 + $0xf8] sm:$0xff] %vm297, %v8913
        %s8946 = sand.u32 %s142, 1
        %s8947 = scalar_lea.sflag [#allocation6], %s8946
        %s8948 = sand.u32 %s142, 1
        %s8949 = smul.addr %s8948, 256
        %s8950 = scalar_lea.vmem [#allocation13], %s8949
        // Predicated region
        $region61: #{residual_block_nhwc.1} parent=39 // pred_check
          %p8951 = pneg %p152
        $region62: #{residual_block_nhwc.1} parent=39 // pred_check_branch
          %8953 = sbr.rel (%p8951) target = $region64
        $region63: #{residual_block_nhwc.1} parent=39 // pred_region
          %s8955 = ssub.s32 4096, 4096
          %8956 = vsyncadd %s8947, %s8955
          %s8957 = smul.addr %s24, 32
          %s8958 = smul.addr %s8957, 128
          %s8959 = scalar_lea.hbm %s5, %s8958
          %s8960 = sshll.u32 %s8950, 4
          %s8961 = int_to_ptr.vmem [resolvable:$true] %s8960
          %8966 = dma.vmem_to_hbm [thread:$0]  %s8961, 4096, %s8959, %s8947, 128, 128, 8
        $region64: #{residual_block_nhwc.1} parent=39 // pred_fallthru
          _
      $region40: #{residual_block_nhwc.1} parent=5 // pred_fallthru
        _
      %p8967 = scmp.le.s32.totalorder 2, %s19
      // Predicated region
      $region65: #{residual_block_nhwc.1} parent=5 // pred_check
        %p8968 = pneg %p8967
      $region66: #{residual_block_nhwc.1} parent=5 // pred_check_branch
        %8970 = sbr.rel (%p8968) target = $region68
      $region67: #{residual_block_nhwc.1} parent=5 // pred_region
        %s8971 = ssub.s32 %s19, 2
        // Predicated region
        $region69: #{residual_block_nhwc.1} parent=67 // pred_check
          %p8972 = pneg %p158
        $region70: #{residual_block_nhwc.1} parent=67 // pred_check_branch
          %8974 = sbr.rel (%p8972) target = $region72
        $region71: #{residual_block_nhwc.1} parent=67 // pred_region
          %s8975 = sand.u32 %s143, 1
          %s8976 = scalar_lea.sflag [#allocation6], %s8975
          %s8977 = sand.u32 %s143, 1
          %s8978 = smul.addr %s8977, 256
          %s8979 = scalar_lea.vmem [#allocation13], %s8978
          %8980 = dma.done %s8976, 4096
        $region72: #{residual_block_nhwc.1} parent=67 // pred_fallthru
          _
      $region68: #{residual_block_nhwc.1} parent=5 // pred_fallthru
        _
    $region6: #{residual_block_nhwc.1} parent=1 // loop_footer
      %s23 = sadd.s32 1, %s19
    $region7: #{residual_block_nhwc.1} parent=1 // loop_footer_branch
      %18 = sbr.rel target = $region3
    $region8: #{residual_block_nhwc.1} parent=1 // loop_exit
      _
    %8981 = vsyncpa [#allocation5], 1
    %s8982 = scalar_lea.sflag [#allocation5], 1
    %8983 = vsyncpa %s8982, 1
    %8984 = vsyncpa [#allocation8], 1
    %8985 = vsyncpa [#allocation11], 1
    %8986 = vsyncpa [#allocation6], 1
    %s8987 = scalar_lea.sflag [#allocation6], 1
    %8988 = vsyncpa %s8987, 1

</llo_original>
